<compile_context>
chip_gen: v7x
topology: tpu7x:2x2x1
jax: 0.10.0
libtpu: 0.0.40
codegen_flags: <defaults>
</compile_context>

<pallas_src>
import functools
import math

import jax
import jax.numpy as jnp
from jax.experimental import pallas as pl
from jax.experimental.pallas import tpu as pltpu  # noqa: F401  (not needed at these sizes)

# ----------------------------- model configuration -----------------------------
VOCAB = 50
VOCAB_PAD = 128        # lane-dense padded vocab for the logits matmul/store
D_MODEL = 32           # d_model
NHEADS = 4             # internal_nheads
HEAD_DIM = D_MODEL // NHEADS
D_FF = 64              # dim_feedforward
NLAYERS = 2            # nlayers (encoder stand-in + decoder)
CODEBOOK = 32          # codebook_size
COMMITMENT = 1.0
PADDING_IDX = 0
UNK_IDX = 1
BOS_IDX = 2

B = 2                  # batch
NSENT = 2              # sentences per document (S)
T_SRC = 6              # source tokens per sentence (UNK gets prepended -> 7)
T_TGT = 8              # target tokens per sentence

NEG = -1e30            # additive mask value (numerically equivalent to -inf)


# ------------------------------ fused Pallas kernel -----------------------------
def fused_forward_kernel(
    # data / masks / codebook
    src_ref, tgt_ref, encmask_ref, selfmask_ref, crossmask_ref, cb_ref,
    # encoder weights (stacked over layers)
    e_wqkv, e_bqkv, e_wo, e_bo, e_ln1g, e_ln1b,
    e_w1, e_b1, e_w2, e_b2, e_ln2g, e_ln2b,
    # decoder weights (stacked over layers)
    d_sa_wqkv, d_sa_bqkv, d_sa_wo, d_sa_bo,
    d_ca_wq, d_ca_bq, d_ca_wkv, d_ca_bkv, d_ca_wo, d_ca_bo,
    d_ln1g, d_ln1b, d_ln2g, d_ln2b, d_ln3g, d_ln3b,
    d_w1, d_b1, d_w2, d_b2,
    # final norm + output projection (vocab padded to VOCAB_PAD lanes)
    lnf_g, lnf_b, w_out, b_out,
    # outputs
    logits_ref, enc_out_ref, qloss_ref, ppl_ref,
):
    E = D_MODEL
    H, dh = NHEADS, HEAD_DIM
    Ms = src_ref.shape[0]          # flattened source tokens  (N * Ts)
    scale = 1.0 / math.sqrt(dh)

    def dot(a, b):
        # bf16 MXU operands, f32 accumulation.
        return jnp.dot(a.astype(jnp.bfloat16), b.astype(jnp.bfloat16),
                       preferred_element_type=jnp.float32)

    def dot_nt(a, b):
        # a @ b.T without an explicit transpose (contract last dims).
        return jax.lax.dot_general(
            a.astype(jnp.bfloat16), b.astype(jnp.bfloat16),
            (((1,), (1,)), ((), ())), preferred_element_type=jnp.float32)

    def layer_norm(x, g, b):
        mu = jnp.mean(x, axis=-1, keepdims=True)
        xc = x - mu
        var = jnp.mean(xc * xc, axis=-1, keepdims=True)
        return xc * jax.lax.rsqrt(var + 1e-5) * g + b

    def attend(q, k, v, mask):
        # q [Mq, E], k/v [Mk, E]; mask [Mq, Mk] additive (block-diagonal across
        # sentences + key padding (+ causal)).  All sequences & all queries of
        # the batch are processed at once; heads unrolled statically.
        q = q * scale                      # fold 1/sqrt(dh) into q (single VPU op)
        outs = []
        for h in range(H):
            sl = slice(h * dh, (h + 1) * dh)
            s = dot_nt(q[:, sl], k[:, sl]) + mask            # [Mq, Mk] f32
            s = s - jnp.max(s, axis=-1, keepdims=True)
            p = jnp.exp(s)
            p = p * pl.reciprocal(jnp.sum(p, axis=-1, keepdims=True), approx=True)
            outs.append(dot(p, v[:, sl]))                    # [Mq, dh]
        return jnp.concatenate(outs, axis=-1)                # [Mq, E]

    # ------------------------- encoder stack (stand-in) -------------------------
    x = src_ref[...]                                         # [Ms, E] f32
    enc_mask = encmask_ref[...]
    for l in range(NLAYERS):
        qkv = dot(x, e_wqkv[l]) + e_bqkv[l]                  # fused QKV  [Ms, 3E]
        a = attend(qkv[:, :E], qkv[:, E:2 * E], qkv[:, 2 * E:], enc_mask)
        a = dot(a, e_wo[l]) + e_bo[l]
        x = layer_norm(x + a, e_ln1g[l], e_ln1b[l])
        ff = jnp.maximum(dot(x, e_w1[l]) + e_b1[l], 0.0)
        ff = dot(ff, e_w2[l]) + e_b2[l]
        x = layer_norm(x + ff, e_ln2g[l], e_ln2b[l])

    # --------------------- vector quantization (fused VQ) -----------------------
    cb = cb_ref[...]                                         # [K, E] f32
    xc_dot = jax.lax.dot_general(x, cb, (((1,), (1,)), ((), ())),
                                 preferred_element_type=jnp.float32)   # [Ms, K]
    ones_e = jnp.ones((1, E), jnp.float32)
    c2 = jax.lax.dot_general(ones_e, cb * cb, (((1,), (1,)), ((), ())),
                             preferred_element_type=jnp.float32)       # [1, K]
    x2 = jnp.sum(x * x, axis=-1, keepdims=True)                         # [Ms, 1]
    dist = x2 - 2.0 * xc_dot + c2                                       # [Ms, K]

    # nearest code via iota + min/select (first index on ties), no argmin/gather
    dmin = jnp.min(dist, axis=-1, keepdims=True)
    kiota = jax.lax.broadcasted_iota(jnp.int32, dist.shape, 1).astype(jnp.float32)
    first_min = jnp.min(jnp.where(dist <= dmin, kiota, float(CODEBOOK)),
                        axis=-1, keepdims=True)
    enc = (kiota == first_min).astype(jnp.float32)           # one-hot [Ms, K]
    quant = jnp.dot(enc, cb, preferred_element_type=jnp.float32)  # [Ms, E]

    enc_out_ref[...] = enc

    diff = quant - x
    d2 = jnp.sum(diff * diff, axis=-1, keepdims=True)        # [Ms, 1]
    qloss_ref[...] = jnp.sum(d2, axis=0, keepdims=True) * (COMMITMENT / (Ms * E))

    avg_p = jnp.sum(enc, axis=0, keepdims=True) * (1.0 / Ms)  # [1, K]
    ent = jnp.sum(avg_p * jnp.log(avg_p + 1e-10), axis=-1, keepdims=True)
    ppl_ref[...] = jnp.exp(-ent)

    # ------------------------------ decoder stack -------------------------------
    mem = quant                                              # quantized memory
    y = tgt_ref[...]                                         # [Mt, E]
    self_mask = selfmask_ref[...]
    cross_mask = crossmask_ref[...]
    for l in range(NLAYERS):
        # self-attention (causal + tgt key padding), fused QKV
        qkv = dot(y, d_sa_wqkv[l]) + d_sa_bqkv[l]
        a = attend(qkv[:, :E], qkv[:, E:2 * E], qkv[:, 2 * E:], self_mask)
        a = dot(a, d_sa_wo[l]) + d_sa_bo[l]
        y = layer_norm(y + a, d_ln1g[l], d_ln1b[l])

        # cross-attention over quantized memory (fused KV)
        q = dot(y, d_ca_wq[l]) + d_ca_bq[l]
        kv = dot(mem, d_ca_wkv[l]) + d_ca_bkv[l]
        a = attend(q, kv[:, :E], kv[:, E:], cross_mask)
        a = dot(a, d_ca_wo[l]) + d_ca_bo[l]
        y = layer_norm(y + a, d_ln2g[l], d_ln2b[l])

        # feed-forward
        ff = jnp.maximum(dot(y, d_w1[l]) + d_b1[l], 0.0)
        ff = dot(ff, d_w2[l]) + d_b2[l]
        y = layer_norm(y + ff, d_ln3g[l], d_ln3b[l])

    # final LayerNorm + lane-dense (128-wide) vocab projection
    y = layer_norm(y, lnf_g[...], lnf_b[...])
    logits_ref[...] = dot(y, w_out[...]) + b_out[...]


# ----------------------------------- forward ------------------------------------
def forward(params, src, tgt):
    Bb, S, Tsrc = src.shape
    _, _, Tt = tgt.shape
    N = Bb * S
    Ts = Tsrc + 1
    Ms, Mt = N * Ts, N * Tt

    # encode(): prepend per-sentence UNK token; embedding gather stays in XLA.
    unk = jnp.full((Bb, S, 1), UNK_IDX, jnp.int32)
    src_tok = jnp.concatenate([unk, src], axis=2).reshape(Ms)
    tgt_tok = tgt.reshape(Mt)
    src_x = jnp.take(params["emb"], src_tok, axis=0)          # [Ms, E] f32
    tgt_x = jnp.take(params["emb"], tgt_tok, axis=0)          # [Mt, E] f32

    # Flattened-batch additive masks: block-diagonal across sentences
    # + key padding (+ causal for decoder self-attention).  Tiny ([<=32, <=32]),
    # shared across all heads and layers inside the kernel.
    seq_s = jnp.repeat(jnp.arange(N, dtype=jnp.int32), Ts)
    seq_t = jnp.repeat(jnp.arange(N, dtype=jnp.int32), Tt)
    pos_t = jnp.tile(jnp.arange(Tt, dtype=jnp.int32), (N,))
    src_ok = src_tok != PADDING_IDX
    tgt_ok = tgt_tok != PADDING_IDX

    enc_ok = (seq_s[:, None] == seq_s[None, :]) & src_ok[None, :]
    self_ok = ((seq_t[:, None] == seq_t[None, :])
               & (pos_t[None, :] <= pos_t[:, None]) & tgt_ok[None, :])
    cross_ok = seq_t[:, None] == seq_s[None, :]   # no memory key padding (reference)
    to_add = lambda ok: jnp.where(ok, 0.0, NEG).astype(jnp.float32)

    e, d = params["enc"], params["dec"]
    weights = (
        # encoder (order matches kernel signature)
        e["wqkv"], e["bqkv"], e["wo"], e["bo"], e["ln1g"], e["ln1b"],
        e["w1"], e["b1"], e["w2"], e["b2"], e["ln2g"], e["ln2b"],
        # decoder
        d["sa_wqkv"], d["sa_bqkv"], d["sa_wo"], d["sa_bo"],
        d["ca_wq"], d["ca_bq"], d["ca_wkv"], d["ca_bkv"], d["ca_wo"], d["ca_bo"],
        d["ln1g"], d["ln1b"], d["ln2g"], d["ln2b"], d["ln3g"], d["ln3b"],
        d["w1"], d["b1"], d["w2"], d["b2"],
        # final
        params["lnf_g"], params["lnf_b"], params["w_out"], params["b_out"],
    )

    logits_pad, enc_flat, qloss, ppl = pl.pallas_call(
        fused_forward_kernel,
        out_shape=(
            jax.ShapeDtypeStruct((Mt, VOCAB_PAD), jnp.float32),   # lane-dense logits
            jax.ShapeDtypeStruct((Ms, CODEBOOK), jnp.float32),    # one-hot encodings
            jax.ShapeDtypeStruct((1, 1), jnp.float32),            # commitment loss
            jax.ShapeDtypeStruct((1, 1), jnp.float32),            # perplexity
        ),
    )(src_x, tgt_x, to_add(enc_ok), to_add(self_ok), to_add(cross_ok),
      params["codebook"], *weights)

    logits = logits_pad[:, :VOCAB].reshape(Bb, S, Tt, VOCAB)
    encodings = enc_flat.reshape(Bb, S, Ts, CODEBOOK)
    return logits, encodings, qloss[0, 0], ppl[0, 0]


# -------------------------------- parameter init --------------------------------
def init_params(key):
    keys = iter(jax.random.split(key, 64))
    E, F, L, K = D_MODEL, D_FF, NLAYERS, CODEBOOK

    def nrm(shape, scale=0.02):
        return jax.random.normal(next(keys), shape, jnp.float32) * scale

    def wstack(shape, scale=0.02):
        # Matmul weights stored in bf16 (MXU-native); biases / LN params in f32.
        return jnp.stack([nrm(shape, scale) for _ in range(L)]).astype(jnp.bfloat16)

    zeros = lambda *s: jnp.zeros(s, jnp.float32)
    ones = lambda *s: jnp.ones(s, jnp.float32)

    emb = nrm((VOCAB, E), 1.0).at[PADDING_IDX].set(0.0)      # padding row zeroed
    codebook = nrm((K, E), 1.0)

    enc = dict(
        wqkv=wstack((E, 3 * E)), bqkv=zeros(L, 1, 3 * E),
        wo=wstack((E, E)), bo=zeros(L, 1, E),
        ln1g=ones(L, 1, E), ln1b=zeros(L, 1, E),
        w1=wstack((E, F)), b1=zeros(L, 1, F),
        w2=wstack((F, E)), b2=zeros(L, 1, E),
        ln2g=ones(L, 1, E), ln2b=zeros(L, 1, E),
    )
    dec = dict(
        sa_wqkv=wstack((E, 3 * E)), sa_bqkv=zeros(L, 1, 3 * E),
        sa_wo=wstack((E, E)), sa_bo=zeros(L, 1, E),
        ca_wq=wstack((E, E)), ca_bq=zeros(L, 1, E),
        ca_wkv=wstack((E, 2 * E)), ca_bkv=zeros(L, 1, 2 * E),
        ca_wo=wstack((E, E)), ca_bo=zeros(L, 1, E),
        ln1g=ones(L, 1, E), ln1b=zeros(L, 1, E),
        ln2g=ones(L, 1, E), ln2b=zeros(L, 1, E),
        ln3g=ones(L, 1, E), ln3b=zeros(L, 1, E),
        w1=wstack((E, F)), b1=zeros(L, 1, F),
        w2=wstack((F, E)), b2=zeros(L, 1, E),
    )

    # lane-dense padded vocab projection (extra columns are zero, sliced off later)
    w_out = (jnp.zeros((E, VOCAB_PAD), jnp.float32)
             .at[:, :VOCAB].set(nrm((E, VOCAB)))
             .astype(jnp.bfloat16))

    return dict(
        emb=emb, codebook=codebook, enc=enc, dec=dec,
        lnf_g=ones(1, E), lnf_b=zeros(1, E),
        w_out=w_out, b_out=zeros(1, VOCAB_PAD),
    )


# ------------------------------------- main --------------------------------------
if __name__ == "__main__":
    key = jax.random.PRNGKey(0)
    pkey, skey, tkey = jax.random.split(key, 3)

    params = init_params(pkey)

    src = jax.random.randint(skey, (B, NSENT, T_SRC), 1, VOCAB, dtype=jnp.int32)
    src = src.at[0, 0, -1].set(PADDING_IDX)       # exercise src padding mask
    tgt = jax.random.randint(tkey, (B, NSENT, T_TGT), 0, VOCAB, dtype=jnp.int32)
    tgt = tgt.at[:, :, 0].set(BOS_IDX)            # BOS first (no fully-masked rows)

    fwd = jax.jit(forward)
    logits, encodings, q_loss, perplexity = fwd(params, src, tgt)
    jax.block_until_ready((logits, encodings, q_loss, perplexity))

    assert logits.shape == (B, NSENT, T_TGT, VOCAB)
    assert encodings.shape == (B, NSENT, T_SRC + 1, CODEBOOK)
    assert bool(jnp.all(jnp.isfinite(logits)))
    assert bool(jnp.isfinite(q_loss)) and bool(jnp.isfinite(perplexity))
    print("KERNEL_OK")
</pallas_src>

<mosaic_0001>
module attributes {stable_mosaic.version = 11 : i64} {
  func.func @fused_forward_kernel(%arg0: memref<28x32xf32, #tpu.memory_space<vmem>>, %arg1: memref<32x32xf32, #tpu.memory_space<vmem>>, %arg2: memref<28x28xf32, #tpu.memory_space<vmem>>, %arg3: memref<32x32xf32, #tpu.memory_space<vmem>>, %arg4: memref<32x28xf32, #tpu.memory_space<vmem>>, %arg5: memref<32x32xf32, #tpu.memory_space<vmem>>, %arg6: memref<2x32x96xbf16, #tpu.memory_space<vmem>>, %arg7: memref<2x1x96xf32, #tpu.memory_space<vmem>>, %arg8: memref<2x32x32xbf16, #tpu.memory_space<vmem>>, %arg9: memref<2x1x32xf32, #tpu.memory_space<vmem>>, %arg10: memref<2x1x32xf32, #tpu.memory_space<vmem>>, %arg11: memref<2x1x32xf32, #tpu.memory_space<vmem>>, %arg12: memref<2x32x64xbf16, #tpu.memory_space<vmem>>, %arg13: memref<2x1x64xf32, #tpu.memory_space<vmem>>, %arg14: memref<2x64x32xbf16, #tpu.memory_space<vmem>>, %arg15: memref<2x1x32xf32, #tpu.memory_space<vmem>>, %arg16: memref<2x1x32xf32, #tpu.memory_space<vmem>>, %arg17: memref<2x1x32xf32, #tpu.memory_space<vmem>>, %arg18: memref<2x32x96xbf16, #tpu.memory_space<vmem>>, %arg19: memref<2x1x96xf32, #tpu.memory_space<vmem>>, %arg20: memref<2x32x32xbf16, #tpu.memory_space<vmem>>, %arg21: memref<2x1x32xf32, #tpu.memory_space<vmem>>, %arg22: memref<2x32x32xbf16, #tpu.memory_space<vmem>>, %arg23: memref<2x1x32xf32, #tpu.memory_space<vmem>>, %arg24: memref<2x32x64xbf16, #tpu.memory_space<vmem>>, %arg25: memref<2x1x64xf32, #tpu.memory_space<vmem>>, %arg26: memref<2x32x32xbf16, #tpu.memory_space<vmem>>, %arg27: memref<2x1x32xf32, #tpu.memory_space<vmem>>, %arg28: memref<2x1x32xf32, #tpu.memory_space<vmem>>, %arg29: memref<2x1x32xf32, #tpu.memory_space<vmem>>, %arg30: memref<2x1x32xf32, #tpu.memory_space<vmem>>, %arg31: memref<2x1x32xf32, #tpu.memory_space<vmem>>, %arg32: memref<2x1x32xf32, #tpu.memory_space<vmem>>, %arg33: memref<2x1x32xf32, #tpu.memory_space<vmem>>, %arg34: memref<2x32x64xbf16, #tpu.memory_space<vmem>>, %arg35: memref<2x1x64xf32, #tpu.memory_space<vmem>>, %arg36: memref<2x64x32xbf16, #tpu.memory_space<vmem>>, %arg37: memref<2x1x32xf32, #tpu.memory_space<vmem>>, %arg38: memref<1x32xf32, #tpu.memory_space<vmem>>, %arg39: memref<1x32xf32, #tpu.memory_space<vmem>>, %arg40: memref<32x128xbf16, #tpu.memory_space<vmem>>, %arg41: memref<1x128xf32, #tpu.memory_space<vmem>>, %arg42: memref<32x128xf32, #tpu.memory_space<vmem>>, %arg43: memref<28x32xf32, #tpu.memory_space<vmem>>, %arg44: memref<1x1xf32, #tpu.memory_space<vmem>>, %arg45: memref<1x1xf32, #tpu.memory_space<vmem>>) attributes {dimension_semantics = [], scalar_prefetch = 0 : i64, scratch_operands = 0 : i64, tpu.core_type = #tpu.core_type<tc>} {
    %c0 = arith.constant 0 : index
    %c0_0 = arith.constant 0 : index
    %0 = vector.load %arg0[%c0, %c0_0] : memref<28x32xf32, #tpu.memory_space<vmem>>, vector<28x32xf32>
    %c0_1 = arith.constant 0 : index
    %c0_2 = arith.constant 0 : index
    %1 = vector.load %arg2[%c0_1, %c0_2] : memref<28x28xf32, #tpu.memory_space<vmem>>, vector<28x28xf32>
    %c0_3 = arith.constant 0 : index
    %c0_4 = arith.constant 0 : index
    %c0_5 = arith.constant 0 : index
    %2 = vector.load %arg6[%c0_3, %c0_4, %c0_5] : memref<2x32x96xbf16, #tpu.memory_space<vmem>>, vector<1x32x96xbf16>
    %3 = vector.shape_cast %2 : vector<1x32x96xbf16> to vector<32x96xbf16>
    %4 = arith.truncf %0 : vector<28x32xf32> to vector<28x32xbf16>
    %cst = arith.constant dense<0.000000e+00> : vector<28x96xf32>
    %5 = tpu.matmul %4, %3, %cst {dimension_numbers = #tpu.dot_dimension_numbers<[1], [0], [0], [1], [0, 0, 1, 1], [], []>} : vector<28x32xbf16>, vector<32x96xbf16>, vector<28x96xf32> -> vector<28x96xf32>
    %c0_6 = arith.constant 0 : index
    %c0_7 = arith.constant 0 : index
    %c0_8 = arith.constant 0 : index
    %6 = vector.load %arg7[%c0_6, %c0_7, %c0_8] : memref<2x1x96xf32, #tpu.memory_space<vmem>>, vector<1x1x96xf32>
    %7 = vector.shape_cast %6 : vector<1x1x96xf32> to vector<1x96xf32>
    %8 = vector.broadcast %7 : vector<1x96xf32> to vector<28x96xf32>
    %9 = arith.addf %5, %8 : vector<28x96xf32>
    %10 = vector.extract_strided_slice %9 {offsets = [0, 0], sizes = [28, 32], strides = [1, 1]} : vector<28x96xf32> to vector<28x32xf32>
    %11 = vector.extract_strided_slice %9 {offsets = [0, 32], sizes = [28, 32], strides = [1, 1]} : vector<28x96xf32> to vector<28x32xf32>
    %12 = vector.extract_strided_slice %9 {offsets = [0, 64], sizes = [28, 32], strides = [1, 1]} : vector<28x96xf32> to vector<28x32xf32>
    %cst_9 = arith.constant 0.353553385 : f32
    %13 = vector.broadcast %cst_9 : f32 to vector<28x32xf32>
    %14 = arith.mulf %10, %13 : vector<28x32xf32>
    %15 = vector.extract_strided_slice %14 {offsets = [0, 0], sizes = [28, 8], strides = [1, 1]} : vector<28x32xf32> to vector<28x8xf32>
    %16 = vector.extract_strided_slice %11 {offsets = [0, 0], sizes = [28, 8], strides = [1, 1]} : vector<28x32xf32> to vector<28x8xf32>
    %17 = arith.truncf %15 : vector<28x8xf32> to vector<28x8xbf16>
    %18 = arith.truncf %16 : vector<28x8xf32> to vector<28x8xbf16>
    %cst_10 = arith.constant dense<0.000000e+00> : vector<28x28xf32>
    %19 = tpu.matmul %17, %18, %cst_10 {dimension_numbers = #tpu.dot_dimension_numbers<[1], [1], [0], [0], [0, 0, 1, 0], [], []>} : vector<28x8xbf16>, vector<28x8xbf16>, vector<28x28xf32> -> vector<28x28xf32>
    %20 = arith.addf %19, %1 : vector<28x28xf32>
    %cst_11 = arith.constant dense<0xFF800000> : vector<28xf32>
    %21 = vector.multi_reduction <maximumf>, %20, %cst_11 [1] : vector<28x28xf32> to vector<28xf32>
    %22 = vector.shape_cast %21 : vector<28xf32> to vector<28x1xf32>
    %23 = vector.broadcast %22 : vector<28x1xf32> to vector<28x28xf32>
    %24 = arith.subf %20, %23 : vector<28x28xf32>
    %25 = math.exp %24 : vector<28x28xf32>
    %cst_12 = arith.constant dense<0.000000e+00> : vector<28xf32>
    %26 = vector.multi_reduction <add>, %25, %cst_12 [1] : vector<28x28xf32> to vector<28xf32>
    %27 = vector.shape_cast %26 : vector<28xf32> to vector<28x1xf32>
    %28 = tpu.reciprocal %27 {approx = true} : vector<28x1xf32> -> vector<28x1xf32>
    %29 = vector.broadcast %28 : vector<28x1xf32> to vector<28x28xf32>
    %30 = arith.mulf %25, %29 : vector<28x28xf32>
    %31 = vector.extract_strided_slice %12 {offsets = [0, 0], sizes = [28, 8], strides = [1, 1]} : vector<28x32xf32> to vector<28x8xf32>
    %32 = arith.truncf %30 : vector<28x28xf32> to vector<28x28xbf16>
    %33 = arith.truncf %31 : vector<28x8xf32> to vector<28x8xbf16>
    %cst_13 = arith.constant dense<0.000000e+00> : vector<28x8xf32>
    %34 = tpu.matmul %32, %33, %cst_13 {dimension_numbers = #tpu.dot_dimension_numbers<[1], [0], [0], [1], [0, 0, 1, 1], [], []>} : vector<28x28xbf16>, vector<28x8xbf16>, vector<28x8xf32> -> vector<28x8xf32>
    %35 = vector.extract_strided_slice %14 {offsets = [0, 8], sizes = [28, 8], strides = [1, 1]} : vector<28x32xf32> to vector<28x8xf32>
    %36 = vector.extract_strided_slice %11 {offsets = [0, 8], sizes = [28, 8], strides = [1, 1]} : vector<28x32xf32> to vector<28x8xf32>
    %37 = arith.truncf %35 : vector<28x8xf32> to vector<28x8xbf16>
    %38 = arith.truncf %36 : vector<28x8xf32> to vector<28x8xbf16>
    %cst_14 = arith.constant dense<0.000000e+00> : vector<28x28xf32>
    %39 = tpu.matmul %37, %38, %cst_14 {dimension_numbers = #tpu.dot_dimension_numbers<[1], [1], [0], [0], [0, 0, 1, 0], [], []>} : vector<28x8xbf16>, vector<28x8xbf16>, vector<28x28xf32> -> vector<28x28xf32>
    %40 = arith.addf %39, %1 : vector<28x28xf32>
    %cst_15 = arith.constant dense<0xFF800000> : vector<28xf32>
    %41 = vector.multi_reduction <maximumf>, %40, %cst_15 [1] : vector<28x28xf32> to vector<28xf32>
    %42 = vector.shape_cast %41 : vector<28xf32> to vector<28x1xf32>
    %43 = vector.broadcast %42 : vector<28x1xf32> to vector<28x28xf32>
    %44 = arith.subf %40, %43 : vector<28x28xf32>
    %45 = math.exp %44 : vector<28x28xf32>
    %cst_16 = arith.constant dense<0.000000e+00> : vector<28xf32>
    %46 = vector.multi_reduction <add>, %45, %cst_16 [1] : vector<28x28xf32> to vector<28xf32>
    %47 = vector.shape_cast %46 : vector<28xf32> to vector<28x1xf32>
    %48 = tpu.reciprocal %47 {approx = true} : vector<28x1xf32> -> vector<28x1xf32>
    %49 = vector.broadcast %48 : vector<28x1xf32> to vector<28x28xf32>
    %50 = arith.mulf %45, %49 : vector<28x28xf32>
    %51 = vector.extract_strided_slice %12 {offsets = [0, 8], sizes = [28, 8], strides = [1, 1]} : vector<28x32xf32> to vector<28x8xf32>
    %52 = arith.truncf %50 : vector<28x28xf32> to vector<28x28xbf16>
    %53 = arith.truncf %51 : vector<28x8xf32> to vector<28x8xbf16>
    %cst_17 = arith.constant dense<0.000000e+00> : vector<28x8xf32>
    %54 = tpu.matmul %52, %53, %cst_17 {dimension_numbers = #tpu.dot_dimension_numbers<[1], [0], [0], [1], [0, 0, 1, 1], [], []>} : vector<28x28xbf16>, vector<28x8xbf16>, vector<28x8xf32> -> vector<28x8xf32>
    %55 = vector.extract_strided_slice %14 {offsets = [0, 16], sizes = [28, 8], strides = [1, 1]} : vector<28x32xf32> to vector<28x8xf32>
    %56 = vector.extract_strided_slice %11 {offsets = [0, 16], sizes = [28, 8], strides = [1, 1]} : vector<28x32xf32> to vector<28x8xf32>
    %57 = arith.truncf %55 : vector<28x8xf32> to vector<28x8xbf16>
    %58 = arith.truncf %56 : vector<28x8xf32> to vector<28x8xbf16>
    %cst_18 = arith.constant dense<0.000000e+00> : vector<28x28xf32>
    %59 = tpu.matmul %57, %58, %cst_18 {dimension_numbers = #tpu.dot_dimension_numbers<[1], [1], [0], [0], [0, 0, 1, 0], [], []>} : vector<28x8xbf16>, vector<28x8xbf16>, vector<28x28xf32> -> vector<28x28xf32>
    %60 = arith.addf %59, %1 : vector<28x28xf32>
    %cst_19 = arith.constant dense<0xFF800000> : vector<28xf32>
    %61 = vector.multi_reduction <maximumf>, %60, %cst_19 [1] : vector<28x28xf32> to vector<28xf32>
    %62 = vector.shape_cast %61 : vector<28xf32> to vector<28x1xf32>
    %63 = vector.broadcast %62 : vector<28x1xf32> to vector<28x28xf32>
    %64 = arith.subf %60, %63 : vector<28x28xf32>
    %65 = math.exp %64 : vector<28x28xf32>
    %cst_20 = arith.constant dense<0.000000e+00> : vector<28xf32>
    %66 = vector.multi_reduction <add>, %65, %cst_20 [1] : vector<28x28xf32> to vector<28xf32>
    %67 = vector.shape_cast %66 : vector<28xf32> to vector<28x1xf32>
    %68 = tpu.reciprocal %67 {approx = true} : vector<28x1xf32> -> vector<28x1xf32>
    %69 = vector.broadcast %68 : vector<28x1xf32> to vector<28x28xf32>
    %70 = arith.mulf %65, %69 : vector<28x28xf32>
    %71 = vector.extract_strided_slice %12 {offsets = [0, 16], sizes = [28, 8], strides = [1, 1]} : vector<28x32xf32> to vector<28x8xf32>
    %72 = arith.truncf %70 : vector<28x28xf32> to vector<28x28xbf16>
    %73 = arith.truncf %71 : vector<28x8xf32> to vector<28x8xbf16>
    %cst_21 = arith.constant dense<0.000000e+00> : vector<28x8xf32>
    %74 = tpu.matmul %72, %73, %cst_21 {dimension_numbers = #tpu.dot_dimension_numbers<[1], [0], [0], [1], [0, 0, 1, 1], [], []>} : vector<28x28xbf16>, vector<28x8xbf16>, vector<28x8xf32> -> vector<28x8xf32>
    %75 = vector.extract_strided_slice %14 {offsets = [0, 24], sizes = [28, 8], strides = [1, 1]} : vector<28x32xf32> to vector<28x8xf32>
    %76 = vector.extract_strided_slice %11 {offsets = [0, 24], sizes = [28, 8], strides = [1, 1]} : vector<28x32xf32> to vector<28x8xf32>
    %77 = arith.truncf %75 : vector<28x8xf32> to vector<28x8xbf16>
    %78 = arith.truncf %76 : vector<28x8xf32> to vector<28x8xbf16>
    %cst_22 = arith.constant dense<0.000000e+00> : vector<28x28xf32>
    %79 = tpu.matmul %77, %78, %cst_22 {dimension_numbers = #tpu.dot_dimension_numbers<[1], [1], [0], [0], [0, 0, 1, 0], [], []>} : vector<28x8xbf16>, vector<28x8xbf16>, vector<28x28xf32> -> vector<28x28xf32>
    %80 = arith.addf %79, %1 : vector<28x28xf32>
    %cst_23 = arith.constant dense<0xFF800000> : vector<28xf32>
    %81 = vector.multi_reduction <maximumf>, %80, %cst_23 [1] : vector<28x28xf32> to vector<28xf32>
    %82 = vector.shape_cast %81 : vector<28xf32> to vector<28x1xf32>
    %83 = vector.broadcast %82 : vector<28x1xf32> to vector<28x28xf32>
    %84 = arith.subf %80, %83 : vector<28x28xf32>
    %85 = math.exp %84 : vector<28x28xf32>
    %cst_24 = arith.constant dense<0.000000e+00> : vector<28xf32>
    %86 = vector.multi_reduction <add>, %85, %cst_24 [1] : vector<28x28xf32> to vector<28xf32>
    %87 = vector.shape_cast %86 : vector<28xf32> to vector<28x1xf32>
    %88 = tpu.reciprocal %87 {approx = true} : vector<28x1xf32> -> vector<28x1xf32>
    %89 = vector.broadcast %88 : vector<28x1xf32> to vector<28x28xf32>
    %90 = arith.mulf %85, %89 : vector<28x28xf32>
    %91 = vector.extract_strided_slice %12 {offsets = [0, 24], sizes = [28, 8], strides = [1, 1]} : vector<28x32xf32> to vector<28x8xf32>
    %92 = arith.truncf %90 : vector<28x28xf32> to vector<28x28xbf16>
    %93 = arith.truncf %91 : vector<28x8xf32> to vector<28x8xbf16>
    %cst_25 = arith.constant dense<0.000000e+00> : vector<28x8xf32>
    %94 = tpu.matmul %92, %93, %cst_25 {dimension_numbers = #tpu.dot_dimension_numbers<[1], [0], [0], [1], [0, 0, 1, 1], [], []>} : vector<28x28xbf16>, vector<28x8xbf16>, vector<28x8xf32> -> vector<28x8xf32>
    %95 = tpu.concatenate %34, %54, %74, %94 in 1 : vector<28x8xf32>, vector<28x8xf32>, vector<28x8xf32>, vector<28x8xf32> -> vector<28x32xf32>
    %c0_26 = arith.constant 0 : index
    %c0_27 = arith.constant 0 : index
    %c0_28 = arith.constant 0 : index
    %96 = vector.load %arg8[%c0_26, %c0_27, %c0_28] : memref<2x32x32xbf16, #tpu.memory_space<vmem>>, vector<1x32x32xbf16>
    %97 = vector.shape_cast %96 : vector<1x32x32xbf16> to vector<32x32xbf16>
    %98 = arith.truncf %95 : vector<28x32xf32> to vector<28x32xbf16>
    %cst_29 = arith.constant dense<0.000000e+00> : vector<28x32xf32>
    %99 = tpu.matmul %98, %97, %cst_29 {dimension_numbers = #tpu.dot_dimension_numbers<[1], [0], [0], [1], [0, 0, 1, 1], [], []>} : vector<28x32xbf16>, vector<32x32xbf16>, vector<28x32xf32> -> vector<28x32xf32>
    %c0_30 = arith.constant 0 : index
    %c0_31 = arith.constant 0 : index
    %c0_32 = arith.constant 0 : index
    %100 = vector.load %arg9[%c0_30, %c0_31, %c0_32] : memref<2x1x32xf32, #tpu.memory_space<vmem>>, vector<1x1x32xf32>
    %101 = vector.shape_cast %100 : vector<1x1x32xf32> to vector<1x32xf32>
    %102 = vector.broadcast %101 : vector<1x32xf32> to vector<28x32xf32>
    %103 = arith.addf %99, %102 : vector<28x32xf32>
    %104 = arith.addf %0, %103 : vector<28x32xf32>
    %c0_33 = arith.constant 0 : index
    %c0_34 = arith.constant 0 : index
    %c0_35 = arith.constant 0 : index
    %105 = vector.load %arg10[%c0_33, %c0_34, %c0_35] : memref<2x1x32xf32, #tpu.memory_space<vmem>>, vector<1x1x32xf32>
    %106 = vector.shape_cast %105 : vector<1x1x32xf32> to vector<1x32xf32>
    %c0_36 = arith.constant 0 : index
    %c0_37 = arith.constant 0 : index
    %c0_38 = arith.constant 0 : index
    %107 = vector.load %arg11[%c0_36, %c0_37, %c0_38] : memref<2x1x32xf32, #tpu.memory_space<vmem>>, vector<1x1x32xf32>
    %108 = vector.shape_cast %107 : vector<1x1x32xf32> to vector<1x32xf32>
    %cst_39 = arith.constant dense<0.000000e+00> : vector<28xf32>
    %109 = vector.multi_reduction <add>, %104, %cst_39 [1] : vector<28x32xf32> to vector<28xf32>
    %110 = vector.shape_cast %109 : vector<28xf32> to vector<28x1xf32>
    %cst_40 = arith.constant 3.200000e+01 : f32
    %111 = vector.broadcast %cst_40 : f32 to vector<28x1xf32>
    %112 = arith.divf %110, %111 : vector<28x1xf32>
    %113 = vector.broadcast %112 : vector<28x1xf32> to vector<28x32xf32>
    %114 = arith.subf %104, %113 : vector<28x32xf32>
    %115 = arith.mulf %114, %114 : vector<28x32xf32>
    %cst_41 = arith.constant dense<0.000000e+00> : vector<28xf32>
    %116 = vector.multi_reduction <add>, %115, %cst_41 [1] : vector<28x32xf32> to vector<28xf32>
    %117 = vector.shape_cast %116 : vector<28xf32> to vector<28x1xf32>
    %cst_42 = arith.constant 3.200000e+01 : f32
    %118 = vector.broadcast %cst_42 : f32 to vector<28x1xf32>
    %119 = arith.divf %117, %118 : vector<28x1xf32>
    %cst_43 = arith.constant 9.99999974E-6 : f32
    %120 = vector.broadcast %cst_43 : f32 to vector<28x1xf32>
    %121 = arith.addf %119, %120 : vector<28x1xf32>
    %122 = math.rsqrt %121 : vector<28x1xf32>
    %123 = vector.broadcast %122 : vector<28x1xf32> to vector<28x32xf32>
    %124 = arith.mulf %114, %123 : vector<28x32xf32>
    %125 = vector.broadcast %106 : vector<1x32xf32> to vector<28x32xf32>
    %126 = arith.mulf %124, %125 : vector<28x32xf32>
    %127 = vector.broadcast %108 : vector<1x32xf32> to vector<28x32xf32>
    %128 = arith.addf %126, %127 : vector<28x32xf32>
    %c0_44 = arith.constant 0 : index
    %c0_45 = arith.constant 0 : index
    %c0_46 = arith.constant 0 : index
    %129 = vector.load %arg12[%c0_44, %c0_45, %c0_46] : memref<2x32x64xbf16, #tpu.memory_space<vmem>>, vector<1x32x64xbf16>
    %130 = vector.shape_cast %129 : vector<1x32x64xbf16> to vector<32x64xbf16>
    %131 = arith.truncf %128 : vector<28x32xf32> to vector<28x32xbf16>
    %cst_47 = arith.constant dense<0.000000e+00> : vector<28x64xf32>
    %132 = tpu.matmul %131, %130, %cst_47 {dimension_numbers = #tpu.dot_dimension_numbers<[1], [0], [0], [1], [0, 0, 1, 1], [], []>} : vector<28x32xbf16>, vector<32x64xbf16>, vector<28x64xf32> -> vector<28x64xf32>
    %c0_48 = arith.constant 0 : index
    %c0_49 = arith.constant 0 : index
    %c0_50 = arith.constant 0 : index
    %133 = vector.load %arg13[%c0_48, %c0_49, %c0_50] : memref<2x1x64xf32, #tpu.memory_space<vmem>>, vector<1x1x64xf32>
    %134 = vector.shape_cast %133 : vector<1x1x64xf32> to vector<1x64xf32>
    %135 = vector.broadcast %134 : vector<1x64xf32> to vector<28x64xf32>
    %136 = arith.addf %132, %135 : vector<28x64xf32>
    %cst_51 = arith.constant 0.000000e+00 : f32
    %137 = vector.broadcast %cst_51 : f32 to vector<28x64xf32>
    %138 = arith.maximumf %136, %137 : vector<28x64xf32>
    %c0_52 = arith.constant 0 : index
    %c0_53 = arith.constant 0 : index
    %c0_54 = arith.constant 0 : index
    %139 = vector.load %arg14[%c0_52, %c0_53, %c0_54] : memref<2x64x32xbf16, #tpu.memory_space<vmem>>, vector<1x64x32xbf16>
    %140 = vector.shape_cast %139 : vector<1x64x32xbf16> to vector<64x32xbf16>
    %141 = arith.truncf %138 : vector<28x64xf32> to vector<28x64xbf16>
    %cst_55 = arith.constant dense<0.000000e+00> : vector<28x32xf32>
    %142 = tpu.matmul %141, %140, %cst_55 {dimension_numbers = #tpu.dot_dimension_numbers<[1], [0], [0], [1], [0, 0, 1, 1], [], []>} : vector<28x64xbf16>, vector<64x32xbf16>, vector<28x32xf32> -> vector<28x32xf32>
    %c0_56 = arith.constant 0 : index
    %c0_57 = arith.constant 0 : index
    %c0_58 = arith.constant 0 : index
    %143 = vector.load %arg15[%c0_56, %c0_57, %c0_58] : memref<2x1x32xf32, #tpu.memory_space<vmem>>, vector<1x1x32xf32>
    %144 = vector.shape_cast %143 : vector<1x1x32xf32> to vector<1x32xf32>
    %145 = vector.broadcast %144 : vector<1x32xf32> to vector<28x32xf32>
    %146 = arith.addf %142, %145 : vector<28x32xf32>
    %147 = arith.addf %128, %146 : vector<28x32xf32>
    %c0_59 = arith.constant 0 : index
    %c0_60 = arith.constant 0 : index
    %c0_61 = arith.constant 0 : index
    %148 = vector.load %arg16[%c0_59, %c0_60, %c0_61] : memref<2x1x32xf32, #tpu.memory_space<vmem>>, vector<1x1x32xf32>
    %149 = vector.shape_cast %148 : vector<1x1x32xf32> to vector<1x32xf32>
    %c0_62 = arith.constant 0 : index
    %c0_63 = arith.constant 0 : index
    %c0_64 = arith.constant 0 : index
    %150 = vector.load %arg17[%c0_62, %c0_63, %c0_64] : memref<2x1x32xf32, #tpu.memory_space<vmem>>, vector<1x1x32xf32>
    %151 = vector.shape_cast %150 : vector<1x1x32xf32> to vector<1x32xf32>
    %cst_65 = arith.constant dense<0.000000e+00> : vector<28xf32>
    %152 = vector.multi_reduction <add>, %147, %cst_65 [1] : vector<28x32xf32> to vector<28xf32>
    %153 = vector.shape_cast %152 : vector<28xf32> to vector<28x1xf32>
    %cst_66 = arith.constant 3.200000e+01 : f32
    %154 = vector.broadcast %cst_66 : f32 to vector<28x1xf32>
    %155 = arith.divf %153, %154 : vector<28x1xf32>
    %156 = vector.broadcast %155 : vector<28x1xf32> to vector<28x32xf32>
    %157 = arith.subf %147, %156 : vector<28x32xf32>
    %158 = arith.mulf %157, %157 : vector<28x32xf32>
    %cst_67 = arith.constant dense<0.000000e+00> : vector<28xf32>
    %159 = vector.multi_reduction <add>, %158, %cst_67 [1] : vector<28x32xf32> to vector<28xf32>
    %160 = vector.shape_cast %159 : vector<28xf32> to vector<28x1xf32>
    %cst_68 = arith.constant 3.200000e+01 : f32
    %161 = vector.broadcast %cst_68 : f32 to vector<28x1xf32>
    %162 = arith.divf %160, %161 : vector<28x1xf32>
    %cst_69 = arith.constant 9.99999974E-6 : f32
    %163 = vector.broadcast %cst_69 : f32 to vector<28x1xf32>
    %164 = arith.addf %162, %163 : vector<28x1xf32>
    %165 = math.rsqrt %164 : vector<28x1xf32>
    %166 = vector.broadcast %165 : vector<28x1xf32> to vector<28x32xf32>
    %167 = arith.mulf %157, %166 : vector<28x32xf32>
    %168 = vector.broadcast %149 : vector<1x32xf32> to vector<28x32xf32>
    %169 = arith.mulf %167, %168 : vector<28x32xf32>
    %170 = vector.broadcast %151 : vector<1x32xf32> to vector<28x32xf32>
    %171 = arith.addf %169, %170 : vector<28x32xf32>
    %c1 = arith.constant 1 : index
    %c0_70 = arith.constant 0 : index
    %c0_71 = arith.constant 0 : index
    %172 = vector.load %arg6[%c1, %c0_70, %c0_71] : memref<2x32x96xbf16, #tpu.memory_space<vmem>>, vector<1x32x96xbf16>
    %173 = vector.shape_cast %172 : vector<1x32x96xbf16> to vector<32x96xbf16>
    %174 = arith.truncf %171 : vector<28x32xf32> to vector<28x32xbf16>
    %cst_72 = arith.constant dense<0.000000e+00> : vector<28x96xf32>
    %175 = tpu.matmul %174, %173, %cst_72 {dimension_numbers = #tpu.dot_dimension_numbers<[1], [0], [0], [1], [0, 0, 1, 1], [], []>} : vector<28x32xbf16>, vector<32x96xbf16>, vector<28x96xf32> -> vector<28x96xf32>
    %c1_73 = arith.constant 1 : index
    %c0_74 = arith.constant 0 : index
    %c0_75 = arith.constant 0 : index
    %176 = vector.load %arg7[%c1_73, %c0_74, %c0_75] : memref<2x1x96xf32, #tpu.memory_space<vmem>>, vector<1x1x96xf32>
    %177 = vector.shape_cast %176 : vector<1x1x96xf32> to vector<1x96xf32>
    %178 = vector.broadcast %177 : vector<1x96xf32> to vector<28x96xf32>
    %179 = arith.addf %175, %178 : vector<28x96xf32>
    %180 = vector.extract_strided_slice %179 {offsets = [0, 0], sizes = [28, 32], strides = [1, 1]} : vector<28x96xf32> to vector<28x32xf32>
    %181 = vector.extract_strided_slice %179 {offsets = [0, 32], sizes = [28, 32], strides = [1, 1]} : vector<28x96xf32> to vector<28x32xf32>
    %182 = vector.extract_strided_slice %179 {offsets = [0, 64], sizes = [28, 32], strides = [1, 1]} : vector<28x96xf32> to vector<28x32xf32>
    %cst_76 = arith.constant 0.353553385 : f32
    %183 = vector.broadcast %cst_76 : f32 to vector<28x32xf32>
    %184 = arith.mulf %180, %183 : vector<28x32xf32>
    %185 = vector.extract_strided_slice %184 {offsets = [0, 0], sizes = [28, 8], strides = [1, 1]} : vector<28x32xf32> to vector<28x8xf32>
    %186 = vector.extract_strided_slice %181 {offsets = [0, 0], sizes = [28, 8], strides = [1, 1]} : vector<28x32xf32> to vector<28x8xf32>
    %187 = arith.truncf %185 : vector<28x8xf32> to vector<28x8xbf16>
    %188 = arith.truncf %186 : vector<28x8xf32> to vector<28x8xbf16>
    %cst_77 = arith.constant dense<0.000000e+00> : vector<28x28xf32>
    %189 = tpu.matmul %187, %188, %cst_77 {dimension_numbers = #tpu.dot_dimension_numbers<[1], [1], [0], [0], [0, 0, 1, 0], [], []>} : vector<28x8xbf16>, vector<28x8xbf16>, vector<28x28xf32> -> vector<28x28xf32>
    %190 = arith.addf %189, %1 : vector<28x28xf32>
    %cst_78 = arith.constant dense<0xFF800000> : vector<28xf32>
    %191 = vector.multi_reduction <maximumf>, %190, %cst_78 [1] : vector<28x28xf32> to vector<28xf32>
    %192 = vector.shape_cast %191 : vector<28xf32> to vector<28x1xf32>
    %193 = vector.broadcast %192 : vector<28x1xf32> to vector<28x28xf32>
    %194 = arith.subf %190, %193 : vector<28x28xf32>
    %195 = math.exp %194 : vector<28x28xf32>
    %cst_79 = arith.constant dense<0.000000e+00> : vector<28xf32>
    %196 = vector.multi_reduction <add>, %195, %cst_79 [1] : vector<28x28xf32> to vector<28xf32>
    %197 = vector.shape_cast %196 : vector<28xf32> to vector<28x1xf32>
    %198 = tpu.reciprocal %197 {approx = true} : vector<28x1xf32> -> vector<28x1xf32>
    %199 = vector.broadcast %198 : vector<28x1xf32> to vector<28x28xf32>
    %200 = arith.mulf %195, %199 : vector<28x28xf32>
    %201 = vector.extract_strided_slice %182 {offsets = [0, 0], sizes = [28, 8], strides = [1, 1]} : vector<28x32xf32> to vector<28x8xf32>
    %202 = arith.truncf %200 : vector<28x28xf32> to vector<28x28xbf16>
    %203 = arith.truncf %201 : vector<28x8xf32> to vector<28x8xbf16>
    %cst_80 = arith.constant dense<0.000000e+00> : vector<28x8xf32>
    %204 = tpu.matmul %202, %203, %cst_80 {dimension_numbers = #tpu.dot_dimension_numbers<[1], [0], [0], [1], [0, 0, 1, 1], [], []>} : vector<28x28xbf16>, vector<28x8xbf16>, vector<28x8xf32> -> vector<28x8xf32>
    %205 = vector.extract_strided_slice %184 {offsets = [0, 8], sizes = [28, 8], strides = [1, 1]} : vector<28x32xf32> to vector<28x8xf32>
    %206 = vector.extract_strided_slice %181 {offsets = [0, 8], sizes = [28, 8], strides = [1, 1]} : vector<28x32xf32> to vector<28x8xf32>
    %207 = arith.truncf %205 : vector<28x8xf32> to vector<28x8xbf16>
    %208 = arith.truncf %206 : vector<28x8xf32> to vector<28x8xbf16>
    %cst_81 = arith.constant dense<0.000000e+00> : vector<28x28xf32>
    %209 = tpu.matmul %207, %208, %cst_81 {dimension_numbers = #tpu.dot_dimension_numbers<[1], [1], [0], [0], [0, 0, 1, 0], [], []>} : vector<28x8xbf16>, vector<28x8xbf16>, vector<28x28xf32> -> vector<28x28xf32>
    %210 = arith.addf %209, %1 : vector<28x28xf32>
    %cst_82 = arith.constant dense<0xFF800000> : vector<28xf32>
    %211 = vector.multi_reduction <maximumf>, %210, %cst_82 [1] : vector<28x28xf32> to vector<28xf32>
    %212 = vector.shape_cast %211 : vector<28xf32> to vector<28x1xf32>
    %213 = vector.broadcast %212 : vector<28x1xf32> to vector<28x28xf32>
    %214 = arith.subf %210, %213 : vector<28x28xf32>
    %215 = math.exp %214 : vector<28x28xf32>
    %cst_83 = arith.constant dense<0.000000e+00> : vector<28xf32>
    %216 = vector.multi_reduction <add>, %215, %cst_83 [1] : vector<28x28xf32> to vector<28xf32>
    %217 = vector.shape_cast %216 : vector<28xf32> to vector<28x1xf32>
    %218 = tpu.reciprocal %217 {approx = true} : vector<28x1xf32> -> vector<28x1xf32>
    %219 = vector.broadcast %218 : vector<28x1xf32> to vector<28x28xf32>
    %220 = arith.mulf %215, %219 : vector<28x28xf32>
    %221 = vector.extract_strided_slice %182 {offsets = [0, 8], sizes = [28, 8], strides = [1, 1]} : vector<28x32xf32> to vector<28x8xf32>
    %222 = arith.truncf %220 : vector<28x28xf32> to vector<28x28xbf16>
    %223 = arith.truncf %221 : vector<28x8xf32> to vector<28x8xbf16>
    %cst_84 = arith.constant dense<0.000000e+00> : vector<28x8xf32>
    %224 = tpu.matmul %222, %223, %cst_84 {dimension_numbers = #tpu.dot_dimension_numbers<[1], [0], [0], [1], [0, 0, 1, 1], [], []>} : vector<28x28xbf16>, vector<28x8xbf16>, vector<28x8xf32> -> vector<28x8xf32>
    %225 = vector.extract_strided_slice %184 {offsets = [0, 16], sizes = [28, 8], strides = [1, 1]} : vector<28x32xf32> to vector<28x8xf32>
    %226 = vector.extract_strided_slice %181 {offsets = [0, 16], sizes = [28, 8], strides = [1, 1]} : vector<28x32xf32> to vector<28x8xf32>
    %227 = arith.truncf %225 : vector<28x8xf32> to vector<28x8xbf16>
    %228 = arith.truncf %226 : vector<28x8xf32> to vector<28x8xbf16>
    %cst_85 = arith.constant dense<0.000000e+00> : vector<28x28xf32>
    %229 = tpu.matmul %227, %228, %cst_85 {dimension_numbers = #tpu.dot_dimension_numbers<[1], [1], [0], [0], [0, 0, 1, 0], [], []>} : vector<28x8xbf16>, vector<28x8xbf16>, vector<28x28xf32> -> vector<28x28xf32>
    %230 = arith.addf %229, %1 : vector<28x28xf32>
    %cst_86 = arith.constant dense<0xFF800000> : vector<28xf32>
    %231 = vector.multi_reduction <maximumf>, %230, %cst_86 [1] : vector<28x28xf32> to vector<28xf32>
    %232 = vector.shape_cast %231 : vector<28xf32> to vector<28x1xf32>
    %233 = vector.broadcast %232 : vector<28x1xf32> to vector<28x28xf32>
    %234 = arith.subf %230, %233 : vector<28x28xf32>
    %235 = math.exp %234 : vector<28x28xf32>
    %cst_87 = arith.constant dense<0.000000e+00> : vector<28xf32>
    %236 = vector.multi_reduction <add>, %235, %cst_87 [1] : vector<28x28xf32> to vector<28xf32>
    %237 = vector.shape_cast %236 : vector<28xf32> to vector<28x1xf32>
    %238 = tpu.reciprocal %237 {approx = true} : vector<28x1xf32> -> vector<28x1xf32>
    %239 = vector.broadcast %238 : vector<28x1xf32> to vector<28x28xf32>
    %240 = arith.mulf %235, %239 : vector<28x28xf32>
    %241 = vector.extract_strided_slice %182 {offsets = [0, 16], sizes = [28, 8], strides = [1, 1]} : vector<28x32xf32> to vector<28x8xf32>
    %242 = arith.truncf %240 : vector<28x28xf32> to vector<28x28xbf16>
    %243 = arith.truncf %241 : vector<28x8xf32> to vector<28x8xbf16>
    %cst_88 = arith.constant dense<0.000000e+00> : vector<28x8xf32>
    %244 = tpu.matmul %242, %243, %cst_88 {dimension_numbers = #tpu.dot_dimension_numbers<[1], [0], [0], [1], [0, 0, 1, 1], [], []>} : vector<28x28xbf16>, vector<28x8xbf16>, vector<28x8xf32> -> vector<28x8xf32>
    %245 = vector.extract_strided_slice %184 {offsets = [0, 24], sizes = [28, 8], strides = [1, 1]} : vector<28x32xf32> to vector<28x8xf32>
    %246 = vector.extract_strided_slice %181 {offsets = [0, 24], sizes = [28, 8], strides = [1, 1]} : vector<28x32xf32> to vector<28x8xf32>
    %247 = arith.truncf %245 : vector<28x8xf32> to vector<28x8xbf16>
    %248 = arith.truncf %246 : vector<28x8xf32> to vector<28x8xbf16>
    %cst_89 = arith.constant dense<0.000000e+00> : vector<28x28xf32>
    %249 = tpu.matmul %247, %248, %cst_89 {dimension_numbers = #tpu.dot_dimension_numbers<[1], [1], [0], [0], [0, 0, 1, 0], [], []>} : vector<28x8xbf16>, vector<28x8xbf16>, vector<28x28xf32> -> vector<28x28xf32>
    %250 = arith.addf %249, %1 : vector<28x28xf32>
    %cst_90 = arith.constant dense<0xFF800000> : vector<28xf32>
    %251 = vector.multi_reduction <maximumf>, %250, %cst_90 [1] : vector<28x28xf32> to vector<28xf32>
    %252 = vector.shape_cast %251 : vector<28xf32> to vector<28x1xf32>
    %253 = vector.broadcast %252 : vector<28x1xf32> to vector<28x28xf32>
    %254 = arith.subf %250, %253 : vector<28x28xf32>
    %255 = math.exp %254 : vector<28x28xf32>
    %cst_91 = arith.constant dense<0.000000e+00> : vector<28xf32>
    %256 = vector.multi_reduction <add>, %255, %cst_91 [1] : vector<28x28xf32> to vector<28xf32>
    %257 = vector.shape_cast %256 : vector<28xf32> to vector<28x1xf32>
    %258 = tpu.reciprocal %257 {approx = true} : vector<28x1xf32> -> vector<28x1xf32>
    %259 = vector.broadcast %258 : vector<28x1xf32> to vector<28x28xf32>
    %260 = arith.mulf %255, %259 : vector<28x28xf32>
    %261 = vector.extract_strided_slice %182 {offsets = [0, 24], sizes = [28, 8], strides = [1, 1]} : vector<28x32xf32> to vector<28x8xf32>
    %262 = arith.truncf %260 : vector<28x28xf32> to vector<28x28xbf16>
    %263 = arith.truncf %261 : vector<28x8xf32> to vector<28x8xbf16>
    %cst_92 = arith.constant dense<0.000000e+00> : vector<28x8xf32>
    %264 = tpu.matmul %262, %263, %cst_92 {dimension_numbers = #tpu.dot_dimension_numbers<[1], [0], [0], [1], [0, 0, 1, 1], [], []>} : vector<28x28xbf16>, vector<28x8xbf16>, vector<28x8xf32> -> vector<28x8xf32>
    %265 = tpu.concatenate %204, %224, %244, %264 in 1 : vector<28x8xf32>, vector<28x8xf32>, vector<28x8xf32>, vector<28x8xf32> -> vector<28x32xf32>
    %c1_93 = arith.constant 1 : index
    %c0_94 = arith.constant 0 : index
    %c0_95 = arith.constant 0 : index
    %266 = vector.load %arg8[%c1_93, %c0_94, %c0_95] : memref<2x32x32xbf16, #tpu.memory_space<vmem>>, vector<1x32x32xbf16>
    %267 = vector.shape_cast %266 : vector<1x32x32xbf16> to vector<32x32xbf16>
    %268 = arith.truncf %265 : vector<28x32xf32> to vector<28x32xbf16>
    %cst_96 = arith.constant dense<0.000000e+00> : vector<28x32xf32>
    %269 = tpu.matmul %268, %267, %cst_96 {dimension_numbers = #tpu.dot_dimension_numbers<[1], [0], [0], [1], [0, 0, 1, 1], [], []>} : vector<28x32xbf16>, vector<32x32xbf16>, vector<28x32xf32> -> vector<28x32xf32>
    %c1_97 = arith.constant 1 : index
    %c0_98 = arith.constant 0 : index
    %c0_99 = arith.constant 0 : index
    %270 = vector.load %arg9[%c1_97, %c0_98, %c0_99] : memref<2x1x32xf32, #tpu.memory_space<vmem>>, vector<1x1x32xf32>
    %271 = vector.shape_cast %270 : vector<1x1x32xf32> to vector<1x32xf32>
    %272 = vector.broadcast %271 : vector<1x32xf32> to vector<28x32xf32>
    %273 = arith.addf %269, %272 : vector<28x32xf32>
    %274 = arith.addf %171, %273 : vector<28x32xf32>
    %c1_100 = arith.constant 1 : index
    %c0_101 = arith.constant 0 : index
    %c0_102 = arith.constant 0 : index
    %275 = vector.load %arg10[%c1_100, %c0_101, %c0_102] : memref<2x1x32xf32, #tpu.memory_space<vmem>>, vector<1x1x32xf32>
    %276 = vector.shape_cast %275 : vector<1x1x32xf32> to vector<1x32xf32>
    %c1_103 = arith.constant 1 : index
    %c0_104 = arith.constant 0 : index
    %c0_105 = arith.constant 0 : index
    %277 = vector.load %arg11[%c1_103, %c0_104, %c0_105] : memref<2x1x32xf32, #tpu.memory_space<vmem>>, vector<1x1x32xf32>
    %278 = vector.shape_cast %277 : vector<1x1x32xf32> to vector<1x32xf32>
    %cst_106 = arith.constant dense<0.000000e+00> : vector<28xf32>
    %279 = vector.multi_reduction <add>, %274, %cst_106 [1] : vector<28x32xf32> to vector<28xf32>
    %280 = vector.shape_cast %279 : vector<28xf32> to vector<28x1xf32>
    %cst_107 = arith.constant 3.200000e+01 : f32
    %281 = vector.broadcast %cst_107 : f32 to vector<28x1xf32>
    %282 = arith.divf %280, %281 : vector<28x1xf32>
    %283 = vector.broadcast %282 : vector<28x1xf32> to vector<28x32xf32>
    %284 = arith.subf %274, %283 : vector<28x32xf32>
    %285 = arith.mulf %284, %284 : vector<28x32xf32>
    %cst_108 = arith.constant dense<0.000000e+00> : vector<28xf32>
    %286 = vector.multi_reduction <add>, %285, %cst_108 [1] : vector<28x32xf32> to vector<28xf32>
    %287 = vector.shape_cast %286 : vector<28xf32> to vector<28x1xf32>
    %cst_109 = arith.constant 3.200000e+01 : f32
    %288 = vector.broadcast %cst_109 : f32 to vector<28x1xf32>
    %289 = arith.divf %287, %288 : vector<28x1xf32>
    %cst_110 = arith.constant 9.99999974E-6 : f32
    %290 = vector.broadcast %cst_110 : f32 to vector<28x1xf32>
    %291 = arith.addf %289, %290 : vector<28x1xf32>
    %292 = math.rsqrt %291 : vector<28x1xf32>
    %293 = vector.broadcast %292 : vector<28x1xf32> to vector<28x32xf32>
    %294 = arith.mulf %284, %293 : vector<28x32xf32>
    %295 = vector.broadcast %276 : vector<1x32xf32> to vector<28x32xf32>
    %296 = arith.mulf %294, %295 : vector<28x32xf32>
    %297 = vector.broadcast %278 : vector<1x32xf32> to vector<28x32xf32>
    %298 = arith.addf %296, %297 : vector<28x32xf32>
    %c1_111 = arith.constant 1 : index
    %c0_112 = arith.constant 0 : index
    %c0_113 = arith.constant 0 : index
    %299 = vector.load %arg12[%c1_111, %c0_112, %c0_113] : memref<2x32x64xbf16, #tpu.memory_space<vmem>>, vector<1x32x64xbf16>
    %300 = vector.shape_cast %299 : vector<1x32x64xbf16> to vector<32x64xbf16>
    %301 = arith.truncf %298 : vector<28x32xf32> to vector<28x32xbf16>
    %cst_114 = arith.constant dense<0.000000e+00> : vector<28x64xf32>
    %302 = tpu.matmul %301, %300, %cst_114 {dimension_numbers = #tpu.dot_dimension_numbers<[1], [0], [0], [1], [0, 0, 1, 1], [], []>} : vector<28x32xbf16>, vector<32x64xbf16>, vector<28x64xf32> -> vector<28x64xf32>
    %c1_115 = arith.constant 1 : index
    %c0_116 = arith.constant 0 : index
    %c0_117 = arith.constant 0 : index
    %303 = vector.load %arg13[%c1_115, %c0_116, %c0_117] : memref<2x1x64xf32, #tpu.memory_space<vmem>>, vector<1x1x64xf32>
    %304 = vector.shape_cast %303 : vector<1x1x64xf32> to vector<1x64xf32>
    %305 = vector.broadcast %304 : vector<1x64xf32> to vector<28x64xf32>
    %306 = arith.addf %302, %305 : vector<28x64xf32>
    %cst_118 = arith.constant 0.000000e+00 : f32
    %307 = vector.broadcast %cst_118 : f32 to vector<28x64xf32>
    %308 = arith.maximumf %306, %307 : vector<28x64xf32>
    %c1_119 = arith.constant 1 : index
    %c0_120 = arith.constant 0 : index
    %c0_121 = arith.constant 0 : index
    %309 = vector.load %arg14[%c1_119, %c0_120, %c0_121] : memref<2x64x32xbf16, #tpu.memory_space<vmem>>, vector<1x64x32xbf16>
    %310 = vector.shape_cast %309 : vector<1x64x32xbf16> to vector<64x32xbf16>
    %311 = arith.truncf %308 : vector<28x64xf32> to vector<28x64xbf16>
    %cst_122 = arith.constant dense<0.000000e+00> : vector<28x32xf32>
    %312 = tpu.matmul %311, %310, %cst_122 {dimension_numbers = #tpu.dot_dimension_numbers<[1], [0], [0], [1], [0, 0, 1, 1], [], []>} : vector<28x64xbf16>, vector<64x32xbf16>, vector<28x32xf32> -> vector<28x32xf32>
    %c1_123 = arith.constant 1 : index
    %c0_124 = arith.constant 0 : index
    %c0_125 = arith.constant 0 : index
    %313 = vector.load %arg15[%c1_123, %c0_124, %c0_125] : memref<2x1x32xf32, #tpu.memory_space<vmem>>, vector<1x1x32xf32>
    %314 = vector.shape_cast %313 : vector<1x1x32xf32> to vector<1x32xf32>
    %315 = vector.broadcast %314 : vector<1x32xf32> to vector<28x32xf32>
    %316 = arith.addf %312, %315 : vector<28x32xf32>
    %317 = arith.addf %298, %316 : vector<28x32xf32>
    %c1_126 = arith.constant 1 : index
    %c0_127 = arith.constant 0 : index
    %c0_128 = arith.constant 0 : index
    %318 = vector.load %arg16[%c1_126, %c0_127, %c0_128] : memref<2x1x32xf32, #tpu.memory_space<vmem>>, vector<1x1x32xf32>
    %319 = vector.shape_cast %318 : vector<1x1x32xf32> to vector<1x32xf32>
    %c1_129 = arith.constant 1 : index
    %c0_130 = arith.constant 0 : index
    %c0_131 = arith.constant 0 : index
    %320 = vector.load %arg17[%c1_129, %c0_130, %c0_131] : memref<2x1x32xf32, #tpu.memory_space<vmem>>, vector<1x1x32xf32>
    %321 = vector.shape_cast %320 : vector<1x1x32xf32> to vector<1x32xf32>
    %cst_132 = arith.constant dense<0.000000e+00> : vector<28xf32>
    %322 = vector.multi_reduction <add>, %317, %cst_132 [1] : vector<28x32xf32> to vector<28xf32>
    %323 = vector.shape_cast %322 : vector<28xf32> to vector<28x1xf32>
    %cst_133 = arith.constant 3.200000e+01 : f32
    %324 = vector.broadcast %cst_133 : f32 to vector<28x1xf32>
    %325 = arith.divf %323, %324 : vector<28x1xf32>
    %326 = vector.broadcast %325 : vector<28x1xf32> to vector<28x32xf32>
    %327 = arith.subf %317, %326 : vector<28x32xf32>
    %328 = arith.mulf %327, %327 : vector<28x32xf32>
    %cst_134 = arith.constant dense<0.000000e+00> : vector<28xf32>
    %329 = vector.multi_reduction <add>, %328, %cst_134 [1] : vector<28x32xf32> to vector<28xf32>
    %330 = vector.shape_cast %329 : vector<28xf32> to vector<28x1xf32>
    %cst_135 = arith.constant 3.200000e+01 : f32
    %331 = vector.broadcast %cst_135 : f32 to vector<28x1xf32>
    %332 = arith.divf %330, %331 : vector<28x1xf32>
    %cst_136 = arith.constant 9.99999974E-6 : f32
    %333 = vector.broadcast %cst_136 : f32 to vector<28x1xf32>
    %334 = arith.addf %332, %333 : vector<28x1xf32>
    %335 = math.rsqrt %334 : vector<28x1xf32>
    %336 = vector.broadcast %335 : vector<28x1xf32> to vector<28x32xf32>
    %337 = arith.mulf %327, %336 : vector<28x32xf32>
    %338 = vector.broadcast %319 : vector<1x32xf32> to vector<28x32xf32>
    %339 = arith.mulf %337, %338 : vector<28x32xf32>
    %340 = vector.broadcast %321 : vector<1x32xf32> to vector<28x32xf32>
    %341 = arith.addf %339, %340 : vector<28x32xf32>
    %c0_137 = arith.constant 0 : index
    %c0_138 = arith.constant 0 : index
    %342 = vector.load %arg5[%c0_137, %c0_138] : memref<32x32xf32, #tpu.memory_space<vmem>>, vector<32x32xf32>
    %cst_139 = arith.constant dense<0.000000e+00> : vector<28x32xf32>
    %343 = tpu.matmul %341, %342, %cst_139 {dimension_numbers = #tpu.dot_dimension_numbers<[1], [1], [0], [0], [0, 0, 1, 0], [], []>} : vector<28x32xf32>, vector<32x32xf32>, vector<28x32xf32> -> vector<28x32xf32>
    %cst_140 = arith.constant 1.000000e+00 : f32
    %344 = vector.broadcast %cst_140 : f32 to vector<1x32xf32>
    %345 = arith.mulf %342, %342 : vector<32x32xf32>
    %cst_141 = arith.constant dense<0.000000e+00> : vector<1x32xf32>
    %346 = tpu.matmul %344, %345, %cst_141 {dimension_numbers = #tpu.dot_dimension_numbers<[1], [1], [0], [0], [0, 0, 1, 0], [], []>} : vector<1x32xf32>, vector<32x32xf32>, vector<1x32xf32> -> vector<1x32xf32>
    %347 = arith.mulf %341, %341 : vector<28x32xf32>
    %cst_142 = arith.constant dense<0.000000e+00> : vector<28xf32>
    %348 = vector.multi_reduction <add>, %347, %cst_142 [1] : vector<28x32xf32> to vector<28xf32>
    %349 = vector.shape_cast %348 : vector<28xf32> to vector<28x1xf32>
    %cst_143 = arith.constant 2.000000e+00 : f32
    %350 = vector.broadcast %cst_143 : f32 to vector<28x32xf32>
    %351 = arith.mulf %350, %343 : vector<28x32xf32>
    %352 = vector.broadcast %349 : vector<28x1xf32> to vector<28x32xf32>
    %353 = arith.subf %352, %351 : vector<28x32xf32>
    %354 = vector.broadcast %346 : vector<1x32xf32> to vector<28x32xf32>
    %355 = arith.addf %353, %354 : vector<28x32xf32>
    %cst_144 = arith.constant dense<0x7F800000> : vector<28xf32>
    %356 = vector.multi_reduction <minimumf>, %355, %cst_144 [1] : vector<28x32xf32> to vector<28xf32>
    %357 = vector.shape_cast %356 : vector<28xf32> to vector<28x1xf32>
    %358 = tpu.iota {dimensions = array<i32: 1>} : vector<28x32xi32>
    %359 = arith.sitofp %358 : vector<28x32xi32> to vector<28x32xf32>
    %360 = vector.broadcast %357 : vector<28x1xf32> to vector<28x32xf32>
    %361 = arith.cmpf ole, %355, %360 : vector<28x32xf32>
    %cst_145 = arith.constant 3.200000e+01 : f32
    %362 = vector.broadcast %cst_145 : f32 to vector<28x32xf32>
    %363 = arith.select %361, %359, %362 : vector<28x32xi1>, vector<28x32xf32>
    %cst_146 = arith.constant dense<0x7F800000> : vector<28xf32>
    %364 = vector.multi_reduction <minimumf>, %363, %cst_146 [1] : vector<28x32xf32> to vector<28xf32>
    %365 = vector.shape_cast %364 : vector<28xf32> to vector<28x1xf32>
    %366 = vector.broadcast %365 : vector<28x1xf32> to vector<28x32xf32>
    %367 = arith.cmpf oeq, %359, %366 : vector<28x32xf32>
    %368 = arith.extui %367 : vector<28x32xi1> to vector<28x32xi32>
    %369 = arith.sitofp %368 : vector<28x32xi32> to vector<28x32xf32>
    %cst_147 = arith.constant dense<0.000000e+00> : vector<28x32xf32>
    %370 = tpu.matmul %369, %342, %cst_147 {dimension_numbers = #tpu.dot_dimension_numbers<[1], [0], [0], [1], [0, 0, 1, 1], [], []>} : vector<28x32xf32>, vector<32x32xf32>, vector<28x32xf32> -> vector<28x32xf32>
    %c0_148 = arith.constant 0 : index
    %c0_149 = arith.constant 0 : index
    %371 = vector.load %arg43[%c0_148, %c0_149] : memref<28x32xf32, #tpu.memory_space<vmem>>, vector<28x32xf32>
    tpu.vector_store %arg43[%c0_148, %c0_149], %369 {strides = array<i32>} : memref<28x32xf32, #tpu.memory_space<vmem>>, vector<28x32xf32>,
    %372 = arith.subf %370, %341 : vector<28x32xf32>
    %373 = arith.mulf %372, %372 : vector<28x32xf32>
    %cst_150 = arith.constant dense<0.000000e+00> : vector<28xf32>
    %374 = vector.multi_reduction <add>, %373, %cst_150 [1] : vector<28x32xf32> to vector<28xf32>
    %375 = vector.shape_cast %374 : vector<28xf32> to vector<28x1xf32>
    %cst_151 = arith.constant dense<0.000000e+00> : vector<1xf32>
    %376 = vector.multi_reduction <add>, %375, %cst_151 [0] : vector<28x1xf32> to vector<1xf32>
    %377 = vector.shape_cast %376 : vector<1xf32> to vector<1x1xf32>
    %cst_152 = arith.constant 0.00111607148 : f32
    %378 = vector.broadcast %cst_152 : f32 to vector<1x1xf32>
    %379 = arith.mulf %377, %378 : vector<1x1xf32>
    %c0_153 = arith.constant 0 : index
    %c0_154 = arith.constant 0 : index
    %380 = vector.load %arg44[%c0_153, %c0_154] : memref<1x1xf32, #tpu.memory_space<vmem>>, vector<1x1xf32>
    tpu.vector_store %arg44[%c0_153, %c0_154], %379 {strides = array<i32>} : memref<1x1xf32, #tpu.memory_space<vmem>>, vector<1x1xf32>,
    %cst_155 = arith.constant dense<0.000000e+00> : vector<32xf32>
    %381 = vector.multi_reduction <add>, %369, %cst_155 [0] : vector<28x32xf32> to vector<32xf32>
    %382 = vector.shape_cast %381 : vector<32xf32> to vector<1x32xf32>
    %cst_156 = arith.constant 0.0357142873 : f32
    %383 = vector.broadcast %cst_156 : f32 to vector<1x32xf32>
    %384 = arith.mulf %382, %383 : vector<1x32xf32>
    %cst_157 = arith.constant 1.000000e-10 : f32
    %385 = vector.broadcast %cst_157 : f32 to vector<1x32xf32>
    %386 = arith.addf %384, %385 : vector<1x32xf32>
    %387 = math.log %386 : vector<1x32xf32>
    %388 = arith.mulf %384, %387 : vector<1x32xf32>
    %cst_158 = arith.constant dense<0.000000e+00> : vector<1xf32>
    %389 = vector.multi_reduction <add>, %388, %cst_158 [1] : vector<1x32xf32> to vector<1xf32>
    %390 = vector.shape_cast %389 : vector<1xf32> to vector<1x1xf32>
    %cst_159 = arith.constant 0.000000e+00 : f32
    %391 = vector.broadcast %cst_159 : f32 to vector<1x1xf32>
    %392 = arith.subf %391, %390 : vector<1x1xf32>
    %393 = math.exp %392 : vector<1x1xf32>
    %c0_160 = arith.constant 0 : index
    %c0_161 = arith.constant 0 : index
    %394 = vector.load %arg45[%c0_160, %c0_161] : memref<1x1xf32, #tpu.memory_space<vmem>>, vector<1x1xf32>
    tpu.vector_store %arg45[%c0_160, %c0_161], %393 {strides = array<i32>} : memref<1x1xf32, #tpu.memory_space<vmem>>, vector<1x1xf32>,
    %c0_162 = arith.constant 0 : index
    %c0_163 = arith.constant 0 : index
    %395 = vector.load %arg1[%c0_162, %c0_163] : memref<32x32xf32, #tpu.memory_space<vmem>>, vector<32x32xf32>
    %c0_164 = arith.constant 0 : index
    %c0_165 = arith.constant 0 : index
    %396 = vector.load %arg3[%c0_164, %c0_165] : memref<32x32xf32, #tpu.memory_space<vmem>>, vector<32x32xf32>
    %c0_166 = arith.constant 0 : index
    %c0_167 = arith.constant 0 : index
    %397 = vector.load %arg4[%c0_166, %c0_167] : memref<32x28xf32, #tpu.memory_space<vmem>>, vector<32x28xf32>
    %c0_168 = arith.constant 0 : index
    %c0_169 = arith.constant 0 : index
    %c0_170 = arith.constant 0 : index
    %398 = vector.load %arg18[%c0_168, %c0_169, %c0_170] : memref<2x32x96xbf16, #tpu.memory_space<vmem>>, vector<1x32x96xbf16>
    %399 = vector.shape_cast %398 : vector<1x32x96xbf16> to vector<32x96xbf16>
    %400 = arith.truncf %395 : vector<32x32xf32> to vector<32x32xbf16>
    %cst_171 = arith.constant dense<0.000000e+00> : vector<32x96xf32>
    %401 = tpu.matmul %400, %399, %cst_171 {dimension_numbers = #tpu.dot_dimension_numbers<[1], [0], [0], [1], [0, 0, 1, 1], [], []>} : vector<32x32xbf16>, vector<32x96xbf16>, vector<32x96xf32> -> vector<32x96xf32>
    %c0_172 = arith.constant 0 : index
    %c0_173 = arith.constant 0 : index
    %c0_174 = arith.constant 0 : index
    %402 = vector.load %arg19[%c0_172, %c0_173, %c0_174] : memref<2x1x96xf32, #tpu.memory_space<vmem>>, vector<1x1x96xf32>
    %403 = vector.shape_cast %402 : vector<1x1x96xf32> to vector<1x96xf32>
    %404 = vector.broadcast %403 : vector<1x96xf32> to vector<32x96xf32>
    %405 = arith.addf %401, %404 : vector<32x96xf32>
    %406 = vector.extract_strided_slice %405 {offsets = [0, 0], sizes = [32, 32], strides = [1, 1]} : vector<32x96xf32> to vector<32x32xf32>
    %407 = vector.extract_strided_slice %405 {offsets = [0, 32], sizes = [32, 32], strides = [1, 1]} : vector<32x96xf32> to vector<32x32xf32>
    %408 = vector.extract_strided_slice %405 {offsets = [0, 64], sizes = [32, 32], strides = [1, 1]} : vector<32x96xf32> to vector<32x32xf32>
    %cst_175 = arith.constant 0.353553385 : f32
    %409 = vector.broadcast %cst_175 : f32 to vector<32x32xf32>
    %410 = arith.mulf %406, %409 : vector<32x32xf32>
    %411 = vector.extract_strided_slice %410 {offsets = [0, 0], sizes = [32, 8], strides = [1, 1]} : vector<32x32xf32> to vector<32x8xf32>
    %412 = vector.extract_strided_slice %407 {offsets = [0, 0], sizes = [32, 8], strides = [1, 1]} : vector<32x32xf32> to vector<32x8xf32>
    %413 = arith.truncf %411 : vector<32x8xf32> to vector<32x8xbf16>
    %414 = arith.truncf %412 : vector<32x8xf32> to vector<32x8xbf16>
    %cst_176 = arith.constant dense<0.000000e+00> : vector<32x32xf32>
    %415 = tpu.matmul %413, %414, %cst_176 {dimension_numbers = #tpu.dot_dimension_numbers<[1], [1], [0], [0], [0, 0, 1, 0], [], []>} : vector<32x8xbf16>, vector<32x8xbf16>, vector<32x32xf32> -> vector<32x32xf32>
    %416 = arith.addf %415, %396 : vector<32x32xf32>
    %cst_177 = arith.constant dense<0xFF800000> : vector<32xf32>
    %417 = vector.multi_reduction <maximumf>, %416, %cst_177 [1] : vector<32x32xf32> to vector<32xf32>
    %418 = vector.shape_cast %417 : vector<32xf32> to vector<32x1xf32>
    %419 = vector.broadcast %418 : vector<32x1xf32> to vector<32x32xf32>
    %420 = arith.subf %416, %419 : vector<32x32xf32>
    %421 = math.exp %420 : vector<32x32xf32>
    %cst_178 = arith.constant dense<0.000000e+00> : vector<32xf32>
    %422 = vector.multi_reduction <add>, %421, %cst_178 [1] : vector<32x32xf32> to vector<32xf32>
    %423 = vector.shape_cast %422 : vector<32xf32> to vector<32x1xf32>
    %424 = tpu.reciprocal %423 {approx = true} : vector<32x1xf32> -> vector<32x1xf32>
    %425 = vector.broadcast %424 : vector<32x1xf32> to vector<32x32xf32>
    %426 = arith.mulf %421, %425 : vector<32x32xf32>
    %427 = vector.extract_strided_slice %408 {offsets = [0, 0], sizes = [32, 8], strides = [1, 1]} : vector<32x32xf32> to vector<32x8xf32>
    %428 = arith.truncf %426 : vector<32x32xf32> to vector<32x32xbf16>
    %429 = arith.truncf %427 : vector<32x8xf32> to vector<32x8xbf16>
    %cst_179 = arith.constant dense<0.000000e+00> : vector<32x8xf32>
    %430 = tpu.matmul %428, %429, %cst_179 {dimension_numbers = #tpu.dot_dimension_numbers<[1], [0], [0], [1], [0, 0, 1, 1], [], []>} : vector<32x32xbf16>, vector<32x8xbf16>, vector<32x8xf32> -> vector<32x8xf32>
    %431 = vector.extract_strided_slice %410 {offsets = [0, 8], sizes = [32, 8], strides = [1, 1]} : vector<32x32xf32> to vector<32x8xf32>
    %432 = vector.extract_strided_slice %407 {offsets = [0, 8], sizes = [32, 8], strides = [1, 1]} : vector<32x32xf32> to vector<32x8xf32>
    %433 = arith.truncf %431 : vector<32x8xf32> to vector<32x8xbf16>
    %434 = arith.truncf %432 : vector<32x8xf32> to vector<32x8xbf16>
    %cst_180 = arith.constant dense<0.000000e+00> : vector<32x32xf32>
    %435 = tpu.matmul %433, %434, %cst_180 {dimension_numbers = #tpu.dot_dimension_numbers<[1], [1], [0], [0], [0, 0, 1, 0], [], []>} : vector<32x8xbf16>, vector<32x8xbf16>, vector<32x32xf32> -> vector<32x32xf32>
    %436 = arith.addf %435, %396 : vector<32x32xf32>
    %cst_181 = arith.constant dense<0xFF800000> : vector<32xf32>
    %437 = vector.multi_reduction <maximumf>, %436, %cst_181 [1] : vector<32x32xf32> to vector<32xf32>
    %438 = vector.shape_cast %437 : vector<32xf32> to vector<32x1xf32>
    %439 = vector.broadcast %438 : vector<32x1xf32> to vector<32x32xf32>
    %440 = arith.subf %436, %439 : vector<32x32xf32>
    %441 = math.exp %440 : vector<32x32xf32>
    %cst_182 = arith.constant dense<0.000000e+00> : vector<32xf32>
    %442 = vector.multi_reduction <add>, %441, %cst_182 [1] : vector<32x32xf32> to vector<32xf32>
    %443 = vector.shape_cast %442 : vector<32xf32> to vector<32x1xf32>
    %444 = tpu.reciprocal %443 {approx = true} : vector<32x1xf32> -> vector<32x1xf32>
    %445 = vector.broadcast %444 : vector<32x1xf32> to vector<32x32xf32>
    %446 = arith.mulf %441, %445 : vector<32x32xf32>
    %447 = vector.extract_strided_slice %408 {offsets = [0, 8], sizes = [32, 8], strides = [1, 1]} : vector<32x32xf32> to vector<32x8xf32>
    %448 = arith.truncf %446 : vector<32x32xf32> to vector<32x32xbf16>
    %449 = arith.truncf %447 : vector<32x8xf32> to vector<32x8xbf16>
    %cst_183 = arith.constant dense<0.000000e+00> : vector<32x8xf32>
    %450 = tpu.matmul %448, %449, %cst_183 {dimension_numbers = #tpu.dot_dimension_numbers<[1], [0], [0], [1], [0, 0, 1, 1], [], []>} : vector<32x32xbf16>, vector<32x8xbf16>, vector<32x8xf32> -> vector<32x8xf32>
    %451 = vector.extract_strided_slice %410 {offsets = [0, 16], sizes = [32, 8], strides = [1, 1]} : vector<32x32xf32> to vector<32x8xf32>
    %452 = vector.extract_strided_slice %407 {offsets = [0, 16], sizes = [32, 8], strides = [1, 1]} : vector<32x32xf32> to vector<32x8xf32>
    %453 = arith.truncf %451 : vector<32x8xf32> to vector<32x8xbf16>
    %454 = arith.truncf %452 : vector<32x8xf32> to vector<32x8xbf16>
    %cst_184 = arith.constant dense<0.000000e+00> : vector<32x32xf32>
    %455 = tpu.matmul %453, %454, %cst_184 {dimension_numbers = #tpu.dot_dimension_numbers<[1], [1], [0], [0], [0, 0, 1, 0], [], []>} : vector<32x8xbf16>, vector<32x8xbf16>, vector<32x32xf32> -> vector<32x32xf32>
    %456 = arith.addf %455, %396 : vector<32x32xf32>
    %cst_185 = arith.constant dense<0xFF800000> : vector<32xf32>
    %457 = vector.multi_reduction <maximumf>, %456, %cst_185 [1] : vector<32x32xf32> to vector<32xf32>
    %458 = vector.shape_cast %457 : vector<32xf32> to vector<32x1xf32>
    %459 = vector.broadcast %458 : vector<32x1xf32> to vector<32x32xf32>
    %460 = arith.subf %456, %459 : vector<32x32xf32>
    %461 = math.exp %460 : vector<32x32xf32>
    %cst_186 = arith.constant dense<0.000000e+00> : vector<32xf32>
    %462 = vector.multi_reduction <add>, %461, %cst_186 [1] : vector<32x32xf32> to vector<32xf32>
    %463 = vector.shape_cast %462 : vector<32xf32> to vector<32x1xf32>
    %464 = tpu.reciprocal %463 {approx = true} : vector<32x1xf32> -> vector<32x1xf32>
    %465 = vector.broadcast %464 : vector<32x1xf32> to vector<32x32xf32>
    %466 = arith.mulf %461, %465 : vector<32x32xf32>
    %467 = vector.extract_strided_slice %408 {offsets = [0, 16], sizes = [32, 8], strides = [1, 1]} : vector<32x32xf32> to vector<32x8xf32>
    %468 = arith.truncf %466 : vector<32x32xf32> to vector<32x32xbf16>
    %469 = arith.truncf %467 : vector<32x8xf32> to vector<32x8xbf16>
    %cst_187 = arith.constant dense<0.000000e+00> : vector<32x8xf32>
    %470 = tpu.matmul %468, %469, %cst_187 {dimension_numbers = #tpu.dot_dimension_numbers<[1], [0], [0], [1], [0, 0, 1, 1], [], []>} : vector<32x32xbf16>, vector<32x8xbf16>, vector<32x8xf32> -> vector<32x8xf32>
    %471 = vector.extract_strided_slice %410 {offsets = [0, 24], sizes = [32, 8], strides = [1, 1]} : vector<32x32xf32> to vector<32x8xf32>
    %472 = vector.extract_strided_slice %407 {offsets = [0, 24], sizes = [32, 8], strides = [1, 1]} : vector<32x32xf32> to vector<32x8xf32>
    %473 = arith.truncf %471 : vector<32x8xf32> to vector<32x8xbf16>
    %474 = arith.truncf %472 : vector<32x8xf32> to vector<32x8xbf16>
    %cst_188 = arith.constant dense<0.000000e+00> : vector<32x32xf32>
    %475 = tpu.matmul %473, %474, %cst_188 {dimension_numbers = #tpu.dot_dimension_numbers<[1], [1], [0], [0], [0, 0, 1, 0], [], []>} : vector<32x8xbf16>, vector<32x8xbf16>, vector<32x32xf32> -> vector<32x32xf32>
    %476 = arith.addf %475, %396 : vector<32x32xf32>
    %cst_189 = arith.constant dense<0xFF800000> : vector<32xf32>
    %477 = vector.multi_reduction <maximumf>, %476, %cst_189 [1] : vector<32x32xf32> to vector<32xf32>
    %478 = vector.shape_cast %477 : vector<32xf32> to vector<32x1xf32>
    %479 = vector.broadcast %478 : vector<32x1xf32> to vector<32x32xf32>
    %480 = arith.subf %476, %479 : vector<32x32xf32>
    %481 = math.exp %480 : vector<32x32xf32>
    %cst_190 = arith.constant dense<0.000000e+00> : vector<32xf32>
    %482 = vector.multi_reduction <add>, %481, %cst_190 [1] : vector<32x32xf32> to vector<32xf32>
    %483 = vector.shape_cast %482 : vector<32xf32> to vector<32x1xf32>
    %484 = tpu.reciprocal %483 {approx = true} : vector<32x1xf32> -> vector<32x1xf32>
    %485 = vector.broadcast %484 : vector<32x1xf32> to vector<32x32xf32>
    %486 = arith.mulf %481, %485 : vector<32x32xf32>
    %487 = vector.extract_strided_slice %408 {offsets = [0, 24], sizes = [32, 8], strides = [1, 1]} : vector<32x32xf32> to vector<32x8xf32>
    %488 = arith.truncf %486 : vector<32x32xf32> to vector<32x32xbf16>
    %489 = arith.truncf %487 : vector<32x8xf32> to vector<32x8xbf16>
    %cst_191 = arith.constant dense<0.000000e+00> : vector<32x8xf32>
    %490 = tpu.matmul %488, %489, %cst_191 {dimension_numbers = #tpu.dot_dimension_numbers<[1], [0], [0], [1], [0, 0, 1, 1], [], []>} : vector<32x32xbf16>, vector<32x8xbf16>, vector<32x8xf32> -> vector<32x8xf32>
    %491 = tpu.concatenate %430, %450, %470, %490 in 1 : vector<32x8xf32>, vector<32x8xf32>, vector<32x8xf32>, vector<32x8xf32> -> vector<32x32xf32>
    %c0_192 = arith.constant 0 : index
    %c0_193 = arith.constant 0 : index
    %c0_194 = arith.constant 0 : index
    %492 = vector.load %arg20[%c0_192, %c0_193, %c0_194] : memref<2x32x32xbf16, #tpu.memory_space<vmem>>, vector<1x32x32xbf16>
    %493 = vector.shape_cast %492 : vector<1x32x32xbf16> to vector<32x32xbf16>
    %494 = arith.truncf %491 : vector<32x32xf32> to vector<32x32xbf16>
    %cst_195 = arith.constant dense<0.000000e+00> : vector<32x32xf32>
    %495 = tpu.matmul %494, %493, %cst_195 {dimension_numbers = #tpu.dot_dimension_numbers<[1], [0], [0], [1], [0, 0, 1, 1], [], []>} : vector<32x32xbf16>, vector<32x32xbf16>, vector<32x32xf32> -> vector<32x32xf32>
    %c0_196 = arith.constant 0 : index
    %c0_197 = arith.constant 0 : index
    %c0_198 = arith.constant 0 : index
    %496 = vector.load %arg21[%c0_196, %c0_197, %c0_198] : memref<2x1x32xf32, #tpu.memory_space<vmem>>, vector<1x1x32xf32>
    %497 = vector.shape_cast %496 : vector<1x1x32xf32> to vector<1x32xf32>
    %498 = vector.broadcast %497 : vector<1x32xf32> to vector<32x32xf32>
    %499 = arith.addf %495, %498 : vector<32x32xf32>
    %500 = arith.addf %395, %499 : vector<32x32xf32>
    %c0_199 = arith.constant 0 : index
    %c0_200 = arith.constant 0 : index
    %c0_201 = arith.constant 0 : index
    %501 = vector.load %arg28[%c0_199, %c0_200, %c0_201] : memref<2x1x32xf32, #tpu.memory_space<vmem>>, vector<1x1x32xf32>
    %502 = vector.shape_cast %501 : vector<1x1x32xf32> to vector<1x32xf32>
    %c0_202 = arith.constant 0 : index
    %c0_203 = arith.constant 0 : index
    %c0_204 = arith.constant 0 : index
    %503 = vector.load %arg29[%c0_202, %c0_203, %c0_204] : memref<2x1x32xf32, #tpu.memory_space<vmem>>, vector<1x1x32xf32>
    %504 = vector.shape_cast %503 : vector<1x1x32xf32> to vector<1x32xf32>
    %cst_205 = arith.constant dense<0.000000e+00> : vector<32xf32>
    %505 = vector.multi_reduction <add>, %500, %cst_205 [1] : vector<32x32xf32> to vector<32xf32>
    %506 = vector.shape_cast %505 : vector<32xf32> to vector<32x1xf32>
    %cst_206 = arith.constant 3.200000e+01 : f32
    %507 = vector.broadcast %cst_206 : f32 to vector<32x1xf32>
    %508 = arith.divf %506, %507 : vector<32x1xf32>
    %509 = vector.broadcast %508 : vector<32x1xf32> to vector<32x32xf32>
    %510 = arith.subf %500, %509 : vector<32x32xf32>
    %511 = arith.mulf %510, %510 : vector<32x32xf32>
    %cst_207 = arith.constant dense<0.000000e+00> : vector<32xf32>
    %512 = vector.multi_reduction <add>, %511, %cst_207 [1] : vector<32x32xf32> to vector<32xf32>
    %513 = vector.shape_cast %512 : vector<32xf32> to vector<32x1xf32>
    %cst_208 = arith.constant 3.200000e+01 : f32
    %514 = vector.broadcast %cst_208 : f32 to vector<32x1xf32>
    %515 = arith.divf %513, %514 : vector<32x1xf32>
    %cst_209 = arith.constant 9.99999974E-6 : f32
    %516 = vector.broadcast %cst_209 : f32 to vector<32x1xf32>
    %517 = arith.addf %515, %516 : vector<32x1xf32>
    %518 = math.rsqrt %517 : vector<32x1xf32>
    %519 = vector.broadcast %518 : vector<32x1xf32> to vector<32x32xf32>
    %520 = arith.mulf %510, %519 : vector<32x32xf32>
    %521 = vector.broadcast %502 : vector<1x32xf32> to vector<32x32xf32>
    %522 = arith.mulf %520, %521 : vector<32x32xf32>
    %523 = vector.broadcast %504 : vector<1x32xf32> to vector<32x32xf32>
    %524 = arith.addf %522, %523 : vector<32x32xf32>
    %c0_210 = arith.constant 0 : index
    %c0_211 = arith.constant 0 : index
    %c0_212 = arith.constant 0 : index
    %525 = vector.load %arg22[%c0_210, %c0_211, %c0_212] : memref<2x32x32xbf16, #tpu.memory_space<vmem>>, vector<1x32x32xbf16>
    %526 = vector.shape_cast %525 : vector<1x32x32xbf16> to vector<32x32xbf16>
    %527 = arith.truncf %524 : vector<32x32xf32> to vector<32x32xbf16>
    %cst_213 = arith.constant dense<0.000000e+00> : vector<32x32xf32>
    %528 = tpu.matmul %527, %526, %cst_213 {dimension_numbers = #tpu.dot_dimension_numbers<[1], [0], [0], [1], [0, 0, 1, 1], [], []>} : vector<32x32xbf16>, vector<32x32xbf16>, vector<32x32xf32> -> vector<32x32xf32>
    %c0_214 = arith.constant 0 : index
    %c0_215 = arith.constant 0 : index
    %c0_216 = arith.constant 0 : index
    %529 = vector.load %arg23[%c0_214, %c0_215, %c0_216] : memref<2x1x32xf32, #tpu.memory_space<vmem>>, vector<1x1x32xf32>
    %530 = vector.shape_cast %529 : vector<1x1x32xf32> to vector<1x32xf32>
    %531 = vector.broadcast %530 : vector<1x32xf32> to vector<32x32xf32>
    %532 = arith.addf %528, %531 : vector<32x32xf32>
    %c0_217 = arith.constant 0 : index
    %c0_218 = arith.constant 0 : index
    %c0_219 = arith.constant 0 : index
    %533 = vector.load %arg24[%c0_217, %c0_218, %c0_219] : memref<2x32x64xbf16, #tpu.memory_space<vmem>>, vector<1x32x64xbf16>
    %534 = vector.shape_cast %533 : vector<1x32x64xbf16> to vector<32x64xbf16>
    %535 = arith.truncf %370 : vector<28x32xf32> to vector<28x32xbf16>
    %cst_220 = arith.constant dense<0.000000e+00> : vector<28x64xf32>
    %536 = tpu.matmul %535, %534, %cst_220 {dimension_numbers = #tpu.dot_dimension_numbers<[1], [0], [0], [1], [0, 0, 1, 1], [], []>} : vector<28x32xbf16>, vector<32x64xbf16>, vector<28x64xf32> -> vector<28x64xf32>
    %c0_221 = arith.constant 0 : index
    %c0_222 = arith.constant 0 : index
    %c0_223 = arith.constant 0 : index
    %537 = vector.load %arg25[%c0_221, %c0_222, %c0_223] : memref<2x1x64xf32, #tpu.memory_space<vmem>>, vector<1x1x64xf32>
    %538 = vector.shape_cast %537 : vector<1x1x64xf32> to vector<1x64xf32>
    %539 = vector.broadcast %538 : vector<1x64xf32> to vector<28x64xf32>
    %540 = arith.addf %536, %539 : vector<28x64xf32>
    %541 = vector.extract_strided_slice %540 {offsets = [0, 0], sizes = [28, 32], strides = [1, 1]} : vector<28x64xf32> to vector<28x32xf32>
    %542 = vector.extract_strided_slice %540 {offsets = [0, 32], sizes = [28, 32], strides = [1, 1]} : vector<28x64xf32> to vector<28x32xf32>
    %cst_224 = arith.constant 0.353553385 : f32
    %543 = vector.broadcast %cst_224 : f32 to vector<32x32xf32>
    %544 = arith.mulf %532, %543 : vector<32x32xf32>
    %545 = vector.extract_strided_slice %544 {offsets = [0, 0], sizes = [32, 8], strides = [1, 1]} : vector<32x32xf32> to vector<32x8xf32>
    %546 = vector.extract_strided_slice %541 {offsets = [0, 0], sizes = [28, 8], strides = [1, 1]} : vector<28x32xf32> to vector<28x8xf32>
    %547 = arith.truncf %545 : vector<32x8xf32> to vector<32x8xbf16>
    %548 = arith.truncf %546 : vector<28x8xf32> to vector<28x8xbf16>
    %cst_225 = arith.constant dense<0.000000e+00> : vector<32x28xf32>
    %549 = tpu.matmul %547, %548, %cst_225 {dimension_numbers = #tpu.dot_dimension_numbers<[1], [1], [0], [0], [0, 0, 1, 0], [], []>} : vector<32x8xbf16>, vector<28x8xbf16>, vector<32x28xf32> -> vector<32x28xf32>
    %550 = arith.addf %549, %397 : vector<32x28xf32>
    %cst_226 = arith.constant dense<0xFF800000> : vector<32xf32>
    %551 = vector.multi_reduction <maximumf>, %550, %cst_226 [1] : vector<32x28xf32> to vector<32xf32>
    %552 = vector.shape_cast %551 : vector<32xf32> to vector<32x1xf32>
    %553 = vector.broadcast %552 : vector<32x1xf32> to vector<32x28xf32>
    %554 = arith.subf %550, %553 : vector<32x28xf32>
    %555 = math.exp %554 : vector<32x28xf32>
    %cst_227 = arith.constant dense<0.000000e+00> : vector<32xf32>
    %556 = vector.multi_reduction <add>, %555, %cst_227 [1] : vector<32x28xf32> to vector<32xf32>
    %557 = vector.shape_cast %556 : vector<32xf32> to vector<32x1xf32>
    %558 = tpu.reciprocal %557 {approx = true} : vector<32x1xf32> -> vector<32x1xf32>
    %559 = vector.broadcast %558 : vector<32x1xf32> to vector<32x28xf32>
    %560 = arith.mulf %555, %559 : vector<32x28xf32>
    %561 = vector.extract_strided_slice %542 {offsets = [0, 0], sizes = [28, 8], strides = [1, 1]} : vector<28x32xf32> to vector<28x8xf32>
    %562 = arith.truncf %560 : vector<32x28xf32> to vector<32x28xbf16>
    %563 = arith.truncf %561 : vector<28x8xf32> to vector<28x8xbf16>
    %cst_228 = arith.constant dense<0.000000e+00> : vector<32x8xf32>
    %564 = tpu.matmul %562, %563, %cst_228 {dimension_numbers = #tpu.dot_dimension_numbers<[1], [0], [0], [1], [0, 0, 1, 1], [], []>} : vector<32x28xbf16>, vector<28x8xbf16>, vector<32x8xf32> -> vector<32x8xf32>
    %565 = vector.extract_strided_slice %544 {offsets = [0, 8], sizes = [32, 8], strides = [1, 1]} : vector<32x32xf32> to vector<32x8xf32>
    %566 = vector.extract_strided_slice %541 {offsets = [0, 8], sizes = [28, 8], strides = [1, 1]} : vector<28x32xf32> to vector<28x8xf32>
    %567 = arith.truncf %565 : vector<32x8xf32> to vector<32x8xbf16>
    %568 = arith.truncf %566 : vector<28x8xf32> to vector<28x8xbf16>
    %cst_229 = arith.constant dense<0.000000e+00> : vector<32x28xf32>
    %569 = tpu.matmul %567, %568, %cst_229 {dimension_numbers = #tpu.dot_dimension_numbers<[1], [1], [0], [0], [0, 0, 1, 0], [], []>} : vector<32x8xbf16>, vector<28x8xbf16>, vector<32x28xf32> -> vector<32x28xf32>
    %570 = arith.addf %569, %397 : vector<32x28xf32>
    %cst_230 = arith.constant dense<0xFF800000> : vector<32xf32>
    %571 = vector.multi_reduction <maximumf>, %570, %cst_230 [1] : vector<32x28xf32> to vector<32xf32>
    %572 = vector.shape_cast %571 : vector<32xf32> to vector<32x1xf32>
    %573 = vector.broadcast %572 : vector<32x1xf32> to vector<32x28xf32>
    %574 = arith.subf %570, %573 : vector<32x28xf32>
    %575 = math.exp %574 : vector<32x28xf32>
    %cst_231 = arith.constant dense<0.000000e+00> : vector<32xf32>
    %576 = vector.multi_reduction <add>, %575, %cst_231 [1] : vector<32x28xf32> to vector<32xf32>
    %577 = vector.shape_cast %576 : vector<32xf32> to vector<32x1xf32>
    %578 = tpu.reciprocal %577 {approx = true} : vector<32x1xf32> -> vector<32x1xf32>
    %579 = vector.broadcast %578 : vector<32x1xf32> to vector<32x28xf32>
    %580 = arith.mulf %575, %579 : vector<32x28xf32>
    %581 = vector.extract_strided_slice %542 {offsets = [0, 8], sizes = [28, 8], strides = [1, 1]} : vector<28x32xf32> to vector<28x8xf32>
    %582 = arith.truncf %580 : vector<32x28xf32> to vector<32x28xbf16>
    %583 = arith.truncf %581 : vector<28x8xf32> to vector<28x8xbf16>
    %cst_232 = arith.constant dense<0.000000e+00> : vector<32x8xf32>
    %584 = tpu.matmul %582, %583, %cst_232 {dimension_numbers = #tpu.dot_dimension_numbers<[1], [0], [0], [1], [0, 0, 1, 1], [], []>} : vector<32x28xbf16>, vector<28x8xbf16>, vector<32x8xf32> -> vector<32x8xf32>
    %585 = vector.extract_strided_slice %544 {offsets = [0, 16], sizes = [32, 8], strides = [1, 1]} : vector<32x32xf32> to vector<32x8xf32>
    %586 = vector.extract_strided_slice %541 {offsets = [0, 16], sizes = [28, 8], strides = [1, 1]} : vector<28x32xf32> to vector<28x8xf32>
    %587 = arith.truncf %585 : vector<32x8xf32> to vector<32x8xbf16>
    %588 = arith.truncf %586 : vector<28x8xf32> to vector<28x8xbf16>
    %cst_233 = arith.constant dense<0.000000e+00> : vector<32x28xf32>
    %589 = tpu.matmul %587, %588, %cst_233 {dimension_numbers = #tpu.dot_dimension_numbers<[1], [1], [0], [0], [0, 0, 1, 0], [], []>} : vector<32x8xbf16>, vector<28x8xbf16>, vector<32x28xf32> -> vector<32x28xf32>
    %590 = arith.addf %589, %397 : vector<32x28xf32>
    %cst_234 = arith.constant dense<0xFF800000> : vector<32xf32>
    %591 = vector.multi_reduction <maximumf>, %590, %cst_234 [1] : vector<32x28xf32> to vector<32xf32>
    %592 = vector.shape_cast %591 : vector<32xf32> to vector<32x1xf32>
    %593 = vector.broadcast %592 : vector<32x1xf32> to vector<32x28xf32>
    %594 = arith.subf %590, %593 : vector<32x28xf32>
    %595 = math.exp %594 : vector<32x28xf32>
    %cst_235 = arith.constant dense<0.000000e+00> : vector<32xf32>
    %596 = vector.multi_reduction <add>, %595, %cst_235 [1] : vector<32x28xf32> to vector<32xf32>
    %597 = vector.shape_cast %596 : vector<32xf32> to vector<32x1xf32>
    %598 = tpu.reciprocal %597 {approx = true} : vector<32x1xf32> -> vector<32x1xf32>
    %599 = vector.broadcast %598 : vector<32x1xf32> to vector<32x28xf32>
    %600 = arith.mulf %595, %599 : vector<32x28xf32>
    %601 = vector.extract_strided_slice %542 {offsets = [0, 16], sizes = [28, 8], strides = [1, 1]} : vector<28x32xf32> to vector<28x8xf32>
    %602 = arith.truncf %600 : vector<32x28xf32> to vector<32x28xbf16>
    %603 = arith.truncf %601 : vector<28x8xf32> to vector<28x8xbf16>
    %cst_236 = arith.constant dense<0.000000e+00> : vector<32x8xf32>
    %604 = tpu.matmul %602, %603, %cst_236 {dimension_numbers = #tpu.dot_dimension_numbers<[1], [0], [0], [1], [0, 0, 1, 1], [], []>} : vector<32x28xbf16>, vector<28x8xbf16>, vector<32x8xf32> -> vector<32x8xf32>
    %605 = vector.extract_strided_slice %544 {offsets = [0, 24], sizes = [32, 8], strides = [1, 1]} : vector<32x32xf32> to vector<32x8xf32>
    %606 = vector.extract_strided_slice %541 {offsets = [0, 24], sizes = [28, 8], strides = [1, 1]} : vector<28x32xf32> to vector<28x8xf32>
    %607 = arith.truncf %605 : vector<32x8xf32> to vector<32x8xbf16>
    %608 = arith.truncf %606 : vector<28x8xf32> to vector<28x8xbf16>
    %cst_237 = arith.constant dense<0.000000e+00> : vector<32x28xf32>
    %609 = tpu.matmul %607, %608, %cst_237 {dimension_numbers = #tpu.dot_dimension_numbers<[1], [1], [0], [0], [0, 0, 1, 0], [], []>} : vector<32x8xbf16>, vector<28x8xbf16>, vector<32x28xf32> -> vector<32x28xf32>
    %610 = arith.addf %609, %397 : vector<32x28xf32>
    %cst_238 = arith.constant dense<0xFF800000> : vector<32xf32>
    %611 = vector.multi_reduction <maximumf>, %610, %cst_238 [1] : vector<32x28xf32> to vector<32xf32>
    %612 = vector.shape_cast %611 : vector<32xf32> to vector<32x1xf32>
    %613 = vector.broadcast %612 : vector<32x1xf32> to vector<32x28xf32>
    %614 = arith.subf %610, %613 : vector<32x28xf32>
    %615 = math.exp %614 : vector<32x28xf32>
    %cst_239 = arith.constant dense<0.000000e+00> : vector<32xf32>
    %616 = vector.multi_reduction <add>, %615, %cst_239 [1] : vector<32x28xf32> to vector<32xf32>
    %617 = vector.shape_cast %616 : vector<32xf32> to vector<32x1xf32>
    %618 = tpu.reciprocal %617 {approx = true} : vector<32x1xf32> -> vector<32x1xf32>
    %619 = vector.broadcast %618 : vector<32x1xf32> to vector<32x28xf32>
    %620 = arith.mulf %615, %619 : vector<32x28xf32>
    %621 = vector.extract_strided_slice %542 {offsets = [0, 24], sizes = [28, 8], strides = [1, 1]} : vector<28x32xf32> to vector<28x8xf32>
    %622 = arith.truncf %620 : vector<32x28xf32> to vector<32x28xbf16>
    %623 = arith.truncf %621 : vector<28x8xf32> to vector<28x8xbf16>
    %cst_240 = arith.constant dense<0.000000e+00> : vector<32x8xf32>
    %624 = tpu.matmul %622, %623, %cst_240 {dimension_numbers = #tpu.dot_dimension_numbers<[1], [0], [0], [1], [0, 0, 1, 1], [], []>} : vector<32x28xbf16>, vector<28x8xbf16>, vector<32x8xf32> -> vector<32x8xf32>
    %625 = tpu.concatenate %564, %584, %604, %624 in 1 : vector<32x8xf32>, vector<32x8xf32>, vector<32x8xf32>, vector<32x8xf32> -> vector<32x32xf32>
    %c0_241 = arith.constant 0 : index
    %c0_242 = arith.constant 0 : index
    %c0_243 = arith.constant 0 : index
    %626 = vector.load %arg26[%c0_241, %c0_242, %c0_243] : memref<2x32x32xbf16, #tpu.memory_space<vmem>>, vector<1x32x32xbf16>
    %627 = vector.shape_cast %626 : vector<1x32x32xbf16> to vector<32x32xbf16>
    %628 = arith.truncf %625 : vector<32x32xf32> to vector<32x32xbf16>
    %cst_244 = arith.constant dense<0.000000e+00> : vector<32x32xf32>
    %629 = tpu.matmul %628, %627, %cst_244 {dimension_numbers = #tpu.dot_dimension_numbers<[1], [0], [0], [1], [0, 0, 1, 1], [], []>} : vector<32x32xbf16>, vector<32x32xbf16>, vector<32x32xf32> -> vector<32x32xf32>
    %c0_245 = arith.constant 0 : index
    %c0_246 = arith.constant 0 : index
    %c0_247 = arith.constant 0 : index
    %630 = vector.load %arg27[%c0_245, %c0_246, %c0_247] : memref<2x1x32xf32, #tpu.memory_space<vmem>>, vector<1x1x32xf32>
    %631 = vector.shape_cast %630 : vector<1x1x32xf32> to vector<1x32xf32>
    %632 = vector.broadcast %631 : vector<1x32xf32> to vector<32x32xf32>
    %633 = arith.addf %629, %632 : vector<32x32xf32>
    %634 = arith.addf %524, %633 : vector<32x32xf32>
    %c0_248 = arith.constant 0 : index
    %c0_249 = arith.constant 0 : index
    %c0_250 = arith.constant 0 : index
    %635 = vector.load %arg30[%c0_248, %c0_249, %c0_250] : memref<2x1x32xf32, #tpu.memory_space<vmem>>, vector<1x1x32xf32>
    %636 = vector.shape_cast %635 : vector<1x1x32xf32> to vector<1x32xf32>
    %c0_251 = arith.constant 0 : index
    %c0_252 = arith.constant 0 : index
    %c0_253 = arith.constant 0 : index
    %637 = vector.load %arg31[%c0_251, %c0_252, %c0_253] : memref<2x1x32xf32, #tpu.memory_space<vmem>>, vector<1x1x32xf32>
    %638 = vector.shape_cast %637 : vector<1x1x32xf32> to vector<1x32xf32>
    %cst_254 = arith.constant dense<0.000000e+00> : vector<32xf32>
    %639 = vector.multi_reduction <add>, %634, %cst_254 [1] : vector<32x32xf32> to vector<32xf32>
    %640 = vector.shape_cast %639 : vector<32xf32> to vector<32x1xf32>
    %cst_255 = arith.constant 3.200000e+01 : f32
    %641 = vector.broadcast %cst_255 : f32 to vector<32x1xf32>
    %642 = arith.divf %640, %641 : vector<32x1xf32>
    %643 = vector.broadcast %642 : vector<32x1xf32> to vector<32x32xf32>
    %644 = arith.subf %634, %643 : vector<32x32xf32>
    %645 = arith.mulf %644, %644 : vector<32x32xf32>
    %cst_256 = arith.constant dense<0.000000e+00> : vector<32xf32>
    %646 = vector.multi_reduction <add>, %645, %cst_256 [1] : vector<32x32xf32> to vector<32xf32>
    %647 = vector.shape_cast %646 : vector<32xf32> to vector<32x1xf32>
    %cst_257 = arith.constant 3.200000e+01 : f32
    %648 = vector.broadcast %cst_257 : f32 to vector<32x1xf32>
    %649 = arith.divf %647, %648 : vector<32x1xf32>
    %cst_258 = arith.constant 9.99999974E-6 : f32
    %650 = vector.broadcast %cst_258 : f32 to vector<32x1xf32>
    %651 = arith.addf %649, %650 : vector<32x1xf32>
    %652 = math.rsqrt %651 : vector<32x1xf32>
    %653 = vector.broadcast %652 : vector<32x1xf32> to vector<32x32xf32>
    %654 = arith.mulf %644, %653 : vector<32x32xf32>
    %655 = vector.broadcast %636 : vector<1x32xf32> to vector<32x32xf32>
    %656 = arith.mulf %654, %655 : vector<32x32xf32>
    %657 = vector.broadcast %638 : vector<1x32xf32> to vector<32x32xf32>
    %658 = arith.addf %656, %657 : vector<32x32xf32>
    %c0_259 = arith.constant 0 : index
    %c0_260 = arith.constant 0 : index
    %c0_261 = arith.constant 0 : index
    %659 = vector.load %arg34[%c0_259, %c0_260, %c0_261] : memref<2x32x64xbf16, #tpu.memory_space<vmem>>, vector<1x32x64xbf16>
    %660 = vector.shape_cast %659 : vector<1x32x64xbf16> to vector<32x64xbf16>
    %661 = arith.truncf %658 : vector<32x32xf32> to vector<32x32xbf16>
    %cst_262 = arith.constant dense<0.000000e+00> : vector<32x64xf32>
    %662 = tpu.matmul %661, %660, %cst_262 {dimension_numbers = #tpu.dot_dimension_numbers<[1], [0], [0], [1], [0, 0, 1, 1], [], []>} : vector<32x32xbf16>, vector<32x64xbf16>, vector<32x64xf32> -> vector<32x64xf32>
    %c0_263 = arith.constant 0 : index
    %c0_264 = arith.constant 0 : index
    %c0_265 = arith.constant 0 : index
    %663 = vector.load %arg35[%c0_263, %c0_264, %c0_265] : memref<2x1x64xf32, #tpu.memory_space<vmem>>, vector<1x1x64xf32>
    %664 = vector.shape_cast %663 : vector<1x1x64xf32> to vector<1x64xf32>
    %665 = vector.broadcast %664 : vector<1x64xf32> to vector<32x64xf32>
    %666 = arith.addf %662, %665 : vector<32x64xf32>
    %cst_266 = arith.constant 0.000000e+00 : f32
    %667 = vector.broadcast %cst_266 : f32 to vector<32x64xf32>
    %668 = arith.maximumf %666, %667 : vector<32x64xf32>
    %c0_267 = arith.constant 0 : index
    %c0_268 = arith.constant 0 : index
    %c0_269 = arith.constant 0 : index
    %669 = vector.load %arg36[%c0_267, %c0_268, %c0_269] : memref<2x64x32xbf16, #tpu.memory_space<vmem>>, vector<1x64x32xbf16>
    %670 = vector.shape_cast %669 : vector<1x64x32xbf16> to vector<64x32xbf16>
    %671 = arith.truncf %668 : vector<32x64xf32> to vector<32x64xbf16>
    %cst_270 = arith.constant dense<0.000000e+00> : vector<32x32xf32>
    %672 = tpu.matmul %671, %670, %cst_270 {dimension_numbers = #tpu.dot_dimension_numbers<[1], [0], [0], [1], [0, 0, 1, 1], [], []>} : vector<32x64xbf16>, vector<64x32xbf16>, vector<32x32xf32> -> vector<32x32xf32>
    %c0_271 = arith.constant 0 : index
    %c0_272 = arith.constant 0 : index
    %c0_273 = arith.constant 0 : index
    %673 = vector.load %arg37[%c0_271, %c0_272, %c0_273] : memref<2x1x32xf32, #tpu.memory_space<vmem>>, vector<1x1x32xf32>
    %674 = vector.shape_cast %673 : vector<1x1x32xf32> to vector<1x32xf32>
    %675 = vector.broadcast %674 : vector<1x32xf32> to vector<32x32xf32>
    %676 = arith.addf %672, %675 : vector<32x32xf32>
    %677 = arith.addf %658, %676 : vector<32x32xf32>
    %c0_274 = arith.constant 0 : index
    %c0_275 = arith.constant 0 : index
    %c0_276 = arith.constant 0 : index
    %678 = vector.load %arg32[%c0_274, %c0_275, %c0_276] : memref<2x1x32xf32, #tpu.memory_space<vmem>>, vector<1x1x32xf32>
    %679 = vector.shape_cast %678 : vector<1x1x32xf32> to vector<1x32xf32>
    %c0_277 = arith.constant 0 : index
    %c0_278 = arith.constant 0 : index
    %c0_279 = arith.constant 0 : index
    %680 = vector.load %arg33[%c0_277, %c0_278, %c0_279] : memref<2x1x32xf32, #tpu.memory_space<vmem>>, vector<1x1x32xf32>
    %681 = vector.shape_cast %680 : vector<1x1x32xf32> to vector<1x32xf32>
    %cst_280 = arith.constant dense<0.000000e+00> : vector<32xf32>
    %682 = vector.multi_reduction <add>, %677, %cst_280 [1] : vector<32x32xf32> to vector<32xf32>
    %683 = vector.shape_cast %682 : vector<32xf32> to vector<32x1xf32>
    %cst_281 = arith.constant 3.200000e+01 : f32
    %684 = vector.broadcast %cst_281 : f32 to vector<32x1xf32>
    %685 = arith.divf %683, %684 : vector<32x1xf32>
    %686 = vector.broadcast %685 : vector<32x1xf32> to vector<32x32xf32>
    %687 = arith.subf %677, %686 : vector<32x32xf32>
    %688 = arith.mulf %687, %687 : vector<32x32xf32>
    %cst_282 = arith.constant dense<0.000000e+00> : vector<32xf32>
    %689 = vector.multi_reduction <add>, %688, %cst_282 [1] : vector<32x32xf32> to vector<32xf32>
    %690 = vector.shape_cast %689 : vector<32xf32> to vector<32x1xf32>
    %cst_283 = arith.constant 3.200000e+01 : f32
    %691 = vector.broadcast %cst_283 : f32 to vector<32x1xf32>
    %692 = arith.divf %690, %691 : vector<32x1xf32>
    %cst_284 = arith.constant 9.99999974E-6 : f32
    %693 = vector.broadcast %cst_284 : f32 to vector<32x1xf32>
    %694 = arith.addf %692, %693 : vector<32x1xf32>
    %695 = math.rsqrt %694 : vector<32x1xf32>
    %696 = vector.broadcast %695 : vector<32x1xf32> to vector<32x32xf32>
    %697 = arith.mulf %687, %696 : vector<32x32xf32>
    %698 = vector.broadcast %679 : vector<1x32xf32> to vector<32x32xf32>
    %699 = arith.mulf %697, %698 : vector<32x32xf32>
    %700 = vector.broadcast %681 : vector<1x32xf32> to vector<32x32xf32>
    %701 = arith.addf %699, %700 : vector<32x32xf32>
    %c1_285 = arith.constant 1 : index
    %c0_286 = arith.constant 0 : index
    %c0_287 = arith.constant 0 : index
    %702 = vector.load %arg18[%c1_285, %c0_286, %c0_287] : memref<2x32x96xbf16, #tpu.memory_space<vmem>>, vector<1x32x96xbf16>
    %703 = vector.shape_cast %702 : vector<1x32x96xbf16> to vector<32x96xbf16>
    %704 = arith.truncf %701 : vector<32x32xf32> to vector<32x32xbf16>
    %cst_288 = arith.constant dense<0.000000e+00> : vector<32x96xf32>
    %705 = tpu.matmul %704, %703, %cst_288 {dimension_numbers = #tpu.dot_dimension_numbers<[1], [0], [0], [1], [0, 0, 1, 1], [], []>} : vector<32x32xbf16>, vector<32x96xbf16>, vector<32x96xf32> -> vector<32x96xf32>
    %c1_289 = arith.constant 1 : index
    %c0_290 = arith.constant 0 : index
    %c0_291 = arith.constant 0 : index
    %706 = vector.load %arg19[%c1_289, %c0_290, %c0_291] : memref<2x1x96xf32, #tpu.memory_space<vmem>>, vector<1x1x96xf32>
    %707 = vector.shape_cast %706 : vector<1x1x96xf32> to vector<1x96xf32>
    %708 = vector.broadcast %707 : vector<1x96xf32> to vector<32x96xf32>
    %709 = arith.addf %705, %708 : vector<32x96xf32>
    %710 = vector.extract_strided_slice %709 {offsets = [0, 0], sizes = [32, 32], strides = [1, 1]} : vector<32x96xf32> to vector<32x32xf32>
    %711 = vector.extract_strided_slice %709 {offsets = [0, 32], sizes = [32, 32], strides = [1, 1]} : vector<32x96xf32> to vector<32x32xf32>
    %712 = vector.extract_strided_slice %709 {offsets = [0, 64], sizes = [32, 32], strides = [1, 1]} : vector<32x96xf32> to vector<32x32xf32>
    %cst_292 = arith.constant 0.353553385 : f32
    %713 = vector.broadcast %cst_292 : f32 to vector<32x32xf32>
    %714 = arith.mulf %710, %713 : vector<32x32xf32>
    %715 = vector.extract_strided_slice %714 {offsets = [0, 0], sizes = [32, 8], strides = [1, 1]} : vector<32x32xf32> to vector<32x8xf32>
    %716 = vector.extract_strided_slice %711 {offsets = [0, 0], sizes = [32, 8], strides = [1, 1]} : vector<32x32xf32> to vector<32x8xf32>
    %717 = arith.truncf %715 : vector<32x8xf32> to vector<32x8xbf16>
    %718 = arith.truncf %716 : vector<32x8xf32> to vector<32x8xbf16>
    %cst_293 = arith.constant dense<0.000000e+00> : vector<32x32xf32>
    %719 = tpu.matmul %717, %718, %cst_293 {dimension_numbers = #tpu.dot_dimension_numbers<[1], [1], [0], [0], [0, 0, 1, 0], [], []>} : vector<32x8xbf16>, vector<32x8xbf16>, vector<32x32xf32> -> vector<32x32xf32>
    %720 = arith.addf %719, %396 : vector<32x32xf32>
    %cst_294 = arith.constant dense<0xFF800000> : vector<32xf32>
    %721 = vector.multi_reduction <maximumf>, %720, %cst_294 [1] : vector<32x32xf32> to vector<32xf32>
    %722 = vector.shape_cast %721 : vector<32xf32> to vector<32x1xf32>
    %723 = vector.broadcast %722 : vector<32x1xf32> to vector<32x32xf32>
    %724 = arith.subf %720, %723 : vector<32x32xf32>
    %725 = math.exp %724 : vector<32x32xf32>
    %cst_295 = arith.constant dense<0.000000e+00> : vector<32xf32>
    %726 = vector.multi_reduction <add>, %725, %cst_295 [1] : vector<32x32xf32> to vector<32xf32>
    %727 = vector.shape_cast %726 : vector<32xf32> to vector<32x1xf32>
    %728 = tpu.reciprocal %727 {approx = true} : vector<32x1xf32> -> vector<32x1xf32>
    %729 = vector.broadcast %728 : vector<32x1xf32> to vector<32x32xf32>
    %730 = arith.mulf %725, %729 : vector<32x32xf32>
    %731 = vector.extract_strided_slice %712 {offsets = [0, 0], sizes = [32, 8], strides = [1, 1]} : vector<32x32xf32> to vector<32x8xf32>
    %732 = arith.truncf %730 : vector<32x32xf32> to vector<32x32xbf16>
    %733 = arith.truncf %731 : vector<32x8xf32> to vector<32x8xbf16>
    %cst_296 = arith.constant dense<0.000000e+00> : vector<32x8xf32>
    %734 = tpu.matmul %732, %733, %cst_296 {dimension_numbers = #tpu.dot_dimension_numbers<[1], [0], [0], [1], [0, 0, 1, 1], [], []>} : vector<32x32xbf16>, vector<32x8xbf16>, vector<32x8xf32> -> vector<32x8xf32>
    %735 = vector.extract_strided_slice %714 {offsets = [0, 8], sizes = [32, 8], strides = [1, 1]} : vector<32x32xf32> to vector<32x8xf32>
    %736 = vector.extract_strided_slice %711 {offsets = [0, 8], sizes = [32, 8], strides = [1, 1]} : vector<32x32xf32> to vector<32x8xf32>
    %737 = arith.truncf %735 : vector<32x8xf32> to vector<32x8xbf16>
    %738 = arith.truncf %736 : vector<32x8xf32> to vector<32x8xbf16>
    %cst_297 = arith.constant dense<0.000000e+00> : vector<32x32xf32>
    %739 = tpu.matmul %737, %738, %cst_297 {dimension_numbers = #tpu.dot_dimension_numbers<[1], [1], [0], [0], [0, 0, 1, 0], [], []>} : vector<32x8xbf16>, vector<32x8xbf16>, vector<32x32xf32> -> vector<32x32xf32>
    %740 = arith.addf %739, %396 : vector<32x32xf32>
    %cst_298 = arith.constant dense<0xFF800000> : vector<32xf32>
    %741 = vector.multi_reduction <maximumf>, %740, %cst_298 [1] : vector<32x32xf32> to vector<32xf32>
    %742 = vector.shape_cast %741 : vector<32xf32> to vector<32x1xf32>
    %743 = vector.broadcast %742 : vector<32x1xf32> to vector<32x32xf32>
    %744 = arith.subf %740, %743 : vector<32x32xf32>
    %745 = math.exp %744 : vector<32x32xf32>
    %cst_299 = arith.constant dense<0.000000e+00> : vector<32xf32>
    %746 = vector.multi_reduction <add>, %745, %cst_299 [1] : vector<32x32xf32> to vector<32xf32>
    %747 = vector.shape_cast %746 : vector<32xf32> to vector<32x1xf32>
    %748 = tpu.reciprocal %747 {approx = true} : vector<32x1xf32> -> vector<32x1xf32>
    %749 = vector.broadcast %748 : vector<32x1xf32> to vector<32x32xf32>
    %750 = arith.mulf %745, %749 : vector<32x32xf32>
    %751 = vector.extract_strided_slice %712 {offsets = [0, 8], sizes = [32, 8], strides = [1, 1]} : vector<32x32xf32> to vector<32x8xf32>
    %752 = arith.truncf %750 : vector<32x32xf32> to vector<32x32xbf16>
    %753 = arith.truncf %751 : vector<32x8xf32> to vector<32x8xbf16>
    %cst_300 = arith.constant dense<0.000000e+00> : vector<32x8xf32>
    %754 = tpu.matmul %752, %753, %cst_300 {dimension_numbers = #tpu.dot_dimension_numbers<[1], [0], [0], [1], [0, 0, 1, 1], [], []>} : vector<32x32xbf16>, vector<32x8xbf16>, vector<32x8xf32> -> vector<32x8xf32>
    %755 = vector.extract_strided_slice %714 {offsets = [0, 16], sizes = [32, 8], strides = [1, 1]} : vector<32x32xf32> to vector<32x8xf32>
    %756 = vector.extract_strided_slice %711 {offsets = [0, 16], sizes = [32, 8], strides = [1, 1]} : vector<32x32xf32> to vector<32x8xf32>
    %757 = arith.truncf %755 : vector<32x8xf32> to vector<32x8xbf16>
    %758 = arith.truncf %756 : vector<32x8xf32> to vector<32x8xbf16>
    %cst_301 = arith.constant dense<0.000000e+00> : vector<32x32xf32>
    %759 = tpu.matmul %757, %758, %cst_301 {dimension_numbers = #tpu.dot_dimension_numbers<[1], [1], [0], [0], [0, 0, 1, 0], [], []>} : vector<32x8xbf16>, vector<32x8xbf16>, vector<32x32xf32> -> vector<32x32xf32>
    %760 = arith.addf %759, %396 : vector<32x32xf32>
    %cst_302 = arith.constant dense<0xFF800000> : vector<32xf32>
    %761 = vector.multi_reduction <maximumf>, %760, %cst_302 [1] : vector<32x32xf32> to vector<32xf32>
    %762 = vector.shape_cast %761 : vector<32xf32> to vector<32x1xf32>
    %763 = vector.broadcast %762 : vector<32x1xf32> to vector<32x32xf32>
    %764 = arith.subf %760, %763 : vector<32x32xf32>
    %765 = math.exp %764 : vector<32x32xf32>
    %cst_303 = arith.constant dense<0.000000e+00> : vector<32xf32>
    %766 = vector.multi_reduction <add>, %765, %cst_303 [1] : vector<32x32xf32> to vector<32xf32>
    %767 = vector.shape_cast %766 : vector<32xf32> to vector<32x1xf32>
    %768 = tpu.reciprocal %767 {approx = true} : vector<32x1xf32> -> vector<32x1xf32>
    %769 = vector.broadcast %768 : vector<32x1xf32> to vector<32x32xf32>
    %770 = arith.mulf %765, %769 : vector<32x32xf32>
    %771 = vector.extract_strided_slice %712 {offsets = [0, 16], sizes = [32, 8], strides = [1, 1]} : vector<32x32xf32> to vector<32x8xf32>
    %772 = arith.truncf %770 : vector<32x32xf32> to vector<32x32xbf16>
    %773 = arith.truncf %771 : vector<32x8xf32> to vector<32x8xbf16>
    %cst_304 = arith.constant dense<0.000000e+00> : vector<32x8xf32>
    %774 = tpu.matmul %772, %773, %cst_304 {dimension_numbers = #tpu.dot_dimension_numbers<[1], [0], [0], [1], [0, 0, 1, 1], [], []>} : vector<32x32xbf16>, vector<32x8xbf16>, vector<32x8xf32> -> vector<32x8xf32>
    %775 = vector.extract_strided_slice %714 {offsets = [0, 24], sizes = [32, 8], strides = [1, 1]} : vector<32x32xf32> to vector<32x8xf32>
    %776 = vector.extract_strided_slice %711 {offsets = [0, 24], sizes = [32, 8], strides = [1, 1]} : vector<32x32xf32> to vector<32x8xf32>
    %777 = arith.truncf %775 : vector<32x8xf32> to vector<32x8xbf16>
    %778 = arith.truncf %776 : vector<32x8xf32> to vector<32x8xbf16>
    %cst_305 = arith.constant dense<0.000000e+00> : vector<32x32xf32>
    %779 = tpu.matmul %777, %778, %cst_305 {dimension_numbers = #tpu.dot_dimension_numbers<[1], [1], [0], [0], [0, 0, 1, 0], [], []>} : vector<32x8xbf16>, vector<32x8xbf16>, vector<32x32xf32> -> vector<32x32xf32>
    %780 = arith.addf %779, %396 : vector<32x32xf32>
    %cst_306 = arith.constant dense<0xFF800000> : vector<32xf32>
    %781 = vector.multi_reduction <maximumf>, %780, %cst_306 [1] : vector<32x32xf32> to vector<32xf32>
    %782 = vector.shape_cast %781 : vector<32xf32> to vector<32x1xf32>
    %783 = vector.broadcast %782 : vector<32x1xf32> to vector<32x32xf32>
    %784 = arith.subf %780, %783 : vector<32x32xf32>
    %785 = math.exp %784 : vector<32x32xf32>
    %cst_307 = arith.constant dense<0.000000e+00> : vector<32xf32>
    %786 = vector.multi_reduction <add>, %785, %cst_307 [1] : vector<32x32xf32> to vector<32xf32>
    %787 = vector.shape_cast %786 : vector<32xf32> to vector<32x1xf32>
    %788 = tpu.reciprocal %787 {approx = true} : vector<32x1xf32> -> vector<32x1xf32>
    %789 = vector.broadcast %788 : vector<32x1xf32> to vector<32x32xf32>
    %790 = arith.mulf %785, %789 : vector<32x32xf32>
    %791 = vector.extract_strided_slice %712 {offsets = [0, 24], sizes = [32, 8], strides = [1, 1]} : vector<32x32xf32> to vector<32x8xf32>
    %792 = arith.truncf %790 : vector<32x32xf32> to vector<32x32xbf16>
    %793 = arith.truncf %791 : vector<32x8xf32> to vector<32x8xbf16>
    %cst_308 = arith.constant dense<0.000000e+00> : vector<32x8xf32>
    %794 = tpu.matmul %792, %793, %cst_308 {dimension_numbers = #tpu.dot_dimension_numbers<[1], [0], [0], [1], [0, 0, 1, 1], [], []>} : vector<32x32xbf16>, vector<32x8xbf16>, vector<32x8xf32> -> vector<32x8xf32>
    %795 = tpu.concatenate %734, %754, %774, %794 in 1 : vector<32x8xf32>, vector<32x8xf32>, vector<32x8xf32>, vector<32x8xf32> -> vector<32x32xf32>
    %c1_309 = arith.constant 1 : index
    %c0_310 = arith.constant 0 : index
    %c0_311 = arith.constant 0 : index
    %796 = vector.load %arg20[%c1_309, %c0_310, %c0_311] : memref<2x32x32xbf16, #tpu.memory_space<vmem>>, vector<1x32x32xbf16>
    %797 = vector.shape_cast %796 : vector<1x32x32xbf16> to vector<32x32xbf16>
    %798 = arith.truncf %795 : vector<32x32xf32> to vector<32x32xbf16>
    %cst_312 = arith.constant dense<0.000000e+00> : vector<32x32xf32>
    %799 = tpu.matmul %798, %797, %cst_312 {dimension_numbers = #tpu.dot_dimension_numbers<[1], [0], [0], [1], [0, 0, 1, 1], [], []>} : vector<32x32xbf16>, vector<32x32xbf16>, vector<32x32xf32> -> vector<32x32xf32>
    %c1_313 = arith.constant 1 : index
    %c0_314 = arith.constant 0 : index
    %c0_315 = arith.constant 0 : index
    %800 = vector.load %arg21[%c1_313, %c0_314, %c0_315] : memref<2x1x32xf32, #tpu.memory_space<vmem>>, vector<1x1x32xf32>
    %801 = vector.shape_cast %800 : vector<1x1x32xf32> to vector<1x32xf32>
    %802 = vector.broadcast %801 : vector<1x32xf32> to vector<32x32xf32>
    %803 = arith.addf %799, %802 : vector<32x32xf32>
    %804 = arith.addf %701, %803 : vector<32x32xf32>
    %c1_316 = arith.constant 1 : index
    %c0_317 = arith.constant 0 : index
    %c0_318 = arith.constant 0 : index
    %805 = vector.load %arg28[%c1_316, %c0_317, %c0_318] : memref<2x1x32xf32, #tpu.memory_space<vmem>>, vector<1x1x32xf32>
    %806 = vector.shape_cast %805 : vector<1x1x32xf32> to vector<1x32xf32>
    %c1_319 = arith.constant 1 : index
    %c0_320 = arith.constant 0 : index
    %c0_321 = arith.constant 0 : index
    %807 = vector.load %arg29[%c1_319, %c0_320, %c0_321] : memref<2x1x32xf32, #tpu.memory_space<vmem>>, vector<1x1x32xf32>
    %808 = vector.shape_cast %807 : vector<1x1x32xf32> to vector<1x32xf32>
    %cst_322 = arith.constant dense<0.000000e+00> : vector<32xf32>
    %809 = vector.multi_reduction <add>, %804, %cst_322 [1] : vector<32x32xf32> to vector<32xf32>
    %810 = vector.shape_cast %809 : vector<32xf32> to vector<32x1xf32>
    %cst_323 = arith.constant 3.200000e+01 : f32
    %811 = vector.broadcast %cst_323 : f32 to vector<32x1xf32>
    %812 = arith.divf %810, %811 : vector<32x1xf32>
    %813 = vector.broadcast %812 : vector<32x1xf32> to vector<32x32xf32>
    %814 = arith.subf %804, %813 : vector<32x32xf32>
    %815 = arith.mulf %814, %814 : vector<32x32xf32>
    %cst_324 = arith.constant dense<0.000000e+00> : vector<32xf32>
    %816 = vector.multi_reduction <add>, %815, %cst_324 [1] : vector<32x32xf32> to vector<32xf32>
    %817 = vector.shape_cast %816 : vector<32xf32> to vector<32x1xf32>
    %cst_325 = arith.constant 3.200000e+01 : f32
    %818 = vector.broadcast %cst_325 : f32 to vector<32x1xf32>
    %819 = arith.divf %817, %818 : vector<32x1xf32>
    %cst_326 = arith.constant 9.99999974E-6 : f32
    %820 = vector.broadcast %cst_326 : f32 to vector<32x1xf32>
    %821 = arith.addf %819, %820 : vector<32x1xf32>
    %822 = math.rsqrt %821 : vector<32x1xf32>
    %823 = vector.broadcast %822 : vector<32x1xf32> to vector<32x32xf32>
    %824 = arith.mulf %814, %823 : vector<32x32xf32>
    %825 = vector.broadcast %806 : vector<1x32xf32> to vector<32x32xf32>
    %826 = arith.mulf %824, %825 : vector<32x32xf32>
    %827 = vector.broadcast %808 : vector<1x32xf32> to vector<32x32xf32>
    %828 = arith.addf %826, %827 : vector<32x32xf32>
    %c1_327 = arith.constant 1 : index
    %c0_328 = arith.constant 0 : index
    %c0_329 = arith.constant 0 : index
    %829 = vector.load %arg22[%c1_327, %c0_328, %c0_329] : memref<2x32x32xbf16, #tpu.memory_space<vmem>>, vector<1x32x32xbf16>
    %830 = vector.shape_cast %829 : vector<1x32x32xbf16> to vector<32x32xbf16>
    %831 = arith.truncf %828 : vector<32x32xf32> to vector<32x32xbf16>
    %cst_330 = arith.constant dense<0.000000e+00> : vector<32x32xf32>
    %832 = tpu.matmul %831, %830, %cst_330 {dimension_numbers = #tpu.dot_dimension_numbers<[1], [0], [0], [1], [0, 0, 1, 1], [], []>} : vector<32x32xbf16>, vector<32x32xbf16>, vector<32x32xf32> -> vector<32x32xf32>
    %c1_331 = arith.constant 1 : index
    %c0_332 = arith.constant 0 : index
    %c0_333 = arith.constant 0 : index
    %833 = vector.load %arg23[%c1_331, %c0_332, %c0_333] : memref<2x1x32xf32, #tpu.memory_space<vmem>>, vector<1x1x32xf32>
    %834 = vector.shape_cast %833 : vector<1x1x32xf32> to vector<1x32xf32>
    %835 = vector.broadcast %834 : vector<1x32xf32> to vector<32x32xf32>
    %836 = arith.addf %832, %835 : vector<32x32xf32>
    %c1_334 = arith.constant 1 : index
    %c0_335 = arith.constant 0 : index
    %c0_336 = arith.constant 0 : index
    %837 = vector.load %arg24[%c1_334, %c0_335, %c0_336] : memref<2x32x64xbf16, #tpu.memory_space<vmem>>, vector<1x32x64xbf16>
    %838 = vector.shape_cast %837 : vector<1x32x64xbf16> to vector<32x64xbf16>
    %839 = arith.truncf %370 : vector<28x32xf32> to vector<28x32xbf16>
    %cst_337 = arith.constant dense<0.000000e+00> : vector<28x64xf32>
    %840 = tpu.matmul %839, %838, %cst_337 {dimension_numbers = #tpu.dot_dimension_numbers<[1], [0], [0], [1], [0, 0, 1, 1], [], []>} : vector<28x32xbf16>, vector<32x64xbf16>, vector<28x64xf32> -> vector<28x64xf32>
    %c1_338 = arith.constant 1 : index
    %c0_339 = arith.constant 0 : index
    %c0_340 = arith.constant 0 : index
    %841 = vector.load %arg25[%c1_338, %c0_339, %c0_340] : memref<2x1x64xf32, #tpu.memory_space<vmem>>, vector<1x1x64xf32>
    %842 = vector.shape_cast %841 : vector<1x1x64xf32> to vector<1x64xf32>
    %843 = vector.broadcast %842 : vector<1x64xf32> to vector<28x64xf32>
    %844 = arith.addf %840, %843 : vector<28x64xf32>
    %845 = vector.extract_strided_slice %844 {offsets = [0, 0], sizes = [28, 32], strides = [1, 1]} : vector<28x64xf32> to vector<28x32xf32>
    %846 = vector.extract_strided_slice %844 {offsets = [0, 32], sizes = [28, 32], strides = [1, 1]} : vector<28x64xf32> to vector<28x32xf32>
    %cst_341 = arith.constant 0.353553385 : f32
    %847 = vector.broadcast %cst_341 : f32 to vector<32x32xf32>
    %848 = arith.mulf %836, %847 : vector<32x32xf32>
    %849 = vector.extract_strided_slice %848 {offsets = [0, 0], sizes = [32, 8], strides = [1, 1]} : vector<32x32xf32> to vector<32x8xf32>
    %850 = vector.extract_strided_slice %845 {offsets = [0, 0], sizes = [28, 8], strides = [1, 1]} : vector<28x32xf32> to vector<28x8xf32>
    %851 = arith.truncf %849 : vector<32x8xf32> to vector<32x8xbf16>
    %852 = arith.truncf %850 : vector<28x8xf32> to vector<28x8xbf16>
    %cst_342 = arith.constant dense<0.000000e+00> : vector<32x28xf32>
    %853 = tpu.matmul %851, %852, %cst_342 {dimension_numbers = #tpu.dot_dimension_numbers<[1], [1], [0], [0], [0, 0, 1, 0], [], []>} : vector<32x8xbf16>, vector<28x8xbf16>, vector<32x28xf32> -> vector<32x28xf32>
    %854 = arith.addf %853, %397 : vector<32x28xf32>
    %cst_343 = arith.constant dense<0xFF800000> : vector<32xf32>
    %855 = vector.multi_reduction <maximumf>, %854, %cst_343 [1] : vector<32x28xf32> to vector<32xf32>
    %856 = vector.shape_cast %855 : vector<32xf32> to vector<32x1xf32>
    %857 = vector.broadcast %856 : vector<32x1xf32> to vector<32x28xf32>
    %858 = arith.subf %854, %857 : vector<32x28xf32>
    %859 = math.exp %858 : vector<32x28xf32>
    %cst_344 = arith.constant dense<0.000000e+00> : vector<32xf32>
    %860 = vector.multi_reduction <add>, %859, %cst_344 [1] : vector<32x28xf32> to vector<32xf32>
    %861 = vector.shape_cast %860 : vector<32xf32> to vector<32x1xf32>
    %862 = tpu.reciprocal %861 {approx = true} : vector<32x1xf32> -> vector<32x1xf32>
    %863 = vector.broadcast %862 : vector<32x1xf32> to vector<32x28xf32>
    %864 = arith.mulf %859, %863 : vector<32x28xf32>
    %865 = vector.extract_strided_slice %846 {offsets = [0, 0], sizes = [28, 8], strides = [1, 1]} : vector<28x32xf32> to vector<28x8xf32>
    %866 = arith.truncf %864 : vector<32x28xf32> to vector<32x28xbf16>
    %867 = arith.truncf %865 : vector<28x8xf32> to vector<28x8xbf16>
    %cst_345 = arith.constant dense<0.000000e+00> : vector<32x8xf32>
    %868 = tpu.matmul %866, %867, %cst_345 {dimension_numbers = #tpu.dot_dimension_numbers<[1], [0], [0], [1], [0, 0, 1, 1], [], []>} : vector<32x28xbf16>, vector<28x8xbf16>, vector<32x8xf32> -> vector<32x8xf32>
    %869 = vector.extract_strided_slice %848 {offsets = [0, 8], sizes = [32, 8], strides = [1, 1]} : vector<32x32xf32> to vector<32x8xf32>
    %870 = vector.extract_strided_slice %845 {offsets = [0, 8], sizes = [28, 8], strides = [1, 1]} : vector<28x32xf32> to vector<28x8xf32>
    %871 = arith.truncf %869 : vector<32x8xf32> to vector<32x8xbf16>
    %872 = arith.truncf %870 : vector<28x8xf32> to vector<28x8xbf16>
    %cst_346 = arith.constant dense<0.000000e+00> : vector<32x28xf32>
    %873 = tpu.matmul %871, %872, %cst_346 {dimension_numbers = #tpu.dot_dimension_numbers<[1], [1], [0], [0], [0, 0, 1, 0], [], []>} : vector<32x8xbf16>, vector<28x8xbf16>, vector<32x28xf32> -> vector<32x28xf32>
    %874 = arith.addf %873, %397 : vector<32x28xf32>
    %cst_347 = arith.constant dense<0xFF800000> : vector<32xf32>
    %875 = vector.multi_reduction <maximumf>, %874, %cst_347 [1] : vector<32x28xf32> to vector<32xf32>
    %876 = vector.shape_cast %875 : vector<32xf32> to vector<32x1xf32>
    %877 = vector.broadcast %876 : vector<32x1xf32> to vector<32x28xf32>
    %878 = arith.subf %874, %877 : vector<32x28xf32>
    %879 = math.exp %878 : vector<32x28xf32>
    %cst_348 = arith.constant dense<0.000000e+00> : vector<32xf32>
    %880 = vector.multi_reduction <add>, %879, %cst_348 [1] : vector<32x28xf32> to vector<32xf32>
    %881 = vector.shape_cast %880 : vector<32xf32> to vector<32x1xf32>
    %882 = tpu.reciprocal %881 {approx = true} : vector<32x1xf32> -> vector<32x1xf32>
    %883 = vector.broadcast %882 : vector<32x1xf32> to vector<32x28xf32>
    %884 = arith.mulf %879, %883 : vector<32x28xf32>
    %885 = vector.extract_strided_slice %846 {offsets = [0, 8], sizes = [28, 8], strides = [1, 1]} : vector<28x32xf32> to vector<28x8xf32>
    %886 = arith.truncf %884 : vector<32x28xf32> to vector<32x28xbf16>
    %887 = arith.truncf %885 : vector<28x8xf32> to vector<28x8xbf16>
    %cst_349 = arith.constant dense<0.000000e+00> : vector<32x8xf32>
    %888 = tpu.matmul %886, %887, %cst_349 {dimension_numbers = #tpu.dot_dimension_numbers<[1], [0], [0], [1], [0, 0, 1, 1], [], []>} : vector<32x28xbf16>, vector<28x8xbf16>, vector<32x8xf32> -> vector<32x8xf32>
    %889 = vector.extract_strided_slice %848 {offsets = [0, 16], sizes = [32, 8], strides = [1, 1]} : vector<32x32xf32> to vector<32x8xf32>
    %890 = vector.extract_strided_slice %845 {offsets = [0, 16], sizes = [28, 8], strides = [1, 1]} : vector<28x32xf32> to vector<28x8xf32>
    %891 = arith.truncf %889 : vector<32x8xf32> to vector<32x8xbf16>
    %892 = arith.truncf %890 : vector<28x8xf32> to vector<28x8xbf16>
    %cst_350 = arith.constant dense<0.000000e+00> : vector<32x28xf32>
    %893 = tpu.matmul %891, %892, %cst_350 {dimension_numbers = #tpu.dot_dimension_numbers<[1], [1], [0], [0], [0, 0, 1, 0], [], []>} : vector<32x8xbf16>, vector<28x8xbf16>, vector<32x28xf32> -> vector<32x28xf32>
    %894 = arith.addf %893, %397 : vector<32x28xf32>
    %cst_351 = arith.constant dense<0xFF800000> : vector<32xf32>
    %895 = vector.multi_reduction <maximumf>, %894, %cst_351 [1] : vector<32x28xf32> to vector<32xf32>
    %896 = vector.shape_cast %895 : vector<32xf32> to vector<32x1xf32>
    %897 = vector.broadcast %896 : vector<32x1xf32> to vector<32x28xf32>
    %898 = arith.subf %894, %897 : vector<32x28xf32>
    %899 = math.exp %898 : vector<32x28xf32>
    %cst_352 = arith.constant dense<0.000000e+00> : vector<32xf32>
    %900 = vector.multi_reduction <add>, %899, %cst_352 [1] : vector<32x28xf32> to vector<32xf32>
    %901 = vector.shape_cast %900 : vector<32xf32> to vector<32x1xf32>
    %902 = tpu.reciprocal %901 {approx = true} : vector<32x1xf32> -> vector<32x1xf32>
    %903 = vector.broadcast %902 : vector<32x1xf32> to vector<32x28xf32>
    %904 = arith.mulf %899, %903 : vector<32x28xf32>
    %905 = vector.extract_strided_slice %846 {offsets = [0, 16], sizes = [28, 8], strides = [1, 1]} : vector<28x32xf32> to vector<28x8xf32>
    %906 = arith.truncf %904 : vector<32x28xf32> to vector<32x28xbf16>
    %907 = arith.truncf %905 : vector<28x8xf32> to vector<28x8xbf16>
    %cst_353 = arith.constant dense<0.000000e+00> : vector<32x8xf32>
    %908 = tpu.matmul %906, %907, %cst_353 {dimension_numbers = #tpu.dot_dimension_numbers<[1], [0], [0], [1], [0, 0, 1, 1], [], []>} : vector<32x28xbf16>, vector<28x8xbf16>, vector<32x8xf32> -> vector<32x8xf32>
    %909 = vector.extract_strided_slice %848 {offsets = [0, 24], sizes = [32, 8], strides = [1, 1]} : vector<32x32xf32> to vector<32x8xf32>
    %910 = vector.extract_strided_slice %845 {offsets = [0, 24], sizes = [28, 8], strides = [1, 1]} : vector<28x32xf32> to vector<28x8xf32>
    %911 = arith.truncf %909 : vector<32x8xf32> to vector<32x8xbf16>
    %912 = arith.truncf %910 : vector<28x8xf32> to vector<28x8xbf16>
    %cst_354 = arith.constant dense<0.000000e+00> : vector<32x28xf32>
    %913 = tpu.matmul %911, %912, %cst_354 {dimension_numbers = #tpu.dot_dimension_numbers<[1], [1], [0], [0], [0, 0, 1, 0], [], []>} : vector<32x8xbf16>, vector<28x8xbf16>, vector<32x28xf32> -> vector<32x28xf32>
    %914 = arith.addf %913, %397 : vector<32x28xf32>
    %cst_355 = arith.constant dense<0xFF800000> : vector<32xf32>
    %915 = vector.multi_reduction <maximumf>, %914, %cst_355 [1] : vector<32x28xf32> to vector<32xf32>
    %916 = vector.shape_cast %915 : vector<32xf32> to vector<32x1xf32>
    %917 = vector.broadcast %916 : vector<32x1xf32> to vector<32x28xf32>
    %918 = arith.subf %914, %917 : vector<32x28xf32>
    %919 = math.exp %918 : vector<32x28xf32>
    %cst_356 = arith.constant dense<0.000000e+00> : vector<32xf32>
    %920 = vector.multi_reduction <add>, %919, %cst_356 [1] : vector<32x28xf32> to vector<32xf32>
    %921 = vector.shape_cast %920 : vector<32xf32> to vector<32x1xf32>
    %922 = tpu.reciprocal %921 {approx = true} : vector<32x1xf32> -> vector<32x1xf32>
    %923 = vector.broadcast %922 : vector<32x1xf32> to vector<32x28xf32>
    %924 = arith.mulf %919, %923 : vector<32x28xf32>
    %925 = vector.extract_strided_slice %846 {offsets = [0, 24], sizes = [28, 8], strides = [1, 1]} : vector<28x32xf32> to vector<28x8xf32>
    %926 = arith.truncf %924 : vector<32x28xf32> to vector<32x28xbf16>
    %927 = arith.truncf %925 : vector<28x8xf32> to vector<28x8xbf16>
    %cst_357 = arith.constant dense<0.000000e+00> : vector<32x8xf32>
    %928 = tpu.matmul %926, %927, %cst_357 {dimension_numbers = #tpu.dot_dimension_numbers<[1], [0], [0], [1], [0, 0, 1, 1], [], []>} : vector<32x28xbf16>, vector<28x8xbf16>, vector<32x8xf32> -> vector<32x8xf32>
    %929 = tpu.concatenate %868, %888, %908, %928 in 1 : vector<32x8xf32>, vector<32x8xf32>, vector<32x8xf32>, vector<32x8xf32> -> vector<32x32xf32>
    %c1_358 = arith.constant 1 : index
    %c0_359 = arith.constant 0 : index
    %c0_360 = arith.constant 0 : index
    %930 = vector.load %arg26[%c1_358, %c0_359, %c0_360] : memref<2x32x32xbf16, #tpu.memory_space<vmem>>, vector<1x32x32xbf16>
    %931 = vector.shape_cast %930 : vector<1x32x32xbf16> to vector<32x32xbf16>
    %932 = arith.truncf %929 : vector<32x32xf32> to vector<32x32xbf16>
    %cst_361 = arith.constant dense<0.000000e+00> : vector<32x32xf32>
    %933 = tpu.matmul %932, %931, %cst_361 {dimension_numbers = #tpu.dot_dimension_numbers<[1], [0], [0], [1], [0, 0, 1, 1], [], []>} : vector<32x32xbf16>, vector<32x32xbf16>, vector<32x32xf32> -> vector<32x32xf32>
    %c1_362 = arith.constant 1 : index
    %c0_363 = arith.constant 0 : index
    %c0_364 = arith.constant 0 : index
    %934 = vector.load %arg27[%c1_362, %c0_363, %c0_364] : memref<2x1x32xf32, #tpu.memory_space<vmem>>, vector<1x1x32xf32>
    %935 = vector.shape_cast %934 : vector<1x1x32xf32> to vector<1x32xf32>
    %936 = vector.broadcast %935 : vector<1x32xf32> to vector<32x32xf32>
    %937 = arith.addf %933, %936 : vector<32x32xf32>
    %938 = arith.addf %828, %937 : vector<32x32xf32>
    %c1_365 = arith.constant 1 : index
    %c0_366 = arith.constant 0 : index
    %c0_367 = arith.constant 0 : index
    %939 = vector.load %arg30[%c1_365, %c0_366, %c0_367] : memref<2x1x32xf32, #tpu.memory_space<vmem>>, vector<1x1x32xf32>
    %940 = vector.shape_cast %939 : vector<1x1x32xf32> to vector<1x32xf32>
    %c1_368 = arith.constant 1 : index
    %c0_369 = arith.constant 0 : index
    %c0_370 = arith.constant 0 : index
    %941 = vector.load %arg31[%c1_368, %c0_369, %c0_370] : memref<2x1x32xf32, #tpu.memory_space<vmem>>, vector<1x1x32xf32>
    %942 = vector.shape_cast %941 : vector<1x1x32xf32> to vector<1x32xf32>
    %cst_371 = arith.constant dense<0.000000e+00> : vector<32xf32>
    %943 = vector.multi_reduction <add>, %938, %cst_371 [1] : vector<32x32xf32> to vector<32xf32>
    %944 = vector.shape_cast %943 : vector<32xf32> to vector<32x1xf32>
    %cst_372 = arith.constant 3.200000e+01 : f32
    %945 = vector.broadcast %cst_372 : f32 to vector<32x1xf32>
    %946 = arith.divf %944, %945 : vector<32x1xf32>
    %947 = vector.broadcast %946 : vector<32x1xf32> to vector<32x32xf32>
    %948 = arith.subf %938, %947 : vector<32x32xf32>
    %949 = arith.mulf %948, %948 : vector<32x32xf32>
    %cst_373 = arith.constant dense<0.000000e+00> : vector<32xf32>
    %950 = vector.multi_reduction <add>, %949, %cst_373 [1] : vector<32x32xf32> to vector<32xf32>
    %951 = vector.shape_cast %950 : vector<32xf32> to vector<32x1xf32>
    %cst_374 = arith.constant 3.200000e+01 : f32
    %952 = vector.broadcast %cst_374 : f32 to vector<32x1xf32>
    %953 = arith.divf %951, %952 : vector<32x1xf32>
    %cst_375 = arith.constant 9.99999974E-6 : f32
    %954 = vector.broadcast %cst_375 : f32 to vector<32x1xf32>
    %955 = arith.addf %953, %954 : vector<32x1xf32>
    %956 = math.rsqrt %955 : vector<32x1xf32>
    %957 = vector.broadcast %956 : vector<32x1xf32> to vector<32x32xf32>
    %958 = arith.mulf %948, %957 : vector<32x32xf32>
    %959 = vector.broadcast %940 : vector<1x32xf32> to vector<32x32xf32>
    %960 = arith.mulf %958, %959 : vector<32x32xf32>
    %961 = vector.broadcast %942 : vector<1x32xf32> to vector<32x32xf32>
    %962 = arith.addf %960, %961 : vector<32x32xf32>
    %c1_376 = arith.constant 1 : index
    %c0_377 = arith.constant 0 : index
    %c0_378 = arith.constant 0 : index
    %963 = vector.load %arg34[%c1_376, %c0_377, %c0_378] : memref<2x32x64xbf16, #tpu.memory_space<vmem>>, vector<1x32x64xbf16>
    %964 = vector.shape_cast %963 : vector<1x32x64xbf16> to vector<32x64xbf16>
    %965 = arith.truncf %962 : vector<32x32xf32> to vector<32x32xbf16>
    %cst_379 = arith.constant dense<0.000000e+00> : vector<32x64xf32>
    %966 = tpu.matmul %965, %964, %cst_379 {dimension_numbers = #tpu.dot_dimension_numbers<[1], [0], [0], [1], [0, 0, 1, 1], [], []>} : vector<32x32xbf16>, vector<32x64xbf16>, vector<32x64xf32> -> vector<32x64xf32>
    %c1_380 = arith.constant 1 : index
    %c0_381 = arith.constant 0 : index
    %c0_382 = arith.constant 0 : index
    %967 = vector.load %arg35[%c1_380, %c0_381, %c0_382] : memref<2x1x64xf32, #tpu.memory_space<vmem>>, vector<1x1x64xf32>
    %968 = vector.shape_cast %967 : vector<1x1x64xf32> to vector<1x64xf32>
    %969 = vector.broadcast %968 : vector<1x64xf32> to vector<32x64xf32>
    %970 = arith.addf %966, %969 : vector<32x64xf32>
    %cst_383 = arith.constant 0.000000e+00 : f32
    %971 = vector.broadcast %cst_383 : f32 to vector<32x64xf32>
    %972 = arith.maximumf %970, %971 : vector<32x64xf32>
    %c1_384 = arith.constant 1 : index
    %c0_385 = arith.constant 0 : index
    %c0_386 = arith.constant 0 : index
    %973 = vector.load %arg36[%c1_384, %c0_385, %c0_386] : memref<2x64x32xbf16, #tpu.memory_space<vmem>>, vector<1x64x32xbf16>
    %974 = vector.shape_cast %973 : vector<1x64x32xbf16> to vector<64x32xbf16>
    %975 = arith.truncf %972 : vector<32x64xf32> to vector<32x64xbf16>
    %cst_387 = arith.constant dense<0.000000e+00> : vector<32x32xf32>
    %976 = tpu.matmul %975, %974, %cst_387 {dimension_numbers = #tpu.dot_dimension_numbers<[1], [0], [0], [1], [0, 0, 1, 1], [], []>} : vector<32x64xbf16>, vector<64x32xbf16>, vector<32x32xf32> -> vector<32x32xf32>
    %c1_388 = arith.constant 1 : index
    %c0_389 = arith.constant 0 : index
    %c0_390 = arith.constant 0 : index
    %977 = vector.load %arg37[%c1_388, %c0_389, %c0_390] : memref<2x1x32xf32, #tpu.memory_space<vmem>>, vector<1x1x32xf32>
    %978 = vector.shape_cast %977 : vector<1x1x32xf32> to vector<1x32xf32>
    %979 = vector.broadcast %978 : vector<1x32xf32> to vector<32x32xf32>
    %980 = arith.addf %976, %979 : vector<32x32xf32>
    %981 = arith.addf %962, %980 : vector<32x32xf32>
    %c1_391 = arith.constant 1 : index
    %c0_392 = arith.constant 0 : index
    %c0_393 = arith.constant 0 : index
    %982 = vector.load %arg32[%c1_391, %c0_392, %c0_393] : memref<2x1x32xf32, #tpu.memory_space<vmem>>, vector<1x1x32xf32>
    %983 = vector.shape_cast %982 : vector<1x1x32xf32> to vector<1x32xf32>
    %c1_394 = arith.constant 1 : index
    %c0_395 = arith.constant 0 : index
    %c0_396 = arith.constant 0 : index
    %984 = vector.load %arg33[%c1_394, %c0_395, %c0_396] : memref<2x1x32xf32, #tpu.memory_space<vmem>>, vector<1x1x32xf32>
    %985 = vector.shape_cast %984 : vector<1x1x32xf32> to vector<1x32xf32>
    %cst_397 = arith.constant dense<0.000000e+00> : vector<32xf32>
    %986 = vector.multi_reduction <add>, %981, %cst_397 [1] : vector<32x32xf32> to vector<32xf32>
    %987 = vector.shape_cast %986 : vector<32xf32> to vector<32x1xf32>
    %cst_398 = arith.constant 3.200000e+01 : f32
    %988 = vector.broadcast %cst_398 : f32 to vector<32x1xf32>
    %989 = arith.divf %987, %988 : vector<32x1xf32>
    %990 = vector.broadcast %989 : vector<32x1xf32> to vector<32x32xf32>
    %991 = arith.subf %981, %990 : vector<32x32xf32>
    %992 = arith.mulf %991, %991 : vector<32x32xf32>
    %cst_399 = arith.constant dense<0.000000e+00> : vector<32xf32>
    %993 = vector.multi_reduction <add>, %992, %cst_399 [1] : vector<32x32xf32> to vector<32xf32>
    %994 = vector.shape_cast %993 : vector<32xf32> to vector<32x1xf32>
    %cst_400 = arith.constant 3.200000e+01 : f32
    %995 = vector.broadcast %cst_400 : f32 to vector<32x1xf32>
    %996 = arith.divf %994, %995 : vector<32x1xf32>
    %cst_401 = arith.constant 9.99999974E-6 : f32
    %997 = vector.broadcast %cst_401 : f32 to vector<32x1xf32>
    %998 = arith.addf %996, %997 : vector<32x1xf32>
    %999 = math.rsqrt %998 : vector<32x1xf32>
    %1000 = vector.broadcast %999 : vector<32x1xf32> to vector<32x32xf32>
    %1001 = arith.mulf %991, %1000 : vector<32x32xf32>
    %1002 = vector.broadcast %983 : vector<1x32xf32> to vector<32x32xf32>
    %1003 = arith.mulf %1001, %1002 : vector<32x32xf32>
    %1004 = vector.broadcast %985 : vector<1x32xf32> to vector<32x32xf32>
    %1005 = arith.addf %1003, %1004 : vector<32x32xf32>
    %c0_402 = arith.constant 0 : index
    %c0_403 = arith.constant 0 : index
    %1006 = vector.load %arg38[%c0_402, %c0_403] : memref<1x32xf32, #tpu.memory_space<vmem>>, vector<1x32xf32>
    %c0_404 = arith.constant 0 : index
    %c0_405 = arith.constant 0 : index
    %1007 = vector.load %arg39[%c0_404, %c0_405] : memref<1x32xf32, #tpu.memory_space<vmem>>, vector<1x32xf32>
    %cst_406 = arith.constant dense<0.000000e+00> : vector<32xf32>
    %1008 = vector.multi_reduction <add>, %1005, %cst_406 [1] : vector<32x32xf32> to vector<32xf32>
    %1009 = vector.shape_cast %1008 : vector<32xf32> to vector<32x1xf32>
    %cst_407 = arith.constant 3.200000e+01 : f32
    %1010 = vector.broadcast %cst_407 : f32 to vector<32x1xf32>
    %1011 = arith.divf %1009, %1010 : vector<32x1xf32>
    %1012 = vector.broadcast %1011 : vector<32x1xf32> to vector<32x32xf32>
    %1013 = arith.subf %1005, %1012 : vector<32x32xf32>
    %1014 = arith.mulf %1013, %1013 : vector<32x32xf32>
    %cst_408 = arith.constant dense<0.000000e+00> : vector<32xf32>
    %1015 = vector.multi_reduction <add>, %1014, %cst_408 [1] : vector<32x32xf32> to vector<32xf32>
    %1016 = vector.shape_cast %1015 : vector<32xf32> to vector<32x1xf32>
    %cst_409 = arith.constant 3.200000e+01 : f32
    %1017 = vector.broadcast %cst_409 : f32 to vector<32x1xf32>
    %1018 = arith.divf %1016, %1017 : vector<32x1xf32>
    %cst_410 = arith.constant 9.99999974E-6 : f32
    %1019 = vector.broadcast %cst_410 : f32 to vector<32x1xf32>
    %1020 = arith.addf %1018, %1019 : vector<32x1xf32>
    %1021 = math.rsqrt %1020 : vector<32x1xf32>
    %1022 = vector.broadcast %1021 : vector<32x1xf32> to vector<32x32xf32>
    %1023 = arith.mulf %1013, %1022 : vector<32x32xf32>
    %1024 = vector.broadcast %1006 : vector<1x32xf32> to vector<32x32xf32>
    %1025 = arith.mulf %1023, %1024 : vector<32x32xf32>
    %1026 = vector.broadcast %1007 : vector<1x32xf32> to vector<32x32xf32>
    %1027 = arith.addf %1025, %1026 : vector<32x32xf32>
    %c0_411 = arith.constant 0 : index
    %c0_412 = arith.constant 0 : index
    %1028 = vector.load %arg40[%c0_411, %c0_412] : memref<32x128xbf16, #tpu.memory_space<vmem>>, vector<32x128xbf16>
    %1029 = arith.truncf %1027 : vector<32x32xf32> to vector<32x32xbf16>
    %cst_413 = arith.constant dense<0.000000e+00> : vector<32x128xf32>
    %1030 = tpu.matmul %1029, %1028, %cst_413 {dimension_numbers = #tpu.dot_dimension_numbers<[1], [0], [0], [1], [0, 0, 1, 1], [], []>} : vector<32x32xbf16>, vector<32x128xbf16>, vector<32x128xf32> -> vector<32x128xf32>
    %c0_414 = arith.constant 0 : index
    %c0_415 = arith.constant 0 : index
    %1031 = vector.load %arg41[%c0_414, %c0_415] : memref<1x128xf32, #tpu.memory_space<vmem>>, vector<1x128xf32>
    %1032 = vector.broadcast %1031 : vector<1x128xf32> to vector<32x128xf32>
    %1033 = arith.addf %1030, %1032 : vector<32x128xf32>
    %c0_416 = arith.constant 0 : index
    %c0_417 = arith.constant 0 : index
    %1034 = vector.load %arg42[%c0_416, %c0_417] : memref<32x128xf32, #tpu.memory_space<vmem>>, vector<32x128xf32>
    tpu.vector_store %arg42[%c0_416, %c0_417], %1033 {strides = array<i32>} : memref<32x128xf32, #tpu.memory_space<vmem>>, vector<32x128xf32>,
    return
  }
}

</mosaic_0001>

<llo_original>
// kernel: le.14
$region0: #{le.14}
  %s0 = inlined_call_operand.vmem [shape: s32[4,8], index: 0, kind: input, shape index: {}]
  %s1 = inlined_call_operand.vmem [shape: s32[32], index: 1, kind: output, shape index: {}]
  $region1: #{le.14} parent=0
    #allocation0 [shape = 'u8[4096]{0}', space=vmem, size = 0x1000, scoped, tag = 'scoped mem for output reshape']
    #allocation1 [shape = 'u8[4096]{0}', space=vmem, size = 0x1000, scoped, tag = 'scoped mem for input reshape']
    %s3 = sshllo.u32 0, 4
    %v4 = vld [vmem:[%s0] sm:%s3]
    %5 = vst [vmem:[#allocation1] sm:%s3] %v4
    %v6 = vld [vmem:[#allocation1] sm:$0x1]
    %vm7 = vcmask 64512
    %8 = vst.msk [vmem:[#allocation0] sm:$0x1] %vm7, %v6
    %s9 = scalar_lea.vmem [#allocation1], 3
    %v10 = vld [vmem:[%s9] sm:$0x1]
    %11 = vrot.lane.b32.xlu0 %v10, 24
    %v12 = vpop.permute.xlu0 %11
    %vm13 = vcmask 261312
    %14 = vst.msk [vmem:[#allocation0] sm:$0x1] %vm13, %v12
    %s15 = scalar_lea.vmem [#allocation1], 2
    %v16 = vld [vmem:[%s15] sm:$0x1]
    %17 = vrot.lane.b32.xlu0 %v16, 16
    %v18 = vpop.permute.xlu0 %17
    %vm19 = vcmask 195712
    %20 = vst.msk [vmem:[#allocation0] sm:$0x1] %vm19, %v18
    %s21 = scalar_lea.vmem [#allocation1], 1
    %v22 = vld [vmem:[%s21] sm:$0x1]
    %23 = vrot.lane.b32.xlu0 %v22, 8
    %v24 = vpop.permute.xlu0 %23
    %vm25 = vcmask 130112
    %26 = vst.msk [vmem:[#allocation0] sm:$0x1] %vm25, %v24
    %s28 = sshllo.u32 0, 1
    %v30 = vld [vmem:[#allocation0] sm:%s28]
    %s31 = sshllo.u32 0, 1
    %32 = vst [vmem:[%s1] sm:%s31] %v30

// kernel: eq.22
$region0: #{eq.22}
  %s0 = inlined_call_operand.vmem [shape: s32[4,7], index: 0, kind: input, shape index: {}]
  %s1 = inlined_call_operand.vmem [shape: s32[28], index: 1, kind: output, shape index: {}]
  $region1: #{eq.22} parent=0
    #allocation0 [shape = 'u8[4096]{0}', space=vmem, size = 0x1000, scoped, tag = 'scoped mem for output reshape']
    #allocation1 [shape = 'u8[4096]{0}', space=vmem, size = 0x1000, scoped, tag = 'scoped mem for input reshape']
    %s3 = sshllo.u32 0, 4
    %v4 = vld [vmem:[%s0] sm:%s3]
    %5 = vst [vmem:[#allocation1] sm:%s3] %v4
    %v6 = vld [vmem:[#allocation1] sm:$0x1]
    %vm7 = vcmask 56320
    %8 = vst.msk [vmem:[#allocation0] sm:$0x1] %vm7, %v6
    %s9 = scalar_lea.vmem [#allocation1], 3
    %v10 = vld [vmem:[%s9] sm:$0x1]
    %11 = vrot.lane.b32.xlu0 %v10, 21
    %v12 = vpop.permute.xlu0 %11
    %vm13 = vcmask 228520
    %14 = vst.msk [vmem:[#allocation0] sm:$0x1] %vm13, %v12
    %s15 = scalar_lea.vmem [#allocation1], 2
    %v16 = vld [vmem:[%s15] sm:$0x1]
    %17 = vrot.lane.b32.xlu0 %v16, 14
    %v18 = vpop.permute.xlu0 %17
    %vm19 = vcmask 171120
    %20 = vst.msk [vmem:[#allocation0] sm:$0x1] %vm19, %v18
    %s21 = scalar_lea.vmem [#allocation1], 1
    %v22 = vld [vmem:[%s21] sm:$0x1]
    %23 = vrot.lane.b32.xlu0 %v22, 7
    %v24 = vpop.permute.xlu0 %23
    %vm25 = vcmask 113720
    %26 = vst.msk [vmem:[#allocation0] sm:$0x1] %vm25, %v24
    %s28 = sshllo.u32 0, 1
    %v30 = vld [vmem:[#allocation0] sm:%s28]
    %s31 = sshllo.u32 0, 1
    %32 = vst [vmem:[%s1] sm:%s31] %v30

// kernel: forward.1
$region0: #{forward.1}
  #allocation0 [shape = 'u32[]', space=smem, size = 0x4, offset = 0x4, fixed_abs, tag = 'smem constant byte address 0x4 - core index']
  #allocation1 [shape = 'u32[144,128]{1,0:T(1,128)}', space=vmem, size = 0x12000, scoped, tag = 'internal scratch']
  %s0 = inlined_call_operand.smem [shape: u32[46], index: -1, kind: input, shape index: {}]
  %s1 = sld [smem:[%s0]]
  %s2 = scalar_lea.smem %s0, 1
  %s3 = sld [smem:[%s2]]
  %s4 = scalar_lea.smem %s0, 2
  %s5 = sld [smem:[%s4]]
  %s6 = scalar_lea.smem %s0, 3
  %s7 = sld [smem:[%s6]]
  %s8 = scalar_lea.smem %s0, 4
  %s9 = sld [smem:[%s8]]
  %s10 = scalar_lea.smem %s0, 5
  %s11 = sld [smem:[%s10]]
  %s12 = scalar_lea.smem %s0, 6
  %s13 = sld [smem:[%s12]]
  %s14 = scalar_lea.smem %s0, 7
  %s15 = sld [smem:[%s14]]
  %s16 = scalar_lea.smem %s0, 8
  %s17 = sld [smem:[%s16]]
  %s18 = scalar_lea.smem %s0, 9
  %s19 = sld [smem:[%s18]]
  %s20 = scalar_lea.smem %s0, 10
  %s21 = sld [smem:[%s20]]
  %s22 = scalar_lea.smem %s0, 11
  %s23 = sld [smem:[%s22]]
  %s24 = scalar_lea.smem %s0, 12
  %s25 = sld [smem:[%s24]]
  %s26 = scalar_lea.smem %s0, 13
  %s27 = sld [smem:[%s26]]
  %s28 = scalar_lea.smem %s0, 14
  %s29 = sld [smem:[%s28]]
  %s30 = scalar_lea.smem %s0, 15
  %s31 = sld [smem:[%s30]]
  %s32 = scalar_lea.smem %s0, 16
  %s33 = sld [smem:[%s32]]
  %s34 = scalar_lea.smem %s0, 17
  %s35 = sld [smem:[%s34]]
  %s36 = scalar_lea.smem %s0, 18
  %s37 = sld [smem:[%s36]]
  %s38 = scalar_lea.smem %s0, 19
  %s39 = sld [smem:[%s38]]
  %s40 = scalar_lea.smem %s0, 20
  %s41 = sld [smem:[%s40]]
  %s42 = scalar_lea.smem %s0, 21
  %s43 = sld [smem:[%s42]]
  %s44 = scalar_lea.smem %s0, 22
  %s45 = sld [smem:[%s44]]
  %s46 = scalar_lea.smem %s0, 23
  %s47 = sld [smem:[%s46]]
  %s48 = scalar_lea.smem %s0, 24
  %s49 = sld [smem:[%s48]]
  %s50 = scalar_lea.smem %s0, 25
  %s51 = sld [smem:[%s50]]
  %s52 = scalar_lea.smem %s0, 26
  %s53 = sld [smem:[%s52]]
  %s54 = scalar_lea.smem %s0, 27
  %s55 = sld [smem:[%s54]]
  %s56 = scalar_lea.smem %s0, 28
  %s57 = sld [smem:[%s56]]
  %s58 = scalar_lea.smem %s0, 29
  %s59 = sld [smem:[%s58]]
  %s60 = scalar_lea.smem %s0, 30
  %s61 = sld [smem:[%s60]]
  %s62 = scalar_lea.smem %s0, 31
  %s63 = sld [smem:[%s62]]
  %s64 = scalar_lea.smem %s0, 32
  %s65 = sld [smem:[%s64]]
  %s66 = scalar_lea.smem %s0, 33
  %s67 = sld [smem:[%s66]]
  %s68 = scalar_lea.smem %s0, 34
  %s69 = sld [smem:[%s68]]
  %s70 = scalar_lea.smem %s0, 35
  %s71 = sld [smem:[%s70]]
  %s72 = scalar_lea.smem %s0, 36
  %s73 = sld [smem:[%s72]]
  %s74 = scalar_lea.smem %s0, 37
  %s75 = sld [smem:[%s74]]
  %s76 = scalar_lea.smem %s0, 38
  %s77 = sld [smem:[%s76]]
  %s78 = scalar_lea.smem %s0, 39
  %s79 = sld [smem:[%s78]]
  %s80 = scalar_lea.smem %s0, 40
  %s81 = sld [smem:[%s80]]
  %s82 = scalar_lea.smem %s0, 41
  %s83 = sld [smem:[%s82]]
  %s84 = scalar_lea.smem %s0, 42
  %s85 = sld [smem:[%s84]]
  %s86 = scalar_lea.smem %s0, 43
  %s87 = sld [smem:[%s86]]
  %s88 = scalar_lea.smem %s0, 44
  %s89 = sld [smem:[%s88]]
  %s90 = scalar_lea.smem %s0, 45
  %s91 = sld [smem:[%s90]]
  %92 = xla_tuple %s85, %s87, %s89, %s91
  %s93 = sld [smem:[#allocation0]]
  $region202: #{forward.1} parent=0
    _
  %s95 = ssub.s32 1, %s93
  %s96 = scalar_select 0, %s95, %s93
  $region1: #{forward.1} parent=0
    #allocation2 [shape = 'u8[16384]{0}', space=vmem, size = 0x4000, scoped, tag = 'output window, operand 0, single buffered']
    #allocation3 [shape = 's32[1]{0}', space=sflag, size = 0x4, scoped, tag = 'scoped memory for forward.1']
    #allocation4 [shape = 'u8[512]{0}', space=vmem, size = 0x400, scoped, tag = 'output window, operand 2, single buffered']
    #allocation5 [shape = 's32[1]{0}', space=sflag, size = 0x4, scoped, tag = 'scoped memory for forward.1']
    #allocation6 [shape = 'u8[512]{0}', space=vmem, size = 0x400, scoped, tag = 'output window, operand 3, single buffered']
    %97 = vsyncpa [#allocation3], 0
    %98 = vsyncpa [#allocation5], 0
    // Predicated region
    $region2: #{forward.1} parent=1 // pred_check
      _
    $region3: #{forward.1} parent=1 // pred_check_branch
      %100 = sbr.rel (0) target = $region5
    $region4: #{forward.1} parent=1 // pred_region
      _
    $region5: #{forward.1} parent=1 // pred_fallthru
      _
    // Predicated region
    $region6: #{forward.1} parent=1 // pred_check
      _
    $region7: #{forward.1} parent=1 // pred_check_branch
      %102 = sbr.rel (0) target = $region9
    $region8: #{forward.1} parent=1 // pred_region
      _
    $region9: #{forward.1} parent=1 // pred_fallthru
      _
    // Predicated region
    $region10: #{forward.1} parent=1 // pred_check
      _
    $region11: #{forward.1} parent=1 // pred_check_branch
      %104 = sbr.rel (0) target = $region13
    $region12: #{forward.1} parent=1 // pred_region
      _
    $region13: #{forward.1} parent=1 // pred_fallthru
      _
    // Predicated region
    $region14: #{forward.1} parent=1 // pred_check
      _
    $region15: #{forward.1} parent=1 // pred_check_branch
      %106 = sbr.rel (0) target = $region17
    $region16: #{forward.1} parent=1 // pred_region
      _
    $region17: #{forward.1} parent=1 // pred_fallthru
      _
    // Predicated region
    $region18: #{forward.1} parent=1 // pred_check
      _
    $region19: #{forward.1} parent=1 // pred_check_branch
      %108 = sbr.rel (0) target = $region21
    $region20: #{forward.1} parent=1 // pred_region
      _
    $region21: #{forward.1} parent=1 // pred_fallthru
      _
    // Predicated region
    $region22: #{forward.1} parent=1 // pred_check
      _
    $region23: #{forward.1} parent=1 // pred_check_branch
      %110 = sbr.rel (0) target = $region25
    $region24: #{forward.1} parent=1 // pred_region
      _
    $region25: #{forward.1} parent=1 // pred_fallthru
      _
    // Predicated region
    $region26: #{forward.1} parent=1 // pred_check
      _
    $region27: #{forward.1} parent=1 // pred_check_branch
      %112 = sbr.rel (0) target = $region29
    $region28: #{forward.1} parent=1 // pred_region
      _
    $region29: #{forward.1} parent=1 // pred_fallthru
      _
    // Predicated region
    $region30: #{forward.1} parent=1 // pred_check
      _
    $region31: #{forward.1} parent=1 // pred_check_branch
      %114 = sbr.rel (0) target = $region33
    $region32: #{forward.1} parent=1 // pred_region
      _
    $region33: #{forward.1} parent=1 // pred_fallthru
      _
    // Predicated region
    $region34: #{forward.1} parent=1 // pred_check
      _
    $region35: #{forward.1} parent=1 // pred_check_branch
      %116 = sbr.rel (0) target = $region37
    $region36: #{forward.1} parent=1 // pred_region
      _
    $region37: #{forward.1} parent=1 // pred_fallthru
      _
    // Predicated region
    $region38: #{forward.1} parent=1 // pred_check
      _
    $region39: #{forward.1} parent=1 // pred_check_branch
      %118 = sbr.rel (0) target = $region41
    $region40: #{forward.1} parent=1 // pred_region
      _
    $region41: #{forward.1} parent=1 // pred_fallthru
      _
    // Predicated region
    $region42: #{forward.1} parent=1 // pred_check
      _
    $region43: #{forward.1} parent=1 // pred_check_branch
      %120 = sbr.rel (0) target = $region45
    $region44: #{forward.1} parent=1 // pred_region
      _
    $region45: #{forward.1} parent=1 // pred_fallthru
      _
    // Predicated region
    $region46: #{forward.1} parent=1 // pred_check
      _
    $region47: #{forward.1} parent=1 // pred_check_branch
      %122 = sbr.rel (0) target = $region49
    $region48: #{forward.1} parent=1 // pred_region
      _
    $region49: #{forward.1} parent=1 // pred_fallthru
      _
    // Predicated region
    $region50: #{forward.1} parent=1 // pred_check
      _
    $region51: #{forward.1} parent=1 // pred_check_branch
      %124 = sbr.rel (0) target = $region53
    $region52: #{forward.1} parent=1 // pred_region
      _
    $region53: #{forward.1} parent=1 // pred_fallthru
      _
    // Predicated region
    $region54: #{forward.1} parent=1 // pred_check
      _
    $region55: #{forward.1} parent=1 // pred_check_branch
      %126 = sbr.rel (0) target = $region57
    $region56: #{forward.1} parent=1 // pred_region
      _
    $region57: #{forward.1} parent=1 // pred_fallthru
      _
    // Predicated region
    $region58: #{forward.1} parent=1 // pred_check
      _
    $region59: #{forward.1} parent=1 // pred_check_branch
      %128 = sbr.rel (0) target = $region61
    $region60: #{forward.1} parent=1 // pred_region
      _
    $region61: #{forward.1} parent=1 // pred_fallthru
      _
    // Predicated region
    $region62: #{forward.1} parent=1 // pred_check
      _
    $region63: #{forward.1} parent=1 // pred_check_branch
      %130 = sbr.rel (0) target = $region65
    $region64: #{forward.1} parent=1 // pred_region
      _
    $region65: #{forward.1} parent=1 // pred_fallthru
      _
    // Predicated region
    $region66: #{forward.1} parent=1 // pred_check
      _
    $region67: #{forward.1} parent=1 // pred_check_branch
      %132 = sbr.rel (0) target = $region69
    $region68: #{forward.1} parent=1 // pred_region
      _
    $region69: #{forward.1} parent=1 // pred_fallthru
      _
    // Predicated region
    $region70: #{forward.1} parent=1 // pred_check
      _
    $region71: #{forward.1} parent=1 // pred_check_branch
      %134 = sbr.rel (0) target = $region73
    $region72: #{forward.1} parent=1 // pred_region
      _
    $region73: #{forward.1} parent=1 // pred_fallthru
      _
    // Predicated region
    $region74: #{forward.1} parent=1 // pred_check
      _
    $region75: #{forward.1} parent=1 // pred_check_branch
      %136 = sbr.rel (0) target = $region77
    $region76: #{forward.1} parent=1 // pred_region
      _
    $region77: #{forward.1} parent=1 // pred_fallthru
      _
    // Predicated region
    $region78: #{forward.1} parent=1 // pred_check
      _
    $region79: #{forward.1} parent=1 // pred_check_branch
      %138 = sbr.rel (0) target = $region81
    $region80: #{forward.1} parent=1 // pred_region
      _
    $region81: #{forward.1} parent=1 // pred_fallthru
      _
    // Predicated region
    $region82: #{forward.1} parent=1 // pred_check
      _
    $region83: #{forward.1} parent=1 // pred_check_branch
      %140 = sbr.rel (0) target = $region85
    $region84: #{forward.1} parent=1 // pred_region
      _
    $region85: #{forward.1} parent=1 // pred_fallthru
      _
    // Predicated region
    $region86: #{forward.1} parent=1 // pred_check
      _
    $region87: #{forward.1} parent=1 // pred_check_branch
      %142 = sbr.rel (0) target = $region89
    $region88: #{forward.1} parent=1 // pred_region
      _
    $region89: #{forward.1} parent=1 // pred_fallthru
      _
    // Predicated region
    $region90: #{forward.1} parent=1 // pred_check
      _
    $region91: #{forward.1} parent=1 // pred_check_branch
      %144 = sbr.rel (0) target = $region93
    $region92: #{forward.1} parent=1 // pred_region
      _
    $region93: #{forward.1} parent=1 // pred_fallthru
      _
    // Predicated region
    $region94: #{forward.1} parent=1 // pred_check
      _
    $region95: #{forward.1} parent=1 // pred_check_branch
      %146 = sbr.rel (0) target = $region97
    $region96: #{forward.1} parent=1 // pred_region
      _
    $region97: #{forward.1} parent=1 // pred_fallthru
      _
    // Predicated region
    $region98: #{forward.1} parent=1 // pred_check
      _
    $region99: #{forward.1} parent=1 // pred_check_branch
      %148 = sbr.rel (0) target = $region101
    $region100: #{forward.1} parent=1 // pred_region
      _
    $region101: #{forward.1} parent=1 // pred_fallthru
      _
    // Predicated region
    $region102: #{forward.1} parent=1 // pred_check
      _
    $region103: #{forward.1} parent=1 // pred_check_branch
      %150 = sbr.rel (0) target = $region105
    $region104: #{forward.1} parent=1 // pred_region
      _
    $region105: #{forward.1} parent=1 // pred_fallthru
      _
    // Predicated region
    $region106: #{forward.1} parent=1 // pred_check
      _
    $region107: #{forward.1} parent=1 // pred_check_branch
      %152 = sbr.rel (0) target = $region109
    $region108: #{forward.1} parent=1 // pred_region
      _
    $region109: #{forward.1} parent=1 // pred_fallthru
      _
    // Predicated region
    $region110: #{forward.1} parent=1 // pred_check
      _
    $region111: #{forward.1} parent=1 // pred_check_branch
      %154 = sbr.rel (0) target = $region113
    $region112: #{forward.1} parent=1 // pred_region
      _
    $region113: #{forward.1} parent=1 // pred_fallthru
      _
    // Predicated region
    $region114: #{forward.1} parent=1 // pred_check
      _
    $region115: #{forward.1} parent=1 // pred_check_branch
      %156 = sbr.rel (0) target = $region117
    $region116: #{forward.1} parent=1 // pred_region
      _
    $region117: #{forward.1} parent=1 // pred_fallthru
      _
    // Predicated region
    $region118: #{forward.1} parent=1 // pred_check
      _
    $region119: #{forward.1} parent=1 // pred_check_branch
      %158 = sbr.rel (0) target = $region121
    $region120: #{forward.1} parent=1 // pred_region
      _
    $region121: #{forward.1} parent=1 // pred_fallthru
      _
    // Predicated region
    $region122: #{forward.1} parent=1 // pred_check
      _
    $region123: #{forward.1} parent=1 // pred_check_branch
      %160 = sbr.rel (0) target = $region125
    $region124: #{forward.1} parent=1 // pred_region
      _
    $region125: #{forward.1} parent=1 // pred_fallthru
      _
    // Predicated region
    $region126: #{forward.1} parent=1 // pred_check
      _
    $region127: #{forward.1} parent=1 // pred_check_branch
      %162 = sbr.rel (0) target = $region129
    $region128: #{forward.1} parent=1 // pred_region
      _
    $region129: #{forward.1} parent=1 // pred_fallthru
      _
    // Predicated region
    $region130: #{forward.1} parent=1 // pred_check
      _
    $region131: #{forward.1} parent=1 // pred_check_branch
      %164 = sbr.rel (0) target = $region133
    $region132: #{forward.1} parent=1 // pred_region
      _
    $region133: #{forward.1} parent=1 // pred_fallthru
      _
    // Predicated region
    $region134: #{forward.1} parent=1 // pred_check
      _
    $region135: #{forward.1} parent=1 // pred_check_branch
      %166 = sbr.rel (0) target = $region137
    $region136: #{forward.1} parent=1 // pred_region
      _
    $region137: #{forward.1} parent=1 // pred_fallthru
      _
    // Predicated region
    $region138: #{forward.1} parent=1 // pred_check
      _
    $region139: #{forward.1} parent=1 // pred_check_branch
      %168 = sbr.rel (0) target = $region141
    $region140: #{forward.1} parent=1 // pred_region
      _
    $region141: #{forward.1} parent=1 // pred_fallthru
      _
    // Predicated region
    $region142: #{forward.1} parent=1 // pred_check
      _
    $region143: #{forward.1} parent=1 // pred_check_branch
      %170 = sbr.rel (0) target = $region145
    $region144: #{forward.1} parent=1 // pred_region
      _
    $region145: #{forward.1} parent=1 // pred_fallthru
      _
    // Predicated region
    $region146: #{forward.1} parent=1 // pred_check
      _
    $region147: #{forward.1} parent=1 // pred_check_branch
      %172 = sbr.rel (0) target = $region149
    $region148: #{forward.1} parent=1 // pred_region
      _
    $region149: #{forward.1} parent=1 // pred_fallthru
      _
    // Predicated region
    $region150: #{forward.1} parent=1 // pred_check
      _
    $region151: #{forward.1} parent=1 // pred_check_branch
      %174 = sbr.rel (0) target = $region153
    $region152: #{forward.1} parent=1 // pred_region
      _
    $region153: #{forward.1} parent=1 // pred_fallthru
      _
    // Predicated region
    $region154: #{forward.1} parent=1 // pred_check
      _
    $region155: #{forward.1} parent=1 // pred_check_branch
      %176 = sbr.rel (0) target = $region157
    $region156: #{forward.1} parent=1 // pred_region
      _
    $region157: #{forward.1} parent=1 // pred_fallthru
      _
    // Predicated region
    $region158: #{forward.1} parent=1 // pred_check
      _
    $region159: #{forward.1} parent=1 // pred_check_branch
      %178 = sbr.rel (0) target = $region161
    $region160: #{forward.1} parent=1 // pred_region
      _
    $region161: #{forward.1} parent=1 // pred_fallthru
      _
    // Predicated region
    $region162: #{forward.1} parent=1 // pred_check
      _
    $region163: #{forward.1} parent=1 // pred_check_branch
      %180 = sbr.rel (0) target = $region165
    $region164: #{forward.1} parent=1 // pred_region
      _
    $region165: #{forward.1} parent=1 // pred_fallthru
      _
    // Predicated region
    $region166: #{forward.1} parent=1 // pred_check
      _
    $region167: #{forward.1} parent=1 // pred_check_branch
      %182 = sbr.rel (0) target = $region169
    $region168: #{forward.1} parent=1 // pred_region
      _
    $region169: #{forward.1} parent=1 // pred_fallthru
      _
    %v184 = vld [vmem:[%s1] sm:$0xff]
    %v185 = vld [vmem:[%s1 + $0x8] sm:$0xff]
    %v186 = vld [vmem:[%s1 + $0x10] sm:$0xff]
    %v187 = vld [vmem:[%s1 + $0x18] sm:$0xf]
    %v188 = vld [vmem:[%s5] sm:$0xff]
    %v189 = vld [vmem:[%s5 + $0x8] sm:$0xff]
    %v190 = vld [vmem:[%s5 + $0x10] sm:$0xff]
    %v191 = vld [vmem:[%s5 + $0x18] sm:$0xf]
    %v192 = vld [vmem:[%s13] sm:$0xf]
    %v193 = vld [vmem:[%s13 + $0x4] sm:$0xf]
    %v194 = vld [vmem:[%s13 + $0x8] sm:$0xf]
    %v195 = vld [vmem:[%s13 + $0xc] sm:$0xf]
    %v196 = vpack.c.bf16 %v185, %v184
    %v197 = vpack.c.bf16 %v187, %v186
    %v198 = vld [vmem:[%s15] sm:$0x1]
    %v200 = vlaneseq
    %v201 = vshrl.u32 %v200, 7
    %v202 = vsub.s32 0, %v201
    %v203 = vrot.slane %v198, %v202
    %v209 = vunpack.c.l.b16 %v192
    %v210 = vunpack.c.l.b16 %v193
    %v211 = vunpack.c.l.b16 %v194
    %v212 = vunpack.c.l.b16 %v195
    %v213 = vpack.c.b16 %v210, %v209
    %v214 = vpack.c.b16 %v212, %v211
    %vm217 = vcmask 261120
    %v219 = vsel %vm217, %v196, 0
    %v222 = vsel %vm217, %v197, 0
    %224 = vmatprep.subr.bf16.mxu0 0
    %225 = vmatpush1.bf16.msra.mxu0 %v213
    %226 = vmatprep.subr.bf16.mxu0 0
    %227 = vmatpush1.bf16.msra.mxu0 %v214
    %228 = vmatprep.subr.bf16.mxu0 0
    %229 = vmatpush1.bf16.msra.mxu0 0
    %230 = vmatprep.subr.bf16.mxu0 0
    %231 = vmatpush1.bf16.msra.mxu0 0
    %232 = vmatprep.subr.bf16.mxu0 0
    %233 = vmatpush1.bf16.msra.mxu0 0
    %234 = vmatprep.subr.bf16.mxu0 0
    %235 = vmatpush1.bf16.msra.mxu0 0
    %236 = vmatprep.subr.bf16.mxu0 0
    %237 = vmatpush1.bf16.msra.mxu0 0
    %238 = vmatprep.subr.bf16.mxu0 0
    %239 = vmatpush1.bf16.msra.mxu0 0
    %240 = vmatprep.subr.bf16.mxu0 0
    %241 = vmatpush1.bf16.msra.mxu0 0
    %242 = vmatprep.subr.bf16.mxu0 0
    %243 = vmatpush1.bf16.msra.mxu0 0
    %244 = vmatprep.subr.bf16.mxu0 0
    %245 = vmatpush1.bf16.msra.mxu0 0
    %246 = vmatprep.subr.bf16.mxu0 0
    %247 = vmatpush1.bf16.msra.mxu0 0
    %248 = vmatprep.subr.bf16.mxu0 0
    %249 = vmatpush1.bf16.msra.mxu0 0
    %250 = vmatprep.subr.bf16.mxu0 0
    %251 = vmatpush1.bf16.msra.mxu0 0
    %252 = vmatprep.subr.bf16.mxu0 0
    %253 = vmatpush1.bf16.msra.mxu0 0
    %254 = vmatprep.subr.bf16.mxu0 0
    %255 = vmatpush1.bf16.msra.mxu0 0
    %256 = vmatprep.mubr.bf16.mxu0 0
    %257 = vmatmul.mubr.bf16.gmra.mrb[0].mxu0 %v219
    %v258 = vpop.f32.mrb[0].mxu0
    %v259 = vadd.f32 %v203, %v258
    %v260 = vpop.f32.mrb[0].mxu0
    %v261 = vpop.f32.mrb[0].mxu0
    %v262 = vadd.f32 %v203, %v261
    %v263 = vpop.f32.mrb[0].mxu0
    %264 = vmatprep.mubr.bf16.mxu0 0
    %265 = vmatmul.mubr.bf16.gmra.mrb[0].mxu0 %v222
    %v266 = vpop.f32.mrb[0].mxu0
    %v267 = vadd.f32 %v203, %v266
    %v268 = vpop.f32.mrb[0].mxu0
    %v269 = vpop.f32.mrb[0].mxu0
    %v270 = vadd.f32 %v203, %v269
    %v271 = vpop.f32.mrb[0].mxu0
    %272 = vdwg.mxu0
    %v273 = vmul.f32 %v259, 0.35355338
    %v274 = vmul.f32 %v262, 0.35355338
    %v275 = vmul.f32 %v267, 0.35355338
    %v276 = vmul.f32 %v270, 0.35355338
    %v277 = vpack.c.bf16 %v274, %v273
    %v278 = vpack.c.bf16 %v276, %v275
    %v279 = vpack.c.bf16 %v262, %v259
    %v280 = vpack.c.bf16 %v270, %v267
    %283 = vrot.lane.b32.xlu0 %v279, 96
    %v284 = vpop.permute.xlu0 %283
    %285 = vrot.lane.b32.xlu0 %v280, 96
    %v286 = vpop.permute.xlu0 %285
    %vm287 = vcmask 64512
    %v289 = vsel %vm287, %v277, 0
    %v292 = vsel %vm287, %v278, 0
    %v295 = vsel %vm287, %v284, 0
    %v298 = vsel %vm287, %v286, 0
    %300 = vmatprep.subr.bf16.mxu0 0
    %301 = vmatpush1.bf16.xpose.msra.mxu0 %v295
    %302 = vmatprep.subr.bf16.mxu0 0
    %303 = vmatpush1.bf16.xpose.msra.mxu0 %v298
    %304 = vmatprep.subr.bf16.mxu0 0
    %305 = vmatpush1.bf16.xpose.msra.mxu0 0
    %306 = vmatprep.subr.bf16.mxu0 0
    %307 = vmatpush1.bf16.xpose.msra.mxu0 0
    %308 = vmatprep.subr.bf16.mxu0 0
    %309 = vmatpush1.bf16.xpose.msra.mxu0 0
    %310 = vmatprep.subr.bf16.mxu0 0
    %311 = vmatpush1.bf16.xpose.msra.mxu0 0
    %312 = vmatprep.subr.bf16.mxu0 0
    %313 = vmatpush1.bf16.xpose.msra.mxu0 0
    %314 = vmatprep.subr.bf16.mxu0 0
    %315 = vmatpush1.bf16.xpose.msra.mxu0 0
    %316 = vmatprep.subr.bf16.mxu0 0
    %317 = vmatpush1.bf16.xpose.msra.mxu0 0
    %318 = vmatprep.subr.bf16.mxu0 0
    %319 = vmatpush1.bf16.xpose.msra.mxu0 0
    %320 = vmatprep.subr.bf16.mxu0 0
    %321 = vmatpush1.bf16.xpose.msra.mxu0 0
    %322 = vmatprep.subr.bf16.mxu0 0
    %323 = vmatpush1.bf16.xpose.msra.mxu0 0
    %324 = vmatprep.subr.bf16.mxu0 0
    %325 = vmatpush1.bf16.xpose.msra.mxu0 0
    %326 = vmatprep.subr.bf16.mxu0 0
    %327 = vmatpush1.bf16.xpose.msra.mxu0 0
    %328 = vmatprep.subr.bf16.mxu0 0
    %329 = vmatpush1.bf16.xpose.msra.mxu0 0
    %330 = vmatprep.subr.bf16.mxu0 0
    %331 = vmatpush1.bf16.xpose.msra.mxu0 0
    %332 = vmatprep.mubr.bf16.mxu0 0
    %333 = vmatmul.mubr.bf16.gmra.mrb[0].mxu0 %v289
    %v334 = vpop.f32.mrb[0].mxu0
    %v335 = vadd.f32 %v188, %v334
    %v336 = vpop.f32.mrb[0].mxu0
    %v337 = vpop.f32.mrb[0].mxu0
    %v338 = vadd.f32 %v189, %v337
    %v339 = vpop.f32.mrb[0].mxu0
    %340 = vmatprep.mubr.bf16.mxu0 0
    %341 = vmatmul.mubr.bf16.gmra.mrb[0].mxu0 %v292
    %v342 = vpop.f32.mrb[0].mxu0
    %v343 = vadd.f32 %v190, %v342
    %v344 = vpop.f32.mrb[0].mxu0
    %v345 = vpop.f32.mrb[0].mxu0
    %v346 = vadd.f32 %v191, %v345
    %v347 = vpop.f32.mrb[0].mxu0
    %348 = vdwg.mxu0
    %vm349 = vcmask 228352
    %v350 = vsel %vm349, %v335, -inf
    %351 = vmax.xlane.f32.xlu0 %v350
    %v352 = vpop.xlane.xlu0 %351
    %v353 = vsel %vm349, %v338, -inf
    %354 = vmax.xlane.f32.xlu0 %v353
    %v355 = vpop.xlane.xlu0 %354
    %v356 = vsel %vm349, %v343, -inf
    %357 = vmax.xlane.f32.xlu0 %v356
    %v358 = vpop.xlane.xlu0 %357
    %vm359 = vcmask 224256
    %v360 = vsel %vm359, %v346, -inf
    %361 = vmax.xlane.f32.xlu0 %v360
    %v362 = vpop.xlane.xlu0 %361
    %v363 = vsub.f32 %v335, %v352
    %v364 = vsub.f32 %v338, %v355
    %v365 = vsub.f32 %v343, %v358
    %v366 = vsub.f32 %v346, %v362
    %v367 = vmul.f32 %v363, 1.442695
    %v368 = vpow.pop %v367
    %v369 = vmul.f32 %v364, 1.442695
    %v370 = vpow.pop %v369
    %v371 = vmul.f32 %v365, 1.442695
    %v372 = vpow.pop %v371
    %v373 = vmul.f32 %v366, 1.442695
    %v374 = vpow.pop %v373
    %v375 = vsel %vm349, %v368, 0.0
    %376 = vadd.xlane.f32.xlu0 %v375
    %v377 = vpop.xlane.xlu0 %376
    %v378 = vsel %vm349, %v370, 0.0
    %379 = vadd.xlane.f32.xlu0 %v378
    %v380 = vpop.xlane.xlu0 %379
    %v381 = vsel %vm349, %v372, 0.0
    %382 = vadd.xlane.f32.xlu0 %v381
    %v383 = vpop.xlane.xlu0 %382
    %v384 = vsel %vm359, %v374, 0.0
    %385 = vadd.xlane.f32.xlu0 %v384
    %v386 = vpop.xlane.xlu0 %385
    %v387 = vrcp.pop %v377
    %v388 = vrcp.pop %v380
    %v389 = vrcp.pop %v383
    %v390 = vrcp.pop %v386
    %v391 = vmul.f32 %v368, %v387
    %v392 = vmul.f32 %v370, %v388
    %v393 = vmul.f32 %v372, %v389
    %v394 = vmul.f32 %v374, %v390
    %v395 = vpack.c.bf16 %v392, %v391
    %v396 = vpack.c.bf16 %v394, %v393
    %397 = vrot.lane.b32.xlu0 %v279, 64
    %v398 = vpop.permute.xlu0 %397
    %399 = vrot.lane.b32.xlu0 %v280, 64
    %v400 = vpop.permute.xlu0 %399
    %v403 = vsel %vm349, %v395, 0
    %v406 = vsel %vm349, %v396, 0
    %vm408 = vcmask 1045504
    %v410 = vsel %vm408, %v400, 0
    %412 = vmatprep.subr.bf16.mxu0 0
    %413 = vmatpush1.bf16.msra.mxu0 %v398
    %414 = vmatprep.subr.bf16.mxu0 0
    %415 = vmatpush1.bf16.msra.mxu0 %v410
    %416 = vmatprep.subr.bf16.mxu0 0
    %417 = vmatpush1.bf16.msra.mxu0 0
    %418 = vmatprep.subr.bf16.mxu0 0
    %419 = vmatpush1.bf16.msra.mxu0 0
    %420 = vmatprep.subr.bf16.mxu0 0
    %421 = vmatpush1.bf16.msra.mxu0 0
    %422 = vmatprep.subr.bf16.mxu0 0
    %423 = vmatpush1.bf16.msra.mxu0 0
    %424 = vmatprep.subr.bf16.mxu0 0
    %425 = vmatpush1.bf16.msra.mxu0 0
    %426 = vmatprep.subr.bf16.mxu0 0
    %427 = vmatpush1.bf16.msra.mxu0 0
    %428 = vmatprep.subr.bf16.mxu0 0
    %429 = vmatpush1.bf16.msra.mxu0 0
    %430 = vmatprep.subr.bf16.mxu0 0
    %431 = vmatpush1.bf16.msra.mxu0 0
    %432 = vmatprep.subr.bf16.mxu0 0
    %433 = vmatpush1.bf16.msra.mxu0 0
    %434 = vmatprep.subr.bf16.mxu0 0
    %435 = vmatpush1.bf16.msra.mxu0 0
    %436 = vmatprep.subr.bf16.mxu0 0
    %437 = vmatpush1.bf16.msra.mxu0 0
    %438 = vmatprep.subr.bf16.mxu0 0
    %439 = vmatpush1.bf16.msra.mxu0 0
    %440 = vmatprep.subr.bf16.mxu0 0
    %441 = vmatpush1.bf16.msra.mxu0 0
    %442 = vmatprep.subr.bf16.mxu0 0
    %443 = vmatpush1.bf16.msra.mxu0 0
    %444 = vmatprep.mubr.bf16.mxu0 0
    %445 = vmatmul.mubr.bf16.gmra.mrb[0].mxu0 %v403
    %v446 = vpop.f32.mrb[0].mxu0
    %v447 = vadd.f32 0.0, %v446
    %v448 = vpop.f32.mrb[0].mxu0
    %v449 = vpop.f32.mrb[0].mxu0
    %v450 = vadd.f32 0.0, %v449
    %v451 = vpop.f32.mrb[0].mxu0
    %452 = vmatprep.mubr.bf16.mxu0 0
    %453 = vmatmul.mubr.bf16.gmra.mrb[0].mxu0 %v406
    %v454 = vpop.f32.mrb[0].mxu0
    %v455 = vadd.f32 0.0, %v454
    %v456 = vpop.f32.mrb[0].mxu0
    %v457 = vpop.f32.mrb[0].mxu0
    %v458 = vadd.f32 0.0, %v457
    %v459 = vpop.f32.mrb[0].mxu0
    %460 = vdwg.mxu0
    %463 = vrot.lane.b32.xlu0 %v277, 120
    %v464 = vpop.permute.xlu0 %463
    %465 = vrot.lane.b32.xlu0 %v278, 120
    %v466 = vpop.permute.xlu0 %465
    %467 = vrot.lane.b32.xlu0 %v279, 88
    %v468 = vpop.permute.xlu0 %467
    %469 = vrot.lane.b32.xlu0 %v280, 88
    %v470 = vpop.permute.xlu0 %469
    %v472 = vsel %vm287, %v464, 0
    %v475 = vsel %vm287, %v466, 0
    %v478 = vsel %vm287, %v468, 0
    %v481 = vsel %vm287, %v470, 0
    %483 = vmatprep.subr.bf16.mxu0 0
    %484 = vmatpush1.bf16.xpose.msra.mxu0 %v478
    %485 = vmatprep.subr.bf16.mxu0 0
    %486 = vmatpush1.bf16.xpose.msra.mxu0 %v481
    %487 = vmatprep.subr.bf16.mxu0 0
    %488 = vmatpush1.bf16.xpose.msra.mxu0 0
    %489 = vmatprep.subr.bf16.mxu0 0
    %490 = vmatpush1.bf16.xpose.msra.mxu0 0
    %491 = vmatprep.subr.bf16.mxu0 0
    %492 = vmatpush1.bf16.xpose.msra.mxu0 0
    %493 = vmatprep.subr.bf16.mxu0 0
    %494 = vmatpush1.bf16.xpose.msra.mxu0 0
    %495 = vmatprep.subr.bf16.mxu0 0
    %496 = vmatpush1.bf16.xpose.msra.mxu0 0
    %497 = vmatprep.subr.bf16.mxu0 0
    %498 = vmatpush1.bf16.xpose.msra.mxu0 0
    %499 = vmatprep.subr.bf16.mxu0 0
    %500 = vmatpush1.bf16.xpose.msra.mxu0 0
    %501 = vmatprep.subr.bf16.mxu0 0
    %502 = vmatpush1.bf16.xpose.msra.mxu0 0
    %503 = vmatprep.subr.bf16.mxu0 0
    %504 = vmatpush1.bf16.xpose.msra.mxu0 0
    %505 = vmatprep.subr.bf16.mxu0 0
    %506 = vmatpush1.bf16.xpose.msra.mxu0 0
    %507 = vmatprep.subr.bf16.mxu0 0
    %508 = vmatpush1.bf16.xpose.msra.mxu0 0
    %509 = vmatprep.subr.bf16.mxu0 0
    %510 = vmatpush1.bf16.xpose.msra.mxu0 0
    %511 = vmatprep.subr.bf16.mxu0 0
    %512 = vmatpush1.bf16.xpose.msra.mxu0 0
    %513 = vmatprep.subr.bf16.mxu0 0
    %514 = vmatpush1.bf16.xpose.msra.mxu0 0
    %515 = vmatprep.mubr.bf16.mxu0 0
    %516 = vmatmul.mubr.bf16.gmra.mrb[0].mxu0 %v472
    %v517 = vpop.f32.mrb[0].mxu0
    %v518 = vadd.f32 %v188, %v517
    %v519 = vpop.f32.mrb[0].mxu0
    %v520 = vpop.f32.mrb[0].mxu0
    %v521 = vadd.f32 %v189, %v520
    %v522 = vpop.f32.mrb[0].mxu0
    %523 = vmatprep.mubr.bf16.mxu0 0
    %524 = vmatmul.mubr.bf16.gmra.mrb[0].mxu0 %v475
    %v525 = vpop.f32.mrb[0].mxu0
    %v526 = vadd.f32 %v190, %v525
    %v527 = vpop.f32.mrb[0].mxu0
    %v528 = vpop.f32.mrb[0].mxu0
    %v529 = vadd.f32 %v191, %v528
    %v530 = vpop.f32.mrb[0].mxu0
    %531 = vdwg.mxu0
    %v532 = vsel %vm349, %v518, -inf
    %533 = vmax.xlane.f32.xlu0 %v532
    %v534 = vpop.xlane.xlu0 %533
    %v535 = vsel %vm349, %v521, -inf
    %536 = vmax.xlane.f32.xlu0 %v535
    %v537 = vpop.xlane.xlu0 %536
    %v538 = vsel %vm349, %v526, -inf
    %539 = vmax.xlane.f32.xlu0 %v538
    %v540 = vpop.xlane.xlu0 %539
    %v541 = vsel %vm359, %v529, -inf
    %542 = vmax.xlane.f32.xlu0 %v541
    %v543 = vpop.xlane.xlu0 %542
    %v544 = vsub.f32 %v518, %v534
    %v545 = vsub.f32 %v521, %v537
    %v546 = vsub.f32 %v526, %v540
    %v547 = vsub.f32 %v529, %v543
    %v548 = vmul.f32 %v544, 1.442695
    %v549 = vpow.pop %v548
    %v550 = vmul.f32 %v545, 1.442695
    %v551 = vpow.pop %v550
    %v552 = vmul.f32 %v546, 1.442695
    %v553 = vpow.pop %v552
    %v554 = vmul.f32 %v547, 1.442695
    %v555 = vpow.pop %v554
    %v556 = vsel %vm349, %v549, 0.0
    %557 = vadd.xlane.f32.xlu0 %v556
    %v558 = vpop.xlane.xlu0 %557
    %v559 = vsel %vm349, %v551, 0.0
    %560 = vadd.xlane.f32.xlu0 %v559
    %v561 = vpop.xlane.xlu0 %560
    %v562 = vsel %vm349, %v553, 0.0
    %563 = vadd.xlane.f32.xlu0 %v562
    %v564 = vpop.xlane.xlu0 %563
    %v565 = vsel %vm359, %v555, 0.0
    %566 = vadd.xlane.f32.xlu0 %v565
    %v567 = vpop.xlane.xlu0 %566
    %v568 = vrcp.pop %v558
    %v569 = vrcp.pop %v561
    %v570 = vrcp.pop %v564
    %v571 = vrcp.pop %v567
    %v572 = vmul.f32 %v549, %v568
    %v573 = vmul.f32 %v551, %v569
    %v574 = vmul.f32 %v553, %v570
    %v575 = vmul.f32 %v555, %v571
    %v576 = vpack.c.bf16 %v573, %v572
    %v577 = vpack.c.bf16 %v575, %v574
    %578 = vrot.lane.b32.xlu0 %v279, 56
    %v579 = vpop.permute.xlu0 %578
    %580 = vrot.lane.b32.xlu0 %v280, 56
    %v581 = vpop.permute.xlu0 %580
    %v584 = vsel %vm349, %v576, 0
    %v587 = vsel %vm349, %v577, 0
    %v590 = vsel %vm408, %v581, 0
    %592 = vmatprep.subr.bf16.mxu0 0
    %593 = vmatpush1.bf16.msra.mxu0 %v579
    %594 = vmatprep.subr.bf16.mxu0 0
    %595 = vmatpush1.bf16.msra.mxu0 %v590
    %596 = vmatprep.subr.bf16.mxu0 0
    %597 = vmatpush1.bf16.msra.mxu0 0
    %598 = vmatprep.subr.bf16.mxu0 0
    %599 = vmatpush1.bf16.msra.mxu0 0
    %600 = vmatprep.subr.bf16.mxu0 0
    %601 = vmatpush1.bf16.msra.mxu0 0
    %602 = vmatprep.subr.bf16.mxu0 0
    %603 = vmatpush1.bf16.msra.mxu0 0
    %604 = vmatprep.subr.bf16.mxu0 0
    %605 = vmatpush1.bf16.msra.mxu0 0
    %606 = vmatprep.subr.bf16.mxu0 0
    %607 = vmatpush1.bf16.msra.mxu0 0
    %608 = vmatprep.subr.bf16.mxu0 0
    %609 = vmatpush1.bf16.msra.mxu0 0
    %610 = vmatprep.subr.bf16.mxu0 0
    %611 = vmatpush1.bf16.msra.mxu0 0
    %612 = vmatprep.subr.bf16.mxu0 0
    %613 = vmatpush1.bf16.msra.mxu0 0
    %614 = vmatprep.subr.bf16.mxu0 0
    %615 = vmatpush1.bf16.msra.mxu0 0
    %616 = vmatprep.subr.bf16.mxu0 0
    %617 = vmatpush1.bf16.msra.mxu0 0
    %618 = vmatprep.subr.bf16.mxu0 0
    %619 = vmatpush1.bf16.msra.mxu0 0
    %620 = vmatprep.subr.bf16.mxu0 0
    %621 = vmatpush1.bf16.msra.mxu0 0
    %622 = vmatprep.subr.bf16.mxu0 0
    %623 = vmatpush1.bf16.msra.mxu0 0
    %624 = vmatprep.mubr.bf16.mxu0 0
    %625 = vmatmul.mubr.bf16.gmra.mrb[0].mxu0 %v584
    %v626 = vpop.f32.mrb[0].mxu0
    %v627 = vadd.f32 0.0, %v626
    %v628 = vpop.f32.mrb[0].mxu0
    %v629 = vpop.f32.mrb[0].mxu0
    %v630 = vadd.f32 0.0, %v629
    %v631 = vpop.f32.mrb[0].mxu0
    %632 = vmatprep.mubr.bf16.mxu0 0
    %633 = vmatmul.mubr.bf16.gmra.mrb[0].mxu0 %v587
    %v634 = vpop.f32.mrb[0].mxu0
    %v635 = vadd.f32 0.0, %v634
    %v636 = vpop.f32.mrb[0].mxu0
    %v637 = vpop.f32.mrb[0].mxu0
    %v638 = vadd.f32 0.0, %v637
    %v639 = vpop.f32.mrb[0].mxu0
    %640 = vdwg.mxu0
    %641 = vrot.lane.b32.xlu0 %v277, 112
    %v642 = vpop.permute.xlu0 %641
    %643 = vrot.lane.b32.xlu0 %v278, 112
    %v644 = vpop.permute.xlu0 %643
    %645 = vrot.lane.b32.xlu0 %v279, 80
    %v646 = vpop.permute.xlu0 %645
    %647 = vrot.lane.b32.xlu0 %v280, 80
    %v648 = vpop.permute.xlu0 %647
    %v650 = vsel %vm287, %v642, 0
    %v653 = vsel %vm287, %v644, 0
    %v656 = vsel %vm287, %v646, 0
    %v659 = vsel %vm287, %v648, 0
    %661 = vmatprep.subr.bf16.mxu0 0
    %662 = vmatpush1.bf16.xpose.msra.mxu0 %v656
    %663 = vmatprep.subr.bf16.mxu0 0
    %664 = vmatpush1.bf16.xpose.msra.mxu0 %v659
    %665 = vmatprep.subr.bf16.mxu0 0
    %666 = vmatpush1.bf16.xpose.msra.mxu0 0
    %667 = vmatprep.subr.bf16.mxu0 0
    %668 = vmatpush1.bf16.xpose.msra.mxu0 0
    %669 = vmatprep.subr.bf16.mxu0 0
    %670 = vmatpush1.bf16.xpose.msra.mxu0 0
    %671 = vmatprep.subr.bf16.mxu0 0
    %672 = vmatpush1.bf16.xpose.msra.mxu0 0
    %673 = vmatprep.subr.bf16.mxu0 0
    %674 = vmatpush1.bf16.xpose.msra.mxu0 0
    %675 = vmatprep.subr.bf16.mxu0 0
    %676 = vmatpush1.bf16.xpose.msra.mxu0 0
    %677 = vmatprep.subr.bf16.mxu0 0
    %678 = vmatpush1.bf16.xpose.msra.mxu0 0
    %679 = vmatprep.subr.bf16.mxu0 0
    %680 = vmatpush1.bf16.xpose.msra.mxu0 0
    %681 = vmatprep.subr.bf16.mxu0 0
    %682 = vmatpush1.bf16.xpose.msra.mxu0 0
    %683 = vmatprep.subr.bf16.mxu0 0
    %684 = vmatpush1.bf16.xpose.msra.mxu0 0
    %685 = vmatprep.subr.bf16.mxu0 0
    %686 = vmatpush1.bf16.xpose.msra.mxu0 0
    %687 = vmatprep.subr.bf16.mxu0 0
    %688 = vmatpush1.bf16.xpose.msra.mxu0 0
    %689 = vmatprep.subr.bf16.mxu0 0
    %690 = vmatpush1.bf16.xpose.msra.mxu0 0
    %691 = vmatprep.subr.bf16.mxu0 0
    %692 = vmatpush1.bf16.xpose.msra.mxu0 0
    %693 = vmatprep.mubr.bf16.mxu0 0
    %694 = vmatmul.mubr.bf16.gmra.mrb[0].mxu0 %v650
    %v695 = vpop.f32.mrb[0].mxu0
    %v696 = vadd.f32 %v188, %v695
    %v697 = vpop.f32.mrb[0].mxu0
    %v698 = vpop.f32.mrb[0].mxu0
    %v699 = vadd.f32 %v189, %v698
    %v700 = vpop.f32.mrb[0].mxu0
    %701 = vmatprep.mubr.bf16.mxu0 0
    %702 = vmatmul.mubr.bf16.gmra.mrb[0].mxu0 %v653
    %v703 = vpop.f32.mrb[0].mxu0
    %v704 = vadd.f32 %v190, %v703
    %v705 = vpop.f32.mrb[0].mxu0
    %v706 = vpop.f32.mrb[0].mxu0
    %v707 = vadd.f32 %v191, %v706
    %v708 = vpop.f32.mrb[0].mxu0
    %709 = vdwg.mxu0
    %v710 = vsel %vm349, %v696, -inf
    %711 = vmax.xlane.f32.xlu0 %v710
    %v712 = vpop.xlane.xlu0 %711
    %v713 = vsel %vm349, %v699, -inf
    %714 = vmax.xlane.f32.xlu0 %v713
    %v715 = vpop.xlane.xlu0 %714
    %v716 = vsel %vm349, %v704, -inf
    %717 = vmax.xlane.f32.xlu0 %v716
    %v718 = vpop.xlane.xlu0 %717
    %v719 = vsel %vm359, %v707, -inf
    %720 = vmax.xlane.f32.xlu0 %v719
    %v721 = vpop.xlane.xlu0 %720
    %v722 = vsub.f32 %v696, %v712
    %v723 = vsub.f32 %v699, %v715
    %v724 = vsub.f32 %v704, %v718
    %v725 = vsub.f32 %v707, %v721
    %v726 = vmul.f32 %v722, 1.442695
    %v727 = vpow.pop %v726
    %v728 = vmul.f32 %v723, 1.442695
    %v729 = vpow.pop %v728
    %v730 = vmul.f32 %v724, 1.442695
    %v731 = vpow.pop %v730
    %v732 = vmul.f32 %v725, 1.442695
    %v733 = vpow.pop %v732
    %v734 = vsel %vm349, %v727, 0.0
    %735 = vadd.xlane.f32.xlu0 %v734
    %v736 = vpop.xlane.xlu0 %735
    %v737 = vsel %vm349, %v729, 0.0
    %738 = vadd.xlane.f32.xlu0 %v737
    %v739 = vpop.xlane.xlu0 %738
    %v740 = vsel %vm349, %v731, 0.0
    %741 = vadd.xlane.f32.xlu0 %v740
    %v742 = vpop.xlane.xlu0 %741
    %v743 = vsel %vm359, %v733, 0.0
    %744 = vadd.xlane.f32.xlu0 %v743
    %v745 = vpop.xlane.xlu0 %744
    %v746 = vrcp.pop %v736
    %v747 = vrcp.pop %v739
    %v748 = vrcp.pop %v742
    %v749 = vrcp.pop %v745
    %v750 = vmul.f32 %v727, %v746
    %v751 = vmul.f32 %v729, %v747
    %v752 = vmul.f32 %v731, %v748
    %v753 = vmul.f32 %v733, %v749
    %v754 = vpack.c.bf16 %v751, %v750
    %v755 = vpack.c.bf16 %v753, %v752
    %756 = vrot.lane.b32.xlu0 %v279, 48
    %v757 = vpop.permute.xlu0 %756
    %758 = vrot.lane.b32.xlu0 %v280, 48
    %v759 = vpop.permute.xlu0 %758
    %v762 = vsel %vm349, %v754, 0
    %v765 = vsel %vm349, %v755, 0
    %v768 = vsel %vm408, %v759, 0
    %770 = vmatprep.subr.bf16.mxu0 0
    %771 = vmatpush1.bf16.msra.mxu0 %v757
    %772 = vmatprep.subr.bf16.mxu0 0
    %773 = vmatpush1.bf16.msra.mxu0 %v768
    %774 = vmatprep.subr.bf16.mxu0 0
    %775 = vmatpush1.bf16.msra.mxu0 0
    %776 = vmatprep.subr.bf16.mxu0 0
    %777 = vmatpush1.bf16.msra.mxu0 0
    %778 = vmatprep.subr.bf16.mxu0 0
    %779 = vmatpush1.bf16.msra.mxu0 0
    %780 = vmatprep.subr.bf16.mxu0 0
    %781 = vmatpush1.bf16.msra.mxu0 0
    %782 = vmatprep.subr.bf16.mxu0 0
    %783 = vmatpush1.bf16.msra.mxu0 0
    %784 = vmatprep.subr.bf16.mxu0 0
    %785 = vmatpush1.bf16.msra.mxu0 0
    %786 = vmatprep.subr.bf16.mxu0 0
    %787 = vmatpush1.bf16.msra.mxu0 0
    %788 = vmatprep.subr.bf16.mxu0 0
    %789 = vmatpush1.bf16.msra.mxu0 0
    %790 = vmatprep.subr.bf16.mxu0 0
    %791 = vmatpush1.bf16.msra.mxu0 0
    %792 = vmatprep.subr.bf16.mxu0 0
    %793 = vmatpush1.bf16.msra.mxu0 0
    %794 = vmatprep.subr.bf16.mxu0 0
    %795 = vmatpush1.bf16.msra.mxu0 0
    %796 = vmatprep.subr.bf16.mxu0 0
    %797 = vmatpush1.bf16.msra.mxu0 0
    %798 = vmatprep.subr.bf16.mxu0 0
    %799 = vmatpush1.bf16.msra.mxu0 0
    %800 = vmatprep.subr.bf16.mxu0 0
    %801 = vmatpush1.bf16.msra.mxu0 0
    %802 = vmatprep.mubr.bf16.mxu0 0
    %803 = vmatmul.mubr.bf16.gmra.mrb[0].mxu0 %v762
    %v804 = vpop.f32.mrb[0].mxu0
    %v805 = vadd.f32 0.0, %v804
    %v806 = vpop.f32.mrb[0].mxu0
    %v807 = vpop.f32.mrb[0].mxu0
    %v808 = vadd.f32 0.0, %v807
    %v809 = vpop.f32.mrb[0].mxu0
    %810 = vmatprep.mubr.bf16.mxu0 0
    %811 = vmatmul.mubr.bf16.gmra.mrb[0].mxu0 %v765
    %v812 = vpop.f32.mrb[0].mxu0
    %v813 = vadd.f32 0.0, %v812
    %v814 = vpop.f32.mrb[0].mxu0
    %v815 = vpop.f32.mrb[0].mxu0
    %v816 = vadd.f32 0.0, %v815
    %v817 = vpop.f32.mrb[0].mxu0
    %818 = vdwg.mxu0
    %819 = vrot.lane.b32.xlu0 %v277, 104
    %v820 = vpop.permute.xlu0 %819
    %821 = vrot.lane.b32.xlu0 %v278, 104
    %v822 = vpop.permute.xlu0 %821
    %823 = vrot.lane.b32.xlu0 %v279, 72
    %v824 = vpop.permute.xlu0 %823
    %825 = vrot.lane.b32.xlu0 %v280, 72
    %v826 = vpop.permute.xlu0 %825
    %v828 = vsel %vm287, %v820, 0
    %v831 = vsel %vm287, %v822, 0
    %v834 = vsel %vm287, %v824, 0
    %v837 = vsel %vm287, %v826, 0
    %839 = vmatprep.subr.bf16.mxu0 0
    %840 = vmatpush1.bf16.xpose.msra.mxu0 %v834
    %841 = vmatprep.subr.bf16.mxu0 0
    %842 = vmatpush1.bf16.xpose.msra.mxu0 %v837
    %843 = vmatprep.subr.bf16.mxu0 0
    %844 = vmatpush1.bf16.xpose.msra.mxu0 0
    %845 = vmatprep.subr.bf16.mxu0 0
    %846 = vmatpush1.bf16.xpose.msra.mxu0 0
    %847 = vmatprep.subr.bf16.mxu0 0
    %848 = vmatpush1.bf16.xpose.msra.mxu0 0
    %849 = vmatprep.subr.bf16.mxu0 0
    %850 = vmatpush1.bf16.xpose.msra.mxu0 0
    %851 = vmatprep.subr.bf16.mxu0 0
    %852 = vmatpush1.bf16.xpose.msra.mxu0 0
    %853 = vmatprep.subr.bf16.mxu0 0
    %854 = vmatpush1.bf16.xpose.msra.mxu0 0
    %855 = vmatprep.subr.bf16.mxu0 0
    %856 = vmatpush1.bf16.xpose.msra.mxu0 0
    %857 = vmatprep.subr.bf16.mxu0 0
    %858 = vmatpush1.bf16.xpose.msra.mxu0 0
    %859 = vmatprep.subr.bf16.mxu0 0
    %860 = vmatpush1.bf16.xpose.msra.mxu0 0
    %861 = vmatprep.subr.bf16.mxu0 0
    %862 = vmatpush1.bf16.xpose.msra.mxu0 0
    %863 = vmatprep.subr.bf16.mxu0 0
    %864 = vmatpush1.bf16.xpose.msra.mxu0 0
    %865 = vmatprep.subr.bf16.mxu0 0
    %866 = vmatpush1.bf16.xpose.msra.mxu0 0
    %867 = vmatprep.subr.bf16.mxu0 0
    %868 = vmatpush1.bf16.xpose.msra.mxu0 0
    %869 = vmatprep.subr.bf16.mxu0 0
    %870 = vmatpush1.bf16.xpose.msra.mxu0 0
    %871 = vmatprep.mubr.bf16.mxu0 0
    %872 = vmatmul.mubr.bf16.gmra.mrb[0].mxu0 %v828
    %v873 = vpop.f32.mrb[0].mxu0
    %v874 = vadd.f32 %v188, %v873
    %v875 = vpop.f32.mrb[0].mxu0
    %v876 = vpop.f32.mrb[0].mxu0
    %v877 = vadd.f32 %v189, %v876
    %v878 = vpop.f32.mrb[0].mxu0
    %879 = vmatprep.mubr.bf16.mxu0 0
    %880 = vmatmul.mubr.bf16.gmra.mrb[0].mxu0 %v831
    %v881 = vpop.f32.mrb[0].mxu0
    %v882 = vadd.f32 %v190, %v881
    %v883 = vpop.f32.mrb[0].mxu0
    %v884 = vpop.f32.mrb[0].mxu0
    %v885 = vadd.f32 %v191, %v884
    %v886 = vpop.f32.mrb[0].mxu0
    %887 = vdwg.mxu0
    %v888 = vsel %vm349, %v874, -inf
    %889 = vmax.xlane.f32.xlu0 %v888
    %v890 = vpop.xlane.xlu0 %889
    %v891 = vsel %vm349, %v877, -inf
    %892 = vmax.xlane.f32.xlu0 %v891
    %v893 = vpop.xlane.xlu0 %892
    %v894 = vsel %vm349, %v882, -inf
    %895 = vmax.xlane.f32.xlu0 %v894
    %v896 = vpop.xlane.xlu0 %895
    %v897 = vsel %vm359, %v885, -inf
    %898 = vmax.xlane.f32.xlu0 %v897
    %v899 = vpop.xlane.xlu0 %898
    %v900 = vsub.f32 %v874, %v890
    %v901 = vsub.f32 %v877, %v893
    %v902 = vsub.f32 %v882, %v896
    %v903 = vsub.f32 %v885, %v899
    %v904 = vmul.f32 %v900, 1.442695
    %v905 = vpow.pop %v904
    %v906 = vmul.f32 %v901, 1.442695
    %v907 = vpow.pop %v906
    %v908 = vmul.f32 %v902, 1.442695
    %v909 = vpow.pop %v908
    %v910 = vmul.f32 %v903, 1.442695
    %v911 = vpow.pop %v910
    %v912 = vsel %vm349, %v905, 0.0
    %913 = vadd.xlane.f32.xlu0 %v912
    %v914 = vpop.xlane.xlu0 %913
    %v915 = vsel %vm349, %v907, 0.0
    %916 = vadd.xlane.f32.xlu0 %v915
    %v917 = vpop.xlane.xlu0 %916
    %v918 = vsel %vm349, %v909, 0.0
    %919 = vadd.xlane.f32.xlu0 %v918
    %v920 = vpop.xlane.xlu0 %919
    %v921 = vsel %vm359, %v911, 0.0
    %922 = vadd.xlane.f32.xlu0 %v921
    %v923 = vpop.xlane.xlu0 %922
    %v924 = vrcp.pop %v914
    %v925 = vrcp.pop %v917
    %v926 = vrcp.pop %v920
    %v927 = vrcp.pop %v923
    %v928 = vmul.f32 %v905, %v924
    %v929 = vmul.f32 %v907, %v925
    %v930 = vmul.f32 %v909, %v926
    %v931 = vmul.f32 %v911, %v927
    %v932 = vpack.c.bf16 %v929, %v928
    %v933 = vpack.c.bf16 %v931, %v930
    %934 = vrot.lane.b32.xlu0 %v279, 40
    %v935 = vpop.permute.xlu0 %934
    %936 = vrot.lane.b32.xlu0 %v280, 40
    %v937 = vpop.permute.xlu0 %936
    %v940 = vsel %vm349, %v932, 0
    %v943 = vsel %vm349, %v933, 0
    %v946 = vsel %vm408, %v937, 0
    %948 = vmatprep.subr.bf16.mxu0 0
    %949 = vmatpush1.bf16.msra.mxu0 %v935
    %950 = vmatprep.subr.bf16.mxu0 0
    %951 = vmatpush1.bf16.msra.mxu0 %v946
    %952 = vmatprep.subr.bf16.mxu0 0
    %953 = vmatpush1.bf16.msra.mxu0 0
    %954 = vmatprep.subr.bf16.mxu0 0
    %955 = vmatpush1.bf16.msra.mxu0 0
    %956 = vmatprep.subr.bf16.mxu0 0
    %957 = vmatpush1.bf16.msra.mxu0 0
    %958 = vmatprep.subr.bf16.mxu0 0
    %959 = vmatpush1.bf16.msra.mxu0 0
    %960 = vmatprep.subr.bf16.mxu0 0
    %961 = vmatpush1.bf16.msra.mxu0 0
    %962 = vmatprep.subr.bf16.mxu0 0
    %963 = vmatpush1.bf16.msra.mxu0 0
    %964 = vmatprep.subr.bf16.mxu0 0
    %965 = vmatpush1.bf16.msra.mxu0 0
    %966 = vmatprep.subr.bf16.mxu0 0
    %967 = vmatpush1.bf16.msra.mxu0 0
    %968 = vmatprep.subr.bf16.mxu0 0
    %969 = vmatpush1.bf16.msra.mxu0 0
    %970 = vmatprep.subr.bf16.mxu0 0
    %971 = vmatpush1.bf16.msra.mxu0 0
    %972 = vmatprep.subr.bf16.mxu0 0
    %973 = vmatpush1.bf16.msra.mxu0 0
    %974 = vmatprep.subr.bf16.mxu0 0
    %975 = vmatpush1.bf16.msra.mxu0 0
    %976 = vmatprep.subr.bf16.mxu0 0
    %977 = vmatpush1.bf16.msra.mxu0 0
    %978 = vmatprep.subr.bf16.mxu0 0
    %979 = vmatpush1.bf16.msra.mxu0 0
    %980 = vmatprep.mubr.bf16.mxu0 0
    %981 = vmatmul.mubr.bf16.gmra.mrb[0].mxu0 %v940
    %v982 = vpop.f32.mrb[0].mxu0
    %v983 = vadd.f32 0.0, %v982
    %v984 = vpop.f32.mrb[0].mxu0
    %v985 = vpop.f32.mrb[0].mxu0
    %v986 = vadd.f32 0.0, %v985
    %v987 = vpop.f32.mrb[0].mxu0
    %988 = vmatprep.mubr.bf16.mxu0 0
    %989 = vmatmul.mubr.bf16.gmra.mrb[0].mxu0 %v943
    %v990 = vpop.f32.mrb[0].mxu0
    %v991 = vadd.f32 0.0, %v990
    %v992 = vpop.f32.mrb[0].mxu0
    %v993 = vpop.f32.mrb[0].mxu0
    %v994 = vadd.f32 0.0, %v993
    %v995 = vpop.f32.mrb[0].mxu0
    %996 = vdwg.mxu0
    %1001 = vrot.lane.b32.xlu0 %v627, 8
    %v1002 = vpop.permute.xlu0 %1001
    %1003 = vrot.lane.b32.xlu0 %v630, 8
    %v1004 = vpop.permute.xlu0 %1003
    %1005 = vrot.lane.b32.xlu0 %v635, 8
    %v1006 = vpop.permute.xlu0 %1005
    %1007 = vrot.lane.b32.xlu0 %v638, 8
    %v1008 = vpop.permute.xlu0 %1007
    %1017 = vrot.lane.b32.xlu0 %v805, 16
    %v1018 = vpop.permute.xlu0 %1017
    %1019 = vrot.lane.b32.xlu0 %v808, 16
    %v1020 = vpop.permute.xlu0 %1019
    %1021 = vrot.lane.b32.xlu0 %v813, 16
    %v1022 = vpop.permute.xlu0 %1021
    %1023 = vrot.lane.b32.xlu0 %v816, 16
    %v1024 = vpop.permute.xlu0 %1023
    %1033 = vrot.lane.b32.xlu0 %v983, 24
    %v1034 = vpop.permute.xlu0 %1033
    %1035 = vrot.lane.b32.xlu0 %v986, 24
    %v1036 = vpop.permute.xlu0 %1035
    %1037 = vrot.lane.b32.xlu0 %v991, 24
    %v1038 = vpop.permute.xlu0 %1037
    %1039 = vrot.lane.b32.xlu0 %v994, 24
    %v1040 = vpop.permute.xlu0 %1039
    %v1045 = vsel %vm287, %v447, %v1002
    %v1046 = vsel %vm287, %v450, %v1004
    %v1047 = vsel %vm287, %v455, %v1006
    %v1048 = vsel %vm287, %v458, %v1008
    %vm1049 = vcmask 130048
    %v1050 = vsel %vm1049, %v1045, %v1018
    %v1051 = vsel %vm1049, %v1046, %v1020
    %v1052 = vsel %vm1049, %v1047, %v1022
    %v1053 = vsel %vm1049, %v1048, %v1024
    %vm1054 = vcmask 195584
    %v1055 = vsel %vm1054, %v1050, %v1034
    %v1056 = vsel %vm1054, %v1051, %v1036
    %v1057 = vsel %vm1054, %v1052, %v1038
    %v1058 = vsel %vm1054, %v1053, %v1040
    %v1059 = vld [vmem:[%s17] sm:$0xf]
    %v1060 = vld [vmem:[%s17 + $0x4] sm:$0xf]
    %v1061 = vld [vmem:[%s17 + $0x8] sm:$0xf]
    %v1062 = vld [vmem:[%s17 + $0xc] sm:$0xf]
    %v1063 = vpack.c.bf16 %v1056, %v1055
    %v1064 = vpack.c.bf16 %v1058, %v1057
    %v1065 = vld [vmem:[%s19] sm:$0x1]
    %v1067 = vlaneseq
    %v1068 = vshrl.u32 %v1067, 7
    %v1069 = vsub.s32 0, %v1068
    %v1070 = vrot.slane %v1065, %v1069
    %v1076 = vunpack.c.l.b16 %v1059
    %v1077 = vunpack.c.l.b16 %v1060
    %v1078 = vunpack.c.l.b16 %v1061
    %v1079 = vunpack.c.l.b16 %v1062
    %v1080 = vpack.c.b16 %v1077, %v1076
    %v1081 = vpack.c.b16 %v1079, %v1078
    %v1085 = vsel %vm217, %v1063, 0
    %v1088 = vsel %vm217, %v1064, 0
    %1090 = vmatprep.subr.bf16.mxu0 0
    %1091 = vmatpush1.bf16.msra.mxu0 %v1080
    %1092 = vmatprep.subr.bf16.mxu0 0
    %1093 = vmatpush1.bf16.msra.mxu0 %v1081
    %1094 = vmatprep.subr.bf16.mxu0 0
    %1095 = vmatpush1.bf16.msra.mxu0 0
    %1096 = vmatprep.subr.bf16.mxu0 0
    %1097 = vmatpush1.bf16.msra.mxu0 0
    %1098 = vmatprep.subr.bf16.mxu0 0
    %1099 = vmatpush1.bf16.msra.mxu0 0
    %1100 = vmatprep.subr.bf16.mxu0 0
    %1101 = vmatpush1.bf16.msra.mxu0 0
    %1102 = vmatprep.subr.bf16.mxu0 0
    %1103 = vmatpush1.bf16.msra.mxu0 0
    %1104 = vmatprep.subr.bf16.mxu0 0
    %1105 = vmatpush1.bf16.msra.mxu0 0
    %1106 = vmatprep.subr.bf16.mxu0 0
    %1107 = vmatpush1.bf16.msra.mxu0 0
    %1108 = vmatprep.subr.bf16.mxu0 0
    %1109 = vmatpush1.bf16.msra.mxu0 0
    %1110 = vmatprep.subr.bf16.mxu0 0
    %1111 = vmatpush1.bf16.msra.mxu0 0
    %1112 = vmatprep.subr.bf16.mxu0 0
    %1113 = vmatpush1.bf16.msra.mxu0 0
    %1114 = vmatprep.subr.bf16.mxu0 0
    %1115 = vmatpush1.bf16.msra.mxu0 0
    %1116 = vmatprep.subr.bf16.mxu0 0
    %1117 = vmatpush1.bf16.msra.mxu0 0
    %1118 = vmatprep.subr.bf16.mxu0 0
    %1119 = vmatpush1.bf16.msra.mxu0 0
    %1120 = vmatprep.subr.bf16.mxu0 0
    %1121 = vmatpush1.bf16.msra.mxu0 0
    %1122 = vmatprep.mubr.bf16.mxu0 0
    %1123 = vmatmul.mubr.bf16.gmra.mrb[0].mxu0 %v1085
    %v1124 = vpop.f32.mrb[0].mxu0
    %v1125 = vadd.f32 %v1070, %v1124
    %v1126 = vpop.f32.mrb[0].mxu0
    %v1127 = vpop.f32.mrb[0].mxu0
    %v1128 = vadd.f32 %v1070, %v1127
    %v1129 = vpop.f32.mrb[0].mxu0
    %1130 = vmatprep.mubr.bf16.mxu0 0
    %1131 = vmatmul.mubr.bf16.gmra.mrb[0].mxu0 %v1088
    %v1132 = vpop.f32.mrb[0].mxu0
    %v1133 = vadd.f32 %v1070, %v1132
    %v1134 = vpop.f32.mrb[0].mxu0
    %v1135 = vpop.f32.mrb[0].mxu0
    %v1136 = vadd.f32 %v1070, %v1135
    %v1137 = vpop.f32.mrb[0].mxu0
    %1138 = vdwg.mxu0
    %v1139 = vadd.f32 %v184, %v1125
    %v1140 = vadd.f32 %v185, %v1128
    %v1141 = vadd.f32 %v186, %v1133
    %v1142 = vadd.f32 %v187, %v1136
    %v1143 = vld [vmem:[%s21] sm:$0x1]
    %v1144 = vld [vmem:[%s23] sm:$0x1]
    %v1145 = vsel %vm217, %v1139, 0.0
    %1146 = vadd.xlane.f32.xlu0 %v1145
    %v1147 = vpop.xlane.xlu0 %1146
    %v1148 = vsel %vm217, %v1140, 0.0
    %1149 = vadd.xlane.f32.xlu0 %v1148
    %v1150 = vpop.xlane.xlu0 %1149
    %v1151 = vsel %vm217, %v1141, 0.0
    %1152 = vadd.xlane.f32.xlu0 %v1151
    %v1153 = vpop.xlane.xlu0 %1152
    %vm1154 = vcmask 257024
    %v1155 = vsel %vm1154, %v1142, 0.0
    %1156 = vadd.xlane.f32.xlu0 %v1155
    %v1157 = vpop.xlane.xlu0 %1156
    %v1158 = vrcp.pop 32.0
    %v1159 = vmul.f32 %v1147, %v1158
    %v1160 = vmul.f32 %v1150, %v1158
    %v1161 = vmul.f32 %v1153, %v1158
    %v1162 = vmul.f32 %v1157, %v1158
    %v1163 = vsub.f32 %v1139, %v1159
    %v1164 = vsub.f32 %v1140, %v1160
    %v1165 = vsub.f32 %v1141, %v1161
    %v1166 = vsub.f32 %v1142, %v1162
    %v1167 = vmul.f32 %v1163, %v1163
    %v1168 = vmul.f32 %v1164, %v1164
    %v1169 = vmul.f32 %v1165, %v1165
    %v1170 = vmul.f32 %v1166, %v1166
    %v1171 = vsel %vm217, %v1167, 0.0
    %1172 = vadd.xlane.f32.xlu0 %v1171
    %v1173 = vpop.xlane.xlu0 %1172
    %v1174 = vsel %vm217, %v1168, 0.0
    %1175 = vadd.xlane.f32.xlu0 %v1174
    %v1176 = vpop.xlane.xlu0 %1175
    %v1177 = vsel %vm217, %v1169, 0.0
    %1178 = vadd.xlane.f32.xlu0 %v1177
    %v1179 = vpop.xlane.xlu0 %1178
    %v1180 = vsel %vm1154, %v1170, 0.0
    %1181 = vadd.xlane.f32.xlu0 %v1180
    %v1182 = vpop.xlane.xlu0 %1181
    %v1183 = vmul.f32 %v1173, %v1158
    %v1184 = vmul.f32 %v1176, %v1158
    %v1185 = vmul.f32 %v1179, %v1158
    %v1186 = vmul.f32 %v1182, %v1158
    %v1187 = vadd.f32 %v1183, 1e-05
    %v1188 = vadd.f32 %v1184, 1e-05
    %v1189 = vadd.f32 %v1185, 1e-05
    %v1190 = vadd.f32 %v1186, 1e-05
    %v1191 = vrsqrt.pop %v1187
    %v1192 = vrsqrt.pop %v1188
    %v1193 = vrsqrt.pop %v1189
    %v1194 = vrsqrt.pop %v1190
    %v1195 = vmul.f32 %v1163, %v1191
    %v1196 = vmul.f32 %v1164, %v1192
    %v1197 = vmul.f32 %v1165, %v1193
    %v1198 = vmul.f32 %v1166, %v1194
    %v1200 = vlaneseq
    %v1201 = vshrl.u32 %v1200, 7
    %v1202 = vsub.s32 0, %v1201
    %v1203 = vrot.slane %v1143, %v1202
    %v1205 = vmul.f32 %v1195, %v1203
    %v1206 = vmul.f32 %v1196, %v1203
    %v1207 = vmul.f32 %v1197, %v1203
    %v1208 = vmul.f32 %v1198, %v1203
    %v1210 = vlaneseq
    %v1211 = vshrl.u32 %v1210, 7
    %v1212 = vsub.s32 0, %v1211
    %v1213 = vrot.slane %v1144, %v1212
    %v1215 = vadd.f32 %v1205, %v1213
    %v1216 = vadd.f32 %v1206, %v1213
    %v1217 = vadd.f32 %v1207, %v1213
    %v1218 = vadd.f32 %v1208, %v1213
    %v1219 = vld [vmem:[%s25] sm:$0xf]
    %v1220 = vld [vmem:[%s25 + $0x4] sm:$0xf]
    %v1221 = vld [vmem:[%s25 + $0x8] sm:$0xf]
    %v1222 = vld [vmem:[%s25 + $0xc] sm:$0xf]
    %v1223 = vpack.c.bf16 %v1216, %v1215
    %v1224 = vpack.c.bf16 %v1218, %v1217
    %v1225 = vld [vmem:[%s27] sm:$0x1]
    %v1227 = vlaneseq
    %v1228 = vshrl.u32 %v1227, 7
    %v1229 = vsub.s32 0, %v1228
    %v1230 = vrot.slane %v1225, %v1229
    %v1236 = vunpack.c.l.b16 %v1219
    %v1237 = vunpack.c.l.b16 %v1220
    %v1238 = vunpack.c.l.b16 %v1221
    %v1239 = vunpack.c.l.b16 %v1222
    %v1240 = vpack.c.b16 %v1237, %v1236
    %v1241 = vpack.c.b16 %v1239, %v1238
    %v1245 = vsel %vm217, %v1223, 0
    %v1248 = vsel %vm217, %v1224, 0
    %1250 = vmatprep.subr.bf16.mxu0 0
    %1251 = vmatpush1.bf16.msra.mxu0 %v1240
    %1252 = vmatprep.subr.bf16.mxu0 0
    %1253 = vmatpush1.bf16.msra.mxu0 %v1241
    %1254 = vmatprep.subr.bf16.mxu0 0
    %1255 = vmatpush1.bf16.msra.mxu0 0
    %1256 = vmatprep.subr.bf16.mxu0 0
    %1257 = vmatpush1.bf16.msra.mxu0 0
    %1258 = vmatprep.subr.bf16.mxu0 0
    %1259 = vmatpush1.bf16.msra.mxu0 0
    %1260 = vmatprep.subr.bf16.mxu0 0
    %1261 = vmatpush1.bf16.msra.mxu0 0
    %1262 = vmatprep.subr.bf16.mxu0 0
    %1263 = vmatpush1.bf16.msra.mxu0 0
    %1264 = vmatprep.subr.bf16.mxu0 0
    %1265 = vmatpush1.bf16.msra.mxu0 0
    %1266 = vmatprep.subr.bf16.mxu0 0
    %1267 = vmatpush1.bf16.msra.mxu0 0
    %1268 = vmatprep.subr.bf16.mxu0 0
    %1269 = vmatpush1.bf16.msra.mxu0 0
    %1270 = vmatprep.subr.bf16.mxu0 0
    %1271 = vmatpush1.bf16.msra.mxu0 0
    %1272 = vmatprep.subr.bf16.mxu0 0
    %1273 = vmatpush1.bf16.msra.mxu0 0
    %1274 = vmatprep.subr.bf16.mxu0 0
    %1275 = vmatpush1.bf16.msra.mxu0 0
    %1276 = vmatprep.subr.bf16.mxu0 0
    %1277 = vmatpush1.bf16.msra.mxu0 0
    %1278 = vmatprep.subr.bf16.mxu0 0
    %1279 = vmatpush1.bf16.msra.mxu0 0
    %1280 = vmatprep.subr.bf16.mxu0 0
    %1281 = vmatpush1.bf16.msra.mxu0 0
    %1282 = vmatprep.mubr.bf16.mxu0 0
    %1283 = vmatmul.mubr.bf16.gmra.mrb[0].mxu0 %v1245
    %v1284 = vpop.f32.mrb[0].mxu0
    %v1285 = vadd.f32 %v1230, %v1284
    %v1286 = vpop.f32.mrb[0].mxu0
    %v1287 = vpop.f32.mrb[0].mxu0
    %v1288 = vadd.f32 %v1230, %v1287
    %v1289 = vpop.f32.mrb[0].mxu0
    %1290 = vmatprep.mubr.bf16.mxu0 0
    %1291 = vmatmul.mubr.bf16.gmra.mrb[0].mxu0 %v1248
    %v1292 = vpop.f32.mrb[0].mxu0
    %v1293 = vadd.f32 %v1230, %v1292
    %v1294 = vpop.f32.mrb[0].mxu0
    %v1295 = vpop.f32.mrb[0].mxu0
    %v1296 = vadd.f32 %v1230, %v1295
    %v1297 = vpop.f32.mrb[0].mxu0
    %1298 = vdwg.mxu0
    %v1299 = vmax.f32 %v1285, 0.0
    %v1300 = vmax.f32 %v1288, 0.0
    %v1301 = vmax.f32 %v1293, 0.0
    %v1302 = vmax.f32 %v1296, 0.0
    %v1303 = vld [vmem:[%s29] sm:$0xf]
    %v1304 = vld [vmem:[%s29 + $0x4] sm:$0xf]
    %v1305 = vld [vmem:[%s29 + $0x8] sm:$0xf]
    %v1306 = vld [vmem:[%s29 + $0xc] sm:$0xf]
    %v1307 = vld [vmem:[%s29 + $0x10] sm:$0xf]
    %v1308 = vld [vmem:[%s29 + $0x14] sm:$0xf]
    %v1309 = vld [vmem:[%s29 + $0x18] sm:$0xf]
    %v1310 = vld [vmem:[%s29 + $0x1c] sm:$0xf]
    %v1311 = vpack.c.bf16 %v1300, %v1299
    %v1312 = vpack.c.bf16 %v1302, %v1301
    %v1313 = vld [vmem:[%s31] sm:$0x1]
    %v1315 = vlaneseq
    %v1316 = vshrl.u32 %v1315, 7
    %v1317 = vsub.s32 0, %v1316
    %v1318 = vrot.slane %v1313, %v1317
    %v1328 = vunpack.c.l.b16 %v1303
    %v1329 = vunpack.c.l.b16 %v1304
    %v1330 = vunpack.c.l.b16 %v1305
    %v1331 = vunpack.c.l.b16 %v1306
    %v1332 = vunpack.c.l.b16 %v1307
    %v1333 = vunpack.c.l.b16 %v1308
    %v1334 = vunpack.c.l.b16 %v1309
    %v1335 = vunpack.c.l.b16 %v1310
    %v1336 = vpack.c.b16 %v1329, %v1328
    %v1337 = vpack.c.b16 %v1331, %v1330
    %v1338 = vpack.c.b16 %v1333, %v1332
    %v1339 = vpack.c.b16 %v1335, %v1334
    %vm1344 = vcmask 523264
    %v1346 = vsel %vm1344, %v1311, 0
    %v1349 = vsel %vm1344, %v1312, 0
    %1351 = vmatprep.subr.bf16.mxu0 0
    %1352 = vmatpush1.bf16.msra.mxu0 %v1336
    %1353 = vmatprep.subr.bf16.mxu0 0
    %1354 = vmatpush1.bf16.msra.mxu0 %v1337
    %1355 = vmatprep.subr.bf16.mxu0 0
    %1356 = vmatpush1.bf16.msra.mxu0 %v1338
    %1357 = vmatprep.subr.bf16.mxu0 0
    %1358 = vmatpush1.bf16.msra.mxu0 %v1339
    %1359 = vmatprep.subr.bf16.mxu0 0
    %1360 = vmatpush1.bf16.msra.mxu0 0
    %1361 = vmatprep.subr.bf16.mxu0 0
    %1362 = vmatpush1.bf16.msra.mxu0 0
    %1363 = vmatprep.subr.bf16.mxu0 0
    %1364 = vmatpush1.bf16.msra.mxu0 0
    %1365 = vmatprep.subr.bf16.mxu0 0
    %1366 = vmatpush1.bf16.msra.mxu0 0
    %1367 = vmatprep.subr.bf16.mxu0 0
    %1368 = vmatpush1.bf16.msra.mxu0 0
    %1369 = vmatprep.subr.bf16.mxu0 0
    %1370 = vmatpush1.bf16.msra.mxu0 0
    %1371 = vmatprep.subr.bf16.mxu0 0
    %1372 = vmatpush1.bf16.msra.mxu0 0
    %1373 = vmatprep.subr.bf16.mxu0 0
    %1374 = vmatpush1.bf16.msra.mxu0 0
    %1375 = vmatprep.subr.bf16.mxu0 0
    %1376 = vmatpush1.bf16.msra.mxu0 0
    %1377 = vmatprep.subr.bf16.mxu0 0
    %1378 = vmatpush1.bf16.msra.mxu0 0
    %1379 = vmatprep.subr.bf16.mxu0 0
    %1380 = vmatpush1.bf16.msra.mxu0 0
    %1381 = vmatprep.subr.bf16.mxu0 0
    %1382 = vmatpush1.bf16.msra.mxu0 0
    %1383 = vmatprep.mubr.bf16.mxu0 0
    %1384 = vmatmul.mubr.bf16.gmra.mrb[0].mxu0 %v1346
    %v1385 = vpop.f32.mrb[0].mxu0
    %v1386 = vadd.f32 %v1318, %v1385
    %v1387 = vpop.f32.mrb[0].mxu0
    %v1388 = vpop.f32.mrb[0].mxu0
    %v1389 = vadd.f32 %v1318, %v1388
    %v1390 = vpop.f32.mrb[0].mxu0
    %1391 = vmatprep.mubr.bf16.mxu0 0
    %1392 = vmatmul.mubr.bf16.gmra.mrb[0].mxu0 %v1349
    %v1393 = vpop.f32.mrb[0].mxu0
    %v1394 = vadd.f32 %v1318, %v1393
    %v1395 = vpop.f32.mrb[0].mxu0
    %v1396 = vpop.f32.mrb[0].mxu0
    %v1397 = vadd.f32 %v1318, %v1396
    %v1398 = vpop.f32.mrb[0].mxu0
    %1399 = vdwg.mxu0
    %v1400 = vadd.f32 %v1215, %v1386
    %v1401 = vadd.f32 %v1216, %v1389
    %v1402 = vadd.f32 %v1217, %v1394
    %v1403 = vadd.f32 %v1218, %v1397
    %v1404 = vld [vmem:[%s33] sm:$0x1]
    %v1405 = vld [vmem:[%s35] sm:$0x1]
    %v1406 = vsel %vm217, %v1400, 0.0
    %1407 = vadd.xlane.f32.xlu0 %v1406
    %v1408 = vpop.xlane.xlu0 %1407
    %v1409 = vsel %vm217, %v1401, 0.0
    %1410 = vadd.xlane.f32.xlu0 %v1409
    %v1411 = vpop.xlane.xlu0 %1410
    %v1412 = vsel %vm217, %v1402, 0.0
    %1413 = vadd.xlane.f32.xlu0 %v1412
    %v1414 = vpop.xlane.xlu0 %1413
    %v1415 = vsel %vm1154, %v1403, 0.0
    %1416 = vadd.xlane.f32.xlu0 %v1415
    %v1417 = vpop.xlane.xlu0 %1416
    %v1418 = vmul.f32 %v1408, %v1158
    %v1419 = vmul.f32 %v1411, %v1158
    %v1420 = vmul.f32 %v1414, %v1158
    %v1421 = vmul.f32 %v1417, %v1158
    %v1422 = vsub.f32 %v1400, %v1418
    %v1423 = vsub.f32 %v1401, %v1419
    %v1424 = vsub.f32 %v1402, %v1420
    %v1425 = vsub.f32 %v1403, %v1421
    %v1426 = vmul.f32 %v1422, %v1422
    %v1427 = vmul.f32 %v1423, %v1423
    %v1428 = vmul.f32 %v1424, %v1424
    %v1429 = vmul.f32 %v1425, %v1425
    %v1430 = vsel %vm217, %v1426, 0.0
    %1431 = vadd.xlane.f32.xlu0 %v1430
    %v1432 = vpop.xlane.xlu0 %1431
    %v1433 = vsel %vm217, %v1427, 0.0
    %1434 = vadd.xlane.f32.xlu0 %v1433
    %v1435 = vpop.xlane.xlu0 %1434
    %v1436 = vsel %vm217, %v1428, 0.0
    %1437 = vadd.xlane.f32.xlu0 %v1436
    %v1438 = vpop.xlane.xlu0 %1437
    %v1439 = vsel %vm1154, %v1429, 0.0
    %1440 = vadd.xlane.f32.xlu0 %v1439
    %v1441 = vpop.xlane.xlu0 %1440
    %v1442 = vmul.f32 %v1432, %v1158
    %v1443 = vmul.f32 %v1435, %v1158
    %v1444 = vmul.f32 %v1438, %v1158
    %v1445 = vmul.f32 %v1441, %v1158
    %v1446 = vadd.f32 %v1442, 1e-05
    %v1447 = vadd.f32 %v1443, 1e-05
    %v1448 = vadd.f32 %v1444, 1e-05
    %v1449 = vadd.f32 %v1445, 1e-05
    %v1450 = vrsqrt.pop %v1446
    %v1451 = vrsqrt.pop %v1447
    %v1452 = vrsqrt.pop %v1448
    %v1453 = vrsqrt.pop %v1449
    %v1454 = vmul.f32 %v1422, %v1450
    %v1455 = vmul.f32 %v1423, %v1451
    %v1456 = vmul.f32 %v1424, %v1452
    %v1457 = vmul.f32 %v1425, %v1453
    %v1459 = vlaneseq
    %v1460 = vshrl.u32 %v1459, 7
    %v1461 = vsub.s32 0, %v1460
    %v1462 = vrot.slane %v1404, %v1461
    %v1464 = vmul.f32 %v1454, %v1462
    %v1465 = vmul.f32 %v1455, %v1462
    %v1466 = vmul.f32 %v1456, %v1462
    %v1467 = vmul.f32 %v1457, %v1462
    %v1469 = vlaneseq
    %v1470 = vshrl.u32 %v1469, 7
    %v1471 = vsub.s32 0, %v1470
    %v1472 = vrot.slane %v1405, %v1471
    %v1474 = vadd.f32 %v1464, %v1472
    %v1475 = vadd.f32 %v1465, %v1472
    %v1476 = vadd.f32 %v1466, %v1472
    %v1477 = vadd.f32 %v1467, %v1472
    %s1478 = scalar_lea.vmem %s13, 16
    %v1479 = vld [vmem:[%s1478] sm:$0xf]
    %v1480 = vld [vmem:[%s1478 + $0x4] sm:$0xf]
    %v1481 = vld [vmem:[%s1478 + $0x8] sm:$0xf]
    %v1482 = vld [vmem:[%s1478 + $0xc] sm:$0xf]
    %v1483 = vpack.c.bf16 %v1475, %v1474
    %v1484 = vpack.c.bf16 %v1477, %v1476
    %s1485 = scalar_lea.vmem %s15, 1
    %v1486 = vld [vmem:[%s1485] sm:$0x1]
    %v1488 = vlaneseq
    %v1489 = vshrl.u32 %v1488, 7
    %v1490 = vsub.s32 0, %v1489
    %v1491 = vrot.slane %v1486, %v1490
    %v1497 = vunpack.c.l.b16 %v1479
    %v1498 = vunpack.c.l.b16 %v1480
    %v1499 = vunpack.c.l.b16 %v1481
    %v1500 = vunpack.c.l.b16 %v1482
    %v1501 = vpack.c.b16 %v1498, %v1497
    %v1502 = vpack.c.b16 %v1500, %v1499
    %v1506 = vsel %vm217, %v1483, 0
    %v1509 = vsel %vm217, %v1484, 0
    %1511 = vmatprep.subr.bf16.mxu0 0
    %1512 = vmatpush1.bf16.msra.mxu0 %v1501
    %1513 = vmatprep.subr.bf16.mxu0 0
    %1514 = vmatpush1.bf16.msra.mxu0 %v1502
    %1515 = vmatprep.subr.bf16.mxu0 0
    %1516 = vmatpush1.bf16.msra.mxu0 0
    %1517 = vmatprep.subr.bf16.mxu0 0
    %1518 = vmatpush1.bf16.msra.mxu0 0
    %1519 = vmatprep.subr.bf16.mxu0 0
    %1520 = vmatpush1.bf16.msra.mxu0 0
    %1521 = vmatprep.subr.bf16.mxu0 0
    %1522 = vmatpush1.bf16.msra.mxu0 0
    %1523 = vmatprep.subr.bf16.mxu0 0
    %1524 = vmatpush1.bf16.msra.mxu0 0
    %1525 = vmatprep.subr.bf16.mxu0 0
    %1526 = vmatpush1.bf16.msra.mxu0 0
    %1527 = vmatprep.subr.bf16.mxu0 0
    %1528 = vmatpush1.bf16.msra.mxu0 0
    %1529 = vmatprep.subr.bf16.mxu0 0
    %1530 = vmatpush1.bf16.msra.mxu0 0
    %1531 = vmatprep.subr.bf16.mxu0 0
    %1532 = vmatpush1.bf16.msra.mxu0 0
    %1533 = vmatprep.subr.bf16.mxu0 0
    %1534 = vmatpush1.bf16.msra.mxu0 0
    %1535 = vmatprep.subr.bf16.mxu0 0
    %1536 = vmatpush1.bf16.msra.mxu0 0
    %1537 = vmatprep.subr.bf16.mxu0 0
    %1538 = vmatpush1.bf16.msra.mxu0 0
    %1539 = vmatprep.subr.bf16.mxu0 0
    %1540 = vmatpush1.bf16.msra.mxu0 0
    %1541 = vmatprep.subr.bf16.mxu0 0
    %1542 = vmatpush1.bf16.msra.mxu0 0
    %1543 = vmatprep.mubr.bf16.mxu0 0
    %1544 = vmatmul.mubr.bf16.gmra.mrb[0].mxu0 %v1506
    %v1545 = vpop.f32.mrb[0].mxu0
    %v1546 = vadd.f32 %v1491, %v1545
    %v1547 = vpop.f32.mrb[0].mxu0
    %v1548 = vpop.f32.mrb[0].mxu0
    %v1549 = vadd.f32 %v1491, %v1548
    %v1550 = vpop.f32.mrb[0].mxu0
    %1551 = vmatprep.mubr.bf16.mxu0 0
    %1552 = vmatmul.mubr.bf16.gmra.mrb[0].mxu0 %v1509
    %v1553 = vpop.f32.mrb[0].mxu0
    %v1554 = vadd.f32 %v1491, %v1553
    %v1555 = vpop.f32.mrb[0].mxu0
    %v1556 = vpop.f32.mrb[0].mxu0
    %v1557 = vadd.f32 %v1491, %v1556
    %v1558 = vpop.f32.mrb[0].mxu0
    %1559 = vdwg.mxu0
    %v1560 = vmul.f32 %v1546, 0.35355338
    %v1561 = vmul.f32 %v1549, 0.35355338
    %v1562 = vmul.f32 %v1554, 0.35355338
    %v1563 = vmul.f32 %v1557, 0.35355338
    %v1564 = vpack.c.bf16 %v1561, %v1560
    %v1565 = vpack.c.bf16 %v1563, %v1562
    %v1566 = vpack.c.bf16 %v1549, %v1546
    %v1567 = vpack.c.bf16 %v1557, %v1554
    %1570 = vrot.lane.b32.xlu0 %v1566, 96
    %v1571 = vpop.permute.xlu0 %1570
    %1572 = vrot.lane.b32.xlu0 %v1567, 96
    %v1573 = vpop.permute.xlu0 %1572
    %v1575 = vsel %vm287, %v1564, 0
    %v1578 = vsel %vm287, %v1565, 0
    %v1581 = vsel %vm287, %v1571, 0
    %v1584 = vsel %vm287, %v1573, 0
    %1586 = vmatprep.subr.bf16.mxu0 0
    %1587 = vmatpush1.bf16.xpose.msra.mxu0 %v1581
    %1588 = vmatprep.subr.bf16.mxu0 0
    %1589 = vmatpush1.bf16.xpose.msra.mxu0 %v1584
    %1590 = vmatprep.subr.bf16.mxu0 0
    %1591 = vmatpush1.bf16.xpose.msra.mxu0 0
    %1592 = vmatprep.subr.bf16.mxu0 0
    %1593 = vmatpush1.bf16.xpose.msra.mxu0 0
    %1594 = vmatprep.subr.bf16.mxu0 0
    %1595 = vmatpush1.bf16.xpose.msra.mxu0 0
    %1596 = vmatprep.subr.bf16.mxu0 0
    %1597 = vmatpush1.bf16.xpose.msra.mxu0 0
    %1598 = vmatprep.subr.bf16.mxu0 0
    %1599 = vmatpush1.bf16.xpose.msra.mxu0 0
    %1600 = vmatprep.subr.bf16.mxu0 0
    %1601 = vmatpush1.bf16.xpose.msra.mxu0 0
    %1602 = vmatprep.subr.bf16.mxu0 0
    %1603 = vmatpush1.bf16.xpose.msra.mxu0 0
    %1604 = vmatprep.subr.bf16.mxu0 0
    %1605 = vmatpush1.bf16.xpose.msra.mxu0 0
    %1606 = vmatprep.subr.bf16.mxu0 0
    %1607 = vmatpush1.bf16.xpose.msra.mxu0 0
    %1608 = vmatprep.subr.bf16.mxu0 0
    %1609 = vmatpush1.bf16.xpose.msra.mxu0 0
    %1610 = vmatprep.subr.bf16.mxu0 0
    %1611 = vmatpush1.bf16.xpose.msra.mxu0 0
    %1612 = vmatprep.subr.bf16.mxu0 0
    %1613 = vmatpush1.bf16.xpose.msra.mxu0 0
    %1614 = vmatprep.subr.bf16.mxu0 0
    %1615 = vmatpush1.bf16.xpose.msra.mxu0 0
    %1616 = vmatprep.subr.bf16.mxu0 0
    %1617 = vmatpush1.bf16.xpose.msra.mxu0 0
    %1618 = vmatprep.mubr.bf16.mxu0 0
    %1619 = vmatmul.mubr.bf16.gmra.mrb[0].mxu0 %v1575
    %v1620 = vpop.f32.mrb[0].mxu0
    %v1621 = vadd.f32 %v188, %v1620
    %v1622 = vpop.f32.mrb[0].mxu0
    %v1623 = vpop.f32.mrb[0].mxu0
    %v1624 = vadd.f32 %v189, %v1623
    %v1625 = vpop.f32.mrb[0].mxu0
    %1626 = vmatprep.mubr.bf16.mxu0 0
    %1627 = vmatmul.mubr.bf16.gmra.mrb[0].mxu0 %v1578
    %v1628 = vpop.f32.mrb[0].mxu0
    %v1629 = vadd.f32 %v190, %v1628
    %v1630 = vpop.f32.mrb[0].mxu0
    %v1631 = vpop.f32.mrb[0].mxu0
    %v1632 = vadd.f32 %v191, %v1631
    %v1633 = vpop.f32.mrb[0].mxu0
    %1634 = vdwg.mxu0
    %v1635 = vsel %vm349, %v1621, -inf
    %1636 = vmax.xlane.f32.xlu0 %v1635
    %v1637 = vpop.xlane.xlu0 %1636
    %v1638 = vsel %vm349, %v1624, -inf
    %1639 = vmax.xlane.f32.xlu0 %v1638
    %v1640 = vpop.xlane.xlu0 %1639
    %v1641 = vsel %vm349, %v1629, -inf
    %1642 = vmax.xlane.f32.xlu0 %v1641
    %v1643 = vpop.xlane.xlu0 %1642
    %v1644 = vsel %vm359, %v1632, -inf
    %1645 = vmax.xlane.f32.xlu0 %v1644
    %v1646 = vpop.xlane.xlu0 %1645
    %v1647 = vsub.f32 %v1621, %v1637
    %v1648 = vsub.f32 %v1624, %v1640
    %v1649 = vsub.f32 %v1629, %v1643
    %v1650 = vsub.f32 %v1632, %v1646
    %v1651 = vmul.f32 %v1647, 1.442695
    %v1652 = vpow.pop %v1651
    %v1653 = vmul.f32 %v1648, 1.442695
    %v1654 = vpow.pop %v1653
    %v1655 = vmul.f32 %v1649, 1.442695
    %v1656 = vpow.pop %v1655
    %v1657 = vmul.f32 %v1650, 1.442695
    %v1658 = vpow.pop %v1657
    %v1659 = vsel %vm349, %v1652, 0.0
    %1660 = vadd.xlane.f32.xlu0 %v1659
    %v1661 = vpop.xlane.xlu0 %1660
    %v1662 = vsel %vm349, %v1654, 0.0
    %1663 = vadd.xlane.f32.xlu0 %v1662
    %v1664 = vpop.xlane.xlu0 %1663
    %v1665 = vsel %vm349, %v1656, 0.0
    %1666 = vadd.xlane.f32.xlu0 %v1665
    %v1667 = vpop.xlane.xlu0 %1666
    %v1668 = vsel %vm359, %v1658, 0.0
    %1669 = vadd.xlane.f32.xlu0 %v1668
    %v1670 = vpop.xlane.xlu0 %1669
    %v1671 = vrcp.pop %v1661
    %v1672 = vrcp.pop %v1664
    %v1673 = vrcp.pop %v1667
    %v1674 = vrcp.pop %v1670
    %v1675 = vmul.f32 %v1652, %v1671
    %v1676 = vmul.f32 %v1654, %v1672
    %v1677 = vmul.f32 %v1656, %v1673
    %v1678 = vmul.f32 %v1658, %v1674
    %v1679 = vpack.c.bf16 %v1676, %v1675
    %v1680 = vpack.c.bf16 %v1678, %v1677
    %1681 = vrot.lane.b32.xlu0 %v1566, 64
    %v1682 = vpop.permute.xlu0 %1681
    %1683 = vrot.lane.b32.xlu0 %v1567, 64
    %v1684 = vpop.permute.xlu0 %1683
    %v1687 = vsel %vm349, %v1679, 0
    %v1690 = vsel %vm349, %v1680, 0
    %v1693 = vsel %vm408, %v1684, 0
    %1695 = vmatprep.subr.bf16.mxu0 0
    %1696 = vmatpush1.bf16.msra.mxu0 %v1682
    %1697 = vmatprep.subr.bf16.mxu0 0
    %1698 = vmatpush1.bf16.msra.mxu0 %v1693
    %1699 = vmatprep.subr.bf16.mxu0 0
    %1700 = vmatpush1.bf16.msra.mxu0 0
    %1701 = vmatprep.subr.bf16.mxu0 0
    %1702 = vmatpush1.bf16.msra.mxu0 0
    %1703 = vmatprep.subr.bf16.mxu0 0
    %1704 = vmatpush1.bf16.msra.mxu0 0
    %1705 = vmatprep.subr.bf16.mxu0 0
    %1706 = vmatpush1.bf16.msra.mxu0 0
    %1707 = vmatprep.subr.bf16.mxu0 0
    %1708 = vmatpush1.bf16.msra.mxu0 0
    %1709 = vmatprep.subr.bf16.mxu0 0
    %1710 = vmatpush1.bf16.msra.mxu0 0
    %1711 = vmatprep.subr.bf16.mxu0 0
    %1712 = vmatpush1.bf16.msra.mxu0 0
    %1713 = vmatprep.subr.bf16.mxu0 0
    %1714 = vmatpush1.bf16.msra.mxu0 0
    %1715 = vmatprep.subr.bf16.mxu0 0
    %1716 = vmatpush1.bf16.msra.mxu0 0
    %1717 = vmatprep.subr.bf16.mxu0 0
    %1718 = vmatpush1.bf16.msra.mxu0 0
    %1719 = vmatprep.subr.bf16.mxu0 0
    %1720 = vmatpush1.bf16.msra.mxu0 0
    %1721 = vmatprep.subr.bf16.mxu0 0
    %1722 = vmatpush1.bf16.msra.mxu0 0
    %1723 = vmatprep.subr.bf16.mxu0 0
    %1724 = vmatpush1.bf16.msra.mxu0 0
    %1725 = vmatprep.subr.bf16.mxu0 0
    %1726 = vmatpush1.bf16.msra.mxu0 0
    %1727 = vmatprep.mubr.bf16.mxu0 0
    %1728 = vmatmul.mubr.bf16.gmra.mrb[0].mxu0 %v1687
    %v1729 = vpop.f32.mrb[0].mxu0
    %v1730 = vadd.f32 0.0, %v1729
    %v1731 = vpop.f32.mrb[0].mxu0
    %v1732 = vpop.f32.mrb[0].mxu0
    %v1733 = vadd.f32 0.0, %v1732
    %v1734 = vpop.f32.mrb[0].mxu0
    %1735 = vmatprep.mubr.bf16.mxu0 0
    %1736 = vmatmul.mubr.bf16.gmra.mrb[0].mxu0 %v1690
    %v1737 = vpop.f32.mrb[0].mxu0
    %v1738 = vadd.f32 0.0, %v1737
    %v1739 = vpop.f32.mrb[0].mxu0
    %v1740 = vpop.f32.mrb[0].mxu0
    %v1741 = vadd.f32 0.0, %v1740
    %v1742 = vpop.f32.mrb[0].mxu0
    %1743 = vdwg.mxu0
    %1746 = vrot.lane.b32.xlu0 %v1564, 120
    %v1747 = vpop.permute.xlu0 %1746
    %1748 = vrot.lane.b32.xlu0 %v1565, 120
    %v1749 = vpop.permute.xlu0 %1748
    %1750 = vrot.lane.b32.xlu0 %v1566, 88
    %v1751 = vpop.permute.xlu0 %1750
    %1752 = vrot.lane.b32.xlu0 %v1567, 88
    %v1753 = vpop.permute.xlu0 %1752
    %v1755 = vsel %vm287, %v1747, 0
    %v1758 = vsel %vm287, %v1749, 0
    %v1761 = vsel %vm287, %v1751, 0
    %v1764 = vsel %vm287, %v1753, 0
    %1766 = vmatprep.subr.bf16.mxu0 0
    %1767 = vmatpush1.bf16.xpose.msra.mxu0 %v1761
    %1768 = vmatprep.subr.bf16.mxu0 0
    %1769 = vmatpush1.bf16.xpose.msra.mxu0 %v1764
    %1770 = vmatprep.subr.bf16.mxu0 0
    %1771 = vmatpush1.bf16.xpose.msra.mxu0 0
    %1772 = vmatprep.subr.bf16.mxu0 0
    %1773 = vmatpush1.bf16.xpose.msra.mxu0 0
    %1774 = vmatprep.subr.bf16.mxu0 0
    %1775 = vmatpush1.bf16.xpose.msra.mxu0 0
    %1776 = vmatprep.subr.bf16.mxu0 0
    %1777 = vmatpush1.bf16.xpose.msra.mxu0 0
    %1778 = vmatprep.subr.bf16.mxu0 0
    %1779 = vmatpush1.bf16.xpose.msra.mxu0 0
    %1780 = vmatprep.subr.bf16.mxu0 0
    %1781 = vmatpush1.bf16.xpose.msra.mxu0 0
    %1782 = vmatprep.subr.bf16.mxu0 0
    %1783 = vmatpush1.bf16.xpose.msra.mxu0 0
    %1784 = vmatprep.subr.bf16.mxu0 0
    %1785 = vmatpush1.bf16.xpose.msra.mxu0 0
    %1786 = vmatprep.subr.bf16.mxu0 0
    %1787 = vmatpush1.bf16.xpose.msra.mxu0 0
    %1788 = vmatprep.subr.bf16.mxu0 0
    %1789 = vmatpush1.bf16.xpose.msra.mxu0 0
    %1790 = vmatprep.subr.bf16.mxu0 0
    %1791 = vmatpush1.bf16.xpose.msra.mxu0 0
    %1792 = vmatprep.subr.bf16.mxu0 0
    %1793 = vmatpush1.bf16.xpose.msra.mxu0 0
    %1794 = vmatprep.subr.bf16.mxu0 0
    %1795 = vmatpush1.bf16.xpose.msra.mxu0 0
    %1796 = vmatprep.subr.bf16.mxu0 0
    %1797 = vmatpush1.bf16.xpose.msra.mxu0 0
    %1798 = vmatprep.mubr.bf16.mxu0 0
    %1799 = vmatmul.mubr.bf16.gmra.mrb[0].mxu0 %v1755
    %v1800 = vpop.f32.mrb[0].mxu0
    %v1801 = vadd.f32 %v188, %v1800
    %v1802 = vpop.f32.mrb[0].mxu0
    %v1803 = vpop.f32.mrb[0].mxu0
    %v1804 = vadd.f32 %v189, %v1803
    %v1805 = vpop.f32.mrb[0].mxu0
    %1806 = vmatprep.mubr.bf16.mxu0 0
    %1807 = vmatmul.mubr.bf16.gmra.mrb[0].mxu0 %v1758
    %v1808 = vpop.f32.mrb[0].mxu0
    %v1809 = vadd.f32 %v190, %v1808
    %v1810 = vpop.f32.mrb[0].mxu0
    %v1811 = vpop.f32.mrb[0].mxu0
    %v1812 = vadd.f32 %v191, %v1811
    %v1813 = vpop.f32.mrb[0].mxu0
    %1814 = vdwg.mxu0
    %v1815 = vsel %vm349, %v1801, -inf
    %1816 = vmax.xlane.f32.xlu0 %v1815
    %v1817 = vpop.xlane.xlu0 %1816
    %v1818 = vsel %vm349, %v1804, -inf
    %1819 = vmax.xlane.f32.xlu0 %v1818
    %v1820 = vpop.xlane.xlu0 %1819
    %v1821 = vsel %vm349, %v1809, -inf
    %1822 = vmax.xlane.f32.xlu0 %v1821
    %v1823 = vpop.xlane.xlu0 %1822
    %v1824 = vsel %vm359, %v1812, -inf
    %1825 = vmax.xlane.f32.xlu0 %v1824
    %v1826 = vpop.xlane.xlu0 %1825
    %v1827 = vsub.f32 %v1801, %v1817
    %v1828 = vsub.f32 %v1804, %v1820
    %v1829 = vsub.f32 %v1809, %v1823
    %v1830 = vsub.f32 %v1812, %v1826
    %v1831 = vmul.f32 %v1827, 1.442695
    %v1832 = vpow.pop %v1831
    %v1833 = vmul.f32 %v1828, 1.442695
    %v1834 = vpow.pop %v1833
    %v1835 = vmul.f32 %v1829, 1.442695
    %v1836 = vpow.pop %v1835
    %v1837 = vmul.f32 %v1830, 1.442695
    %v1838 = vpow.pop %v1837
    %v1839 = vsel %vm349, %v1832, 0.0
    %1840 = vadd.xlane.f32.xlu0 %v1839
    %v1841 = vpop.xlane.xlu0 %1840
    %v1842 = vsel %vm349, %v1834, 0.0
    %1843 = vadd.xlane.f32.xlu0 %v1842
    %v1844 = vpop.xlane.xlu0 %1843
    %v1845 = vsel %vm349, %v1836, 0.0
    %1846 = vadd.xlane.f32.xlu0 %v1845
    %v1847 = vpop.xlane.xlu0 %1846
    %v1848 = vsel %vm359, %v1838, 0.0
    %1849 = vadd.xlane.f32.xlu0 %v1848
    %v1850 = vpop.xlane.xlu0 %1849
    %v1851 = vrcp.pop %v1841
    %v1852 = vrcp.pop %v1844
    %v1853 = vrcp.pop %v1847
    %v1854 = vrcp.pop %v1850
    %v1855 = vmul.f32 %v1832, %v1851
    %v1856 = vmul.f32 %v1834, %v1852
    %v1857 = vmul.f32 %v1836, %v1853
    %v1858 = vmul.f32 %v1838, %v1854
    %v1859 = vpack.c.bf16 %v1856, %v1855
    %v1860 = vpack.c.bf16 %v1858, %v1857
    %1861 = vrot.lane.b32.xlu0 %v1566, 56
    %v1862 = vpop.permute.xlu0 %1861
    %1863 = vrot.lane.b32.xlu0 %v1567, 56
    %v1864 = vpop.permute.xlu0 %1863
    %v1867 = vsel %vm349, %v1859, 0
    %v1870 = vsel %vm349, %v1860, 0
    %v1873 = vsel %vm408, %v1864, 0
    %1875 = vmatprep.subr.bf16.mxu0 0
    %1876 = vmatpush1.bf16.msra.mxu0 %v1862
    %1877 = vmatprep.subr.bf16.mxu0 0
    %1878 = vmatpush1.bf16.msra.mxu0 %v1873
    %1879 = vmatprep.subr.bf16.mxu0 0
    %1880 = vmatpush1.bf16.msra.mxu0 0
    %1881 = vmatprep.subr.bf16.mxu0 0
    %1882 = vmatpush1.bf16.msra.mxu0 0
    %1883 = vmatprep.subr.bf16.mxu0 0
    %1884 = vmatpush1.bf16.msra.mxu0 0
    %1885 = vmatprep.subr.bf16.mxu0 0
    %1886 = vmatpush1.bf16.msra.mxu0 0
    %1887 = vmatprep.subr.bf16.mxu0 0
    %1888 = vmatpush1.bf16.msra.mxu0 0
    %1889 = vmatprep.subr.bf16.mxu0 0
    %1890 = vmatpush1.bf16.msra.mxu0 0
    %1891 = vmatprep.subr.bf16.mxu0 0
    %1892 = vmatpush1.bf16.msra.mxu0 0
    %1893 = vmatprep.subr.bf16.mxu0 0
    %1894 = vmatpush1.bf16.msra.mxu0 0
    %1895 = vmatprep.subr.bf16.mxu0 0
    %1896 = vmatpush1.bf16.msra.mxu0 0
    %1897 = vmatprep.subr.bf16.mxu0 0
    %1898 = vmatpush1.bf16.msra.mxu0 0
    %1899 = vmatprep.subr.bf16.mxu0 0
    %1900 = vmatpush1.bf16.msra.mxu0 0
    %1901 = vmatprep.subr.bf16.mxu0 0
    %1902 = vmatpush1.bf16.msra.mxu0 0
    %1903 = vmatprep.subr.bf16.mxu0 0
    %1904 = vmatpush1.bf16.msra.mxu0 0
    %1905 = vmatprep.subr.bf16.mxu0 0
    %1906 = vmatpush1.bf16.msra.mxu0 0
    %1907 = vmatprep.mubr.bf16.mxu0 0
    %1908 = vmatmul.mubr.bf16.gmra.mrb[0].mxu0 %v1867
    %v1909 = vpop.f32.mrb[0].mxu0
    %v1910 = vadd.f32 0.0, %v1909
    %v1911 = vpop.f32.mrb[0].mxu0
    %v1912 = vpop.f32.mrb[0].mxu0
    %v1913 = vadd.f32 0.0, %v1912
    %v1914 = vpop.f32.mrb[0].mxu0
    %1915 = vmatprep.mubr.bf16.mxu0 0
    %1916 = vmatmul.mubr.bf16.gmra.mrb[0].mxu0 %v1870
    %v1917 = vpop.f32.mrb[0].mxu0
    %v1918 = vadd.f32 0.0, %v1917
    %v1919 = vpop.f32.mrb[0].mxu0
    %v1920 = vpop.f32.mrb[0].mxu0
    %v1921 = vadd.f32 0.0, %v1920
    %v1922 = vpop.f32.mrb[0].mxu0
    %1923 = vdwg.mxu0
    %1924 = vrot.lane.b32.xlu0 %v1564, 112
    %v1925 = vpop.permute.xlu0 %1924
    %1926 = vrot.lane.b32.xlu0 %v1565, 112
    %v1927 = vpop.permute.xlu0 %1926
    %1928 = vrot.lane.b32.xlu0 %v1566, 80
    %v1929 = vpop.permute.xlu0 %1928
    %1930 = vrot.lane.b32.xlu0 %v1567, 80
    %v1931 = vpop.permute.xlu0 %1930
    %v1933 = vsel %vm287, %v1925, 0
    %v1936 = vsel %vm287, %v1927, 0
    %v1939 = vsel %vm287, %v1929, 0
    %v1942 = vsel %vm287, %v1931, 0
    %1944 = vmatprep.subr.bf16.mxu0 0
    %1945 = vmatpush1.bf16.xpose.msra.mxu0 %v1939
    %1946 = vmatprep.subr.bf16.mxu0 0
    %1947 = vmatpush1.bf16.xpose.msra.mxu0 %v1942
    %1948 = vmatprep.subr.bf16.mxu0 0
    %1949 = vmatpush1.bf16.xpose.msra.mxu0 0
    %1950 = vmatprep.subr.bf16.mxu0 0
    %1951 = vmatpush1.bf16.xpose.msra.mxu0 0
    %1952 = vmatprep.subr.bf16.mxu0 0
    %1953 = vmatpush1.bf16.xpose.msra.mxu0 0
    %1954 = vmatprep.subr.bf16.mxu0 0
    %1955 = vmatpush1.bf16.xpose.msra.mxu0 0
    %1956 = vmatprep.subr.bf16.mxu0 0
    %1957 = vmatpush1.bf16.xpose.msra.mxu0 0
    %1958 = vmatprep.subr.bf16.mxu0 0
    %1959 = vmatpush1.bf16.xpose.msra.mxu0 0
    %1960 = vmatprep.subr.bf16.mxu0 0
    %1961 = vmatpush1.bf16.xpose.msra.mxu0 0
    %1962 = vmatprep.subr.bf16.mxu0 0
    %1963 = vmatpush1.bf16.xpose.msra.mxu0 0
    %1964 = vmatprep.subr.bf16.mxu0 0
    %1965 = vmatpush1.bf16.xpose.msra.mxu0 0
    %1966 = vmatprep.subr.bf16.mxu0 0
    %1967 = vmatpush1.bf16.xpose.msra.mxu0 0
    %1968 = vmatprep.subr.bf16.mxu0 0
    %1969 = vmatpush1.bf16.xpose.msra.mxu0 0
    %1970 = vmatprep.subr.bf16.mxu0 0
    %1971 = vmatpush1.bf16.xpose.msra.mxu0 0
    %1972 = vmatprep.subr.bf16.mxu0 0
    %1973 = vmatpush1.bf16.xpose.msra.mxu0 0
    %1974 = vmatprep.subr.bf16.mxu0 0
    %1975 = vmatpush1.bf16.xpose.msra.mxu0 0
    %1976 = vmatprep.mubr.bf16.mxu0 0
    %1977 = vmatmul.mubr.bf16.gmra.mrb[0].mxu0 %v1933
    %v1978 = vpop.f32.mrb[0].mxu0
    %v1979 = vadd.f32 %v188, %v1978
    %v1980 = vpop.f32.mrb[0].mxu0
    %v1981 = vpop.f32.mrb[0].mxu0
    %v1982 = vadd.f32 %v189, %v1981
    %v1983 = vpop.f32.mrb[0].mxu0
    %1984 = vmatprep.mubr.bf16.mxu0 0
    %1985 = vmatmul.mubr.bf16.gmra.mrb[0].mxu0 %v1936
    %v1986 = vpop.f32.mrb[0].mxu0
    %v1987 = vadd.f32 %v190, %v1986
    %v1988 = vpop.f32.mrb[0].mxu0
    %v1989 = vpop.f32.mrb[0].mxu0
    %v1990 = vadd.f32 %v191, %v1989
    %v1991 = vpop.f32.mrb[0].mxu0
    %1992 = vdwg.mxu0
    %v1993 = vsel %vm349, %v1979, -inf
    %1994 = vmax.xlane.f32.xlu0 %v1993
    %v1995 = vpop.xlane.xlu0 %1994
    %v1996 = vsel %vm349, %v1982, -inf
    %1997 = vmax.xlane.f32.xlu0 %v1996
    %v1998 = vpop.xlane.xlu0 %1997
    %v1999 = vsel %vm349, %v1987, -inf
    %2000 = vmax.xlane.f32.xlu0 %v1999
    %v2001 = vpop.xlane.xlu0 %2000
    %v2002 = vsel %vm359, %v1990, -inf
    %2003 = vmax.xlane.f32.xlu0 %v2002
    %v2004 = vpop.xlane.xlu0 %2003
    %v2005 = vsub.f32 %v1979, %v1995
    %v2006 = vsub.f32 %v1982, %v1998
    %v2007 = vsub.f32 %v1987, %v2001
    %v2008 = vsub.f32 %v1990, %v2004
    %v2009 = vmul.f32 %v2005, 1.442695
    %v2010 = vpow.pop %v2009
    %v2011 = vmul.f32 %v2006, 1.442695
    %v2012 = vpow.pop %v2011
    %v2013 = vmul.f32 %v2007, 1.442695
    %v2014 = vpow.pop %v2013
    %v2015 = vmul.f32 %v2008, 1.442695
    %v2016 = vpow.pop %v2015
    %v2017 = vsel %vm349, %v2010, 0.0
    %2018 = vadd.xlane.f32.xlu0 %v2017
    %v2019 = vpop.xlane.xlu0 %2018
    %v2020 = vsel %vm349, %v2012, 0.0
    %2021 = vadd.xlane.f32.xlu0 %v2020
    %v2022 = vpop.xlane.xlu0 %2021
    %v2023 = vsel %vm349, %v2014, 0.0
    %2024 = vadd.xlane.f32.xlu0 %v2023
    %v2025 = vpop.xlane.xlu0 %2024
    %v2026 = vsel %vm359, %v2016, 0.0
    %2027 = vadd.xlane.f32.xlu0 %v2026
    %v2028 = vpop.xlane.xlu0 %2027
    %v2029 = vrcp.pop %v2019
    %v2030 = vrcp.pop %v2022
    %v2031 = vrcp.pop %v2025
    %v2032 = vrcp.pop %v2028
    %v2033 = vmul.f32 %v2010, %v2029
    %v2034 = vmul.f32 %v2012, %v2030
    %v2035 = vmul.f32 %v2014, %v2031
    %v2036 = vmul.f32 %v2016, %v2032
    %v2037 = vpack.c.bf16 %v2034, %v2033
    %v2038 = vpack.c.bf16 %v2036, %v2035
    %2039 = vrot.lane.b32.xlu0 %v1566, 48
    %v2040 = vpop.permute.xlu0 %2039
    %2041 = vrot.lane.b32.xlu0 %v1567, 48
    %v2042 = vpop.permute.xlu0 %2041
    %v2045 = vsel %vm349, %v2037, 0
    %v2048 = vsel %vm349, %v2038, 0
    %v2051 = vsel %vm408, %v2042, 0
    %2053 = vmatprep.subr.bf16.mxu0 0
    %2054 = vmatpush1.bf16.msra.mxu0 %v2040
    %2055 = vmatprep.subr.bf16.mxu0 0
    %2056 = vmatpush1.bf16.msra.mxu0 %v2051
    %2057 = vmatprep.subr.bf16.mxu0 0
    %2058 = vmatpush1.bf16.msra.mxu0 0
    %2059 = vmatprep.subr.bf16.mxu0 0
    %2060 = vmatpush1.bf16.msra.mxu0 0
    %2061 = vmatprep.subr.bf16.mxu0 0
    %2062 = vmatpush1.bf16.msra.mxu0 0
    %2063 = vmatprep.subr.bf16.mxu0 0
    %2064 = vmatpush1.bf16.msra.mxu0 0
    %2065 = vmatprep.subr.bf16.mxu0 0
    %2066 = vmatpush1.bf16.msra.mxu0 0
    %2067 = vmatprep.subr.bf16.mxu0 0
    %2068 = vmatpush1.bf16.msra.mxu0 0
    %2069 = vmatprep.subr.bf16.mxu0 0
    %2070 = vmatpush1.bf16.msra.mxu0 0
    %2071 = vmatprep.subr.bf16.mxu0 0
    %2072 = vmatpush1.bf16.msra.mxu0 0
    %2073 = vmatprep.subr.bf16.mxu0 0
    %2074 = vmatpush1.bf16.msra.mxu0 0
    %2075 = vmatprep.subr.bf16.mxu0 0
    %2076 = vmatpush1.bf16.msra.mxu0 0
    %2077 = vmatprep.subr.bf16.mxu0 0
    %2078 = vmatpush1.bf16.msra.mxu0 0
    %2079 = vmatprep.subr.bf16.mxu0 0
    %2080 = vmatpush1.bf16.msra.mxu0 0
    %2081 = vmatprep.subr.bf16.mxu0 0
    %2082 = vmatpush1.bf16.msra.mxu0 0
    %2083 = vmatprep.subr.bf16.mxu0 0
    %2084 = vmatpush1.bf16.msra.mxu0 0
    %2085 = vmatprep.mubr.bf16.mxu0 0
    %2086 = vmatmul.mubr.bf16.gmra.mrb[0].mxu0 %v2045
    %v2087 = vpop.f32.mrb[0].mxu0
    %v2088 = vadd.f32 0.0, %v2087
    %v2089 = vpop.f32.mrb[0].mxu0
    %v2090 = vpop.f32.mrb[0].mxu0
    %v2091 = vadd.f32 0.0, %v2090
    %v2092 = vpop.f32.mrb[0].mxu0
    %2093 = vmatprep.mubr.bf16.mxu0 0
    %2094 = vmatmul.mubr.bf16.gmra.mrb[0].mxu0 %v2048
    %v2095 = vpop.f32.mrb[0].mxu0
    %v2096 = vadd.f32 0.0, %v2095
    %v2097 = vpop.f32.mrb[0].mxu0
    %v2098 = vpop.f32.mrb[0].mxu0
    %v2099 = vadd.f32 0.0, %v2098
    %v2100 = vpop.f32.mrb[0].mxu0
    %2101 = vdwg.mxu0
    %2102 = vrot.lane.b32.xlu0 %v1564, 104
    %v2103 = vpop.permute.xlu0 %2102
    %2104 = vrot.lane.b32.xlu0 %v1565, 104
    %v2105 = vpop.permute.xlu0 %2104
    %2106 = vrot.lane.b32.xlu0 %v1566, 72
    %v2107 = vpop.permute.xlu0 %2106
    %2108 = vrot.lane.b32.xlu0 %v1567, 72
    %v2109 = vpop.permute.xlu0 %2108
    %v2111 = vsel %vm287, %v2103, 0
    %v2114 = vsel %vm287, %v2105, 0
    %v2117 = vsel %vm287, %v2107, 0
    %v2120 = vsel %vm287, %v2109, 0
    %2122 = vmatprep.subr.bf16.mxu0 0
    %2123 = vmatpush1.bf16.xpose.msra.mxu0 %v2117
    %2124 = vmatprep.subr.bf16.mxu0 0
    %2125 = vmatpush1.bf16.xpose.msra.mxu0 %v2120
    %2126 = vmatprep.subr.bf16.mxu0 0
    %2127 = vmatpush1.bf16.xpose.msra.mxu0 0
    %2128 = vmatprep.subr.bf16.mxu0 0
    %2129 = vmatpush1.bf16.xpose.msra.mxu0 0
    %2130 = vmatprep.subr.bf16.mxu0 0
    %2131 = vmatpush1.bf16.xpose.msra.mxu0 0
    %2132 = vmatprep.subr.bf16.mxu0 0
    %2133 = vmatpush1.bf16.xpose.msra.mxu0 0
    %2134 = vmatprep.subr.bf16.mxu0 0
    %2135 = vmatpush1.bf16.xpose.msra.mxu0 0
    %2136 = vmatprep.subr.bf16.mxu0 0
    %2137 = vmatpush1.bf16.xpose.msra.mxu0 0
    %2138 = vmatprep.subr.bf16.mxu0 0
    %2139 = vmatpush1.bf16.xpose.msra.mxu0 0
    %2140 = vmatprep.subr.bf16.mxu0 0
    %2141 = vmatpush1.bf16.xpose.msra.mxu0 0
    %2142 = vmatprep.subr.bf16.mxu0 0
    %2143 = vmatpush1.bf16.xpose.msra.mxu0 0
    %2144 = vmatprep.subr.bf16.mxu0 0
    %2145 = vmatpush1.bf16.xpose.msra.mxu0 0
    %2146 = vmatprep.subr.bf16.mxu0 0
    %2147 = vmatpush1.bf16.xpose.msra.mxu0 0
    %2148 = vmatprep.subr.bf16.mxu0 0
    %2149 = vmatpush1.bf16.xpose.msra.mxu0 0
    %2150 = vmatprep.subr.bf16.mxu0 0
    %2151 = vmatpush1.bf16.xpose.msra.mxu0 0
    %2152 = vmatprep.subr.bf16.mxu0 0
    %2153 = vmatpush1.bf16.xpose.msra.mxu0 0
    %2154 = vmatprep.mubr.bf16.mxu0 0
    %2155 = vmatmul.mubr.bf16.gmra.mrb[0].mxu0 %v2111
    %v2156 = vpop.f32.mrb[0].mxu0
    %v2157 = vadd.f32 %v188, %v2156
    %v2158 = vpop.f32.mrb[0].mxu0
    %v2159 = vpop.f32.mrb[0].mxu0
    %v2160 = vadd.f32 %v189, %v2159
    %v2161 = vpop.f32.mrb[0].mxu0
    %2162 = vmatprep.mubr.bf16.mxu0 0
    %2163 = vmatmul.mubr.bf16.gmra.mrb[0].mxu0 %v2114
    %v2164 = vpop.f32.mrb[0].mxu0
    %v2165 = vadd.f32 %v190, %v2164
    %v2166 = vpop.f32.mrb[0].mxu0
    %v2167 = vpop.f32.mrb[0].mxu0
    %v2168 = vadd.f32 %v191, %v2167
    %v2169 = vpop.f32.mrb[0].mxu0
    %2170 = vdwg.mxu0
    %v2171 = vsel %vm349, %v2157, -inf
    %2172 = vmax.xlane.f32.xlu0 %v2171
    %v2173 = vpop.xlane.xlu0 %2172
    %v2174 = vsel %vm349, %v2160, -inf
    %2175 = vmax.xlane.f32.xlu0 %v2174
    %v2176 = vpop.xlane.xlu0 %2175
    %v2177 = vsel %vm349, %v2165, -inf
    %2178 = vmax.xlane.f32.xlu0 %v2177
    %v2179 = vpop.xlane.xlu0 %2178
    %v2180 = vsel %vm359, %v2168, -inf
    %2181 = vmax.xlane.f32.xlu0 %v2180
    %v2182 = vpop.xlane.xlu0 %2181
    %v2183 = vsub.f32 %v2157, %v2173
    %v2184 = vsub.f32 %v2160, %v2176
    %v2185 = vsub.f32 %v2165, %v2179
    %v2186 = vsub.f32 %v2168, %v2182
    %v2187 = vmul.f32 %v2183, 1.442695
    %v2188 = vpow.pop %v2187
    %v2189 = vmul.f32 %v2184, 1.442695
    %v2190 = vpow.pop %v2189
    %v2191 = vmul.f32 %v2185, 1.442695
    %v2192 = vpow.pop %v2191
    %v2193 = vmul.f32 %v2186, 1.442695
    %v2194 = vpow.pop %v2193
    %v2195 = vsel %vm349, %v2188, 0.0
    %2196 = vadd.xlane.f32.xlu0 %v2195
    %v2197 = vpop.xlane.xlu0 %2196
    %v2198 = vsel %vm349, %v2190, 0.0
    %2199 = vadd.xlane.f32.xlu0 %v2198
    %v2200 = vpop.xlane.xlu0 %2199
    %v2201 = vsel %vm349, %v2192, 0.0
    %2202 = vadd.xlane.f32.xlu0 %v2201
    %v2203 = vpop.xlane.xlu0 %2202
    %v2204 = vsel %vm359, %v2194, 0.0
    %2205 = vadd.xlane.f32.xlu0 %v2204
    %v2206 = vpop.xlane.xlu0 %2205
    %v2207 = vrcp.pop %v2197
    %v2208 = vrcp.pop %v2200
    %v2209 = vrcp.pop %v2203
    %v2210 = vrcp.pop %v2206
    %v2211 = vmul.f32 %v2188, %v2207
    %v2212 = vmul.f32 %v2190, %v2208
    %v2213 = vmul.f32 %v2192, %v2209
    %v2214 = vmul.f32 %v2194, %v2210
    %v2215 = vpack.c.bf16 %v2212, %v2211
    %v2216 = vpack.c.bf16 %v2214, %v2213
    %2217 = vrot.lane.b32.xlu0 %v1566, 40
    %v2218 = vpop.permute.xlu0 %2217
    %2219 = vrot.lane.b32.xlu0 %v1567, 40
    %v2220 = vpop.permute.xlu0 %2219
    %v2223 = vsel %vm349, %v2215, 0
    %v2226 = vsel %vm349, %v2216, 0
    %v2229 = vsel %vm408, %v2220, 0
    %2231 = vmatprep.subr.bf16.mxu0 0
    %2232 = vmatpush1.bf16.msra.mxu0 %v2218
    %2233 = vmatprep.subr.bf16.mxu0 0
    %2234 = vmatpush1.bf16.msra.mxu0 %v2229
    %2235 = vmatprep.subr.bf16.mxu0 0
    %2236 = vmatpush1.bf16.msra.mxu0 0
    %2237 = vmatprep.subr.bf16.mxu0 0
    %2238 = vmatpush1.bf16.msra.mxu0 0
    %2239 = vmatprep.subr.bf16.mxu0 0
    %2240 = vmatpush1.bf16.msra.mxu0 0
    %2241 = vmatprep.subr.bf16.mxu0 0
    %2242 = vmatpush1.bf16.msra.mxu0 0
    %2243 = vmatprep.subr.bf16.mxu0 0
    %2244 = vmatpush1.bf16.msra.mxu0 0
    %2245 = vmatprep.subr.bf16.mxu0 0
    %2246 = vmatpush1.bf16.msra.mxu0 0
    %2247 = vmatprep.subr.bf16.mxu0 0
    %2248 = vmatpush1.bf16.msra.mxu0 0
    %2249 = vmatprep.subr.bf16.mxu0 0
    %2250 = vmatpush1.bf16.msra.mxu0 0
    %2251 = vmatprep.subr.bf16.mxu0 0
    %2252 = vmatpush1.bf16.msra.mxu0 0
    %2253 = vmatprep.subr.bf16.mxu0 0
    %2254 = vmatpush1.bf16.msra.mxu0 0
    %2255 = vmatprep.subr.bf16.mxu0 0
    %2256 = vmatpush1.bf16.msra.mxu0 0
    %2257 = vmatprep.subr.bf16.mxu0 0
    %2258 = vmatpush1.bf16.msra.mxu0 0
    %2259 = vmatprep.subr.bf16.mxu0 0
    %2260 = vmatpush1.bf16.msra.mxu0 0
    %2261 = vmatprep.subr.bf16.mxu0 0
    %2262 = vmatpush1.bf16.msra.mxu0 0
    %2263 = vmatprep.mubr.bf16.mxu0 0
    %2264 = vmatmul.mubr.bf16.gmra.mrb[0].mxu0 %v2223
    %v2265 = vpop.f32.mrb[0].mxu0
    %v2266 = vadd.f32 0.0, %v2265
    %v2267 = vpop.f32.mrb[0].mxu0
    %v2268 = vpop.f32.mrb[0].mxu0
    %v2269 = vadd.f32 0.0, %v2268
    %v2270 = vpop.f32.mrb[0].mxu0
    %2271 = vmatprep.mubr.bf16.mxu0 0
    %2272 = vmatmul.mubr.bf16.gmra.mrb[0].mxu0 %v2226
    %v2273 = vpop.f32.mrb[0].mxu0
    %v2274 = vadd.f32 0.0, %v2273
    %v2275 = vpop.f32.mrb[0].mxu0
    %v2276 = vpop.f32.mrb[0].mxu0
    %v2277 = vadd.f32 0.0, %v2276
    %v2278 = vpop.f32.mrb[0].mxu0
    %2279 = vdwg.mxu0
    %2284 = vrot.lane.b32.xlu0 %v1910, 8
    %v2285 = vpop.permute.xlu0 %2284
    %2286 = vrot.lane.b32.xlu0 %v1913, 8
    %v2287 = vpop.permute.xlu0 %2286
    %2288 = vrot.lane.b32.xlu0 %v1918, 8
    %v2289 = vpop.permute.xlu0 %2288
    %2290 = vrot.lane.b32.xlu0 %v1921, 8
    %v2291 = vpop.permute.xlu0 %2290
    %2300 = vrot.lane.b32.xlu0 %v2088, 16
    %v2301 = vpop.permute.xlu0 %2300
    %2302 = vrot.lane.b32.xlu0 %v2091, 16
    %v2303 = vpop.permute.xlu0 %2302
    %2304 = vrot.lane.b32.xlu0 %v2096, 16
    %v2305 = vpop.permute.xlu0 %2304
    %2306 = vrot.lane.b32.xlu0 %v2099, 16
    %v2307 = vpop.permute.xlu0 %2306
    %2316 = vrot.lane.b32.xlu0 %v2266, 24
    %v2317 = vpop.permute.xlu0 %2316
    %2318 = vrot.lane.b32.xlu0 %v2269, 24
    %v2319 = vpop.permute.xlu0 %2318
    %2320 = vrot.lane.b32.xlu0 %v2274, 24
    %v2321 = vpop.permute.xlu0 %2320
    %2322 = vrot.lane.b32.xlu0 %v2277, 24
    %v2323 = vpop.permute.xlu0 %2322
    %v2328 = vsel %vm287, %v1730, %v2285
    %v2329 = vsel %vm287, %v1733, %v2287
    %v2330 = vsel %vm287, %v1738, %v2289
    %v2331 = vsel %vm287, %v1741, %v2291
    %v2332 = vsel %vm1049, %v2328, %v2301
    %v2333 = vsel %vm1049, %v2329, %v2303
    %v2334 = vsel %vm1049, %v2330, %v2305
    %v2335 = vsel %vm1049, %v2331, %v2307
    %v2336 = vsel %vm1054, %v2332, %v2317
    %v2337 = vsel %vm1054, %v2333, %v2319
    %v2338 = vsel %vm1054, %v2334, %v2321
    %v2339 = vsel %vm1054, %v2335, %v2323
    %s2340 = scalar_lea.vmem %s17, 16
    %v2341 = vld [vmem:[%s2340] sm:$0xf]
    %v2342 = vld [vmem:[%s2340 + $0x4] sm:$0xf]
    %v2343 = vld [vmem:[%s2340 + $0x8] sm:$0xf]
    %v2344 = vld [vmem:[%s2340 + $0xc] sm:$0xf]
    %v2345 = vpack.c.bf16 %v2337, %v2336
    %v2346 = vpack.c.bf16 %v2339, %v2338
    %s2347 = scalar_lea.vmem %s19, 1
    %v2348 = vld [vmem:[%s2347] sm:$0x1]
    %v2350 = vlaneseq
    %v2351 = vshrl.u32 %v2350, 7
    %v2352 = vsub.s32 0, %v2351
    %v2353 = vrot.slane %v2348, %v2352
    %v2359 = vunpack.c.l.b16 %v2341
    %v2360 = vunpack.c.l.b16 %v2342
    %v2361 = vunpack.c.l.b16 %v2343
    %v2362 = vunpack.c.l.b16 %v2344
    %v2363 = vpack.c.b16 %v2360, %v2359
    %v2364 = vpack.c.b16 %v2362, %v2361
    %v2368 = vsel %vm217, %v2345, 0
    %v2371 = vsel %vm217, %v2346, 0
    %2373 = vmatprep.subr.bf16.mxu0 0
    %2374 = vmatpush1.bf16.msra.mxu0 %v2363
    %2375 = vmatprep.subr.bf16.mxu0 0
    %2376 = vmatpush1.bf16.msra.mxu0 %v2364
    %2377 = vmatprep.subr.bf16.mxu0 0
    %2378 = vmatpush1.bf16.msra.mxu0 0
    %2379 = vmatprep.subr.bf16.mxu0 0
    %2380 = vmatpush1.bf16.msra.mxu0 0
    %2381 = vmatprep.subr.bf16.mxu0 0
    %2382 = vmatpush1.bf16.msra.mxu0 0
    %2383 = vmatprep.subr.bf16.mxu0 0
    %2384 = vmatpush1.bf16.msra.mxu0 0
    %2385 = vmatprep.subr.bf16.mxu0 0
    %2386 = vmatpush1.bf16.msra.mxu0 0
    %2387 = vmatprep.subr.bf16.mxu0 0
    %2388 = vmatpush1.bf16.msra.mxu0 0
    %2389 = vmatprep.subr.bf16.mxu0 0
    %2390 = vmatpush1.bf16.msra.mxu0 0
    %2391 = vmatprep.subr.bf16.mxu0 0
    %2392 = vmatpush1.bf16.msra.mxu0 0
    %2393 = vmatprep.subr.bf16.mxu0 0
    %2394 = vmatpush1.bf16.msra.mxu0 0
    %2395 = vmatprep.subr.bf16.mxu0 0
    %2396 = vmatpush1.bf16.msra.mxu0 0
    %2397 = vmatprep.subr.bf16.mxu0 0
    %2398 = vmatpush1.bf16.msra.mxu0 0
    %2399 = vmatprep.subr.bf16.mxu0 0
    %2400 = vmatpush1.bf16.msra.mxu0 0
    %2401 = vmatprep.subr.bf16.mxu0 0
    %2402 = vmatpush1.bf16.msra.mxu0 0
    %2403 = vmatprep.subr.bf16.mxu0 0
    %2404 = vmatpush1.bf16.msra.mxu0 0
    %2405 = vmatprep.mubr.bf16.mxu0 0
    %2406 = vmatmul.mubr.bf16.gmra.mrb[0].mxu0 %v2368
    %v2407 = vpop.f32.mrb[0].mxu0
    %v2408 = vadd.f32 %v2353, %v2407
    %v2409 = vpop.f32.mrb[0].mxu0
    %v2410 = vpop.f32.mrb[0].mxu0
    %v2411 = vadd.f32 %v2353, %v2410
    %v2412 = vpop.f32.mrb[0].mxu0
    %2413 = vmatprep.mubr.bf16.mxu0 0
    %2414 = vmatmul.mubr.bf16.gmra.mrb[0].mxu0 %v2371
    %v2415 = vpop.f32.mrb[0].mxu0
    %v2416 = vadd.f32 %v2353, %v2415
    %v2417 = vpop.f32.mrb[0].mxu0
    %v2418 = vpop.f32.mrb[0].mxu0
    %v2419 = vadd.f32 %v2353, %v2418
    %v2420 = vpop.f32.mrb[0].mxu0
    %2421 = vdwg.mxu0
    %v2422 = vadd.f32 %v1474, %v2408
    %v2423 = vadd.f32 %v1475, %v2411
    %v2424 = vadd.f32 %v1476, %v2416
    %v2425 = vadd.f32 %v1477, %v2419
    %s2426 = scalar_lea.vmem %s21, 1
    %v2427 = vld [vmem:[%s2426] sm:$0x1]
    %s2428 = scalar_lea.vmem %s23, 1
    %v2429 = vld [vmem:[%s2428] sm:$0x1]
    %v2430 = vsel %vm217, %v2422, 0.0
    %2431 = vadd.xlane.f32.xlu0 %v2430
    %v2432 = vpop.xlane.xlu0 %2431
    %v2433 = vsel %vm217, %v2423, 0.0
    %2434 = vadd.xlane.f32.xlu0 %v2433
    %v2435 = vpop.xlane.xlu0 %2434
    %v2436 = vsel %vm217, %v2424, 0.0
    %2437 = vadd.xlane.f32.xlu0 %v2436
    %v2438 = vpop.xlane.xlu0 %2437
    %v2439 = vsel %vm1154, %v2425, 0.0
    %2440 = vadd.xlane.f32.xlu0 %v2439
    %v2441 = vpop.xlane.xlu0 %2440
    %v2442 = vmul.f32 %v2432, %v1158
    %v2443 = vmul.f32 %v2435, %v1158
    %v2444 = vmul.f32 %v2438, %v1158
    %v2445 = vmul.f32 %v2441, %v1158
    %v2446 = vsub.f32 %v2422, %v2442
    %v2447 = vsub.f32 %v2423, %v2443
    %v2448 = vsub.f32 %v2424, %v2444
    %v2449 = vsub.f32 %v2425, %v2445
    %v2450 = vmul.f32 %v2446, %v2446
    %v2451 = vmul.f32 %v2447, %v2447
    %v2452 = vmul.f32 %v2448, %v2448
    %v2453 = vmul.f32 %v2449, %v2449
    %v2454 = vsel %vm217, %v2450, 0.0
    %2455 = vadd.xlane.f32.xlu0 %v2454
    %v2456 = vpop.xlane.xlu0 %2455
    %v2457 = vsel %vm217, %v2451, 0.0
    %2458 = vadd.xlane.f32.xlu0 %v2457
    %v2459 = vpop.xlane.xlu0 %2458
    %v2460 = vsel %vm217, %v2452, 0.0
    %2461 = vadd.xlane.f32.xlu0 %v2460
    %v2462 = vpop.xlane.xlu0 %2461
    %v2463 = vsel %vm1154, %v2453, 0.0
    %2464 = vadd.xlane.f32.xlu0 %v2463
    %v2465 = vpop.xlane.xlu0 %2464
    %v2466 = vmul.f32 %v2456, %v1158
    %v2467 = vmul.f32 %v2459, %v1158
    %v2468 = vmul.f32 %v2462, %v1158
    %v2469 = vmul.f32 %v2465, %v1158
    %v2470 = vadd.f32 %v2466, 1e-05
    %v2471 = vadd.f32 %v2467, 1e-05
    %v2472 = vadd.f32 %v2468, 1e-05
    %v2473 = vadd.f32 %v2469, 1e-05
    %v2474 = vrsqrt.pop %v2470
    %v2475 = vrsqrt.pop %v2471
    %v2476 = vrsqrt.pop %v2472
    %v2477 = vrsqrt.pop %v2473
    %v2478 = vmul.f32 %v2446, %v2474
    %v2479 = vmul.f32 %v2447, %v2475
    %v2480 = vmul.f32 %v2448, %v2476
    %v2481 = vmul.f32 %v2449, %v2477
    %v2483 = vlaneseq
    %v2484 = vshrl.u32 %v2483, 7
    %v2485 = vsub.s32 0, %v2484
    %v2486 = vrot.slane %v2427, %v2485
    %v2488 = vmul.f32 %v2478, %v2486
    %v2489 = vmul.f32 %v2479, %v2486
    %v2490 = vmul.f32 %v2480, %v2486
    %v2491 = vmul.f32 %v2481, %v2486
    %v2493 = vlaneseq
    %v2494 = vshrl.u32 %v2493, 7
    %v2495 = vsub.s32 0, %v2494
    %v2496 = vrot.slane %v2429, %v2495
    %v2498 = vadd.f32 %v2488, %v2496
    %v2499 = vadd.f32 %v2489, %v2496
    %v2500 = vadd.f32 %v2490, %v2496
    %v2501 = vadd.f32 %v2491, %v2496
    %s2502 = scalar_lea.vmem %s25, 16
    %v2503 = vld [vmem:[%s2502] sm:$0xf]
    %v2504 = vld [vmem:[%s2502 + $0x4] sm:$0xf]
    %v2505 = vld [vmem:[%s2502 + $0x8] sm:$0xf]
    %v2506 = vld [vmem:[%s2502 + $0xc] sm:$0xf]
    %v2507 = vpack.c.bf16 %v2499, %v2498
    %v2508 = vpack.c.bf16 %v2501, %v2500
    %s2509 = scalar_lea.vmem %s27, 1
    %v2510 = vld [vmem:[%s2509] sm:$0x1]
    %v2512 = vlaneseq
    %v2513 = vshrl.u32 %v2512, 7
    %v2514 = vsub.s32 0, %v2513
    %v2515 = vrot.slane %v2510, %v2514
    %v2521 = vunpack.c.l.b16 %v2503
    %v2522 = vunpack.c.l.b16 %v2504
    %v2523 = vunpack.c.l.b16 %v2505
    %v2524 = vunpack.c.l.b16 %v2506
    %v2525 = vpack.c.b16 %v2522, %v2521
    %v2526 = vpack.c.b16 %v2524, %v2523
    %v2530 = vsel %vm217, %v2507, 0
    %v2533 = vsel %vm217, %v2508, 0
    %2535 = vmatprep.subr.bf16.mxu0 0
    %2536 = vmatpush1.bf16.msra.mxu0 %v2525
    %2537 = vmatprep.subr.bf16.mxu0 0
    %2538 = vmatpush1.bf16.msra.mxu0 %v2526
    %2539 = vmatprep.subr.bf16.mxu0 0
    %2540 = vmatpush1.bf16.msra.mxu0 0
    %2541 = vmatprep.subr.bf16.mxu0 0
    %2542 = vmatpush1.bf16.msra.mxu0 0
    %2543 = vmatprep.subr.bf16.mxu0 0
    %2544 = vmatpush1.bf16.msra.mxu0 0
    %2545 = vmatprep.subr.bf16.mxu0 0
    %2546 = vmatpush1.bf16.msra.mxu0 0
    %2547 = vmatprep.subr.bf16.mxu0 0
    %2548 = vmatpush1.bf16.msra.mxu0 0
    %2549 = vmatprep.subr.bf16.mxu0 0
    %2550 = vmatpush1.bf16.msra.mxu0 0
    %2551 = vmatprep.subr.bf16.mxu0 0
    %2552 = vmatpush1.bf16.msra.mxu0 0
    %2553 = vmatprep.subr.bf16.mxu0 0
    %2554 = vmatpush1.bf16.msra.mxu0 0
    %2555 = vmatprep.subr.bf16.mxu0 0
    %2556 = vmatpush1.bf16.msra.mxu0 0
    %2557 = vmatprep.subr.bf16.mxu0 0
    %2558 = vmatpush1.bf16.msra.mxu0 0
    %2559 = vmatprep.subr.bf16.mxu0 0
    %2560 = vmatpush1.bf16.msra.mxu0 0
    %2561 = vmatprep.subr.bf16.mxu0 0
    %2562 = vmatpush1.bf16.msra.mxu0 0
    %2563 = vmatprep.subr.bf16.mxu0 0
    %2564 = vmatpush1.bf16.msra.mxu0 0
    %2565 = vmatprep.subr.bf16.mxu0 0
    %2566 = vmatpush1.bf16.msra.mxu0 0
    %2567 = vmatprep.mubr.bf16.mxu0 0
    %2568 = vmatmul.mubr.bf16.gmra.mrb[0].mxu0 %v2530
    %v2569 = vpop.f32.mrb[0].mxu0
    %v2570 = vadd.f32 %v2515, %v2569
    %v2571 = vpop.f32.mrb[0].mxu0
    %v2572 = vpop.f32.mrb[0].mxu0
    %v2573 = vadd.f32 %v2515, %v2572
    %v2574 = vpop.f32.mrb[0].mxu0
    %2575 = vmatprep.mubr.bf16.mxu0 0
    %2576 = vmatmul.mubr.bf16.gmra.mrb[0].mxu0 %v2533
    %v2577 = vpop.f32.mrb[0].mxu0
    %v2578 = vadd.f32 %v2515, %v2577
    %v2579 = vpop.f32.mrb[0].mxu0
    %v2580 = vpop.f32.mrb[0].mxu0
    %v2581 = vadd.f32 %v2515, %v2580
    %v2582 = vpop.f32.mrb[0].mxu0
    %2583 = vdwg.mxu0
    %v2584 = vmax.f32 %v2570, 0.0
    %v2585 = vmax.f32 %v2573, 0.0
    %v2586 = vmax.f32 %v2578, 0.0
    %v2587 = vmax.f32 %v2581, 0.0
    %s2588 = scalar_lea.vmem %s29, 32
    %v2589 = vld [vmem:[%s2588] sm:$0xf]
    %v2590 = vld [vmem:[%s2588 + $0x4] sm:$0xf]
    %v2591 = vld [vmem:[%s2588 + $0x8] sm:$0xf]
    %v2592 = vld [vmem:[%s2588 + $0xc] sm:$0xf]
    %v2593 = vld [vmem:[%s2588 + $0x10] sm:$0xf]
    %v2594 = vld [vmem:[%s2588 + $0x14] sm:$0xf]
    %v2595 = vld [vmem:[%s2588 + $0x18] sm:$0xf]
    %v2596 = vld [vmem:[%s2588 + $0x1c] sm:$0xf]
    %v2597 = vpack.c.bf16 %v2585, %v2584
    %v2598 = vpack.c.bf16 %v2587, %v2586
    %s2599 = scalar_lea.vmem %s31, 1
    %v2600 = vld [vmem:[%s2599] sm:$0x1]
    %v2602 = vlaneseq
    %v2603 = vshrl.u32 %v2602, 7
    %v2604 = vsub.s32 0, %v2603
    %v2605 = vrot.slane %v2600, %v2604
    %v2615 = vunpack.c.l.b16 %v2589
    %v2616 = vunpack.c.l.b16 %v2590
    %v2617 = vunpack.c.l.b16 %v2591
    %v2618 = vunpack.c.l.b16 %v2592
    %v2619 = vunpack.c.l.b16 %v2593
    %v2620 = vunpack.c.l.b16 %v2594
    %v2621 = vunpack.c.l.b16 %v2595
    %v2622 = vunpack.c.l.b16 %v2596
    %v2623 = vpack.c.b16 %v2616, %v2615
    %v2624 = vpack.c.b16 %v2618, %v2617
    %v2625 = vpack.c.b16 %v2620, %v2619
    %v2626 = vpack.c.b16 %v2622, %v2621
    %v2632 = vsel %vm1344, %v2597, 0
    %v2635 = vsel %vm1344, %v2598, 0
    %2637 = vmatprep.subr.bf16.mxu0 0
    %2638 = vmatpush1.bf16.msra.mxu0 %v2623
    %2639 = vmatprep.subr.bf16.mxu0 0
    %2640 = vmatpush1.bf16.msra.mxu0 %v2624
    %2641 = vmatprep.subr.bf16.mxu0 0
    %2642 = vmatpush1.bf16.msra.mxu0 %v2625
    %2643 = vmatprep.subr.bf16.mxu0 0
    %2644 = vmatpush1.bf16.msra.mxu0 %v2626
    %2645 = vmatprep.subr.bf16.mxu0 0
    %2646 = vmatpush1.bf16.msra.mxu0 0
    %2647 = vmatprep.subr.bf16.mxu0 0
    %2648 = vmatpush1.bf16.msra.mxu0 0
    %2649 = vmatprep.subr.bf16.mxu0 0
    %2650 = vmatpush1.bf16.msra.mxu0 0
    %2651 = vmatprep.subr.bf16.mxu0 0
    %2652 = vmatpush1.bf16.msra.mxu0 0
    %2653 = vmatprep.subr.bf16.mxu0 0
    %2654 = vmatpush1.bf16.msra.mxu0 0
    %2655 = vmatprep.subr.bf16.mxu0 0
    %2656 = vmatpush1.bf16.msra.mxu0 0
    %2657 = vmatprep.subr.bf16.mxu0 0
    %2658 = vmatpush1.bf16.msra.mxu0 0
    %2659 = vmatprep.subr.bf16.mxu0 0
    %2660 = vmatpush1.bf16.msra.mxu0 0
    %2661 = vmatprep.subr.bf16.mxu0 0
    %2662 = vmatpush1.bf16.msra.mxu0 0
    %2663 = vmatprep.subr.bf16.mxu0 0
    %2664 = vmatpush1.bf16.msra.mxu0 0
    %2665 = vmatprep.subr.bf16.mxu0 0
    %2666 = vmatpush1.bf16.msra.mxu0 0
    %2667 = vmatprep.subr.bf16.mxu0 0
    %2668 = vmatpush1.bf16.msra.mxu0 0
    %2669 = vmatprep.mubr.bf16.mxu0 0
    %2670 = vmatmul.mubr.bf16.gmra.mrb[0].mxu0 %v2632
    %v2671 = vpop.f32.mrb[0].mxu0
    %v2672 = vadd.f32 %v2605, %v2671
    %v2673 = vpop.f32.mrb[0].mxu0
    %v2674 = vpop.f32.mrb[0].mxu0
    %v2675 = vadd.f32 %v2605, %v2674
    %v2676 = vpop.f32.mrb[0].mxu0
    %2677 = vmatprep.mubr.bf16.mxu0 0
    %2678 = vmatmul.mubr.bf16.gmra.mrb[0].mxu0 %v2635
    %v2679 = vpop.f32.mrb[0].mxu0
    %v2680 = vadd.f32 %v2605, %v2679
    %v2681 = vpop.f32.mrb[0].mxu0
    %v2682 = vpop.f32.mrb[0].mxu0
    %v2683 = vadd.f32 %v2605, %v2682
    %v2684 = vpop.f32.mrb[0].mxu0
    %2685 = vdwg.mxu0
    %v2686 = vadd.f32 %v2498, %v2672
    %v2687 = vadd.f32 %v2499, %v2675
    %v2688 = vadd.f32 %v2500, %v2680
    %v2689 = vadd.f32 %v2501, %v2683
    %s2690 = scalar_lea.vmem %s33, 1
    %v2691 = vld [vmem:[%s2690] sm:$0x1]
    %s2692 = scalar_lea.vmem %s35, 1
    %v2693 = vld [vmem:[%s2692] sm:$0x1]
    %v2694 = vsel %vm217, %v2686, 0.0
    %2695 = vadd.xlane.f32.xlu0 %v2694
    %v2696 = vpop.xlane.xlu0 %2695
    %v2697 = vsel %vm217, %v2687, 0.0
    %2698 = vadd.xlane.f32.xlu0 %v2697
    %v2699 = vpop.xlane.xlu0 %2698
    %v2700 = vsel %vm217, %v2688, 0.0
    %2701 = vadd.xlane.f32.xlu0 %v2700
    %v2702 = vpop.xlane.xlu0 %2701
    %v2703 = vsel %vm1154, %v2689, 0.0
    %2704 = vadd.xlane.f32.xlu0 %v2703
    %v2705 = vpop.xlane.xlu0 %2704
    %v2706 = vmul.f32 %v2696, %v1158
    %v2707 = vmul.f32 %v2699, %v1158
    %v2708 = vmul.f32 %v2702, %v1158
    %v2709 = vmul.f32 %v2705, %v1158
    %v2710 = vsub.f32 %v2686, %v2706
    %v2711 = vsub.f32 %v2687, %v2707
    %v2712 = vsub.f32 %v2688, %v2708
    %v2713 = vsub.f32 %v2689, %v2709
    %v2714 = vmul.f32 %v2710, %v2710
    %v2715 = vmul.f32 %v2711, %v2711
    %v2716 = vmul.f32 %v2712, %v2712
    %v2717 = vmul.f32 %v2713, %v2713
    %v2718 = vsel %vm217, %v2714, 0.0
    %2719 = vadd.xlane.f32.xlu0 %v2718
    %v2720 = vpop.xlane.xlu0 %2719
    %v2721 = vsel %vm217, %v2715, 0.0
    %2722 = vadd.xlane.f32.xlu0 %v2721
    %v2723 = vpop.xlane.xlu0 %2722
    %v2724 = vsel %vm217, %v2716, 0.0
    %2725 = vadd.xlane.f32.xlu0 %v2724
    %v2726 = vpop.xlane.xlu0 %2725
    %v2727 = vsel %vm1154, %v2717, 0.0
    %2728 = vadd.xlane.f32.xlu0 %v2727
    %v2729 = vpop.xlane.xlu0 %2728
    %v2730 = vmul.f32 %v2720, %v1158
    %v2731 = vmul.f32 %v2723, %v1158
    %v2732 = vmul.f32 %v2726, %v1158
    %v2733 = vmul.f32 %v2729, %v1158
    %v2734 = vadd.f32 %v2730, 1e-05
    %v2735 = vadd.f32 %v2731, 1e-05
    %v2736 = vadd.f32 %v2732, 1e-05
    %v2737 = vadd.f32 %v2733, 1e-05
    %v2738 = vrsqrt.pop %v2734
    %v2739 = vrsqrt.pop %v2735
    %v2740 = vrsqrt.pop %v2736
    %v2741 = vrsqrt.pop %v2737
    %v2742 = vmul.f32 %v2710, %v2738
    %v2743 = vmul.f32 %v2711, %v2739
    %v2744 = vmul.f32 %v2712, %v2740
    %v2745 = vmul.f32 %v2713, %v2741
    %v2747 = vlaneseq
    %v2748 = vshrl.u32 %v2747, 7
    %v2749 = vsub.s32 0, %v2748
    %v2750 = vrot.slane %v2691, %v2749
    %v2752 = vmul.f32 %v2742, %v2750
    %v2753 = vmul.f32 %v2743, %v2750
    %v2754 = vmul.f32 %v2744, %v2750
    %v2755 = vmul.f32 %v2745, %v2750
    %v2757 = vlaneseq
    %v2758 = vshrl.u32 %v2757, 7
    %v2759 = vsub.s32 0, %v2758
    %v2760 = vrot.slane %v2693, %v2759
    %v2762 = vadd.f32 %v2752, %v2760
    %v2763 = vadd.f32 %v2753, %v2760
    %v2764 = vadd.f32 %v2754, %v2760
    %v2765 = vadd.f32 %v2755, %v2760
    %v2766 = vld [vmem:[%s11] sm:$0xff]
    %v2767 = vld [vmem:[%s11 + $0x8] sm:$0xff]
    %v2768 = vld [vmem:[%s11 + $0x10] sm:$0xff]
    %v2769 = vld [vmem:[%s11 + $0x18] sm:$0xff]
    %v2771 = vsel %vm217, %v2762, 0
    %v2774 = vsel %vm217, %v2763, 0
    %v2777 = vsel %vm217, %v2764, 0
    %v2780 = vsel %vm217, %v2765, 0
    %v2783 = vsel %vm217, %v2766, 0
    %v2786 = vsel %vm217, %v2767, 0
    %v2789 = vsel %vm217, %v2768, 0
    %v2792 = vsel %vm217, %v2769, 0
    %2794 = vmatprep.subr.mxu0 0.0
    %2795 = vmatpush1.xpose.msra.mxu0 %v2783
    %2796 = vmatprep.subr.mxu0 0.0
    %2797 = vmatpush1.xpose.msra.mxu0 %v2786
    %2798 = vmatprep.subr.mxu0 0.0
    %2799 = vmatpush1.xpose.msra.mxu0 %v2789
    %2800 = vmatprep.subr.mxu0 0.0
    %2801 = vmatpush1.xpose.msra.mxu0 %v2792
    %2802 = vmatprep.subr.mxu0 0.0
    %2803 = vmatpush1.xpose.msra.mxu0 0.0
    %2804 = vmatprep.subr.mxu0 0.0
    %2805 = vmatpush1.xpose.msra.mxu0 0.0
    %2806 = vmatprep.subr.mxu0 0.0
    %2807 = vmatpush1.xpose.msra.mxu0 0.0
    %2808 = vmatprep.subr.mxu0 0.0
    %2809 = vmatpush1.xpose.msra.mxu0 0.0
    %2810 = vmatprep.subr.mxu0 0.0
    %2811 = vmatpush1.xpose.msra.mxu0 0.0
    %2812 = vmatprep.subr.mxu0 0.0
    %2813 = vmatpush1.xpose.msra.mxu0 0.0
    %2814 = vmatprep.subr.mxu0 0.0
    %2815 = vmatpush1.xpose.msra.mxu0 0.0
    %2816 = vmatprep.subr.mxu0 0.0
    %2817 = vmatpush1.xpose.msra.mxu0 0.0
    %2818 = vmatprep.subr.mxu0 0.0
    %2819 = vmatpush1.xpose.msra.mxu0 0.0
    %2820 = vmatprep.subr.mxu0 0.0
    %2821 = vmatpush1.xpose.msra.mxu0 0.0
    %2822 = vmatprep.subr.mxu0 0.0
    %2823 = vmatpush1.xpose.msra.mxu0 0.0
    %2824 = vmatprep.subr.mxu0 0.0
    %2825 = vmatpush1.xpose.msra.mxu0 0.0
    %2826 = vmatprep.subr.mxu0 0.0
    %2827 = vmatpush1.xpose.msra.mxu0 0.0
    %2828 = vmatprep.subr.mxu0 0.0
    %2829 = vmatpush1.xpose.msra.mxu0 0.0
    %2830 = vmatprep.subr.mxu0 0.0
    %2831 = vmatpush1.xpose.msra.mxu0 0.0
    %2832 = vmatprep.subr.mxu0 0.0
    %2833 = vmatpush1.xpose.msra.mxu0 0.0
    %2834 = vmatprep.subr.mxu0 0.0
    %2835 = vmatpush1.xpose.msra.mxu0 0.0
    %2836 = vmatprep.subr.mxu0 0.0
    %2837 = vmatpush1.xpose.msra.mxu0 0.0
    %2838 = vmatprep.subr.mxu0 0.0
    %2839 = vmatpush1.xpose.msra.mxu0 0.0
    %2840 = vmatprep.subr.mxu0 0.0
    %2841 = vmatpush1.xpose.msra.mxu0 0.0
    %2842 = vmatprep.subr.mxu0 0.0
    %2843 = vmatpush1.xpose.msra.mxu0 0.0
    %2844 = vmatprep.subr.mxu0 0.0
    %2845 = vmatpush1.xpose.msra.mxu0 0.0
    %2846 = vmatprep.subr.mxu0 0.0
    %2847 = vmatpush1.xpose.msra.mxu0 0.0
    %2848 = vmatprep.subr.mxu0 0.0
    %2849 = vmatpush1.xpose.msra.mxu0 0.0
    %2850 = vmatprep.subr.mxu0 0.0
    %2851 = vmatpush1.xpose.msra.mxu0 0.0
    %2852 = vmatprep.subr.mxu0 0.0
    %2853 = vmatpush1.xpose.msra.mxu0 0.0
    %2854 = vmatprep.subr.mxu0 0.0
    %2855 = vmatpush1.xpose.msra.mxu0 0.0
    %2856 = vmatprep.subr.mxu0 0.0
    %2857 = vmatpush1.xpose.msra.mxu0 0.0
    %2858 = vmatprep.mubr.f32.mxu0 0.0
    %2859 = vmatmul.mubr.f32.gmra.mrb[0].mxu0 %v2771
    %v2860 = vpop.f32.mrb[0].mxu0
    %v2861 = vadd.f32 0.0, %v2860
    %v2862 = vpop.f32.mrb[0].mxu0
    %2863 = vmatprep.mubr.f32.mxu0 0.0
    %2864 = vmatmul.mubr.f32.gmra.mrb[0].mxu0 %v2774
    %v2865 = vpop.f32.mrb[0].mxu0
    %v2866 = vadd.f32 0.0, %v2865
    %v2867 = vpop.f32.mrb[0].mxu0
    %2868 = vmatprep.mubr.f32.mxu0 0.0
    %2869 = vmatmul.mubr.f32.gmra.mrb[0].mxu0 %v2777
    %v2870 = vpop.f32.mrb[0].mxu0
    %v2871 = vadd.f32 0.0, %v2870
    %v2872 = vpop.f32.mrb[0].mxu0
    %2873 = vmatprep.mubr.f32.mxu0 0.0
    %2874 = vmatmul.mubr.f32.gmra.mrb[0].mxu0 %v2780
    %v2875 = vpop.f32.mrb[0].mxu0
    %v2876 = vadd.f32 0.0, %v2875
    %v2877 = vpop.f32.mrb[0].mxu0
    %2878 = vdwg.mxu0
    %v2879 = vmul.f32 %v2766, %v2766
    %v2880 = vmul.f32 %v2767, %v2767
    %v2881 = vmul.f32 %v2768, %v2768
    %v2882 = vmul.f32 %v2769, %v2769
    %v2884 = vsel %vm217, 1.0, 0
    %v2887 = vsel %vm217, %v2879, 0
    %v2890 = vsel %vm217, %v2880, 0
    %v2893 = vsel %vm217, %v2881, 0
    %v2896 = vsel %vm217, %v2882, 0
    %2898 = vmatprep.subr.mxu0 0.0
    %2899 = vmatpush1.xpose.msra.mxu0 %v2887
    %2900 = vmatprep.subr.mxu0 0.0
    %2901 = vmatpush1.xpose.msra.mxu0 %v2890
    %2902 = vmatprep.subr.mxu0 0.0
    %2903 = vmatpush1.xpose.msra.mxu0 %v2893
    %2904 = vmatprep.subr.mxu0 0.0
    %2905 = vmatpush1.xpose.msra.mxu0 %v2896
    %2906 = vmatprep.subr.mxu0 0.0
    %2907 = vmatpush1.xpose.msra.mxu0 0.0
    %2908 = vmatprep.subr.mxu0 0.0
    %2909 = vmatpush1.xpose.msra.mxu0 0.0
    %2910 = vmatprep.subr.mxu0 0.0
    %2911 = vmatpush1.xpose.msra.mxu0 0.0
    %2912 = vmatprep.subr.mxu0 0.0
    %2913 = vmatpush1.xpose.msra.mxu0 0.0
    %2914 = vmatprep.subr.mxu0 0.0
    %2915 = vmatpush1.xpose.msra.mxu0 0.0
    %2916 = vmatprep.subr.mxu0 0.0
    %2917 = vmatpush1.xpose.msra.mxu0 0.0
    %2918 = vmatprep.subr.mxu0 0.0
    %2919 = vmatpush1.xpose.msra.mxu0 0.0
    %2920 = vmatprep.subr.mxu0 0.0
    %2921 = vmatpush1.xpose.msra.mxu0 0.0
    %2922 = vmatprep.subr.mxu0 0.0
    %2923 = vmatpush1.xpose.msra.mxu0 0.0
    %2924 = vmatprep.subr.mxu0 0.0
    %2925 = vmatpush1.xpose.msra.mxu0 0.0
    %2926 = vmatprep.subr.mxu0 0.0
    %2927 = vmatpush1.xpose.msra.mxu0 0.0
    %2928 = vmatprep.subr.mxu0 0.0
    %2929 = vmatpush1.xpose.msra.mxu0 0.0
    %2930 = vmatprep.subr.mxu0 0.0
    %2931 = vmatpush1.xpose.msra.mxu0 0.0
    %2932 = vmatprep.subr.mxu0 0.0
    %2933 = vmatpush1.xpose.msra.mxu0 0.0
    %2934 = vmatprep.subr.mxu0 0.0
    %2935 = vmatpush1.xpose.msra.mxu0 0.0
    %2936 = vmatprep.subr.mxu0 0.0
    %2937 = vmatpush1.xpose.msra.mxu0 0.0
    %2938 = vmatprep.subr.mxu0 0.0
    %2939 = vmatpush1.xpose.msra.mxu0 0.0
    %2940 = vmatprep.subr.mxu0 0.0
    %2941 = vmatpush1.xpose.msra.mxu0 0.0
    %2942 = vmatprep.subr.mxu0 0.0
    %2943 = vmatpush1.xpose.msra.mxu0 0.0
    %2944 = vmatprep.subr.mxu0 0.0
    %2945 = vmatpush1.xpose.msra.mxu0 0.0
    %2946 = vmatprep.subr.mxu0 0.0
    %2947 = vmatpush1.xpose.msra.mxu0 0.0
    %2948 = vmatprep.subr.mxu0 0.0
    %2949 = vmatpush1.xpose.msra.mxu0 0.0
    %2950 = vmatprep.subr.mxu0 0.0
    %2951 = vmatpush1.xpose.msra.mxu0 0.0
    %2952 = vmatprep.subr.mxu0 0.0
    %2953 = vmatpush1.xpose.msra.mxu0 0.0
    %2954 = vmatprep.subr.mxu0 0.0
    %2955 = vmatpush1.xpose.msra.mxu0 0.0
    %2956 = vmatprep.subr.mxu0 0.0
    %2957 = vmatpush1.xpose.msra.mxu0 0.0
    %2958 = vmatprep.subr.mxu0 0.0
    %2959 = vmatpush1.xpose.msra.mxu0 0.0
    %2960 = vmatprep.subr.mxu0 0.0
    %2961 = vmatpush1.xpose.msra.mxu0 0.0
    %2962 = vmatprep.mubr.f32.mxu0 0.0
    %2963 = vmatmul.mubr.f32.gmra.mrb[0].mxu0 %v2884
    %v2964 = vpop.f32.mrb[0].mxu0
    %v2965 = vadd.f32 0.0, %v2964
    %v2966 = vpop.f32.mrb[0].mxu0
    %2967 = vdwg.mxu0
    %v2968 = vmul.f32 %v2762, %v2762
    %v2969 = vmul.f32 %v2763, %v2763
    %v2970 = vmul.f32 %v2764, %v2764
    %v2971 = vmul.f32 %v2765, %v2765
    %v2972 = vsel %vm217, %v2968, 0.0
    %2973 = vadd.xlane.f32.xlu0 %v2972
    %v2974 = vpop.xlane.xlu0 %2973
    %v2975 = vsel %vm217, %v2969, 0.0
    %2976 = vadd.xlane.f32.xlu0 %v2975
    %v2977 = vpop.xlane.xlu0 %2976
    %v2978 = vsel %vm217, %v2970, 0.0
    %2979 = vadd.xlane.f32.xlu0 %v2978
    %v2980 = vpop.xlane.xlu0 %2979
    %v2981 = vsel %vm1154, %v2971, 0.0
    %2982 = vadd.xlane.f32.xlu0 %v2981
    %v2983 = vpop.xlane.xlu0 %2982
    %v2984 = vmul.f32 %v2861, 2.0
    %v2985 = vmul.f32 %v2866, 2.0
    %v2986 = vmul.f32 %v2871, 2.0
    %v2987 = vmul.f32 %v2876, 2.0
    %v2988 = vsub.f32 %v2974, %v2984
    %v2989 = vsub.f32 %v2977, %v2985
    %v2990 = vsub.f32 %v2980, %v2986
    %v2991 = vsub.f32 %v2983, %v2987
    %v2992 = vlaneseq
    %v2993 = vshrl.u32 %v2992, 7
    %v2994 = vsub.s32 0, %v2993
    %v2995 = vrot.slane %v2965, %v2994
    %v2996 = vadd.f32 %v2988, %v2995
    %v2997 = vadd.f32 %v2989, %v2995
    %v2998 = vadd.f32 %v2990, %v2995
    %v2999 = vadd.f32 %v2991, %v2995
    %v3000 = vsel %vm217, %v2996, inf
    %3001 = vmin.xlane.f32.xlu0 %v3000
    %v3002 = vpop.xlane.xlu0 %3001
    %v3003 = vsel %vm217, %v2997, inf
    %3004 = vmin.xlane.f32.xlu0 %v3003
    %v3005 = vpop.xlane.xlu0 %3004
    %v3006 = vsel %vm217, %v2998, inf
    %3007 = vmin.xlane.f32.xlu0 %v3006
    %v3008 = vpop.xlane.xlu0 %3007
    %v3009 = vsel %vm1154, %v2999, inf
    %3010 = vmin.xlane.f32.xlu0 %v3009
    %v3011 = vpop.xlane.xlu0 %3010
    %v3012 = vlaneseq
    %v3013 = vand.u32 %v3012, 127
    %v3014 = vcvt.s32.f32 %v3013
    %vm3015 = vcmp.le.f32.partialorder %v2996, %v3002
    %vm3016 = vcmp.le.f32.partialorder %v2997, %v3005
    %vm3017 = vcmp.le.f32.partialorder %v2998, %v3008
    %vm3018 = vcmp.le.f32.partialorder %v2999, %v3011
    %v3019 = vsel %vm3015, %v3014, 32.0
    %v3020 = vsel %vm3016, %v3014, 32.0
    %v3021 = vsel %vm3017, %v3014, 32.0
    %v3022 = vsel %vm3018, %v3014, 32.0
    %v3023 = vsel %vm217, %v3019, inf
    %3024 = vmin.xlane.f32.xlu0 %v3023
    %v3025 = vpop.xlane.xlu0 %3024
    %v3026 = vsel %vm217, %v3020, inf
    %3027 = vmin.xlane.f32.xlu0 %v3026
    %v3028 = vpop.xlane.xlu0 %3027
    %v3029 = vsel %vm217, %v3021, inf
    %3030 = vmin.xlane.f32.xlu0 %v3029
    %v3031 = vpop.xlane.xlu0 %3030
    %v3032 = vsel %vm1154, %v3022, inf
    %3033 = vmin.xlane.f32.xlu0 %v3032
    %v3034 = vpop.xlane.xlu0 %3033
    %vm3035 = vcmp.eq.f32.partialorder %v3014, %v3025
    %vm3036 = vcmp.eq.f32.partialorder %v3014, %v3028
    %vm3037 = vcmp.eq.f32.partialorder %v3014, %v3031
    %vm3038 = vcmp.eq.f32.partialorder %v3014, %v3034
    %v3039 = vsel %vm3035, 1, 0
    %v3040 = vsel %vm3036, 1, 0
    %v3041 = vsel %vm3037, 1, 0
    %v3042 = vsel %vm3038, 1, 0
    %v3043 = vcvt.s32.f32 %v3039
    %v3044 = vcvt.s32.f32 %v3040
    %v3045 = vcvt.s32.f32 %v3041
    %v3046 = vcvt.s32.f32 %v3042
    %v3048 = vsel %vm217, %v3043, 0
    %v3051 = vsel %vm217, %v3044, 0
    %v3054 = vsel %vm217, %v3045, 0
    %v3057 = vsel %vm217, %v3046, 0
    %3059 = vmatprep.subr.mxu0 0.0
    %3060 = vmatpush1.msra.mxu0 %v2766
    %3061 = vmatprep.subr.mxu0 0.0
    %3062 = vmatpush1.msra.mxu0 %v2767
    %3063 = vmatprep.subr.mxu0 0.0
    %3064 = vmatpush1.msra.mxu0 %v2768
    %3065 = vmatprep.subr.mxu0 0.0
    %3066 = vmatpush1.msra.mxu0 %v2769
    %3067 = vmatprep.subr.mxu0 0.0
    %3068 = vmatpush1.msra.mxu0 0.0
    %3069 = vmatprep.subr.mxu0 0.0
    %3070 = vmatpush1.msra.mxu0 0.0
    %3071 = vmatprep.subr.mxu0 0.0
    %3072 = vmatpush1.msra.mxu0 0.0
    %3073 = vmatprep.subr.mxu0 0.0
    %3074 = vmatpush1.msra.mxu0 0.0
    %3075 = vmatprep.subr.mxu0 0.0
    %3076 = vmatpush1.msra.mxu0 0.0
    %3077 = vmatprep.subr.mxu0 0.0
    %3078 = vmatpush1.msra.mxu0 0.0
    %3079 = vmatprep.subr.mxu0 0.0
    %3080 = vmatpush1.msra.mxu0 0.0
    %3081 = vmatprep.subr.mxu0 0.0
    %3082 = vmatpush1.msra.mxu0 0.0
    %3083 = vmatprep.subr.mxu0 0.0
    %3084 = vmatpush1.msra.mxu0 0.0
    %3085 = vmatprep.subr.mxu0 0.0
    %3086 = vmatpush1.msra.mxu0 0.0
    %3087 = vmatprep.subr.mxu0 0.0
    %3088 = vmatpush1.msra.mxu0 0.0
    %3089 = vmatprep.subr.mxu0 0.0
    %3090 = vmatpush1.msra.mxu0 0.0
    %3091 = vmatprep.subr.mxu0 0.0
    %3092 = vmatpush1.msra.mxu0 0.0
    %3093 = vmatprep.subr.mxu0 0.0
    %3094 = vmatpush1.msra.mxu0 0.0
    %3095 = vmatprep.subr.mxu0 0.0
    %3096 = vmatpush1.msra.mxu0 0.0
    %3097 = vmatprep.subr.mxu0 0.0
    %3098 = vmatpush1.msra.mxu0 0.0
    %3099 = vmatprep.subr.mxu0 0.0
    %3100 = vmatpush1.msra.mxu0 0.0
    %3101 = vmatprep.subr.mxu0 0.0
    %3102 = vmatpush1.msra.mxu0 0.0
    %3103 = vmatprep.subr.mxu0 0.0
    %3104 = vmatpush1.msra.mxu0 0.0
    %3105 = vmatprep.subr.mxu0 0.0
    %3106 = vmatpush1.msra.mxu0 0.0
    %3107 = vmatprep.subr.mxu0 0.0
    %3108 = vmatpush1.msra.mxu0 0.0
    %3109 = vmatprep.subr.mxu0 0.0
    %3110 = vmatpush1.msra.mxu0 0.0
    %3111 = vmatprep.subr.mxu0 0.0
    %3112 = vmatpush1.msra.mxu0 0.0
    %3113 = vmatprep.subr.mxu0 0.0
    %3114 = vmatpush1.msra.mxu0 0.0
    %3115 = vmatprep.subr.mxu0 0.0
    %3116 = vmatpush1.msra.mxu0 0.0
    %3117 = vmatprep.subr.mxu0 0.0
    %3118 = vmatpush1.msra.mxu0 0.0
    %3119 = vmatprep.subr.mxu0 0.0
    %3120 = vmatpush1.msra.mxu0 0.0
    %3121 = vmatprep.subr.mxu0 0.0
    %3122 = vmatpush1.msra.mxu0 0.0
    %3123 = vmatprep.mubr.f32.mxu0 0.0
    %3124 = vmatmul.mubr.f32.gmra.mrb[0].mxu0 %v3048
    %v3125 = vpop.f32.mrb[0].mxu0
    %v3126 = vadd.f32 0.0, %v3125
    %v3127 = vpop.f32.mrb[0].mxu0
    %3128 = vmatprep.mubr.f32.mxu0 0.0
    %3129 = vmatmul.mubr.f32.gmra.mrb[0].mxu0 %v3051
    %v3130 = vpop.f32.mrb[0].mxu0
    %v3131 = vadd.f32 0.0, %v3130
    %v3132 = vpop.f32.mrb[0].mxu0
    %3133 = vmatprep.mubr.f32.mxu0 0.0
    %3134 = vmatmul.mubr.f32.gmra.mrb[0].mxu0 %v3054
    %v3135 = vpop.f32.mrb[0].mxu0
    %v3136 = vadd.f32 0.0, %v3135
    %v3137 = vpop.f32.mrb[0].mxu0
    %3138 = vmatprep.mubr.f32.mxu0 0.0
    %3139 = vmatmul.mubr.f32.gmra.mrb[0].mxu0 %v3057
    %v3140 = vpop.f32.mrb[0].mxu0
    %v3141 = vadd.f32 0.0, %v3140
    %v3142 = vpop.f32.mrb[0].mxu0
    %3143 = vdwg.mxu0
    %3144 = vst.msk [vmem:[%s87] sm:$0xff] %vm217, %v3043
    %3145 = vst.msk [vmem:[%s87 + $0x8] sm:$0xff] %vm217, %v3044
    %3146 = vst.msk [vmem:[%s87 + $0x10] sm:$0xff] %vm217, %v3045
    %3147 = vst.msk [vmem:[%s87 + $0x18] sm:$0xf] %vm1154, %v3046
    %v3148 = vsub.f32 %v3126, %v2762
    %v3149 = vsub.f32 %v3131, %v2763
    %v3150 = vsub.f32 %v3136, %v2764
    %v3151 = vsub.f32 %v3141, %v2765
    %v3152 = vmul.f32 %v3148, %v3148
    %v3153 = vmul.f32 %v3149, %v3149
    %v3154 = vmul.f32 %v3150, %v3150
    %v3155 = vmul.f32 %v3151, %v3151
    %v3156 = vsel %vm217, %v3152, 0.0
    %3157 = vadd.xlane.f32.xlu0 %v3156
    %v3158 = vpop.xlane.xlu0 %3157
    %v3159 = vsel %vm217, %v3153, 0.0
    %3160 = vadd.xlane.f32.xlu0 %v3159
    %v3161 = vpop.xlane.xlu0 %3160
    %v3162 = vsel %vm217, %v3154, 0.0
    %3163 = vadd.xlane.f32.xlu0 %v3162
    %v3164 = vpop.xlane.xlu0 %3163
    %v3165 = vsel %vm1154, %v3155, 0.0
    %3166 = vadd.xlane.f32.xlu0 %v3165
    %v3167 = vpop.xlane.xlu0 %3166
    %v3168 = vadd.f32 %v3158, %v3161
    %v3169 = vadd.f32 %v3168, %v3164
    %vm3170 = vcmask 1043456
    %v3171 = vsel %vm3170, %v3167, 0.0
    %v3172 = vadd.f32 %v3169, %v3171
    %v3173 = vrot.slane %v3172, 4
    %v3174 = vadd.f32 %v3172, %v3173
    %v3175 = vrot.slane %v3174, 2
    %v3176 = vadd.f32 %v3174, %v3175
    %v3177 = vrot.slane %v3176, 1
    %v3178 = vadd.f32 %v3176, %v3177
    %v3179 = vmul.f32 %v3178, 0.0011160715
    %vm3180 = vcmask 0
    %3181 = vst.msk [vmem:[#allocation4] sm:$0x1] %vm3180, %v3179
    %v3182 = vsel %vm217, %v3043, 0.0
    %v3183 = vsel %vm217, %v3044, 0.0
    %v3184 = vadd.f32 %v3182, %v3183
    %v3185 = vsel %vm217, %v3045, 0.0
    %v3186 = vadd.f32 %v3184, %v3185
    %v3187 = vsel %vm1154, %v3046, 0.0
    %v3188 = vadd.f32 %v3186, %v3187
    %v3189 = vrot.slane %v3188, 4
    %v3190 = vadd.f32 %v3188, %v3189
    %v3191 = vrot.slane %v3190, 2
    %v3192 = vadd.f32 %v3190, %v3191
    %v3193 = vrot.slane %v3192, 1
    %v3194 = vadd.f32 %v3192, %v3193
    %v3195 = vmul.f32 %v3194, 0.035714287
    %v3196 = vadd.f32 %v3195, 1e-10
    %v3197 = vlog2.pop %v3196
    %v3198 = vmul.f32 %v3197, 0.6931472
    %v3199 = vmul.f32 %v3195, %v3198
    %v3200 = vsel %vm217, %v3199, 0.0
    %3201 = vadd.xlane.f32.xlu0 %v3200
    %v3202 = vpop.xlane.xlu0 %3201
    %v3203 = vsub.f32 0.0, %v3202
    %v3204 = vmul.f32 %v3203, 1.442695
    %v3205 = vpow.pop %v3204
    %3206 = vst.msk [vmem:[#allocation6] sm:$0x1] %vm3180, %v3205
    %v3207 = vld [vmem:[%s3] sm:$0xff]
    %v3208 = vld [vmem:[%s3 + $0x8] sm:$0xff]
    %v3209 = vld [vmem:[%s3 + $0x10] sm:$0xff]
    %v3210 = vld [vmem:[%s3 + $0x18] sm:$0xff]
    %v3211 = vld [vmem:[%s7] sm:$0xff]
    %v3212 = vld [vmem:[%s7 + $0x8] sm:$0xff]
    %v3213 = vld [vmem:[%s7 + $0x10] sm:$0xff]
    %v3214 = vld [vmem:[%s7 + $0x18] sm:$0xff]
    %v3215 = vld [vmem:[%s9] sm:$0xff]
    %v3216 = vld [vmem:[%s9 + $0x8] sm:$0xff]
    %v3217 = vld [vmem:[%s9 + $0x10] sm:$0xff]
    %v3218 = vld [vmem:[%s9 + $0x18] sm:$0xff]
    %v3219 = vld [vmem:[%s37] sm:$0xf]
    %v3220 = vld [vmem:[%s37 + $0x4] sm:$0xf]
    %v3221 = vld [vmem:[%s37 + $0x8] sm:$0xf]
    %v3222 = vld [vmem:[%s37 + $0xc] sm:$0xf]
    %v3223 = vpack.c.bf16 %v3208, %v3207
    %v3224 = vpack.c.bf16 %v3210, %v3209
    %v3225 = vld [vmem:[%s39] sm:$0x1]
    %v3227 = vlaneseq
    %v3228 = vshrl.u32 %v3227, 7
    %v3229 = vsub.s32 0, %v3228
    %v3230 = vrot.slane %v3225, %v3229
    %v3236 = vunpack.c.l.b16 %v3219
    %v3237 = vunpack.c.l.b16 %v3220
    %v3238 = vunpack.c.l.b16 %v3221
    %v3239 = vunpack.c.l.b16 %v3222
    %v3240 = vpack.c.b16 %v3237, %v3236
    %v3241 = vpack.c.b16 %v3239, %v3238
    %v3245 = vsel %vm217, %v3223, 0
    %v3248 = vsel %vm217, %v3224, 0
    %3250 = vmatprep.subr.bf16.mxu0 0
    %3251 = vmatpush1.bf16.msra.mxu0 %v3240
    %3252 = vmatprep.subr.bf16.mxu0 0
    %3253 = vmatpush1.bf16.msra.mxu0 %v3241
    %3254 = vmatprep.subr.bf16.mxu0 0
    %3255 = vmatpush1.bf16.msra.mxu0 0
    %3256 = vmatprep.subr.bf16.mxu0 0
    %3257 = vmatpush1.bf16.msra.mxu0 0
    %3258 = vmatprep.subr.bf16.mxu0 0
    %3259 = vmatpush1.bf16.msra.mxu0 0
    %3260 = vmatprep.subr.bf16.mxu0 0
    %3261 = vmatpush1.bf16.msra.mxu0 0
    %3262 = vmatprep.subr.bf16.mxu0 0
    %3263 = vmatpush1.bf16.msra.mxu0 0
    %3264 = vmatprep.subr.bf16.mxu0 0
    %3265 = vmatpush1.bf16.msra.mxu0 0
    %3266 = vmatprep.subr.bf16.mxu0 0
    %3267 = vmatpush1.bf16.msra.mxu0 0
    %3268 = vmatprep.subr.bf16.mxu0 0
    %3269 = vmatpush1.bf16.msra.mxu0 0
    %3270 = vmatprep.subr.bf16.mxu0 0
    %3271 = vmatpush1.bf16.msra.mxu0 0
    %3272 = vmatprep.subr.bf16.mxu0 0
    %3273 = vmatpush1.bf16.msra.mxu0 0
    %3274 = vmatprep.subr.bf16.mxu0 0
    %3275 = vmatpush1.bf16.msra.mxu0 0
    %3276 = vmatprep.subr.bf16.mxu0 0
    %3277 = vmatpush1.bf16.msra.mxu0 0
    %3278 = vmatprep.subr.bf16.mxu0 0
    %3279 = vmatpush1.bf16.msra.mxu0 0
    %3280 = vmatprep.subr.bf16.mxu0 0
    %3281 = vmatpush1.bf16.msra.mxu0 0
    %3282 = vmatprep.mubr.bf16.mxu0 0
    %3283 = vmatmul.mubr.bf16.gmra.mrb[0].mxu0 %v3245
    %v3284 = vpop.f32.mrb[0].mxu0
    %v3285 = vadd.f32 %v3230, %v3284
    %v3286 = vpop.f32.mrb[0].mxu0
    %v3287 = vpop.f32.mrb[0].mxu0
    %v3288 = vadd.f32 %v3230, %v3287
    %v3289 = vpop.f32.mrb[0].mxu0
    %3290 = vmatprep.mubr.bf16.mxu0 0
    %3291 = vmatmul.mubr.bf16.gmra.mrb[0].mxu0 %v3248
    %v3292 = vpop.f32.mrb[0].mxu0
    %v3293 = vadd.f32 %v3230, %v3292
    %v3294 = vpop.f32.mrb[0].mxu0
    %v3295 = vpop.f32.mrb[0].mxu0
    %v3296 = vadd.f32 %v3230, %v3295
    %v3297 = vpop.f32.mrb[0].mxu0
    %3298 = vdwg.mxu0
    %v3299 = vmul.f32 %v3285, 0.35355338
    %v3300 = vmul.f32 %v3288, 0.35355338
    %v3301 = vmul.f32 %v3293, 0.35355338
    %v3302 = vmul.f32 %v3296, 0.35355338
    %v3303 = vpack.c.bf16 %v3300, %v3299
    %v3304 = vpack.c.bf16 %v3302, %v3301
    %v3305 = vpack.c.bf16 %v3288, %v3285
    %v3306 = vpack.c.bf16 %v3296, %v3293
    %3309 = vrot.lane.b32.xlu0 %v3305, 96
    %v3310 = vpop.permute.xlu0 %3309
    %3311 = vrot.lane.b32.xlu0 %v3306, 96
    %v3312 = vpop.permute.xlu0 %3311
    %v3314 = vsel %vm287, %v3303, 0
    %v3317 = vsel %vm287, %v3304, 0
    %v3320 = vsel %vm287, %v3310, 0
    %v3323 = vsel %vm287, %v3312, 0
    %3325 = vmatprep.subr.bf16.mxu0 0
    %3326 = vmatpush1.bf16.xpose.msra.mxu0 %v3320
    %3327 = vmatprep.subr.bf16.mxu0 0
    %3328 = vmatpush1.bf16.xpose.msra.mxu0 %v3323
    %3329 = vmatprep.subr.bf16.mxu0 0
    %3330 = vmatpush1.bf16.xpose.msra.mxu0 0
    %3331 = vmatprep.subr.bf16.mxu0 0
    %3332 = vmatpush1.bf16.xpose.msra.mxu0 0
    %3333 = vmatprep.subr.bf16.mxu0 0
    %3334 = vmatpush1.bf16.xpose.msra.mxu0 0
    %3335 = vmatprep.subr.bf16.mxu0 0
    %3336 = vmatpush1.bf16.xpose.msra.mxu0 0
    %3337 = vmatprep.subr.bf16.mxu0 0
    %3338 = vmatpush1.bf16.xpose.msra.mxu0 0
    %3339 = vmatprep.subr.bf16.mxu0 0
    %3340 = vmatpush1.bf16.xpose.msra.mxu0 0
    %3341 = vmatprep.subr.bf16.mxu0 0
    %3342 = vmatpush1.bf16.xpose.msra.mxu0 0
    %3343 = vmatprep.subr.bf16.mxu0 0
    %3344 = vmatpush1.bf16.xpose.msra.mxu0 0
    %3345 = vmatprep.subr.bf16.mxu0 0
    %3346 = vmatpush1.bf16.xpose.msra.mxu0 0
    %3347 = vmatprep.subr.bf16.mxu0 0
    %3348 = vmatpush1.bf16.xpose.msra.mxu0 0
    %3349 = vmatprep.subr.bf16.mxu0 0
    %3350 = vmatpush1.bf16.xpose.msra.mxu0 0
    %3351 = vmatprep.subr.bf16.mxu0 0
    %3352 = vmatpush1.bf16.xpose.msra.mxu0 0
    %3353 = vmatprep.subr.bf16.mxu0 0
    %3354 = vmatpush1.bf16.xpose.msra.mxu0 0
    %3355 = vmatprep.subr.bf16.mxu0 0
    %3356 = vmatpush1.bf16.xpose.msra.mxu0 0
    %3357 = vmatprep.mubr.bf16.mxu0 0
    %3358 = vmatmul.mubr.bf16.gmra.mrb[0].mxu0 %v3314
    %v3359 = vpop.f32.mrb[0].mxu0
    %v3360 = vadd.f32 %v3211, %v3359
    %v3361 = vpop.f32.mrb[0].mxu0
    %v3362 = vpop.f32.mrb[0].mxu0
    %v3363 = vadd.f32 %v3212, %v3362
    %v3364 = vpop.f32.mrb[0].mxu0
    %3365 = vmatprep.mubr.bf16.mxu0 0
    %3366 = vmatmul.mubr.bf16.gmra.mrb[0].mxu0 %v3317
    %v3367 = vpop.f32.mrb[0].mxu0
    %v3368 = vadd.f32 %v3213, %v3367
    %v3369 = vpop.f32.mrb[0].mxu0
    %v3370 = vpop.f32.mrb[0].mxu0
    %v3371 = vadd.f32 %v3214, %v3370
    %v3372 = vpop.f32.mrb[0].mxu0
    %3373 = vdwg.mxu0
    %v3374 = vsel %vm217, %v3360, -inf
    %3375 = vmax.xlane.f32.xlu0 %v3374
    %v3376 = vpop.xlane.xlu0 %3375
    %v3377 = vsel %vm217, %v3363, -inf
    %3378 = vmax.xlane.f32.xlu0 %v3377
    %v3379 = vpop.xlane.xlu0 %3378
    %v3380 = vsel %vm217, %v3368, -inf
    %3381 = vmax.xlane.f32.xlu0 %v3380
    %v3382 = vpop.xlane.xlu0 %3381
    %v3383 = vsel %vm217, %v3371, -inf
    %3384 = vmax.xlane.f32.xlu0 %v3383
    %v3385 = vpop.xlane.xlu0 %3384
    %v3386 = vsub.f32 %v3360, %v3376
    %v3387 = vsub.f32 %v3363, %v3379
    %v3388 = vsub.f32 %v3368, %v3382
    %v3389 = vsub.f32 %v3371, %v3385
    %v3390 = vmul.f32 %v3386, 1.442695
    %v3391 = vpow.pop %v3390
    %v3392 = vmul.f32 %v3387, 1.442695
    %v3393 = vpow.pop %v3392
    %v3394 = vmul.f32 %v3388, 1.442695
    %v3395 = vpow.pop %v3394
    %v3396 = vmul.f32 %v3389, 1.442695
    %v3397 = vpow.pop %v3396
    %v3398 = vsel %vm217, %v3391, 0.0
    %3399 = vadd.xlane.f32.xlu0 %v3398
    %v3400 = vpop.xlane.xlu0 %3399
    %v3401 = vsel %vm217, %v3393, 0.0
    %3402 = vadd.xlane.f32.xlu0 %v3401
    %v3403 = vpop.xlane.xlu0 %3402
    %v3404 = vsel %vm217, %v3395, 0.0
    %3405 = vadd.xlane.f32.xlu0 %v3404
    %v3406 = vpop.xlane.xlu0 %3405
    %v3407 = vsel %vm217, %v3397, 0.0
    %3408 = vadd.xlane.f32.xlu0 %v3407
    %v3409 = vpop.xlane.xlu0 %3408
    %v3410 = vrcp.pop %v3400
    %v3411 = vrcp.pop %v3403
    %v3412 = vrcp.pop %v3406
    %v3413 = vrcp.pop %v3409
    %v3414 = vmul.f32 %v3391, %v3410
    %v3415 = vmul.f32 %v3393, %v3411
    %v3416 = vmul.f32 %v3395, %v3412
    %v3417 = vmul.f32 %v3397, %v3413
    %v3418 = vpack.c.bf16 %v3415, %v3414
    %v3419 = vpack.c.bf16 %v3417, %v3416
    %3420 = vrot.lane.b32.xlu0 %v3305, 64
    %v3421 = vpop.permute.xlu0 %3420
    %3422 = vrot.lane.b32.xlu0 %v3306, 64
    %v3423 = vpop.permute.xlu0 %3422
    %v3427 = vsel %vm217, %v3418, 0
    %v3430 = vsel %vm217, %v3419, 0
    %3432 = vmatprep.subr.bf16.mxu0 0
    %3433 = vmatpush1.bf16.msra.mxu0 %v3421
    %3434 = vmatprep.subr.bf16.mxu0 0
    %3435 = vmatpush1.bf16.msra.mxu0 %v3423
    %3436 = vmatprep.subr.bf16.mxu0 0
    %3437 = vmatpush1.bf16.msra.mxu0 0
    %3438 = vmatprep.subr.bf16.mxu0 0
    %3439 = vmatpush1.bf16.msra.mxu0 0
    %3440 = vmatprep.subr.bf16.mxu0 0
    %3441 = vmatpush1.bf16.msra.mxu0 0
    %3442 = vmatprep.subr.bf16.mxu0 0
    %3443 = vmatpush1.bf16.msra.mxu0 0
    %3444 = vmatprep.subr.bf16.mxu0 0
    %3445 = vmatpush1.bf16.msra.mxu0 0
    %3446 = vmatprep.subr.bf16.mxu0 0
    %3447 = vmatpush1.bf16.msra.mxu0 0
    %3448 = vmatprep.subr.bf16.mxu0 0
    %3449 = vmatpush1.bf16.msra.mxu0 0
    %3450 = vmatprep.subr.bf16.mxu0 0
    %3451 = vmatpush1.bf16.msra.mxu0 0
    %3452 = vmatprep.subr.bf16.mxu0 0
    %3453 = vmatpush1.bf16.msra.mxu0 0
    %3454 = vmatprep.subr.bf16.mxu0 0
    %3455 = vmatpush1.bf16.msra.mxu0 0
    %3456 = vmatprep.subr.bf16.mxu0 0
    %3457 = vmatpush1.bf16.msra.mxu0 0
    %3458 = vmatprep.subr.bf16.mxu0 0
    %3459 = vmatpush1.bf16.msra.mxu0 0
    %3460 = vmatprep.subr.bf16.mxu0 0
    %3461 = vmatpush1.bf16.msra.mxu0 0
    %3462 = vmatprep.subr.bf16.mxu0 0
    %3463 = vmatpush1.bf16.msra.mxu0 0
    %3464 = vmatprep.mubr.bf16.mxu0 0
    %3465 = vmatmul.mubr.bf16.gmra.mrb[0].mxu0 %v3427
    %v3466 = vpop.f32.mrb[0].mxu0
    %v3467 = vadd.f32 0.0, %v3466
    %v3468 = vpop.f32.mrb[0].mxu0
    %v3469 = vpop.f32.mrb[0].mxu0
    %v3470 = vadd.f32 0.0, %v3469
    %v3471 = vpop.f32.mrb[0].mxu0
    %3472 = vmatprep.mubr.bf16.mxu0 0
    %3473 = vmatmul.mubr.bf16.gmra.mrb[0].mxu0 %v3430
    %v3474 = vpop.f32.mrb[0].mxu0
    %v3475 = vadd.f32 0.0, %v3474
    %v3476 = vpop.f32.mrb[0].mxu0
    %v3477 = vpop.f32.mrb[0].mxu0
    %v3478 = vadd.f32 0.0, %v3477
    %v3479 = vpop.f32.mrb[0].mxu0
    %3480 = vdwg.mxu0
    %3483 = vrot.lane.b32.xlu0 %v3303, 120
    %v3484 = vpop.permute.xlu0 %3483
    %3485 = vrot.lane.b32.xlu0 %v3304, 120
    %v3486 = vpop.permute.xlu0 %3485
    %3487 = vrot.lane.b32.xlu0 %v3305, 88
    %v3488 = vpop.permute.xlu0 %3487
    %3489 = vrot.lane.b32.xlu0 %v3306, 88
    %v3490 = vpop.permute.xlu0 %3489
    %v3492 = vsel %vm287, %v3484, 0
    %v3495 = vsel %vm287, %v3486, 0
    %v3498 = vsel %vm287, %v3488, 0
    %v3501 = vsel %vm287, %v3490, 0
    %3503 = vmatprep.subr.bf16.mxu0 0
    %3504 = vmatpush1.bf16.xpose.msra.mxu0 %v3498
    %3505 = vmatprep.subr.bf16.mxu0 0
    %3506 = vmatpush1.bf16.xpose.msra.mxu0 %v3501
    %3507 = vmatprep.subr.bf16.mxu0 0
    %3508 = vmatpush1.bf16.xpose.msra.mxu0 0
    %3509 = vmatprep.subr.bf16.mxu0 0
    %3510 = vmatpush1.bf16.xpose.msra.mxu0 0
    %3511 = vmatprep.subr.bf16.mxu0 0
    %3512 = vmatpush1.bf16.xpose.msra.mxu0 0
    %3513 = vmatprep.subr.bf16.mxu0 0
    %3514 = vmatpush1.bf16.xpose.msra.mxu0 0
    %3515 = vmatprep.subr.bf16.mxu0 0
    %3516 = vmatpush1.bf16.xpose.msra.mxu0 0
    %3517 = vmatprep.subr.bf16.mxu0 0
    %3518 = vmatpush1.bf16.xpose.msra.mxu0 0
    %3519 = vmatprep.subr.bf16.mxu0 0
    %3520 = vmatpush1.bf16.xpose.msra.mxu0 0
    %3521 = vmatprep.subr.bf16.mxu0 0
    %3522 = vmatpush1.bf16.xpose.msra.mxu0 0
    %3523 = vmatprep.subr.bf16.mxu0 0
    %3524 = vmatpush1.bf16.xpose.msra.mxu0 0
    %3525 = vmatprep.subr.bf16.mxu0 0
    %3526 = vmatpush1.bf16.xpose.msra.mxu0 0
    %3527 = vmatprep.subr.bf16.mxu0 0
    %3528 = vmatpush1.bf16.xpose.msra.mxu0 0
    %3529 = vmatprep.subr.bf16.mxu0 0
    %3530 = vmatpush1.bf16.xpose.msra.mxu0 0
    %3531 = vmatprep.subr.bf16.mxu0 0
    %3532 = vmatpush1.bf16.xpose.msra.mxu0 0
    %3533 = vmatprep.subr.bf16.mxu0 0
    %3534 = vmatpush1.bf16.xpose.msra.mxu0 0
    %3535 = vmatprep.mubr.bf16.mxu0 0
    %3536 = vmatmul.mubr.bf16.gmra.mrb[0].mxu0 %v3492
    %v3537 = vpop.f32.mrb[0].mxu0
    %v3538 = vadd.f32 %v3211, %v3537
    %v3539 = vpop.f32.mrb[0].mxu0
    %v3540 = vpop.f32.mrb[0].mxu0
    %v3541 = vadd.f32 %v3212, %v3540
    %v3542 = vpop.f32.mrb[0].mxu0
    %3543 = vmatprep.mubr.bf16.mxu0 0
    %3544 = vmatmul.mubr.bf16.gmra.mrb[0].mxu0 %v3495
    %v3545 = vpop.f32.mrb[0].mxu0
    %v3546 = vadd.f32 %v3213, %v3545
    %v3547 = vpop.f32.mrb[0].mxu0
    %v3548 = vpop.f32.mrb[0].mxu0
    %v3549 = vadd.f32 %v3214, %v3548
    %v3550 = vpop.f32.mrb[0].mxu0
    %3551 = vdwg.mxu0
    %v3552 = vsel %vm217, %v3538, -inf
    %3553 = vmax.xlane.f32.xlu0 %v3552
    %v3554 = vpop.xlane.xlu0 %3553
    %v3555 = vsel %vm217, %v3541, -inf
    %3556 = vmax.xlane.f32.xlu0 %v3555
    %v3557 = vpop.xlane.xlu0 %3556
    %v3558 = vsel %vm217, %v3546, -inf
    %3559 = vmax.xlane.f32.xlu0 %v3558
    %v3560 = vpop.xlane.xlu0 %3559
    %v3561 = vsel %vm217, %v3549, -inf
    %3562 = vmax.xlane.f32.xlu0 %v3561
    %v3563 = vpop.xlane.xlu0 %3562
    %v3564 = vsub.f32 %v3538, %v3554
    %v3565 = vsub.f32 %v3541, %v3557
    %v3566 = vsub.f32 %v3546, %v3560
    %v3567 = vsub.f32 %v3549, %v3563
    %v3568 = vmul.f32 %v3564, 1.442695
    %v3569 = vpow.pop %v3568
    %v3570 = vmul.f32 %v3565, 1.442695
    %v3571 = vpow.pop %v3570
    %v3572 = vmul.f32 %v3566, 1.442695
    %v3573 = vpow.pop %v3572
    %v3574 = vmul.f32 %v3567, 1.442695
    %v3575 = vpow.pop %v3574
    %v3576 = vsel %vm217, %v3569, 0.0
    %3577 = vadd.xlane.f32.xlu0 %v3576
    %v3578 = vpop.xlane.xlu0 %3577
    %v3579 = vsel %vm217, %v3571, 0.0
    %3580 = vadd.xlane.f32.xlu0 %v3579
    %v3581 = vpop.xlane.xlu0 %3580
    %v3582 = vsel %vm217, %v3573, 0.0
    %3583 = vadd.xlane.f32.xlu0 %v3582
    %v3584 = vpop.xlane.xlu0 %3583
    %v3585 = vsel %vm217, %v3575, 0.0
    %3586 = vadd.xlane.f32.xlu0 %v3585
    %v3587 = vpop.xlane.xlu0 %3586
    %v3588 = vrcp.pop %v3578
    %v3589 = vrcp.pop %v3581
    %v3590 = vrcp.pop %v3584
    %v3591 = vrcp.pop %v3587
    %v3592 = vmul.f32 %v3569, %v3588
    %v3593 = vmul.f32 %v3571, %v3589
    %v3594 = vmul.f32 %v3573, %v3590
    %v3595 = vmul.f32 %v3575, %v3591
    %v3596 = vpack.c.bf16 %v3593, %v3592
    %v3597 = vpack.c.bf16 %v3595, %v3594
    %3598 = vrot.lane.b32.xlu0 %v3305, 56
    %v3599 = vpop.permute.xlu0 %3598
    %3600 = vrot.lane.b32.xlu0 %v3306, 56
    %v3601 = vpop.permute.xlu0 %3600
    %v3605 = vsel %vm217, %v3596, 0
    %v3608 = vsel %vm217, %v3597, 0
    %3610 = vmatprep.subr.bf16.mxu0 0
    %3611 = vmatpush1.bf16.msra.mxu0 %v3599
    %3612 = vmatprep.subr.bf16.mxu0 0
    %3613 = vmatpush1.bf16.msra.mxu0 %v3601
    %3614 = vmatprep.subr.bf16.mxu0 0
    %3615 = vmatpush1.bf16.msra.mxu0 0
    %3616 = vmatprep.subr.bf16.mxu0 0
    %3617 = vmatpush1.bf16.msra.mxu0 0
    %3618 = vmatprep.subr.bf16.mxu0 0
    %3619 = vmatpush1.bf16.msra.mxu0 0
    %3620 = vmatprep.subr.bf16.mxu0 0
    %3621 = vmatpush1.bf16.msra.mxu0 0
    %3622 = vmatprep.subr.bf16.mxu0 0
    %3623 = vmatpush1.bf16.msra.mxu0 0
    %3624 = vmatprep.subr.bf16.mxu0 0
    %3625 = vmatpush1.bf16.msra.mxu0 0
    %3626 = vmatprep.subr.bf16.mxu0 0
    %3627 = vmatpush1.bf16.msra.mxu0 0
    %3628 = vmatprep.subr.bf16.mxu0 0
    %3629 = vmatpush1.bf16.msra.mxu0 0
    %3630 = vmatprep.subr.bf16.mxu0 0
    %3631 = vmatpush1.bf16.msra.mxu0 0
    %3632 = vmatprep.subr.bf16.mxu0 0
    %3633 = vmatpush1.bf16.msra.mxu0 0
    %3634 = vmatprep.subr.bf16.mxu0 0
    %3635 = vmatpush1.bf16.msra.mxu0 0
    %3636 = vmatprep.subr.bf16.mxu0 0
    %3637 = vmatpush1.bf16.msra.mxu0 0
    %3638 = vmatprep.subr.bf16.mxu0 0
    %3639 = vmatpush1.bf16.msra.mxu0 0
    %3640 = vmatprep.subr.bf16.mxu0 0
    %3641 = vmatpush1.bf16.msra.mxu0 0
    %3642 = vmatprep.mubr.bf16.mxu0 0
    %3643 = vmatmul.mubr.bf16.gmra.mrb[0].mxu0 %v3605
    %v3644 = vpop.f32.mrb[0].mxu0
    %v3645 = vadd.f32 0.0, %v3644
    %v3646 = vpop.f32.mrb[0].mxu0
    %v3647 = vpop.f32.mrb[0].mxu0
    %v3648 = vadd.f32 0.0, %v3647
    %v3649 = vpop.f32.mrb[0].mxu0
    %3650 = vmatprep.mubr.bf16.mxu0 0
    %3651 = vmatmul.mubr.bf16.gmra.mrb[0].mxu0 %v3608
    %v3652 = vpop.f32.mrb[0].mxu0
    %v3653 = vadd.f32 0.0, %v3652
    %v3654 = vpop.f32.mrb[0].mxu0
    %v3655 = vpop.f32.mrb[0].mxu0
    %v3656 = vadd.f32 0.0, %v3655
    %v3657 = vpop.f32.mrb[0].mxu0
    %3658 = vdwg.mxu0
    %3659 = vrot.lane.b32.xlu0 %v3303, 112
    %v3660 = vpop.permute.xlu0 %3659
    %3661 = vrot.lane.b32.xlu0 %v3304, 112
    %v3662 = vpop.permute.xlu0 %3661
    %3663 = vrot.lane.b32.xlu0 %v3305, 80
    %v3664 = vpop.permute.xlu0 %3663
    %3665 = vrot.lane.b32.xlu0 %v3306, 80
    %v3666 = vpop.permute.xlu0 %3665
    %v3668 = vsel %vm287, %v3660, 0
    %v3671 = vsel %vm287, %v3662, 0
    %v3674 = vsel %vm287, %v3664, 0
    %v3677 = vsel %vm287, %v3666, 0
    %3679 = vmatprep.subr.bf16.mxu0 0
    %3680 = vmatpush1.bf16.xpose.msra.mxu0 %v3674
    %3681 = vmatprep.subr.bf16.mxu0 0
    %3682 = vmatpush1.bf16.xpose.msra.mxu0 %v3677
    %3683 = vmatprep.subr.bf16.mxu0 0
    %3684 = vmatpush1.bf16.xpose.msra.mxu0 0
    %3685 = vmatprep.subr.bf16.mxu0 0
    %3686 = vmatpush1.bf16.xpose.msra.mxu0 0
    %3687 = vmatprep.subr.bf16.mxu0 0
    %3688 = vmatpush1.bf16.xpose.msra.mxu0 0
    %3689 = vmatprep.subr.bf16.mxu0 0
    %3690 = vmatpush1.bf16.xpose.msra.mxu0 0
    %3691 = vmatprep.subr.bf16.mxu0 0
    %3692 = vmatpush1.bf16.xpose.msra.mxu0 0
    %3693 = vmatprep.subr.bf16.mxu0 0
    %3694 = vmatpush1.bf16.xpose.msra.mxu0 0
    %3695 = vmatprep.subr.bf16.mxu0 0
    %3696 = vmatpush1.bf16.xpose.msra.mxu0 0
    %3697 = vmatprep.subr.bf16.mxu0 0
    %3698 = vmatpush1.bf16.xpose.msra.mxu0 0
    %3699 = vmatprep.subr.bf16.mxu0 0
    %3700 = vmatpush1.bf16.xpose.msra.mxu0 0
    %3701 = vmatprep.subr.bf16.mxu0 0
    %3702 = vmatpush1.bf16.xpose.msra.mxu0 0
    %3703 = vmatprep.subr.bf16.mxu0 0
    %3704 = vmatpush1.bf16.xpose.msra.mxu0 0
    %3705 = vmatprep.subr.bf16.mxu0 0
    %3706 = vmatpush1.bf16.xpose.msra.mxu0 0
    %3707 = vmatprep.subr.bf16.mxu0 0
    %3708 = vmatpush1.bf16.xpose.msra.mxu0 0
    %3709 = vmatprep.subr.bf16.mxu0 0
    %3710 = vmatpush1.bf16.xpose.msra.mxu0 0
    %3711 = vmatprep.mubr.bf16.mxu0 0
    %3712 = vmatmul.mubr.bf16.gmra.mrb[0].mxu0 %v3668
    %v3713 = vpop.f32.mrb[0].mxu0
    %v3714 = vadd.f32 %v3211, %v3713
    %v3715 = vpop.f32.mrb[0].mxu0
    %v3716 = vpop.f32.mrb[0].mxu0
    %v3717 = vadd.f32 %v3212, %v3716
    %v3718 = vpop.f32.mrb[0].mxu0
    %3719 = vmatprep.mubr.bf16.mxu0 0
    %3720 = vmatmul.mubr.bf16.gmra.mrb[0].mxu0 %v3671
    %v3721 = vpop.f32.mrb[0].mxu0
    %v3722 = vadd.f32 %v3213, %v3721
    %v3723 = vpop.f32.mrb[0].mxu0
    %v3724 = vpop.f32.mrb[0].mxu0
    %v3725 = vadd.f32 %v3214, %v3724
    %v3726 = vpop.f32.mrb[0].mxu0
    %3727 = vdwg.mxu0
    %v3728 = vsel %vm217, %v3714, -inf
    %3729 = vmax.xlane.f32.xlu0 %v3728
    %v3730 = vpop.xlane.xlu0 %3729
    %v3731 = vsel %vm217, %v3717, -inf
    %3732 = vmax.xlane.f32.xlu0 %v3731
    %v3733 = vpop.xlane.xlu0 %3732
    %v3734 = vsel %vm217, %v3722, -inf
    %3735 = vmax.xlane.f32.xlu0 %v3734
    %v3736 = vpop.xlane.xlu0 %3735
    %v3737 = vsel %vm217, %v3725, -inf
    %3738 = vmax.xlane.f32.xlu0 %v3737
    %v3739 = vpop.xlane.xlu0 %3738
    %v3740 = vsub.f32 %v3714, %v3730
    %v3741 = vsub.f32 %v3717, %v3733
    %v3742 = vsub.f32 %v3722, %v3736
    %v3743 = vsub.f32 %v3725, %v3739
    %v3744 = vmul.f32 %v3740, 1.442695
    %v3745 = vpow.pop %v3744
    %v3746 = vmul.f32 %v3741, 1.442695
    %v3747 = vpow.pop %v3746
    %v3748 = vmul.f32 %v3742, 1.442695
    %v3749 = vpow.pop %v3748
    %v3750 = vmul.f32 %v3743, 1.442695
    %v3751 = vpow.pop %v3750
    %v3752 = vsel %vm217, %v3745, 0.0
    %3753 = vadd.xlane.f32.xlu0 %v3752
    %v3754 = vpop.xlane.xlu0 %3753
    %v3755 = vsel %vm217, %v3747, 0.0
    %3756 = vadd.xlane.f32.xlu0 %v3755
    %v3757 = vpop.xlane.xlu0 %3756
    %v3758 = vsel %vm217, %v3749, 0.0
    %3759 = vadd.xlane.f32.xlu0 %v3758
    %v3760 = vpop.xlane.xlu0 %3759
    %v3761 = vsel %vm217, %v3751, 0.0
    %3762 = vadd.xlane.f32.xlu0 %v3761
    %v3763 = vpop.xlane.xlu0 %3762
    %v3764 = vrcp.pop %v3754
    %v3765 = vrcp.pop %v3757
    %v3766 = vrcp.pop %v3760
    %v3767 = vrcp.pop %v3763
    %v3768 = vmul.f32 %v3745, %v3764
    %v3769 = vmul.f32 %v3747, %v3765
    %v3770 = vmul.f32 %v3749, %v3766
    %v3771 = vmul.f32 %v3751, %v3767
    %v3772 = vpack.c.bf16 %v3769, %v3768
    %v3773 = vpack.c.bf16 %v3771, %v3770
    %3774 = vrot.lane.b32.xlu0 %v3305, 48
    %v3775 = vpop.permute.xlu0 %3774
    %3776 = vrot.lane.b32.xlu0 %v3306, 48
    %v3777 = vpop.permute.xlu0 %3776
    %v3781 = vsel %vm217, %v3772, 0
    %v3784 = vsel %vm217, %v3773, 0
    %3786 = vmatprep.subr.bf16.mxu0 0
    %3787 = vmatpush1.bf16.msra.mxu0 %v3775
    %3788 = vmatprep.subr.bf16.mxu0 0
    %3789 = vmatpush1.bf16.msra.mxu0 %v3777
    %3790 = vmatprep.subr.bf16.mxu0 0
    %3791 = vmatpush1.bf16.msra.mxu0 0
    %3792 = vmatprep.subr.bf16.mxu0 0
    %3793 = vmatpush1.bf16.msra.mxu0 0
    %3794 = vmatprep.subr.bf16.mxu0 0
    %3795 = vmatpush1.bf16.msra.mxu0 0
    %3796 = vmatprep.subr.bf16.mxu0 0
    %3797 = vmatpush1.bf16.msra.mxu0 0
    %3798 = vmatprep.subr.bf16.mxu0 0
    %3799 = vmatpush1.bf16.msra.mxu0 0
    %3800 = vmatprep.subr.bf16.mxu0 0
    %3801 = vmatpush1.bf16.msra.mxu0 0
    %3802 = vmatprep.subr.bf16.mxu0 0
    %3803 = vmatpush1.bf16.msra.mxu0 0
    %3804 = vmatprep.subr.bf16.mxu0 0
    %3805 = vmatpush1.bf16.msra.mxu0 0
    %3806 = vmatprep.subr.bf16.mxu0 0
    %3807 = vmatpush1.bf16.msra.mxu0 0
    %3808 = vmatprep.subr.bf16.mxu0 0
    %3809 = vmatpush1.bf16.msra.mxu0 0
    %3810 = vmatprep.subr.bf16.mxu0 0
    %3811 = vmatpush1.bf16.msra.mxu0 0
    %3812 = vmatprep.subr.bf16.mxu0 0
    %3813 = vmatpush1.bf16.msra.mxu0 0
    %3814 = vmatprep.subr.bf16.mxu0 0
    %3815 = vmatpush1.bf16.msra.mxu0 0
    %3816 = vmatprep.subr.bf16.mxu0 0
    %3817 = vmatpush1.bf16.msra.mxu0 0
    %3818 = vmatprep.mubr.bf16.mxu0 0
    %3819 = vmatmul.mubr.bf16.gmra.mrb[0].mxu0 %v3781
    %v3820 = vpop.f32.mrb[0].mxu0
    %v3821 = vadd.f32 0.0, %v3820
    %v3822 = vpop.f32.mrb[0].mxu0
    %v3823 = vpop.f32.mrb[0].mxu0
    %v3824 = vadd.f32 0.0, %v3823
    %v3825 = vpop.f32.mrb[0].mxu0
    %3826 = vmatprep.mubr.bf16.mxu0 0
    %3827 = vmatmul.mubr.bf16.gmra.mrb[0].mxu0 %v3784
    %v3828 = vpop.f32.mrb[0].mxu0
    %v3829 = vadd.f32 0.0, %v3828
    %v3830 = vpop.f32.mrb[0].mxu0
    %v3831 = vpop.f32.mrb[0].mxu0
    %v3832 = vadd.f32 0.0, %v3831
    %v3833 = vpop.f32.mrb[0].mxu0
    %3834 = vdwg.mxu0
    %3835 = vrot.lane.b32.xlu0 %v3303, 104
    %v3836 = vpop.permute.xlu0 %3835
    %3837 = vrot.lane.b32.xlu0 %v3304, 104
    %v3838 = vpop.permute.xlu0 %3837
    %3839 = vrot.lane.b32.xlu0 %v3305, 72
    %v3840 = vpop.permute.xlu0 %3839
    %3841 = vrot.lane.b32.xlu0 %v3306, 72
    %v3842 = vpop.permute.xlu0 %3841
    %v3844 = vsel %vm287, %v3836, 0
    %v3847 = vsel %vm287, %v3838, 0
    %v3850 = vsel %vm287, %v3840, 0
    %v3853 = vsel %vm287, %v3842, 0
    %3855 = vmatprep.subr.bf16.mxu0 0
    %3856 = vmatpush1.bf16.xpose.msra.mxu0 %v3850
    %3857 = vmatprep.subr.bf16.mxu0 0
    %3858 = vmatpush1.bf16.xpose.msra.mxu0 %v3853
    %3859 = vmatprep.subr.bf16.mxu0 0
    %3860 = vmatpush1.bf16.xpose.msra.mxu0 0
    %3861 = vmatprep.subr.bf16.mxu0 0
    %3862 = vmatpush1.bf16.xpose.msra.mxu0 0
    %3863 = vmatprep.subr.bf16.mxu0 0
    %3864 = vmatpush1.bf16.xpose.msra.mxu0 0
    %3865 = vmatprep.subr.bf16.mxu0 0
    %3866 = vmatpush1.bf16.xpose.msra.mxu0 0
    %3867 = vmatprep.subr.bf16.mxu0 0
    %3868 = vmatpush1.bf16.xpose.msra.mxu0 0
    %3869 = vmatprep.subr.bf16.mxu0 0
    %3870 = vmatpush1.bf16.xpose.msra.mxu0 0
    %3871 = vmatprep.subr.bf16.mxu0 0
    %3872 = vmatpush1.bf16.xpose.msra.mxu0 0
    %3873 = vmatprep.subr.bf16.mxu0 0
    %3874 = vmatpush1.bf16.xpose.msra.mxu0 0
    %3875 = vmatprep.subr.bf16.mxu0 0
    %3876 = vmatpush1.bf16.xpose.msra.mxu0 0
    %3877 = vmatprep.subr.bf16.mxu0 0
    %3878 = vmatpush1.bf16.xpose.msra.mxu0 0
    %3879 = vmatprep.subr.bf16.mxu0 0
    %3880 = vmatpush1.bf16.xpose.msra.mxu0 0
    %3881 = vmatprep.subr.bf16.mxu0 0
    %3882 = vmatpush1.bf16.xpose.msra.mxu0 0
    %3883 = vmatprep.subr.bf16.mxu0 0
    %3884 = vmatpush1.bf16.xpose.msra.mxu0 0
    %3885 = vmatprep.subr.bf16.mxu0 0
    %3886 = vmatpush1.bf16.xpose.msra.mxu0 0
    %3887 = vmatprep.mubr.bf16.mxu0 0
    %3888 = vmatmul.mubr.bf16.gmra.mrb[0].mxu0 %v3844
    %v3889 = vpop.f32.mrb[0].mxu0
    %v3890 = vadd.f32 %v3211, %v3889
    %v3891 = vpop.f32.mrb[0].mxu0
    %v3892 = vpop.f32.mrb[0].mxu0
    %v3893 = vadd.f32 %v3212, %v3892
    %v3894 = vpop.f32.mrb[0].mxu0
    %3895 = vmatprep.mubr.bf16.mxu0 0
    %3896 = vmatmul.mubr.bf16.gmra.mrb[0].mxu0 %v3847
    %v3897 = vpop.f32.mrb[0].mxu0
    %v3898 = vadd.f32 %v3213, %v3897
    %v3899 = vpop.f32.mrb[0].mxu0
    %v3900 = vpop.f32.mrb[0].mxu0
    %v3901 = vadd.f32 %v3214, %v3900
    %v3902 = vpop.f32.mrb[0].mxu0
    %3903 = vdwg.mxu0
    %v3904 = vsel %vm217, %v3890, -inf
    %3905 = vmax.xlane.f32.xlu0 %v3904
    %v3906 = vpop.xlane.xlu0 %3905
    %v3907 = vsel %vm217, %v3893, -inf
    %3908 = vmax.xlane.f32.xlu0 %v3907
    %v3909 = vpop.xlane.xlu0 %3908
    %v3910 = vsel %vm217, %v3898, -inf
    %3911 = vmax.xlane.f32.xlu0 %v3910
    %v3912 = vpop.xlane.xlu0 %3911
    %v3913 = vsel %vm217, %v3901, -inf
    %3914 = vmax.xlane.f32.xlu0 %v3913
    %v3915 = vpop.xlane.xlu0 %3914
    %v3916 = vsub.f32 %v3890, %v3906
    %v3917 = vsub.f32 %v3893, %v3909
    %v3918 = vsub.f32 %v3898, %v3912
    %v3919 = vsub.f32 %v3901, %v3915
    %v3920 = vmul.f32 %v3916, 1.442695
    %v3921 = vpow.pop %v3920
    %v3922 = vmul.f32 %v3917, 1.442695
    %v3923 = vpow.pop %v3922
    %v3924 = vmul.f32 %v3918, 1.442695
    %v3925 = vpow.pop %v3924
    %v3926 = vmul.f32 %v3919, 1.442695
    %v3927 = vpow.pop %v3926
    %v3928 = vsel %vm217, %v3921, 0.0
    %3929 = vadd.xlane.f32.xlu0 %v3928
    %v3930 = vpop.xlane.xlu0 %3929
    %v3931 = vsel %vm217, %v3923, 0.0
    %3932 = vadd.xlane.f32.xlu0 %v3931
    %v3933 = vpop.xlane.xlu0 %3932
    %v3934 = vsel %vm217, %v3925, 0.0
    %3935 = vadd.xlane.f32.xlu0 %v3934
    %v3936 = vpop.xlane.xlu0 %3935
    %v3937 = vsel %vm217, %v3927, 0.0
    %3938 = vadd.xlane.f32.xlu0 %v3937
    %v3939 = vpop.xlane.xlu0 %3938
    %v3940 = vrcp.pop %v3930
    %v3941 = vrcp.pop %v3933
    %v3942 = vrcp.pop %v3936
    %v3943 = vrcp.pop %v3939
    %v3944 = vmul.f32 %v3921, %v3940
    %v3945 = vmul.f32 %v3923, %v3941
    %v3946 = vmul.f32 %v3925, %v3942
    %v3947 = vmul.f32 %v3927, %v3943
    %v3948 = vpack.c.bf16 %v3945, %v3944
    %v3949 = vpack.c.bf16 %v3947, %v3946
    %3950 = vrot.lane.b32.xlu0 %v3305, 40
    %v3951 = vpop.permute.xlu0 %3950
    %3952 = vrot.lane.b32.xlu0 %v3306, 40
    %v3953 = vpop.permute.xlu0 %3952
    %v3957 = vsel %vm217, %v3948, 0
    %v3960 = vsel %vm217, %v3949, 0
    %3962 = vmatprep.subr.bf16.mxu0 0
    %3963 = vmatpush1.bf16.msra.mxu0 %v3951
    %3964 = vmatprep.subr.bf16.mxu0 0
    %3965 = vmatpush1.bf16.msra.mxu0 %v3953
    %3966 = vmatprep.subr.bf16.mxu0 0
    %3967 = vmatpush1.bf16.msra.mxu0 0
    %3968 = vmatprep.subr.bf16.mxu0 0
    %3969 = vmatpush1.bf16.msra.mxu0 0
    %3970 = vmatprep.subr.bf16.mxu0 0
    %3971 = vmatpush1.bf16.msra.mxu0 0
    %3972 = vmatprep.subr.bf16.mxu0 0
    %3973 = vmatpush1.bf16.msra.mxu0 0
    %3974 = vmatprep.subr.bf16.mxu0 0
    %3975 = vmatpush1.bf16.msra.mxu0 0
    %3976 = vmatprep.subr.bf16.mxu0 0
    %3977 = vmatpush1.bf16.msra.mxu0 0
    %3978 = vmatprep.subr.bf16.mxu0 0
    %3979 = vmatpush1.bf16.msra.mxu0 0
    %3980 = vmatprep.subr.bf16.mxu0 0
    %3981 = vmatpush1.bf16.msra.mxu0 0
    %3982 = vmatprep.subr.bf16.mxu0 0
    %3983 = vmatpush1.bf16.msra.mxu0 0
    %3984 = vmatprep.subr.bf16.mxu0 0
    %3985 = vmatpush1.bf16.msra.mxu0 0
    %3986 = vmatprep.subr.bf16.mxu0 0
    %3987 = vmatpush1.bf16.msra.mxu0 0
    %3988 = vmatprep.subr.bf16.mxu0 0
    %3989 = vmatpush1.bf16.msra.mxu0 0
    %3990 = vmatprep.subr.bf16.mxu0 0
    %3991 = vmatpush1.bf16.msra.mxu0 0
    %3992 = vmatprep.subr.bf16.mxu0 0
    %3993 = vmatpush1.bf16.msra.mxu0 0
    %3994 = vmatprep.mubr.bf16.mxu0 0
    %3995 = vmatmul.mubr.bf16.gmra.mrb[0].mxu0 %v3957
    %v3996 = vpop.f32.mrb[0].mxu0
    %v3997 = vadd.f32 0.0, %v3996
    %v3998 = vpop.f32.mrb[0].mxu0
    %v3999 = vpop.f32.mrb[0].mxu0
    %v4000 = vadd.f32 0.0, %v3999
    %v4001 = vpop.f32.mrb[0].mxu0
    %4002 = vmatprep.mubr.bf16.mxu0 0
    %4003 = vmatmul.mubr.bf16.gmra.mrb[0].mxu0 %v3960
    %v4004 = vpop.f32.mrb[0].mxu0
    %v4005 = vadd.f32 0.0, %v4004
    %v4006 = vpop.f32.mrb[0].mxu0
    %v4007 = vpop.f32.mrb[0].mxu0
    %v4008 = vadd.f32 0.0, %v4007
    %v4009 = vpop.f32.mrb[0].mxu0
    %4010 = vdwg.mxu0
    %4015 = vrot.lane.b32.xlu0 %v3645, 8
    %v4016 = vpop.permute.xlu0 %4015
    %4017 = vrot.lane.b32.xlu0 %v3648, 8
    %v4018 = vpop.permute.xlu0 %4017
    %4019 = vrot.lane.b32.xlu0 %v3653, 8
    %v4020 = vpop.permute.xlu0 %4019
    %4021 = vrot.lane.b32.xlu0 %v3656, 8
    %v4022 = vpop.permute.xlu0 %4021
    %4031 = vrot.lane.b32.xlu0 %v3821, 16
    %v4032 = vpop.permute.xlu0 %4031
    %4033 = vrot.lane.b32.xlu0 %v3824, 16
    %v4034 = vpop.permute.xlu0 %4033
    %4035 = vrot.lane.b32.xlu0 %v3829, 16
    %v4036 = vpop.permute.xlu0 %4035
    %4037 = vrot.lane.b32.xlu0 %v3832, 16
    %v4038 = vpop.permute.xlu0 %4037
    %4047 = vrot.lane.b32.xlu0 %v3997, 24
    %v4048 = vpop.permute.xlu0 %4047
    %4049 = vrot.lane.b32.xlu0 %v4000, 24
    %v4050 = vpop.permute.xlu0 %4049
    %4051 = vrot.lane.b32.xlu0 %v4005, 24
    %v4052 = vpop.permute.xlu0 %4051
    %4053 = vrot.lane.b32.xlu0 %v4008, 24
    %v4054 = vpop.permute.xlu0 %4053
    %v4059 = vsel %vm287, %v3467, %v4016
    %v4060 = vsel %vm287, %v3470, %v4018
    %v4061 = vsel %vm287, %v3475, %v4020
    %v4062 = vsel %vm287, %v3478, %v4022
    %v4063 = vsel %vm1049, %v4059, %v4032
    %v4064 = vsel %vm1049, %v4060, %v4034
    %v4065 = vsel %vm1049, %v4061, %v4036
    %v4066 = vsel %vm1049, %v4062, %v4038
    %v4067 = vsel %vm1054, %v4063, %v4048
    %v4068 = vsel %vm1054, %v4064, %v4050
    %v4069 = vsel %vm1054, %v4065, %v4052
    %v4070 = vsel %vm1054, %v4066, %v4054
    %v4071 = vld [vmem:[%s41] sm:$0xf]
    %v4072 = vld [vmem:[%s41 + $0x4] sm:$0xf]
    %v4073 = vld [vmem:[%s41 + $0x8] sm:$0xf]
    %v4074 = vld [vmem:[%s41 + $0xc] sm:$0xf]
    %v4075 = vpack.c.bf16 %v4068, %v4067
    %v4076 = vpack.c.bf16 %v4070, %v4069
    %v4077 = vld [vmem:[%s43] sm:$0x1]
    %v4079 = vlaneseq
    %v4080 = vshrl.u32 %v4079, 7
    %v4081 = vsub.s32 0, %v4080
    %v4082 = vrot.slane %v4077, %v4081
    %v4088 = vunpack.c.l.b16 %v4071
    %v4089 = vunpack.c.l.b16 %v4072
    %v4090 = vunpack.c.l.b16 %v4073
    %v4091 = vunpack.c.l.b16 %v4074
    %v4092 = vpack.c.b16 %v4089, %v4088
    %v4093 = vpack.c.b16 %v4091, %v4090
    %v4097 = vsel %vm217, %v4075, 0
    %v4100 = vsel %vm217, %v4076, 0
    %4102 = vmatprep.subr.bf16.mxu0 0
    %4103 = vmatpush1.bf16.msra.mxu0 %v4092
    %4104 = vmatprep.subr.bf16.mxu0 0
    %4105 = vmatpush1.bf16.msra.mxu0 %v4093
    %4106 = vmatprep.subr.bf16.mxu0 0
    %4107 = vmatpush1.bf16.msra.mxu0 0
    %4108 = vmatprep.subr.bf16.mxu0 0
    %4109 = vmatpush1.bf16.msra.mxu0 0
    %4110 = vmatprep.subr.bf16.mxu0 0
    %4111 = vmatpush1.bf16.msra.mxu0 0
    %4112 = vmatprep.subr.bf16.mxu0 0
    %4113 = vmatpush1.bf16.msra.mxu0 0
    %4114 = vmatprep.subr.bf16.mxu0 0
    %4115 = vmatpush1.bf16.msra.mxu0 0
    %4116 = vmatprep.subr.bf16.mxu0 0
    %4117 = vmatpush1.bf16.msra.mxu0 0
    %4118 = vmatprep.subr.bf16.mxu0 0
    %4119 = vmatpush1.bf16.msra.mxu0 0
    %4120 = vmatprep.subr.bf16.mxu0 0
    %4121 = vmatpush1.bf16.msra.mxu0 0
    %4122 = vmatprep.subr.bf16.mxu0 0
    %4123 = vmatpush1.bf16.msra.mxu0 0
    %4124 = vmatprep.subr.bf16.mxu0 0
    %4125 = vmatpush1.bf16.msra.mxu0 0
    %4126 = vmatprep.subr.bf16.mxu0 0
    %4127 = vmatpush1.bf16.msra.mxu0 0
    %4128 = vmatprep.subr.bf16.mxu0 0
    %4129 = vmatpush1.bf16.msra.mxu0 0
    %4130 = vmatprep.subr.bf16.mxu0 0
    %4131 = vmatpush1.bf16.msra.mxu0 0
    %4132 = vmatprep.subr.bf16.mxu0 0
    %4133 = vmatpush1.bf16.msra.mxu0 0
    %4134 = vmatprep.mubr.bf16.mxu0 0
    %4135 = vmatmul.mubr.bf16.gmra.mrb[0].mxu0 %v4097
    %v4136 = vpop.f32.mrb[0].mxu0
    %v4137 = vadd.f32 %v4082, %v4136
    %v4138 = vpop.f32.mrb[0].mxu0
    %v4139 = vpop.f32.mrb[0].mxu0
    %v4140 = vadd.f32 %v4082, %v4139
    %v4141 = vpop.f32.mrb[0].mxu0
    %4142 = vmatprep.mubr.bf16.mxu0 0
    %4143 = vmatmul.mubr.bf16.gmra.mrb[0].mxu0 %v4100
    %v4144 = vpop.f32.mrb[0].mxu0
    %v4145 = vadd.f32 %v4082, %v4144
    %v4146 = vpop.f32.mrb[0].mxu0
    %v4147 = vpop.f32.mrb[0].mxu0
    %v4148 = vadd.f32 %v4082, %v4147
    %v4149 = vpop.f32.mrb[0].mxu0
    %4150 = vdwg.mxu0
    %v4151 = vadd.f32 %v3207, %v4137
    %v4152 = vadd.f32 %v3208, %v4140
    %v4153 = vadd.f32 %v3209, %v4145
    %v4154 = vadd.f32 %v3210, %v4148
    %v4155 = vld [vmem:[%s57] sm:$0x1]
    %v4156 = vld [vmem:[%s59] sm:$0x1]
    %v4157 = vsel %vm217, %v4151, 0.0
    %4158 = vadd.xlane.f32.xlu0 %v4157
    %v4159 = vpop.xlane.xlu0 %4158
    %v4160 = vsel %vm217, %v4152, 0.0
    %4161 = vadd.xlane.f32.xlu0 %v4160
    %v4162 = vpop.xlane.xlu0 %4161
    %v4163 = vsel %vm217, %v4153, 0.0
    %4164 = vadd.xlane.f32.xlu0 %v4163
    %v4165 = vpop.xlane.xlu0 %4164
    %v4166 = vsel %vm217, %v4154, 0.0
    %4167 = vadd.xlane.f32.xlu0 %v4166
    %v4168 = vpop.xlane.xlu0 %4167
    %v4169 = vmul.f32 %v4159, %v1158
    %v4170 = vmul.f32 %v4162, %v1158
    %v4171 = vmul.f32 %v4165, %v1158
    %v4172 = vmul.f32 %v4168, %v1158
    %v4173 = vsub.f32 %v4151, %v4169
    %v4174 = vsub.f32 %v4152, %v4170
    %v4175 = vsub.f32 %v4153, %v4171
    %v4176 = vsub.f32 %v4154, %v4172
    %v4177 = vmul.f32 %v4173, %v4173
    %v4178 = vmul.f32 %v4174, %v4174
    %v4179 = vmul.f32 %v4175, %v4175
    %v4180 = vmul.f32 %v4176, %v4176
    %v4181 = vsel %vm217, %v4177, 0.0
    %4182 = vadd.xlane.f32.xlu0 %v4181
    %v4183 = vpop.xlane.xlu0 %4182
    %v4184 = vsel %vm217, %v4178, 0.0
    %4185 = vadd.xlane.f32.xlu0 %v4184
    %v4186 = vpop.xlane.xlu0 %4185
    %v4187 = vsel %vm217, %v4179, 0.0
    %4188 = vadd.xlane.f32.xlu0 %v4187
    %v4189 = vpop.xlane.xlu0 %4188
    %v4190 = vsel %vm217, %v4180, 0.0
    %4191 = vadd.xlane.f32.xlu0 %v4190
    %v4192 = vpop.xlane.xlu0 %4191
    %v4193 = vmul.f32 %v4183, %v1158
    %v4194 = vmul.f32 %v4186, %v1158
    %v4195 = vmul.f32 %v4189, %v1158
    %v4196 = vmul.f32 %v4192, %v1158
    %v4197 = vadd.f32 %v4193, 1e-05
    %v4198 = vadd.f32 %v4194, 1e-05
    %v4199 = vadd.f32 %v4195, 1e-05
    %v4200 = vadd.f32 %v4196, 1e-05
    %v4201 = vrsqrt.pop %v4197
    %v4202 = vrsqrt.pop %v4198
    %v4203 = vrsqrt.pop %v4199
    %v4204 = vrsqrt.pop %v4200
    %v4205 = vmul.f32 %v4173, %v4201
    %v4206 = vmul.f32 %v4174, %v4202
    %v4207 = vmul.f32 %v4175, %v4203
    %v4208 = vmul.f32 %v4176, %v4204
    %v4210 = vlaneseq
    %v4211 = vshrl.u32 %v4210, 7
    %v4212 = vsub.s32 0, %v4211
    %v4213 = vrot.slane %v4155, %v4212
    %v4215 = vmul.f32 %v4205, %v4213
    %v4216 = vmul.f32 %v4206, %v4213
    %v4217 = vmul.f32 %v4207, %v4213
    %v4218 = vmul.f32 %v4208, %v4213
    %v4220 = vlaneseq
    %v4221 = vshrl.u32 %v4220, 7
    %v4222 = vsub.s32 0, %v4221
    %v4223 = vrot.slane %v4156, %v4222
    %v4225 = vadd.f32 %v4215, %v4223
    %v4226 = vadd.f32 %v4216, %v4223
    %v4227 = vadd.f32 %v4217, %v4223
    %v4228 = vadd.f32 %v4218, %v4223
    %v4229 = vld [vmem:[%s45] sm:$0xf]
    %v4230 = vld [vmem:[%s45 + $0x4] sm:$0xf]
    %v4231 = vld [vmem:[%s45 + $0x8] sm:$0xf]
    %v4232 = vld [vmem:[%s45 + $0xc] sm:$0xf]
    %v4233 = vpack.c.bf16 %v4226, %v4225
    %v4234 = vpack.c.bf16 %v4228, %v4227
    %v4235 = vld [vmem:[%s47] sm:$0x1]
    %v4237 = vlaneseq
    %v4238 = vshrl.u32 %v4237, 7
    %v4239 = vsub.s32 0, %v4238
    %v4240 = vrot.slane %v4235, %v4239
    %v4246 = vunpack.c.l.b16 %v4229
    %v4247 = vunpack.c.l.b16 %v4230
    %v4248 = vunpack.c.l.b16 %v4231
    %v4249 = vunpack.c.l.b16 %v4232
    %v4250 = vpack.c.b16 %v4247, %v4246
    %v4251 = vpack.c.b16 %v4249, %v4248
    %v4255 = vsel %vm217, %v4233, 0
    %v4258 = vsel %vm217, %v4234, 0
    %4260 = vmatprep.subr.bf16.mxu0 0
    %4261 = vmatpush1.bf16.msra.mxu0 %v4250
    %4262 = vmatprep.subr.bf16.mxu0 0
    %4263 = vmatpush1.bf16.msra.mxu0 %v4251
    %4264 = vmatprep.subr.bf16.mxu0 0
    %4265 = vmatpush1.bf16.msra.mxu0 0
    %4266 = vmatprep.subr.bf16.mxu0 0
    %4267 = vmatpush1.bf16.msra.mxu0 0
    %4268 = vmatprep.subr.bf16.mxu0 0
    %4269 = vmatpush1.bf16.msra.mxu0 0
    %4270 = vmatprep.subr.bf16.mxu0 0
    %4271 = vmatpush1.bf16.msra.mxu0 0
    %4272 = vmatprep.subr.bf16.mxu0 0
    %4273 = vmatpush1.bf16.msra.mxu0 0
    %4274 = vmatprep.subr.bf16.mxu0 0
    %4275 = vmatpush1.bf16.msra.mxu0 0
    %4276 = vmatprep.subr.bf16.mxu0 0
    %4277 = vmatpush1.bf16.msra.mxu0 0
    %4278 = vmatprep.subr.bf16.mxu0 0
    %4279 = vmatpush1.bf16.msra.mxu0 0
    %4280 = vmatprep.subr.bf16.mxu0 0
    %4281 = vmatpush1.bf16.msra.mxu0 0
    %4282 = vmatprep.subr.bf16.mxu0 0
    %4283 = vmatpush1.bf16.msra.mxu0 0
    %4284 = vmatprep.subr.bf16.mxu0 0
    %4285 = vmatpush1.bf16.msra.mxu0 0
    %4286 = vmatprep.subr.bf16.mxu0 0
    %4287 = vmatpush1.bf16.msra.mxu0 0
    %4288 = vmatprep.subr.bf16.mxu0 0
    %4289 = vmatpush1.bf16.msra.mxu0 0
    %4290 = vmatprep.subr.bf16.mxu0 0
    %4291 = vmatpush1.bf16.msra.mxu0 0
    %4292 = vmatprep.mubr.bf16.mxu0 0
    %4293 = vmatmul.mubr.bf16.gmra.mrb[0].mxu0 %v4255
    %v4294 = vpop.f32.mrb[0].mxu0
    %v4295 = vadd.f32 %v4240, %v4294
    %v4296 = vpop.f32.mrb[0].mxu0
    %v4297 = vpop.f32.mrb[0].mxu0
    %v4298 = vadd.f32 %v4240, %v4297
    %v4299 = vpop.f32.mrb[0].mxu0
    %4300 = vmatprep.mubr.bf16.mxu0 0
    %4301 = vmatmul.mubr.bf16.gmra.mrb[0].mxu0 %v4258
    %v4302 = vpop.f32.mrb[0].mxu0
    %v4303 = vadd.f32 %v4240, %v4302
    %v4304 = vpop.f32.mrb[0].mxu0
    %v4305 = vpop.f32.mrb[0].mxu0
    %v4306 = vadd.f32 %v4240, %v4305
    %v4307 = vpop.f32.mrb[0].mxu0
    %4308 = vdwg.mxu0
    %v4309 = vld [vmem:[%s49] sm:$0xf]
    %v4310 = vld [vmem:[%s49 + $0x4] sm:$0xf]
    %v4311 = vld [vmem:[%s49 + $0x8] sm:$0xf]
    %v4312 = vld [vmem:[%s49 + $0xc] sm:$0xf]
    %v4313 = vpack.c.bf16 %v3131, %v3126
    %v4314 = vpack.c.bf16 %v3141, %v3136
    %v4315 = vld [vmem:[%s51] sm:$0x1]
    %v4317 = vlaneseq
    %v4318 = vshrl.u32 %v4317, 7
    %v4319 = vsub.s32 0, %v4318
    %v4320 = vrot.slane %v4315, %v4319
    %v4326 = vunpack.c.l.b16 %v4309
    %v4327 = vunpack.c.l.b16 %v4310
    %v4328 = vunpack.c.l.b16 %v4311
    %v4329 = vunpack.c.l.b16 %v4312
    %v4330 = vpack.c.b16 %v4327, %v4326
    %v4331 = vpack.c.b16 %v4329, %v4328
    %v4335 = vsel %vm217, %v4313, 0
    %v4338 = vsel %vm217, %v4314, 0
    %4340 = vmatprep.subr.bf16.mxu0 0
    %4341 = vmatpush1.bf16.msra.mxu0 %v4330
    %4342 = vmatprep.subr.bf16.mxu0 0
    %4343 = vmatpush1.bf16.msra.mxu0 %v4331
    %4344 = vmatprep.subr.bf16.mxu0 0
    %4345 = vmatpush1.bf16.msra.mxu0 0
    %4346 = vmatprep.subr.bf16.mxu0 0
    %4347 = vmatpush1.bf16.msra.mxu0 0
    %4348 = vmatprep.subr.bf16.mxu0 0
    %4349 = vmatpush1.bf16.msra.mxu0 0
    %4350 = vmatprep.subr.bf16.mxu0 0
    %4351 = vmatpush1.bf16.msra.mxu0 0
    %4352 = vmatprep.subr.bf16.mxu0 0
    %4353 = vmatpush1.bf16.msra.mxu0 0
    %4354 = vmatprep.subr.bf16.mxu0 0
    %4355 = vmatpush1.bf16.msra.mxu0 0
    %4356 = vmatprep.subr.bf16.mxu0 0
    %4357 = vmatpush1.bf16.msra.mxu0 0
    %4358 = vmatprep.subr.bf16.mxu0 0
    %4359 = vmatpush1.bf16.msra.mxu0 0
    %4360 = vmatprep.subr.bf16.mxu0 0
    %4361 = vmatpush1.bf16.msra.mxu0 0
    %4362 = vmatprep.subr.bf16.mxu0 0
    %4363 = vmatpush1.bf16.msra.mxu0 0
    %4364 = vmatprep.subr.bf16.mxu0 0
    %4365 = vmatpush1.bf16.msra.mxu0 0
    %4366 = vmatprep.subr.bf16.mxu0 0
    %4367 = vmatpush1.bf16.msra.mxu0 0
    %4368 = vmatprep.subr.bf16.mxu0 0
    %4369 = vmatpush1.bf16.msra.mxu0 0
    %4370 = vmatprep.subr.bf16.mxu0 0
    %4371 = vmatpush1.bf16.msra.mxu0 0
    %4372 = vmatprep.mubr.bf16.mxu0 0
    %4373 = vmatmul.mubr.bf16.gmra.mrb[0].mxu0 %v4335
    %v4374 = vpop.f32.mrb[0].mxu0
    %v4375 = vadd.f32 %v4320, %v4374
    %v4376 = vpop.f32.mrb[0].mxu0
    %v4377 = vpop.f32.mrb[0].mxu0
    %v4378 = vadd.f32 %v4320, %v4377
    %v4379 = vpop.f32.mrb[0].mxu0
    %4380 = vmatprep.mubr.bf16.mxu0 0
    %4381 = vmatmul.mubr.bf16.gmra.mrb[0].mxu0 %v4338
    %v4382 = vpop.f32.mrb[0].mxu0
    %v4383 = vadd.f32 %v4320, %v4382
    %v4384 = vpop.f32.mrb[0].mxu0
    %v4385 = vpop.f32.mrb[0].mxu0
    %v4386 = vadd.f32 %v4320, %v4385
    %v4387 = vpop.f32.mrb[0].mxu0
    %4388 = vdwg.mxu0
    %v4389 = vmul.f32 %v4295, 0.35355338
    %v4390 = vmul.f32 %v4298, 0.35355338
    %v4391 = vmul.f32 %v4303, 0.35355338
    %v4392 = vmul.f32 %v4306, 0.35355338
    %v4393 = vpack.c.bf16 %v4390, %v4389
    %v4394 = vpack.c.bf16 %v4392, %v4391
    %v4395 = vpack.c.bf16 %v4378, %v4375
    %v4396 = vpack.c.bf16 %v4386, %v4383
    %v4398 = vsel %vm287, %v4393, 0
    %v4401 = vsel %vm287, %v4394, 0
    %v4404 = vsel %vm287, %v4395, 0
    %v4407 = vsel %vm287, %v4396, 0
    %4409 = vmatprep.subr.bf16.mxu0 0
    %4410 = vmatpush1.bf16.xpose.msra.mxu0 %v4404
    %4411 = vmatprep.subr.bf16.mxu0 0
    %4412 = vmatpush1.bf16.xpose.msra.mxu0 %v4407
    %4413 = vmatprep.subr.bf16.mxu0 0
    %4414 = vmatpush1.bf16.xpose.msra.mxu0 0
    %4415 = vmatprep.subr.bf16.mxu0 0
    %4416 = vmatpush1.bf16.xpose.msra.mxu0 0
    %4417 = vmatprep.subr.bf16.mxu0 0
    %4418 = vmatpush1.bf16.xpose.msra.mxu0 0
    %4419 = vmatprep.subr.bf16.mxu0 0
    %4420 = vmatpush1.bf16.xpose.msra.mxu0 0
    %4421 = vmatprep.subr.bf16.mxu0 0
    %4422 = vmatpush1.bf16.xpose.msra.mxu0 0
    %4423 = vmatprep.subr.bf16.mxu0 0
    %4424 = vmatpush1.bf16.xpose.msra.mxu0 0
    %4425 = vmatprep.subr.bf16.mxu0 0
    %4426 = vmatpush1.bf16.xpose.msra.mxu0 0
    %4427 = vmatprep.subr.bf16.mxu0 0
    %4428 = vmatpush1.bf16.xpose.msra.mxu0 0
    %4429 = vmatprep.subr.bf16.mxu0 0
    %4430 = vmatpush1.bf16.xpose.msra.mxu0 0
    %4431 = vmatprep.subr.bf16.mxu0 0
    %4432 = vmatpush1.bf16.xpose.msra.mxu0 0
    %4433 = vmatprep.subr.bf16.mxu0 0
    %4434 = vmatpush1.bf16.xpose.msra.mxu0 0
    %4435 = vmatprep.subr.bf16.mxu0 0
    %4436 = vmatpush1.bf16.xpose.msra.mxu0 0
    %4437 = vmatprep.subr.bf16.mxu0 0
    %4438 = vmatpush1.bf16.xpose.msra.mxu0 0
    %4439 = vmatprep.subr.bf16.mxu0 0
    %4440 = vmatpush1.bf16.xpose.msra.mxu0 0
    %4441 = vmatprep.mubr.bf16.mxu0 0
    %4442 = vmatmul.mubr.bf16.gmra.mrb[0].mxu0 %v4398
    %v4443 = vpop.f32.mrb[0].mxu0
    %v4444 = vadd.f32 %v3215, %v4443
    %v4445 = vpop.f32.mrb[0].mxu0
    %v4446 = vpop.f32.mrb[0].mxu0
    %v4447 = vadd.f32 %v3216, %v4446
    %v4448 = vpop.f32.mrb[0].mxu0
    %4449 = vmatprep.mubr.bf16.mxu0 0
    %4450 = vmatmul.mubr.bf16.gmra.mrb[0].mxu0 %v4401
    %v4451 = vpop.f32.mrb[0].mxu0
    %v4452 = vadd.f32 %v3217, %v4451
    %v4453 = vpop.f32.mrb[0].mxu0
    %v4454 = vpop.f32.mrb[0].mxu0
    %v4455 = vadd.f32 %v3218, %v4454
    %v4456 = vpop.f32.mrb[0].mxu0
    %4457 = vdwg.mxu0
    %v4458 = vsel %vm349, %v4444, -inf
    %4459 = vmax.xlane.f32.xlu0 %v4458
    %v4460 = vpop.xlane.xlu0 %4459
    %v4461 = vsel %vm349, %v4447, -inf
    %4462 = vmax.xlane.f32.xlu0 %v4461
    %v4463 = vpop.xlane.xlu0 %4462
    %v4464 = vsel %vm349, %v4452, -inf
    %4465 = vmax.xlane.f32.xlu0 %v4464
    %v4466 = vpop.xlane.xlu0 %4465
    %v4467 = vsel %vm349, %v4455, -inf
    %4468 = vmax.xlane.f32.xlu0 %v4467
    %v4469 = vpop.xlane.xlu0 %4468
    %v4470 = vsub.f32 %v4444, %v4460
    %v4471 = vsub.f32 %v4447, %v4463
    %v4472 = vsub.f32 %v4452, %v4466
    %v4473 = vsub.f32 %v4455, %v4469
    %v4474 = vmul.f32 %v4470, 1.442695
    %v4475 = vpow.pop %v4474
    %v4476 = vmul.f32 %v4471, 1.442695
    %v4477 = vpow.pop %v4476
    %v4478 = vmul.f32 %v4472, 1.442695
    %v4479 = vpow.pop %v4478
    %v4480 = vmul.f32 %v4473, 1.442695
    %v4481 = vpow.pop %v4480
    %v4482 = vsel %vm349, %v4475, 0.0
    %4483 = vadd.xlane.f32.xlu0 %v4482
    %v4484 = vpop.xlane.xlu0 %4483
    %v4485 = vsel %vm349, %v4477, 0.0
    %4486 = vadd.xlane.f32.xlu0 %v4485
    %v4487 = vpop.xlane.xlu0 %4486
    %v4488 = vsel %vm349, %v4479, 0.0
    %4489 = vadd.xlane.f32.xlu0 %v4488
    %v4490 = vpop.xlane.xlu0 %4489
    %v4491 = vsel %vm349, %v4481, 0.0
    %4492 = vadd.xlane.f32.xlu0 %v4491
    %v4493 = vpop.xlane.xlu0 %4492
    %v4494 = vrcp.pop %v4484
    %v4495 = vrcp.pop %v4487
    %v4496 = vrcp.pop %v4490
    %v4497 = vrcp.pop %v4493
    %v4498 = vmul.f32 %v4475, %v4494
    %v4499 = vmul.f32 %v4477, %v4495
    %v4500 = vmul.f32 %v4479, %v4496
    %v4501 = vmul.f32 %v4481, %v4497
    %v4502 = vpack.c.bf16 %v4499, %v4498
    %v4503 = vpack.c.bf16 %v4501, %v4500
    %4506 = vrot.lane.b32.xlu0 %v4395, 96
    %v4507 = vpop.permute.xlu0 %4506
    %4508 = vrot.lane.b32.xlu0 %v4396, 96
    %v4509 = vpop.permute.xlu0 %4508
    %v4512 = vsel %vm349, %v4502, 0
    %v4515 = vsel %vm349, %v4503, 0
    %v4518 = vsel %vm408, %v4509, 0
    %4520 = vmatprep.subr.bf16.mxu0 0
    %4521 = vmatpush1.bf16.msra.mxu0 %v4507
    %4522 = vmatprep.subr.bf16.mxu0 0
    %4523 = vmatpush1.bf16.msra.mxu0 %v4518
    %4524 = vmatprep.subr.bf16.mxu0 0
    %4525 = vmatpush1.bf16.msra.mxu0 0
    %4526 = vmatprep.subr.bf16.mxu0 0
    %4527 = vmatpush1.bf16.msra.mxu0 0
    %4528 = vmatprep.subr.bf16.mxu0 0
    %4529 = vmatpush1.bf16.msra.mxu0 0
    %4530 = vmatprep.subr.bf16.mxu0 0
    %4531 = vmatpush1.bf16.msra.mxu0 0
    %4532 = vmatprep.subr.bf16.mxu0 0
    %4533 = vmatpush1.bf16.msra.mxu0 0
    %4534 = vmatprep.subr.bf16.mxu0 0
    %4535 = vmatpush1.bf16.msra.mxu0 0
    %4536 = vmatprep.subr.bf16.mxu0 0
    %4537 = vmatpush1.bf16.msra.mxu0 0
    %4538 = vmatprep.subr.bf16.mxu0 0
    %4539 = vmatpush1.bf16.msra.mxu0 0
    %4540 = vmatprep.subr.bf16.mxu0 0
    %4541 = vmatpush1.bf16.msra.mxu0 0
    %4542 = vmatprep.subr.bf16.mxu0 0
    %4543 = vmatpush1.bf16.msra.mxu0 0
    %4544 = vmatprep.subr.bf16.mxu0 0
    %4545 = vmatpush1.bf16.msra.mxu0 0
    %4546 = vmatprep.subr.bf16.mxu0 0
    %4547 = vmatpush1.bf16.msra.mxu0 0
    %4548 = vmatprep.subr.bf16.mxu0 0
    %4549 = vmatpush1.bf16.msra.mxu0 0
    %4550 = vmatprep.subr.bf16.mxu0 0
    %4551 = vmatpush1.bf16.msra.mxu0 0
    %4552 = vmatprep.mubr.bf16.mxu0 0
    %4553 = vmatmul.mubr.bf16.gmra.mrb[0].mxu0 %v4512
    %v4554 = vpop.f32.mrb[0].mxu0
    %v4555 = vadd.f32 0.0, %v4554
    %v4556 = vpop.f32.mrb[0].mxu0
    %v4557 = vpop.f32.mrb[0].mxu0
    %v4558 = vadd.f32 0.0, %v4557
    %v4559 = vpop.f32.mrb[0].mxu0
    %4560 = vmatprep.mubr.bf16.mxu0 0
    %4561 = vmatmul.mubr.bf16.gmra.mrb[0].mxu0 %v4515
    %v4562 = vpop.f32.mrb[0].mxu0
    %v4563 = vadd.f32 0.0, %v4562
    %v4564 = vpop.f32.mrb[0].mxu0
    %v4565 = vpop.f32.mrb[0].mxu0
    %v4566 = vadd.f32 0.0, %v4565
    %v4567 = vpop.f32.mrb[0].mxu0
    %4568 = vdwg.mxu0
    %4571 = vrot.lane.b32.xlu0 %v4393, 120
    %v4572 = vpop.permute.xlu0 %4571
    %4573 = vrot.lane.b32.xlu0 %v4394, 120
    %v4574 = vpop.permute.xlu0 %4573
    %4575 = vrot.lane.b32.xlu0 %v4395, 120
    %v4576 = vpop.permute.xlu0 %4575
    %4577 = vrot.lane.b32.xlu0 %v4396, 120
    %v4578 = vpop.permute.xlu0 %4577
    %v4580 = vsel %vm287, %v4572, 0
    %v4583 = vsel %vm287, %v4574, 0
    %v4586 = vsel %vm287, %v4576, 0
    %v4589 = vsel %vm287, %v4578, 0
    %4591 = vmatprep.subr.bf16.mxu0 0
    %4592 = vmatpush1.bf16.xpose.msra.mxu0 %v4586
    %4593 = vmatprep.subr.bf16.mxu0 0
    %4594 = vmatpush1.bf16.xpose.msra.mxu0 %v4589
    %4595 = vmatprep.subr.bf16.mxu0 0
    %4596 = vmatpush1.bf16.xpose.msra.mxu0 0
    %4597 = vmatprep.subr.bf16.mxu0 0
    %4598 = vmatpush1.bf16.xpose.msra.mxu0 0
    %4599 = vmatprep.subr.bf16.mxu0 0
    %4600 = vmatpush1.bf16.xpose.msra.mxu0 0
    %4601 = vmatprep.subr.bf16.mxu0 0
    %4602 = vmatpush1.bf16.xpose.msra.mxu0 0
    %4603 = vmatprep.subr.bf16.mxu0 0
    %4604 = vmatpush1.bf16.xpose.msra.mxu0 0
    %4605 = vmatprep.subr.bf16.mxu0 0
    %4606 = vmatpush1.bf16.xpose.msra.mxu0 0
    %4607 = vmatprep.subr.bf16.mxu0 0
    %4608 = vmatpush1.bf16.xpose.msra.mxu0 0
    %4609 = vmatprep.subr.bf16.mxu0 0
    %4610 = vmatpush1.bf16.xpose.msra.mxu0 0
    %4611 = vmatprep.subr.bf16.mxu0 0
    %4612 = vmatpush1.bf16.xpose.msra.mxu0 0
    %4613 = vmatprep.subr.bf16.mxu0 0
    %4614 = vmatpush1.bf16.xpose.msra.mxu0 0
    %4615 = vmatprep.subr.bf16.mxu0 0
    %4616 = vmatpush1.bf16.xpose.msra.mxu0 0
    %4617 = vmatprep.subr.bf16.mxu0 0
    %4618 = vmatpush1.bf16.xpose.msra.mxu0 0
    %4619 = vmatprep.subr.bf16.mxu0 0
    %4620 = vmatpush1.bf16.xpose.msra.mxu0 0
    %4621 = vmatprep.subr.bf16.mxu0 0
    %4622 = vmatpush1.bf16.xpose.msra.mxu0 0
    %4623 = vmatprep.mubr.bf16.mxu0 0
    %4624 = vmatmul.mubr.bf16.gmra.mrb[0].mxu0 %v4580
    %v4625 = vpop.f32.mrb[0].mxu0
    %v4626 = vadd.f32 %v3215, %v4625
    %v4627 = vpop.f32.mrb[0].mxu0
    %v4628 = vpop.f32.mrb[0].mxu0
    %v4629 = vadd.f32 %v3216, %v4628
    %v4630 = vpop.f32.mrb[0].mxu0
    %4631 = vmatprep.mubr.bf16.mxu0 0
    %4632 = vmatmul.mubr.bf16.gmra.mrb[0].mxu0 %v4583
    %v4633 = vpop.f32.mrb[0].mxu0
    %v4634 = vadd.f32 %v3217, %v4633
    %v4635 = vpop.f32.mrb[0].mxu0
    %v4636 = vpop.f32.mrb[0].mxu0
    %v4637 = vadd.f32 %v3218, %v4636
    %v4638 = vpop.f32.mrb[0].mxu0
    %4639 = vdwg.mxu0
    %v4640 = vsel %vm349, %v4626, -inf
    %4641 = vmax.xlane.f32.xlu0 %v4640
    %v4642 = vpop.xlane.xlu0 %4641
    %v4643 = vsel %vm349, %v4629, -inf
    %4644 = vmax.xlane.f32.xlu0 %v4643
    %v4645 = vpop.xlane.xlu0 %4644
    %v4646 = vsel %vm349, %v4634, -inf
    %4647 = vmax.xlane.f32.xlu0 %v4646
    %v4648 = vpop.xlane.xlu0 %4647
    %v4649 = vsel %vm349, %v4637, -inf
    %4650 = vmax.xlane.f32.xlu0 %v4649
    %v4651 = vpop.xlane.xlu0 %4650
    %v4652 = vsub.f32 %v4626, %v4642
    %v4653 = vsub.f32 %v4629, %v4645
    %v4654 = vsub.f32 %v4634, %v4648
    %v4655 = vsub.f32 %v4637, %v4651
    %v4656 = vmul.f32 %v4652, 1.442695
    %v4657 = vpow.pop %v4656
    %v4658 = vmul.f32 %v4653, 1.442695
    %v4659 = vpow.pop %v4658
    %v4660 = vmul.f32 %v4654, 1.442695
    %v4661 = vpow.pop %v4660
    %v4662 = vmul.f32 %v4655, 1.442695
    %v4663 = vpow.pop %v4662
    %v4664 = vsel %vm349, %v4657, 0.0
    %4665 = vadd.xlane.f32.xlu0 %v4664
    %v4666 = vpop.xlane.xlu0 %4665
    %v4667 = vsel %vm349, %v4659, 0.0
    %4668 = vadd.xlane.f32.xlu0 %v4667
    %v4669 = vpop.xlane.xlu0 %4668
    %v4670 = vsel %vm349, %v4661, 0.0
    %4671 = vadd.xlane.f32.xlu0 %v4670
    %v4672 = vpop.xlane.xlu0 %4671
    %v4673 = vsel %vm349, %v4663, 0.0
    %4674 = vadd.xlane.f32.xlu0 %v4673
    %v4675 = vpop.xlane.xlu0 %4674
    %v4676 = vrcp.pop %v4666
    %v4677 = vrcp.pop %v4669
    %v4678 = vrcp.pop %v4672
    %v4679 = vrcp.pop %v4675
    %v4680 = vmul.f32 %v4657, %v4676
    %v4681 = vmul.f32 %v4659, %v4677
    %v4682 = vmul.f32 %v4661, %v4678
    %v4683 = vmul.f32 %v4663, %v4679
    %v4684 = vpack.c.bf16 %v4681, %v4680
    %v4685 = vpack.c.bf16 %v4683, %v4682
    %4686 = vrot.lane.b32.xlu0 %v4395, 88
    %v4687 = vpop.permute.xlu0 %4686
    %4688 = vrot.lane.b32.xlu0 %v4396, 88
    %v4689 = vpop.permute.xlu0 %4688
    %v4692 = vsel %vm349, %v4684, 0
    %v4695 = vsel %vm349, %v4685, 0
    %v4698 = vsel %vm408, %v4689, 0
    %4700 = vmatprep.subr.bf16.mxu0 0
    %4701 = vmatpush1.bf16.msra.mxu0 %v4687
    %4702 = vmatprep.subr.bf16.mxu0 0
    %4703 = vmatpush1.bf16.msra.mxu0 %v4698
    %4704 = vmatprep.subr.bf16.mxu0 0
    %4705 = vmatpush1.bf16.msra.mxu0 0
    %4706 = vmatprep.subr.bf16.mxu0 0
    %4707 = vmatpush1.bf16.msra.mxu0 0
    %4708 = vmatprep.subr.bf16.mxu0 0
    %4709 = vmatpush1.bf16.msra.mxu0 0
    %4710 = vmatprep.subr.bf16.mxu0 0
    %4711 = vmatpush1.bf16.msra.mxu0 0
    %4712 = vmatprep.subr.bf16.mxu0 0
    %4713 = vmatpush1.bf16.msra.mxu0 0
    %4714 = vmatprep.subr.bf16.mxu0 0
    %4715 = vmatpush1.bf16.msra.mxu0 0
    %4716 = vmatprep.subr.bf16.mxu0 0
    %4717 = vmatpush1.bf16.msra.mxu0 0
    %4718 = vmatprep.subr.bf16.mxu0 0
    %4719 = vmatpush1.bf16.msra.mxu0 0
    %4720 = vmatprep.subr.bf16.mxu0 0
    %4721 = vmatpush1.bf16.msra.mxu0 0
    %4722 = vmatprep.subr.bf16.mxu0 0
    %4723 = vmatpush1.bf16.msra.mxu0 0
    %4724 = vmatprep.subr.bf16.mxu0 0
    %4725 = vmatpush1.bf16.msra.mxu0 0
    %4726 = vmatprep.subr.bf16.mxu0 0
    %4727 = vmatpush1.bf16.msra.mxu0 0
    %4728 = vmatprep.subr.bf16.mxu0 0
    %4729 = vmatpush1.bf16.msra.mxu0 0
    %4730 = vmatprep.subr.bf16.mxu0 0
    %4731 = vmatpush1.bf16.msra.mxu0 0
    %4732 = vmatprep.mubr.bf16.mxu0 0
    %4733 = vmatmul.mubr.bf16.gmra.mrb[0].mxu0 %v4692
    %v4734 = vpop.f32.mrb[0].mxu0
    %v4735 = vadd.f32 0.0, %v4734
    %v4736 = vpop.f32.mrb[0].mxu0
    %v4737 = vpop.f32.mrb[0].mxu0
    %v4738 = vadd.f32 0.0, %v4737
    %v4739 = vpop.f32.mrb[0].mxu0
    %4740 = vmatprep.mubr.bf16.mxu0 0
    %4741 = vmatmul.mubr.bf16.gmra.mrb[0].mxu0 %v4695
    %v4742 = vpop.f32.mrb[0].mxu0
    %v4743 = vadd.f32 0.0, %v4742
    %v4744 = vpop.f32.mrb[0].mxu0
    %v4745 = vpop.f32.mrb[0].mxu0
    %v4746 = vadd.f32 0.0, %v4745
    %v4747 = vpop.f32.mrb[0].mxu0
    %4748 = vdwg.mxu0
    %4749 = vrot.lane.b32.xlu0 %v4393, 112
    %v4750 = vpop.permute.xlu0 %4749
    %4751 = vrot.lane.b32.xlu0 %v4394, 112
    %v4752 = vpop.permute.xlu0 %4751
    %4753 = vrot.lane.b32.xlu0 %v4395, 112
    %v4754 = vpop.permute.xlu0 %4753
    %4755 = vrot.lane.b32.xlu0 %v4396, 112
    %v4756 = vpop.permute.xlu0 %4755
    %v4758 = vsel %vm287, %v4750, 0
    %v4761 = vsel %vm287, %v4752, 0
    %v4764 = vsel %vm287, %v4754, 0
    %v4767 = vsel %vm287, %v4756, 0
    %4769 = vmatprep.subr.bf16.mxu0 0
    %4770 = vmatpush1.bf16.xpose.msra.mxu0 %v4764
    %4771 = vmatprep.subr.bf16.mxu0 0
    %4772 = vmatpush1.bf16.xpose.msra.mxu0 %v4767
    %4773 = vmatprep.subr.bf16.mxu0 0
    %4774 = vmatpush1.bf16.xpose.msra.mxu0 0
    %4775 = vmatprep.subr.bf16.mxu0 0
    %4776 = vmatpush1.bf16.xpose.msra.mxu0 0
    %4777 = vmatprep.subr.bf16.mxu0 0
    %4778 = vmatpush1.bf16.xpose.msra.mxu0 0
    %4779 = vmatprep.subr.bf16.mxu0 0
    %4780 = vmatpush1.bf16.xpose.msra.mxu0 0
    %4781 = vmatprep.subr.bf16.mxu0 0
    %4782 = vmatpush1.bf16.xpose.msra.mxu0 0
    %4783 = vmatprep.subr.bf16.mxu0 0
    %4784 = vmatpush1.bf16.xpose.msra.mxu0 0
    %4785 = vmatprep.subr.bf16.mxu0 0
    %4786 = vmatpush1.bf16.xpose.msra.mxu0 0
    %4787 = vmatprep.subr.bf16.mxu0 0
    %4788 = vmatpush1.bf16.xpose.msra.mxu0 0
    %4789 = vmatprep.subr.bf16.mxu0 0
    %4790 = vmatpush1.bf16.xpose.msra.mxu0 0
    %4791 = vmatprep.subr.bf16.mxu0 0
    %4792 = vmatpush1.bf16.xpose.msra.mxu0 0
    %4793 = vmatprep.subr.bf16.mxu0 0
    %4794 = vmatpush1.bf16.xpose.msra.mxu0 0
    %4795 = vmatprep.subr.bf16.mxu0 0
    %4796 = vmatpush1.bf16.xpose.msra.mxu0 0
    %4797 = vmatprep.subr.bf16.mxu0 0
    %4798 = vmatpush1.bf16.xpose.msra.mxu0 0
    %4799 = vmatprep.subr.bf16.mxu0 0
    %4800 = vmatpush1.bf16.xpose.msra.mxu0 0
    %4801 = vmatprep.mubr.bf16.mxu0 0
    %4802 = vmatmul.mubr.bf16.gmra.mrb[0].mxu0 %v4758
    %v4803 = vpop.f32.mrb[0].mxu0
    %v4804 = vadd.f32 %v3215, %v4803
    %v4805 = vpop.f32.mrb[0].mxu0
    %v4806 = vpop.f32.mrb[0].mxu0
    %v4807 = vadd.f32 %v3216, %v4806
    %v4808 = vpop.f32.mrb[0].mxu0
    %4809 = vmatprep.mubr.bf16.mxu0 0
    %4810 = vmatmul.mubr.bf16.gmra.mrb[0].mxu0 %v4761
    %v4811 = vpop.f32.mrb[0].mxu0
    %v4812 = vadd.f32 %v3217, %v4811
    %v4813 = vpop.f32.mrb[0].mxu0
    %v4814 = vpop.f32.mrb[0].mxu0
    %v4815 = vadd.f32 %v3218, %v4814
    %v4816 = vpop.f32.mrb[0].mxu0
    %4817 = vdwg.mxu0
    %v4818 = vsel %vm349, %v4804, -inf
    %4819 = vmax.xlane.f32.xlu0 %v4818
    %v4820 = vpop.xlane.xlu0 %4819
    %v4821 = vsel %vm349, %v4807, -inf
    %4822 = vmax.xlane.f32.xlu0 %v4821
    %v4823 = vpop.xlane.xlu0 %4822
    %v4824 = vsel %vm349, %v4812, -inf
    %4825 = vmax.xlane.f32.xlu0 %v4824
    %v4826 = vpop.xlane.xlu0 %4825
    %v4827 = vsel %vm349, %v4815, -inf
    %4828 = vmax.xlane.f32.xlu0 %v4827
    %v4829 = vpop.xlane.xlu0 %4828
    %v4830 = vsub.f32 %v4804, %v4820
    %v4831 = vsub.f32 %v4807, %v4823
    %v4832 = vsub.f32 %v4812, %v4826
    %v4833 = vsub.f32 %v4815, %v4829
    %v4834 = vmul.f32 %v4830, 1.442695
    %v4835 = vpow.pop %v4834
    %v4836 = vmul.f32 %v4831, 1.442695
    %v4837 = vpow.pop %v4836
    %v4838 = vmul.f32 %v4832, 1.442695
    %v4839 = vpow.pop %v4838
    %v4840 = vmul.f32 %v4833, 1.442695
    %v4841 = vpow.pop %v4840
    %v4842 = vsel %vm349, %v4835, 0.0
    %4843 = vadd.xlane.f32.xlu0 %v4842
    %v4844 = vpop.xlane.xlu0 %4843
    %v4845 = vsel %vm349, %v4837, 0.0
    %4846 = vadd.xlane.f32.xlu0 %v4845
    %v4847 = vpop.xlane.xlu0 %4846
    %v4848 = vsel %vm349, %v4839, 0.0
    %4849 = vadd.xlane.f32.xlu0 %v4848
    %v4850 = vpop.xlane.xlu0 %4849
    %v4851 = vsel %vm349, %v4841, 0.0
    %4852 = vadd.xlane.f32.xlu0 %v4851
    %v4853 = vpop.xlane.xlu0 %4852
    %v4854 = vrcp.pop %v4844
    %v4855 = vrcp.pop %v4847
    %v4856 = vrcp.pop %v4850
    %v4857 = vrcp.pop %v4853
    %v4858 = vmul.f32 %v4835, %v4854
    %v4859 = vmul.f32 %v4837, %v4855
    %v4860 = vmul.f32 %v4839, %v4856
    %v4861 = vmul.f32 %v4841, %v4857
    %v4862 = vpack.c.bf16 %v4859, %v4858
    %v4863 = vpack.c.bf16 %v4861, %v4860
    %4864 = vrot.lane.b32.xlu0 %v4395, 80
    %v4865 = vpop.permute.xlu0 %4864
    %4866 = vrot.lane.b32.xlu0 %v4396, 80
    %v4867 = vpop.permute.xlu0 %4866
    %v4870 = vsel %vm349, %v4862, 0
    %v4873 = vsel %vm349, %v4863, 0
    %v4876 = vsel %vm408, %v4867, 0
    %4878 = vmatprep.subr.bf16.mxu0 0
    %4879 = vmatpush1.bf16.msra.mxu0 %v4865
    %4880 = vmatprep.subr.bf16.mxu0 0
    %4881 = vmatpush1.bf16.msra.mxu0 %v4876
    %4882 = vmatprep.subr.bf16.mxu0 0
    %4883 = vmatpush1.bf16.msra.mxu0 0
    %4884 = vmatprep.subr.bf16.mxu0 0
    %4885 = vmatpush1.bf16.msra.mxu0 0
    %4886 = vmatprep.subr.bf16.mxu0 0
    %4887 = vmatpush1.bf16.msra.mxu0 0
    %4888 = vmatprep.subr.bf16.mxu0 0
    %4889 = vmatpush1.bf16.msra.mxu0 0
    %4890 = vmatprep.subr.bf16.mxu0 0
    %4891 = vmatpush1.bf16.msra.mxu0 0
    %4892 = vmatprep.subr.bf16.mxu0 0
    %4893 = vmatpush1.bf16.msra.mxu0 0
    %4894 = vmatprep.subr.bf16.mxu0 0
    %4895 = vmatpush1.bf16.msra.mxu0 0
    %4896 = vmatprep.subr.bf16.mxu0 0
    %4897 = vmatpush1.bf16.msra.mxu0 0
    %4898 = vmatprep.subr.bf16.mxu0 0
    %4899 = vmatpush1.bf16.msra.mxu0 0
    %4900 = vmatprep.subr.bf16.mxu0 0
    %4901 = vmatpush1.bf16.msra.mxu0 0
    %4902 = vmatprep.subr.bf16.mxu0 0
    %4903 = vmatpush1.bf16.msra.mxu0 0
    %4904 = vmatprep.subr.bf16.mxu0 0
    %4905 = vmatpush1.bf16.msra.mxu0 0
    %4906 = vmatprep.subr.bf16.mxu0 0
    %4907 = vmatpush1.bf16.msra.mxu0 0
    %4908 = vmatprep.subr.bf16.mxu0 0
    %4909 = vmatpush1.bf16.msra.mxu0 0
    %4910 = vmatprep.mubr.bf16.mxu0 0
    %4911 = vmatmul.mubr.bf16.gmra.mrb[0].mxu0 %v4870
    %v4912 = vpop.f32.mrb[0].mxu0
    %v4913 = vadd.f32 0.0, %v4912
    %v4914 = vpop.f32.mrb[0].mxu0
    %v4915 = vpop.f32.mrb[0].mxu0
    %v4916 = vadd.f32 0.0, %v4915
    %v4917 = vpop.f32.mrb[0].mxu0
    %4918 = vmatprep.mubr.bf16.mxu0 0
    %4919 = vmatmul.mubr.bf16.gmra.mrb[0].mxu0 %v4873
    %v4920 = vpop.f32.mrb[0].mxu0
    %v4921 = vadd.f32 0.0, %v4920
    %v4922 = vpop.f32.mrb[0].mxu0
    %v4923 = vpop.f32.mrb[0].mxu0
    %v4924 = vadd.f32 0.0, %v4923
    %v4925 = vpop.f32.mrb[0].mxu0
    %4926 = vdwg.mxu0
    %4927 = vrot.lane.b32.xlu0 %v4393, 104
    %v4928 = vpop.permute.xlu0 %4927
    %4929 = vrot.lane.b32.xlu0 %v4394, 104
    %v4930 = vpop.permute.xlu0 %4929
    %4931 = vrot.lane.b32.xlu0 %v4395, 104
    %v4932 = vpop.permute.xlu0 %4931
    %4933 = vrot.lane.b32.xlu0 %v4396, 104
    %v4934 = vpop.permute.xlu0 %4933
    %v4936 = vsel %vm287, %v4928, 0
    %v4939 = vsel %vm287, %v4930, 0
    %v4942 = vsel %vm287, %v4932, 0
    %v4945 = vsel %vm287, %v4934, 0
    %4947 = vmatprep.subr.bf16.mxu0 0
    %4948 = vmatpush1.bf16.xpose.msra.mxu0 %v4942
    %4949 = vmatprep.subr.bf16.mxu0 0
    %4950 = vmatpush1.bf16.xpose.msra.mxu0 %v4945
    %4951 = vmatprep.subr.bf16.mxu0 0
    %4952 = vmatpush1.bf16.xpose.msra.mxu0 0
    %4953 = vmatprep.subr.bf16.mxu0 0
    %4954 = vmatpush1.bf16.xpose.msra.mxu0 0
    %4955 = vmatprep.subr.bf16.mxu0 0
    %4956 = vmatpush1.bf16.xpose.msra.mxu0 0
    %4957 = vmatprep.subr.bf16.mxu0 0
    %4958 = vmatpush1.bf16.xpose.msra.mxu0 0
    %4959 = vmatprep.subr.bf16.mxu0 0
    %4960 = vmatpush1.bf16.xpose.msra.mxu0 0
    %4961 = vmatprep.subr.bf16.mxu0 0
    %4962 = vmatpush1.bf16.xpose.msra.mxu0 0
    %4963 = vmatprep.subr.bf16.mxu0 0
    %4964 = vmatpush1.bf16.xpose.msra.mxu0 0
    %4965 = vmatprep.subr.bf16.mxu0 0
    %4966 = vmatpush1.bf16.xpose.msra.mxu0 0
    %4967 = vmatprep.subr.bf16.mxu0 0
    %4968 = vmatpush1.bf16.xpose.msra.mxu0 0
    %4969 = vmatprep.subr.bf16.mxu0 0
    %4970 = vmatpush1.bf16.xpose.msra.mxu0 0
    %4971 = vmatprep.subr.bf16.mxu0 0
    %4972 = vmatpush1.bf16.xpose.msra.mxu0 0
    %4973 = vmatprep.subr.bf16.mxu0 0
    %4974 = vmatpush1.bf16.xpose.msra.mxu0 0
    %4975 = vmatprep.subr.bf16.mxu0 0
    %4976 = vmatpush1.bf16.xpose.msra.mxu0 0
    %4977 = vmatprep.subr.bf16.mxu0 0
    %4978 = vmatpush1.bf16.xpose.msra.mxu0 0
    %4979 = vmatprep.mubr.bf16.mxu0 0
    %4980 = vmatmul.mubr.bf16.gmra.mrb[0].mxu0 %v4936
    %v4981 = vpop.f32.mrb[0].mxu0
    %v4982 = vadd.f32 %v3215, %v4981
    %v4983 = vpop.f32.mrb[0].mxu0
    %v4984 = vpop.f32.mrb[0].mxu0
    %v4985 = vadd.f32 %v3216, %v4984
    %v4986 = vpop.f32.mrb[0].mxu0
    %4987 = vmatprep.mubr.bf16.mxu0 0
    %4988 = vmatmul.mubr.bf16.gmra.mrb[0].mxu0 %v4939
    %v4989 = vpop.f32.mrb[0].mxu0
    %v4990 = vadd.f32 %v3217, %v4989
    %v4991 = vpop.f32.mrb[0].mxu0
    %v4992 = vpop.f32.mrb[0].mxu0
    %v4993 = vadd.f32 %v3218, %v4992
    %v4994 = vpop.f32.mrb[0].mxu0
    %4995 = vdwg.mxu0
    %v4996 = vsel %vm349, %v4982, -inf
    %4997 = vmax.xlane.f32.xlu0 %v4996
    %v4998 = vpop.xlane.xlu0 %4997
    %v4999 = vsel %vm349, %v4985, -inf
    %5000 = vmax.xlane.f32.xlu0 %v4999
    %v5001 = vpop.xlane.xlu0 %5000
    %v5002 = vsel %vm349, %v4990, -inf
    %5003 = vmax.xlane.f32.xlu0 %v5002
    %v5004 = vpop.xlane.xlu0 %5003
    %v5005 = vsel %vm349, %v4993, -inf
    %5006 = vmax.xlane.f32.xlu0 %v5005
    %v5007 = vpop.xlane.xlu0 %5006
    %v5008 = vsub.f32 %v4982, %v4998
    %v5009 = vsub.f32 %v4985, %v5001
    %v5010 = vsub.f32 %v4990, %v5004
    %v5011 = vsub.f32 %v4993, %v5007
    %v5012 = vmul.f32 %v5008, 1.442695
    %v5013 = vpow.pop %v5012
    %v5014 = vmul.f32 %v5009, 1.442695
    %v5015 = vpow.pop %v5014
    %v5016 = vmul.f32 %v5010, 1.442695
    %v5017 = vpow.pop %v5016
    %v5018 = vmul.f32 %v5011, 1.442695
    %v5019 = vpow.pop %v5018
    %v5020 = vsel %vm349, %v5013, 0.0
    %5021 = vadd.xlane.f32.xlu0 %v5020
    %v5022 = vpop.xlane.xlu0 %5021
    %v5023 = vsel %vm349, %v5015, 0.0
    %5024 = vadd.xlane.f32.xlu0 %v5023
    %v5025 = vpop.xlane.xlu0 %5024
    %v5026 = vsel %vm349, %v5017, 0.0
    %5027 = vadd.xlane.f32.xlu0 %v5026
    %v5028 = vpop.xlane.xlu0 %5027
    %v5029 = vsel %vm349, %v5019, 0.0
    %5030 = vadd.xlane.f32.xlu0 %v5029
    %v5031 = vpop.xlane.xlu0 %5030
    %v5032 = vrcp.pop %v5022
    %v5033 = vrcp.pop %v5025
    %v5034 = vrcp.pop %v5028
    %v5035 = vrcp.pop %v5031
    %v5036 = vmul.f32 %v5013, %v5032
    %v5037 = vmul.f32 %v5015, %v5033
    %v5038 = vmul.f32 %v5017, %v5034
    %v5039 = vmul.f32 %v5019, %v5035
    %v5040 = vpack.c.bf16 %v5037, %v5036
    %v5041 = vpack.c.bf16 %v5039, %v5038
    %5042 = vrot.lane.b32.xlu0 %v4395, 72
    %v5043 = vpop.permute.xlu0 %5042
    %5044 = vrot.lane.b32.xlu0 %v4396, 72
    %v5045 = vpop.permute.xlu0 %5044
    %v5048 = vsel %vm349, %v5040, 0
    %v5051 = vsel %vm349, %v5041, 0
    %v5054 = vsel %vm408, %v5045, 0
    %5056 = vmatprep.subr.bf16.mxu0 0
    %5057 = vmatpush1.bf16.msra.mxu0 %v5043
    %5058 = vmatprep.subr.bf16.mxu0 0
    %5059 = vmatpush1.bf16.msra.mxu0 %v5054
    %5060 = vmatprep.subr.bf16.mxu0 0
    %5061 = vmatpush1.bf16.msra.mxu0 0
    %5062 = vmatprep.subr.bf16.mxu0 0
    %5063 = vmatpush1.bf16.msra.mxu0 0
    %5064 = vmatprep.subr.bf16.mxu0 0
    %5065 = vmatpush1.bf16.msra.mxu0 0
    %5066 = vmatprep.subr.bf16.mxu0 0
    %5067 = vmatpush1.bf16.msra.mxu0 0
    %5068 = vmatprep.subr.bf16.mxu0 0
    %5069 = vmatpush1.bf16.msra.mxu0 0
    %5070 = vmatprep.subr.bf16.mxu0 0
    %5071 = vmatpush1.bf16.msra.mxu0 0
    %5072 = vmatprep.subr.bf16.mxu0 0
    %5073 = vmatpush1.bf16.msra.mxu0 0
    %5074 = vmatprep.subr.bf16.mxu0 0
    %5075 = vmatpush1.bf16.msra.mxu0 0
    %5076 = vmatprep.subr.bf16.mxu0 0
    %5077 = vmatpush1.bf16.msra.mxu0 0
    %5078 = vmatprep.subr.bf16.mxu0 0
    %5079 = vmatpush1.bf16.msra.mxu0 0
    %5080 = vmatprep.subr.bf16.mxu0 0
    %5081 = vmatpush1.bf16.msra.mxu0 0
    %5082 = vmatprep.subr.bf16.mxu0 0
    %5083 = vmatpush1.bf16.msra.mxu0 0
    %5084 = vmatprep.subr.bf16.mxu0 0
    %5085 = vmatpush1.bf16.msra.mxu0 0
    %5086 = vmatprep.subr.bf16.mxu0 0
    %5087 = vmatpush1.bf16.msra.mxu0 0
    %5088 = vmatprep.mubr.bf16.mxu0 0
    %5089 = vmatmul.mubr.bf16.gmra.mrb[0].mxu0 %v5048
    %v5090 = vpop.f32.mrb[0].mxu0
    %v5091 = vadd.f32 0.0, %v5090
    %v5092 = vpop.f32.mrb[0].mxu0
    %v5093 = vpop.f32.mrb[0].mxu0
    %v5094 = vadd.f32 0.0, %v5093
    %v5095 = vpop.f32.mrb[0].mxu0
    %5096 = vmatprep.mubr.bf16.mxu0 0
    %5097 = vmatmul.mubr.bf16.gmra.mrb[0].mxu0 %v5051
    %v5098 = vpop.f32.mrb[0].mxu0
    %v5099 = vadd.f32 0.0, %v5098
    %v5100 = vpop.f32.mrb[0].mxu0
    %v5101 = vpop.f32.mrb[0].mxu0
    %v5102 = vadd.f32 0.0, %v5101
    %v5103 = vpop.f32.mrb[0].mxu0
    %5104 = vdwg.mxu0
    %5109 = vrot.lane.b32.xlu0 %v4735, 8
    %v5110 = vpop.permute.xlu0 %5109
    %5111 = vrot.lane.b32.xlu0 %v4738, 8
    %v5112 = vpop.permute.xlu0 %5111
    %5113 = vrot.lane.b32.xlu0 %v4743, 8
    %v5114 = vpop.permute.xlu0 %5113
    %5115 = vrot.lane.b32.xlu0 %v4746, 8
    %v5116 = vpop.permute.xlu0 %5115
    %5125 = vrot.lane.b32.xlu0 %v4913, 16
    %v5126 = vpop.permute.xlu0 %5125
    %5127 = vrot.lane.b32.xlu0 %v4916, 16
    %v5128 = vpop.permute.xlu0 %5127
    %5129 = vrot.lane.b32.xlu0 %v4921, 16
    %v5130 = vpop.permute.xlu0 %5129
    %5131 = vrot.lane.b32.xlu0 %v4924, 16
    %v5132 = vpop.permute.xlu0 %5131
    %5141 = vrot.lane.b32.xlu0 %v5091, 24
    %v5142 = vpop.permute.xlu0 %5141
    %5143 = vrot.lane.b32.xlu0 %v5094, 24
    %v5144 = vpop.permute.xlu0 %5143
    %5145 = vrot.lane.b32.xlu0 %v5099, 24
    %v5146 = vpop.permute.xlu0 %5145
    %5147 = vrot.lane.b32.xlu0 %v5102, 24
    %v5148 = vpop.permute.xlu0 %5147
    %v5153 = vsel %vm287, %v4555, %v5110
    %v5154 = vsel %vm287, %v4558, %v5112
    %v5155 = vsel %vm287, %v4563, %v5114
    %v5156 = vsel %vm287, %v4566, %v5116
    %v5157 = vsel %vm1049, %v5153, %v5126
    %v5158 = vsel %vm1049, %v5154, %v5128
    %v5159 = vsel %vm1049, %v5155, %v5130
    %v5160 = vsel %vm1049, %v5156, %v5132
    %v5161 = vsel %vm1054, %v5157, %v5142
    %v5162 = vsel %vm1054, %v5158, %v5144
    %v5163 = vsel %vm1054, %v5159, %v5146
    %v5164 = vsel %vm1054, %v5160, %v5148
    %v5165 = vld [vmem:[%s53] sm:$0xf]
    %v5166 = vld [vmem:[%s53 + $0x4] sm:$0xf]
    %v5167 = vld [vmem:[%s53 + $0x8] sm:$0xf]
    %v5168 = vld [vmem:[%s53 + $0xc] sm:$0xf]
    %v5169 = vpack.c.bf16 %v5162, %v5161
    %v5170 = vpack.c.bf16 %v5164, %v5163
    %v5171 = vld [vmem:[%s55] sm:$0x1]
    %v5173 = vlaneseq
    %v5174 = vshrl.u32 %v5173, 7
    %v5175 = vsub.s32 0, %v5174
    %v5176 = vrot.slane %v5171, %v5175
    %v5182 = vunpack.c.l.b16 %v5165
    %v5183 = vunpack.c.l.b16 %v5166
    %v5184 = vunpack.c.l.b16 %v5167
    %v5185 = vunpack.c.l.b16 %v5168
    %v5186 = vpack.c.b16 %v5183, %v5182
    %v5187 = vpack.c.b16 %v5185, %v5184
    %v5191 = vsel %vm217, %v5169, 0
    %v5194 = vsel %vm217, %v5170, 0
    %5196 = vmatprep.subr.bf16.mxu0 0
    %5197 = vmatpush1.bf16.msra.mxu0 %v5186
    %5198 = vmatprep.subr.bf16.mxu0 0
    %5199 = vmatpush1.bf16.msra.mxu0 %v5187
    %5200 = vmatprep.subr.bf16.mxu0 0
    %5201 = vmatpush1.bf16.msra.mxu0 0
    %5202 = vmatprep.subr.bf16.mxu0 0
    %5203 = vmatpush1.bf16.msra.mxu0 0
    %5204 = vmatprep.subr.bf16.mxu0 0
    %5205 = vmatpush1.bf16.msra.mxu0 0
    %5206 = vmatprep.subr.bf16.mxu0 0
    %5207 = vmatpush1.bf16.msra.mxu0 0
    %5208 = vmatprep.subr.bf16.mxu0 0
    %5209 = vmatpush1.bf16.msra.mxu0 0
    %5210 = vmatprep.subr.bf16.mxu0 0
    %5211 = vmatpush1.bf16.msra.mxu0 0
    %5212 = vmatprep.subr.bf16.mxu0 0
    %5213 = vmatpush1.bf16.msra.mxu0 0
    %5214 = vmatprep.subr.bf16.mxu0 0
    %5215 = vmatpush1.bf16.msra.mxu0 0
    %5216 = vmatprep.subr.bf16.mxu0 0
    %5217 = vmatpush1.bf16.msra.mxu0 0
    %5218 = vmatprep.subr.bf16.mxu0 0
    %5219 = vmatpush1.bf16.msra.mxu0 0
    %5220 = vmatprep.subr.bf16.mxu0 0
    %5221 = vmatpush1.bf16.msra.mxu0 0
    %5222 = vmatprep.subr.bf16.mxu0 0
    %5223 = vmatpush1.bf16.msra.mxu0 0
    %5224 = vmatprep.subr.bf16.mxu0 0
    %5225 = vmatpush1.bf16.msra.mxu0 0
    %5226 = vmatprep.subr.bf16.mxu0 0
    %5227 = vmatpush1.bf16.msra.mxu0 0
    %5228 = vmatprep.mubr.bf16.mxu0 0
    %5229 = vmatmul.mubr.bf16.gmra.mrb[0].mxu0 %v5191
    %v5230 = vpop.f32.mrb[0].mxu0
    %v5231 = vadd.f32 %v5176, %v5230
    %v5232 = vpop.f32.mrb[0].mxu0
    %v5233 = vpop.f32.mrb[0].mxu0
    %v5234 = vadd.f32 %v5176, %v5233
    %v5235 = vpop.f32.mrb[0].mxu0
    %5236 = vmatprep.mubr.bf16.mxu0 0
    %5237 = vmatmul.mubr.bf16.gmra.mrb[0].mxu0 %v5194
    %v5238 = vpop.f32.mrb[0].mxu0
    %v5239 = vadd.f32 %v5176, %v5238
    %v5240 = vpop.f32.mrb[0].mxu0
    %v5241 = vpop.f32.mrb[0].mxu0
    %v5242 = vadd.f32 %v5176, %v5241
    %v5243 = vpop.f32.mrb[0].mxu0
    %5244 = vdwg.mxu0
    %v5245 = vadd.f32 %v4225, %v5231
    %v5246 = vadd.f32 %v4226, %v5234
    %v5247 = vadd.f32 %v4227, %v5239
    %v5248 = vadd.f32 %v4228, %v5242
    %v5249 = vld [vmem:[%s61] sm:$0x1]
    %v5250 = vld [vmem:[%s63] sm:$0x1]
    %v5251 = vsel %vm217, %v5245, 0.0
    %5252 = vadd.xlane.f32.xlu0 %v5251
    %v5253 = vpop.xlane.xlu0 %5252
    %v5254 = vsel %vm217, %v5246, 0.0
    %5255 = vadd.xlane.f32.xlu0 %v5254
    %v5256 = vpop.xlane.xlu0 %5255
    %v5257 = vsel %vm217, %v5247, 0.0
    %5258 = vadd.xlane.f32.xlu0 %v5257
    %v5259 = vpop.xlane.xlu0 %5258
    %v5260 = vsel %vm217, %v5248, 0.0
    %5261 = vadd.xlane.f32.xlu0 %v5260
    %v5262 = vpop.xlane.xlu0 %5261
    %v5263 = vmul.f32 %v5253, %v1158
    %v5264 = vmul.f32 %v5256, %v1158
    %v5265 = vmul.f32 %v5259, %v1158
    %v5266 = vmul.f32 %v5262, %v1158
    %v5267 = vsub.f32 %v5245, %v5263
    %v5268 = vsub.f32 %v5246, %v5264
    %v5269 = vsub.f32 %v5247, %v5265
    %v5270 = vsub.f32 %v5248, %v5266
    %v5271 = vmul.f32 %v5267, %v5267
    %v5272 = vmul.f32 %v5268, %v5268
    %v5273 = vmul.f32 %v5269, %v5269
    %v5274 = vmul.f32 %v5270, %v5270
    %v5275 = vsel %vm217, %v5271, 0.0
    %5276 = vadd.xlane.f32.xlu0 %v5275
    %v5277 = vpop.xlane.xlu0 %5276
    %v5278 = vsel %vm217, %v5272, 0.0
    %5279 = vadd.xlane.f32.xlu0 %v5278
    %v5280 = vpop.xlane.xlu0 %5279
    %v5281 = vsel %vm217, %v5273, 0.0
    %5282 = vadd.xlane.f32.xlu0 %v5281
    %v5283 = vpop.xlane.xlu0 %5282
    %v5284 = vsel %vm217, %v5274, 0.0
    %5285 = vadd.xlane.f32.xlu0 %v5284
    %v5286 = vpop.xlane.xlu0 %5285
    %v5287 = vmul.f32 %v5277, %v1158
    %v5288 = vmul.f32 %v5280, %v1158
    %v5289 = vmul.f32 %v5283, %v1158
    %v5290 = vmul.f32 %v5286, %v1158
    %v5291 = vadd.f32 %v5287, 1e-05
    %v5292 = vadd.f32 %v5288, 1e-05
    %v5293 = vadd.f32 %v5289, 1e-05
    %v5294 = vadd.f32 %v5290, 1e-05
    %v5295 = vrsqrt.pop %v5291
    %v5296 = vrsqrt.pop %v5292
    %v5297 = vrsqrt.pop %v5293
    %v5298 = vrsqrt.pop %v5294
    %v5299 = vmul.f32 %v5267, %v5295
    %v5300 = vmul.f32 %v5268, %v5296
    %v5301 = vmul.f32 %v5269, %v5297
    %v5302 = vmul.f32 %v5270, %v5298
    %v5304 = vlaneseq
    %v5305 = vshrl.u32 %v5304, 7
    %v5306 = vsub.s32 0, %v5305
    %v5307 = vrot.slane %v5249, %v5306
    %v5309 = vmul.f32 %v5299, %v5307
    %v5310 = vmul.f32 %v5300, %v5307
    %v5311 = vmul.f32 %v5301, %v5307
    %v5312 = vmul.f32 %v5302, %v5307
    %v5314 = vlaneseq
    %v5315 = vshrl.u32 %v5314, 7
    %v5316 = vsub.s32 0, %v5315
    %v5317 = vrot.slane %v5250, %v5316
    %v5319 = vadd.f32 %v5309, %v5317
    %v5320 = vadd.f32 %v5310, %v5317
    %v5321 = vadd.f32 %v5311, %v5317
    %v5322 = vadd.f32 %v5312, %v5317
    %v5323 = vld [vmem:[%s69] sm:$0xf]
    %v5324 = vld [vmem:[%s69 + $0x4] sm:$0xf]
    %v5325 = vld [vmem:[%s69 + $0x8] sm:$0xf]
    %v5326 = vld [vmem:[%s69 + $0xc] sm:$0xf]
    %v5327 = vpack.c.bf16 %v5320, %v5319
    %v5328 = vpack.c.bf16 %v5322, %v5321
    %v5329 = vld [vmem:[%s71] sm:$0x1]
    %v5331 = vlaneseq
    %v5332 = vshrl.u32 %v5331, 7
    %v5333 = vsub.s32 0, %v5332
    %v5334 = vrot.slane %v5329, %v5333
    %v5340 = vunpack.c.l.b16 %v5323
    %v5341 = vunpack.c.l.b16 %v5324
    %v5342 = vunpack.c.l.b16 %v5325
    %v5343 = vunpack.c.l.b16 %v5326
    %v5344 = vpack.c.b16 %v5341, %v5340
    %v5345 = vpack.c.b16 %v5343, %v5342
    %v5349 = vsel %vm217, %v5327, 0
    %v5352 = vsel %vm217, %v5328, 0
    %5354 = vmatprep.subr.bf16.mxu0 0
    %5355 = vmatpush1.bf16.msra.mxu0 %v5344
    %5356 = vmatprep.subr.bf16.mxu0 0
    %5357 = vmatpush1.bf16.msra.mxu0 %v5345
    %5358 = vmatprep.subr.bf16.mxu0 0
    %5359 = vmatpush1.bf16.msra.mxu0 0
    %5360 = vmatprep.subr.bf16.mxu0 0
    %5361 = vmatpush1.bf16.msra.mxu0 0
    %5362 = vmatprep.subr.bf16.mxu0 0
    %5363 = vmatpush1.bf16.msra.mxu0 0
    %5364 = vmatprep.subr.bf16.mxu0 0
    %5365 = vmatpush1.bf16.msra.mxu0 0
    %5366 = vmatprep.subr.bf16.mxu0 0
    %5367 = vmatpush1.bf16.msra.mxu0 0
    %5368 = vmatprep.subr.bf16.mxu0 0
    %5369 = vmatpush1.bf16.msra.mxu0 0
    %5370 = vmatprep.subr.bf16.mxu0 0
    %5371 = vmatpush1.bf16.msra.mxu0 0
    %5372 = vmatprep.subr.bf16.mxu0 0
    %5373 = vmatpush1.bf16.msra.mxu0 0
    %5374 = vmatprep.subr.bf16.mxu0 0
    %5375 = vmatpush1.bf16.msra.mxu0 0
    %5376 = vmatprep.subr.bf16.mxu0 0
    %5377 = vmatpush1.bf16.msra.mxu0 0
    %5378 = vmatprep.subr.bf16.mxu0 0
    %5379 = vmatpush1.bf16.msra.mxu0 0
    %5380 = vmatprep.subr.bf16.mxu0 0
    %5381 = vmatpush1.bf16.msra.mxu0 0
    %5382 = vmatprep.subr.bf16.mxu0 0
    %5383 = vmatpush1.bf16.msra.mxu0 0
    %5384 = vmatprep.subr.bf16.mxu0 0
    %5385 = vmatpush1.bf16.msra.mxu0 0
    %5386 = vmatprep.mubr.bf16.mxu0 0
    %5387 = vmatmul.mubr.bf16.gmra.mrb[0].mxu0 %v5349
    %v5388 = vpop.f32.mrb[0].mxu0
    %v5389 = vadd.f32 %v5334, %v5388
    %v5390 = vpop.f32.mrb[0].mxu0
    %v5391 = vpop.f32.mrb[0].mxu0
    %v5392 = vadd.f32 %v5334, %v5391
    %v5393 = vpop.f32.mrb[0].mxu0
    %5394 = vmatprep.mubr.bf16.mxu0 0
    %5395 = vmatmul.mubr.bf16.gmra.mrb[0].mxu0 %v5352
    %v5396 = vpop.f32.mrb[0].mxu0
    %v5397 = vadd.f32 %v5334, %v5396
    %v5398 = vpop.f32.mrb[0].mxu0
    %v5399 = vpop.f32.mrb[0].mxu0
    %v5400 = vadd.f32 %v5334, %v5399
    %v5401 = vpop.f32.mrb[0].mxu0
    %5402 = vdwg.mxu0
    %v5403 = vmax.f32 %v5389, 0.0
    %v5404 = vmax.f32 %v5392, 0.0
    %v5405 = vmax.f32 %v5397, 0.0
    %v5406 = vmax.f32 %v5400, 0.0
    %v5407 = vld [vmem:[%s73] sm:$0xf]
    %v5408 = vld [vmem:[%s73 + $0x4] sm:$0xf]
    %v5409 = vld [vmem:[%s73 + $0x8] sm:$0xf]
    %v5410 = vld [vmem:[%s73 + $0xc] sm:$0xf]
    %v5411 = vld [vmem:[%s73 + $0x10] sm:$0xf]
    %v5412 = vld [vmem:[%s73 + $0x14] sm:$0xf]
    %v5413 = vld [vmem:[%s73 + $0x18] sm:$0xf]
    %v5414 = vld [vmem:[%s73 + $0x1c] sm:$0xf]
    %v5415 = vpack.c.bf16 %v5404, %v5403
    %v5416 = vpack.c.bf16 %v5406, %v5405
    %v5417 = vld [vmem:[%s75] sm:$0x1]
    %v5419 = vlaneseq
    %v5420 = vshrl.u32 %v5419, 7
    %v5421 = vsub.s32 0, %v5420
    %v5422 = vrot.slane %v5417, %v5421
    %v5432 = vunpack.c.l.b16 %v5407
    %v5433 = vunpack.c.l.b16 %v5408
    %v5434 = vunpack.c.l.b16 %v5409
    %v5435 = vunpack.c.l.b16 %v5410
    %v5436 = vunpack.c.l.b16 %v5411
    %v5437 = vunpack.c.l.b16 %v5412
    %v5438 = vunpack.c.l.b16 %v5413
    %v5439 = vunpack.c.l.b16 %v5414
    %v5440 = vpack.c.b16 %v5433, %v5432
    %v5441 = vpack.c.b16 %v5435, %v5434
    %v5442 = vpack.c.b16 %v5437, %v5436
    %v5443 = vpack.c.b16 %v5439, %v5438
    %v5449 = vsel %vm1344, %v5415, 0
    %v5452 = vsel %vm1344, %v5416, 0
    %5454 = vmatprep.subr.bf16.mxu0 0
    %5455 = vmatpush1.bf16.msra.mxu0 %v5440
    %5456 = vmatprep.subr.bf16.mxu0 0
    %5457 = vmatpush1.bf16.msra.mxu0 %v5441
    %5458 = vmatprep.subr.bf16.mxu0 0
    %5459 = vmatpush1.bf16.msra.mxu0 %v5442
    %5460 = vmatprep.subr.bf16.mxu0 0
    %5461 = vmatpush1.bf16.msra.mxu0 %v5443
    %5462 = vmatprep.subr.bf16.mxu0 0
    %5463 = vmatpush1.bf16.msra.mxu0 0
    %5464 = vmatprep.subr.bf16.mxu0 0
    %5465 = vmatpush1.bf16.msra.mxu0 0
    %5466 = vmatprep.subr.bf16.mxu0 0
    %5467 = vmatpush1.bf16.msra.mxu0 0
    %5468 = vmatprep.subr.bf16.mxu0 0
    %5469 = vmatpush1.bf16.msra.mxu0 0
    %5470 = vmatprep.subr.bf16.mxu0 0
    %5471 = vmatpush1.bf16.msra.mxu0 0
    %5472 = vmatprep.subr.bf16.mxu0 0
    %5473 = vmatpush1.bf16.msra.mxu0 0
    %5474 = vmatprep.subr.bf16.mxu0 0
    %5475 = vmatpush1.bf16.msra.mxu0 0
    %5476 = vmatprep.subr.bf16.mxu0 0
    %5477 = vmatpush1.bf16.msra.mxu0 0
    %5478 = vmatprep.subr.bf16.mxu0 0
    %5479 = vmatpush1.bf16.msra.mxu0 0
    %5480 = vmatprep.subr.bf16.mxu0 0
    %5481 = vmatpush1.bf16.msra.mxu0 0
    %5482 = vmatprep.subr.bf16.mxu0 0
    %5483 = vmatpush1.bf16.msra.mxu0 0
    %5484 = vmatprep.subr.bf16.mxu0 0
    %5485 = vmatpush1.bf16.msra.mxu0 0
    %5486 = vmatprep.mubr.bf16.mxu0 0
    %5487 = vmatmul.mubr.bf16.gmra.mrb[0].mxu0 %v5449
    %v5488 = vpop.f32.mrb[0].mxu0
    %v5489 = vadd.f32 %v5422, %v5488
    %v5490 = vpop.f32.mrb[0].mxu0
    %v5491 = vpop.f32.mrb[0].mxu0
    %v5492 = vadd.f32 %v5422, %v5491
    %v5493 = vpop.f32.mrb[0].mxu0
    %5494 = vmatprep.mubr.bf16.mxu0 0
    %5495 = vmatmul.mubr.bf16.gmra.mrb[0].mxu0 %v5452
    %v5496 = vpop.f32.mrb[0].mxu0
    %v5497 = vadd.f32 %v5422, %v5496
    %v5498 = vpop.f32.mrb[0].mxu0
    %v5499 = vpop.f32.mrb[0].mxu0
    %v5500 = vadd.f32 %v5422, %v5499
    %v5501 = vpop.f32.mrb[0].mxu0
    %5502 = vdwg.mxu0
    %v5503 = vadd.f32 %v5319, %v5489
    %v5504 = vadd.f32 %v5320, %v5492
    %v5505 = vadd.f32 %v5321, %v5497
    %v5506 = vadd.f32 %v5322, %v5500
    %v5507 = vld [vmem:[%s65] sm:$0x1]
    %v5508 = vld [vmem:[%s67] sm:$0x1]
    %v5509 = vsel %vm217, %v5503, 0.0
    %5510 = vadd.xlane.f32.xlu0 %v5509
    %v5511 = vpop.xlane.xlu0 %5510
    %v5512 = vsel %vm217, %v5504, 0.0
    %5513 = vadd.xlane.f32.xlu0 %v5512
    %v5514 = vpop.xlane.xlu0 %5513
    %v5515 = vsel %vm217, %v5505, 0.0
    %5516 = vadd.xlane.f32.xlu0 %v5515
    %v5517 = vpop.xlane.xlu0 %5516
    %v5518 = vsel %vm217, %v5506, 0.0
    %5519 = vadd.xlane.f32.xlu0 %v5518
    %v5520 = vpop.xlane.xlu0 %5519
    %v5521 = vmul.f32 %v5511, %v1158
    %v5522 = vmul.f32 %v5514, %v1158
    %v5523 = vmul.f32 %v5517, %v1158
    %v5524 = vmul.f32 %v5520, %v1158
    %v5525 = vsub.f32 %v5503, %v5521
    %v5526 = vsub.f32 %v5504, %v5522
    %v5527 = vsub.f32 %v5505, %v5523
    %v5528 = vsub.f32 %v5506, %v5524
    %v5529 = vmul.f32 %v5525, %v5525
    %v5530 = vmul.f32 %v5526, %v5526
    %v5531 = vmul.f32 %v5527, %v5527
    %v5532 = vmul.f32 %v5528, %v5528
    %v5533 = vsel %vm217, %v5529, 0.0
    %5534 = vadd.xlane.f32.xlu0 %v5533
    %v5535 = vpop.xlane.xlu0 %5534
    %v5536 = vsel %vm217, %v5530, 0.0
    %5537 = vadd.xlane.f32.xlu0 %v5536
    %v5538 = vpop.xlane.xlu0 %5537
    %v5539 = vsel %vm217, %v5531, 0.0
    %5540 = vadd.xlane.f32.xlu0 %v5539
    %v5541 = vpop.xlane.xlu0 %5540
    %v5542 = vsel %vm217, %v5532, 0.0
    %5543 = vadd.xlane.f32.xlu0 %v5542
    %v5544 = vpop.xlane.xlu0 %5543
    %v5545 = vmul.f32 %v5535, %v1158
    %v5546 = vmul.f32 %v5538, %v1158
    %v5547 = vmul.f32 %v5541, %v1158
    %v5548 = vmul.f32 %v5544, %v1158
    %v5549 = vadd.f32 %v5545, 1e-05
    %v5550 = vadd.f32 %v5546, 1e-05
    %v5551 = vadd.f32 %v5547, 1e-05
    %v5552 = vadd.f32 %v5548, 1e-05
    %v5553 = vrsqrt.pop %v5549
    %v5554 = vrsqrt.pop %v5550
    %v5555 = vrsqrt.pop %v5551
    %v5556 = vrsqrt.pop %v5552
    %v5557 = vmul.f32 %v5525, %v5553
    %v5558 = vmul.f32 %v5526, %v5554
    %v5559 = vmul.f32 %v5527, %v5555
    %v5560 = vmul.f32 %v5528, %v5556
    %v5562 = vlaneseq
    %v5563 = vshrl.u32 %v5562, 7
    %v5564 = vsub.s32 0, %v5563
    %v5565 = vrot.slane %v5507, %v5564
    %v5567 = vmul.f32 %v5557, %v5565
    %v5568 = vmul.f32 %v5558, %v5565
    %v5569 = vmul.f32 %v5559, %v5565
    %v5570 = vmul.f32 %v5560, %v5565
    %v5572 = vlaneseq
    %v5573 = vshrl.u32 %v5572, 7
    %v5574 = vsub.s32 0, %v5573
    %v5575 = vrot.slane %v5508, %v5574
    %v5577 = vadd.f32 %v5567, %v5575
    %v5578 = vadd.f32 %v5568, %v5575
    %v5579 = vadd.f32 %v5569, %v5575
    %v5580 = vadd.f32 %v5570, %v5575
    %s5581 = scalar_lea.vmem %s37, 16
    %v5582 = vld [vmem:[%s5581] sm:$0xf]
    %v5583 = vld [vmem:[%s5581 + $0x4] sm:$0xf]
    %v5584 = vld [vmem:[%s5581 + $0x8] sm:$0xf]
    %v5585 = vld [vmem:[%s5581 + $0xc] sm:$0xf]
    %v5586 = vpack.c.bf16 %v5578, %v5577
    %v5587 = vpack.c.bf16 %v5580, %v5579
    %s5588 = scalar_lea.vmem %s39, 1
    %v5589 = vld [vmem:[%s5588] sm:$0x1]
    %v5591 = vlaneseq
    %v5592 = vshrl.u32 %v5591, 7
    %v5593 = vsub.s32 0, %v5592
    %v5594 = vrot.slane %v5589, %v5593
    %v5600 = vunpack.c.l.b16 %v5582
    %v5601 = vunpack.c.l.b16 %v5583
    %v5602 = vunpack.c.l.b16 %v5584
    %v5603 = vunpack.c.l.b16 %v5585
    %v5604 = vpack.c.b16 %v5601, %v5600
    %v5605 = vpack.c.b16 %v5603, %v5602
    %v5609 = vsel %vm217, %v5586, 0
    %v5612 = vsel %vm217, %v5587, 0
    %5614 = vmatprep.subr.bf16.mxu0 0
    %5615 = vmatpush1.bf16.msra.mxu0 %v5604
    %5616 = vmatprep.subr.bf16.mxu0 0
    %5617 = vmatpush1.bf16.msra.mxu0 %v5605
    %5618 = vmatprep.subr.bf16.mxu0 0
    %5619 = vmatpush1.bf16.msra.mxu0 0
    %5620 = vmatprep.subr.bf16.mxu0 0
    %5621 = vmatpush1.bf16.msra.mxu0 0
    %5622 = vmatprep.subr.bf16.mxu0 0
    %5623 = vmatpush1.bf16.msra.mxu0 0
    %5624 = vmatprep.subr.bf16.mxu0 0
    %5625 = vmatpush1.bf16.msra.mxu0 0
    %5626 = vmatprep.subr.bf16.mxu0 0
    %5627 = vmatpush1.bf16.msra.mxu0 0
    %5628 = vmatprep.subr.bf16.mxu0 0
    %5629 = vmatpush1.bf16.msra.mxu0 0
    %5630 = vmatprep.subr.bf16.mxu0 0
    %5631 = vmatpush1.bf16.msra.mxu0 0
    %5632 = vmatprep.subr.bf16.mxu0 0
    %5633 = vmatpush1.bf16.msra.mxu0 0
    %5634 = vmatprep.subr.bf16.mxu0 0
    %5635 = vmatpush1.bf16.msra.mxu0 0
    %5636 = vmatprep.subr.bf16.mxu0 0
    %5637 = vmatpush1.bf16.msra.mxu0 0
    %5638 = vmatprep.subr.bf16.mxu0 0
    %5639 = vmatpush1.bf16.msra.mxu0 0
    %5640 = vmatprep.subr.bf16.mxu0 0
    %5641 = vmatpush1.bf16.msra.mxu0 0
    %5642 = vmatprep.subr.bf16.mxu0 0
    %5643 = vmatpush1.bf16.msra.mxu0 0
    %5644 = vmatprep.subr.bf16.mxu0 0
    %5645 = vmatpush1.bf16.msra.mxu0 0
    %5646 = vmatprep.mubr.bf16.mxu0 0
    %5647 = vmatmul.mubr.bf16.gmra.mrb[0].mxu0 %v5609
    %v5648 = vpop.f32.mrb[0].mxu0
    %v5649 = vadd.f32 %v5594, %v5648
    %v5650 = vpop.f32.mrb[0].mxu0
    %v5651 = vpop.f32.mrb[0].mxu0
    %v5652 = vadd.f32 %v5594, %v5651
    %v5653 = vpop.f32.mrb[0].mxu0
    %5654 = vmatprep.mubr.bf16.mxu0 0
    %5655 = vmatmul.mubr.bf16.gmra.mrb[0].mxu0 %v5612
    %v5656 = vpop.f32.mrb[0].mxu0
    %v5657 = vadd.f32 %v5594, %v5656
    %v5658 = vpop.f32.mrb[0].mxu0
    %v5659 = vpop.f32.mrb[0].mxu0
    %v5660 = vadd.f32 %v5594, %v5659
    %v5661 = vpop.f32.mrb[0].mxu0
    %5662 = vdwg.mxu0
    %v5663 = vmul.f32 %v5649, 0.35355338
    %v5664 = vmul.f32 %v5652, 0.35355338
    %v5665 = vmul.f32 %v5657, 0.35355338
    %v5666 = vmul.f32 %v5660, 0.35355338
    %v5667 = vpack.c.bf16 %v5664, %v5663
    %v5668 = vpack.c.bf16 %v5666, %v5665
    %v5669 = vpack.c.bf16 %v5652, %v5649
    %v5670 = vpack.c.bf16 %v5660, %v5657
    %5673 = vrot.lane.b32.xlu0 %v5669, 96
    %v5674 = vpop.permute.xlu0 %5673
    %5675 = vrot.lane.b32.xlu0 %v5670, 96
    %v5676 = vpop.permute.xlu0 %5675
    %v5678 = vsel %vm287, %v5667, 0
    %v5681 = vsel %vm287, %v5668, 0
    %v5684 = vsel %vm287, %v5674, 0
    %v5687 = vsel %vm287, %v5676, 0
    %5689 = vmatprep.subr.bf16.mxu0 0
    %5690 = vmatpush1.bf16.xpose.msra.mxu0 %v5684
    %5691 = vmatprep.subr.bf16.mxu0 0
    %5692 = vmatpush1.bf16.xpose.msra.mxu0 %v5687
    %5693 = vmatprep.subr.bf16.mxu0 0
    %5694 = vmatpush1.bf16.xpose.msra.mxu0 0
    %5695 = vmatprep.subr.bf16.mxu0 0
    %5696 = vmatpush1.bf16.xpose.msra.mxu0 0
    %5697 = vmatprep.subr.bf16.mxu0 0
    %5698 = vmatpush1.bf16.xpose.msra.mxu0 0
    %5699 = vmatprep.subr.bf16.mxu0 0
    %5700 = vmatpush1.bf16.xpose.msra.mxu0 0
    %5701 = vmatprep.subr.bf16.mxu0 0
    %5702 = vmatpush1.bf16.xpose.msra.mxu0 0
    %5703 = vmatprep.subr.bf16.mxu0 0
    %5704 = vmatpush1.bf16.xpose.msra.mxu0 0
    %5705 = vmatprep.subr.bf16.mxu0 0
    %5706 = vmatpush1.bf16.xpose.msra.mxu0 0
    %5707 = vmatprep.subr.bf16.mxu0 0
    %5708 = vmatpush1.bf16.xpose.msra.mxu0 0
    %5709 = vmatprep.subr.bf16.mxu0 0
    %5710 = vmatpush1.bf16.xpose.msra.mxu0 0
    %5711 = vmatprep.subr.bf16.mxu0 0
    %5712 = vmatpush1.bf16.xpose.msra.mxu0 0
    %5713 = vmatprep.subr.bf16.mxu0 0
    %5714 = vmatpush1.bf16.xpose.msra.mxu0 0
    %5715 = vmatprep.subr.bf16.mxu0 0
    %5716 = vmatpush1.bf16.xpose.msra.mxu0 0
    %5717 = vmatprep.subr.bf16.mxu0 0
    %5718 = vmatpush1.bf16.xpose.msra.mxu0 0
    %5719 = vmatprep.subr.bf16.mxu0 0
    %5720 = vmatpush1.bf16.xpose.msra.mxu0 0
    %5721 = vmatprep.mubr.bf16.mxu0 0
    %5722 = vmatmul.mubr.bf16.gmra.mrb[0].mxu0 %v5678
    %v5723 = vpop.f32.mrb[0].mxu0
    %v5724 = vadd.f32 %v3211, %v5723
    %v5725 = vpop.f32.mrb[0].mxu0
    %v5726 = vpop.f32.mrb[0].mxu0
    %v5727 = vadd.f32 %v3212, %v5726
    %v5728 = vpop.f32.mrb[0].mxu0
    %5729 = vmatprep.mubr.bf16.mxu0 0
    %5730 = vmatmul.mubr.bf16.gmra.mrb[0].mxu0 %v5681
    %v5731 = vpop.f32.mrb[0].mxu0
    %v5732 = vadd.f32 %v3213, %v5731
    %v5733 = vpop.f32.mrb[0].mxu0
    %v5734 = vpop.f32.mrb[0].mxu0
    %v5735 = vadd.f32 %v3214, %v5734
    %v5736 = vpop.f32.mrb[0].mxu0
    %5737 = vdwg.mxu0
    %v5738 = vsel %vm217, %v5724, -inf
    %5739 = vmax.xlane.f32.xlu0 %v5738
    %v5740 = vpop.xlane.xlu0 %5739
    %v5741 = vsel %vm217, %v5727, -inf
    %5742 = vmax.xlane.f32.xlu0 %v5741
    %v5743 = vpop.xlane.xlu0 %5742
    %v5744 = vsel %vm217, %v5732, -inf
    %5745 = vmax.xlane.f32.xlu0 %v5744
    %v5746 = vpop.xlane.xlu0 %5745
    %v5747 = vsel %vm217, %v5735, -inf
    %5748 = vmax.xlane.f32.xlu0 %v5747
    %v5749 = vpop.xlane.xlu0 %5748
    %v5750 = vsub.f32 %v5724, %v5740
    %v5751 = vsub.f32 %v5727, %v5743
    %v5752 = vsub.f32 %v5732, %v5746
    %v5753 = vsub.f32 %v5735, %v5749
    %v5754 = vmul.f32 %v5750, 1.442695
    %v5755 = vpow.pop %v5754
    %v5756 = vmul.f32 %v5751, 1.442695
    %v5757 = vpow.pop %v5756
    %v5758 = vmul.f32 %v5752, 1.442695
    %v5759 = vpow.pop %v5758
    %v5760 = vmul.f32 %v5753, 1.442695
    %v5761 = vpow.pop %v5760
    %v5762 = vsel %vm217, %v5755, 0.0
    %5763 = vadd.xlane.f32.xlu0 %v5762
    %v5764 = vpop.xlane.xlu0 %5763
    %v5765 = vsel %vm217, %v5757, 0.0
    %5766 = vadd.xlane.f32.xlu0 %v5765
    %v5767 = vpop.xlane.xlu0 %5766
    %v5768 = vsel %vm217, %v5759, 0.0
    %5769 = vadd.xlane.f32.xlu0 %v5768
    %v5770 = vpop.xlane.xlu0 %5769
    %v5771 = vsel %vm217, %v5761, 0.0
    %5772 = vadd.xlane.f32.xlu0 %v5771
    %v5773 = vpop.xlane.xlu0 %5772
    %v5774 = vrcp.pop %v5764
    %v5775 = vrcp.pop %v5767
    %v5776 = vrcp.pop %v5770
    %v5777 = vrcp.pop %v5773
    %v5778 = vmul.f32 %v5755, %v5774
    %v5779 = vmul.f32 %v5757, %v5775
    %v5780 = vmul.f32 %v5759, %v5776
    %v5781 = vmul.f32 %v5761, %v5777
    %v5782 = vpack.c.bf16 %v5779, %v5778
    %v5783 = vpack.c.bf16 %v5781, %v5780
    %5784 = vrot.lane.b32.xlu0 %v5669, 64
    %v5785 = vpop.permute.xlu0 %5784
    %5786 = vrot.lane.b32.xlu0 %v5670, 64
    %v5787 = vpop.permute.xlu0 %5786
    %v5791 = vsel %vm217, %v5782, 0
    %v5794 = vsel %vm217, %v5783, 0
    %5796 = vmatprep.subr.bf16.mxu0 0
    %5797 = vmatpush1.bf16.msra.mxu0 %v5785
    %5798 = vmatprep.subr.bf16.mxu0 0
    %5799 = vmatpush1.bf16.msra.mxu0 %v5787
    %5800 = vmatprep.subr.bf16.mxu0 0
    %5801 = vmatpush1.bf16.msra.mxu0 0
    %5802 = vmatprep.subr.bf16.mxu0 0
    %5803 = vmatpush1.bf16.msra.mxu0 0
    %5804 = vmatprep.subr.bf16.mxu0 0
    %5805 = vmatpush1.bf16.msra.mxu0 0
    %5806 = vmatprep.subr.bf16.mxu0 0
    %5807 = vmatpush1.bf16.msra.mxu0 0
    %5808 = vmatprep.subr.bf16.mxu0 0
    %5809 = vmatpush1.bf16.msra.mxu0 0
    %5810 = vmatprep.subr.bf16.mxu0 0
    %5811 = vmatpush1.bf16.msra.mxu0 0
    %5812 = vmatprep.subr.bf16.mxu0 0
    %5813 = vmatpush1.bf16.msra.mxu0 0
    %5814 = vmatprep.subr.bf16.mxu0 0
    %5815 = vmatpush1.bf16.msra.mxu0 0
    %5816 = vmatprep.subr.bf16.mxu0 0
    %5817 = vmatpush1.bf16.msra.mxu0 0
    %5818 = vmatprep.subr.bf16.mxu0 0
    %5819 = vmatpush1.bf16.msra.mxu0 0
    %5820 = vmatprep.subr.bf16.mxu0 0
    %5821 = vmatpush1.bf16.msra.mxu0 0
    %5822 = vmatprep.subr.bf16.mxu0 0
    %5823 = vmatpush1.bf16.msra.mxu0 0
    %5824 = vmatprep.subr.bf16.mxu0 0
    %5825 = vmatpush1.bf16.msra.mxu0 0
    %5826 = vmatprep.subr.bf16.mxu0 0
    %5827 = vmatpush1.bf16.msra.mxu0 0
    %5828 = vmatprep.mubr.bf16.mxu0 0
    %5829 = vmatmul.mubr.bf16.gmra.mrb[0].mxu0 %v5791
    %v5830 = vpop.f32.mrb[0].mxu0
    %v5831 = vadd.f32 0.0, %v5830
    %v5832 = vpop.f32.mrb[0].mxu0
    %v5833 = vpop.f32.mrb[0].mxu0
    %v5834 = vadd.f32 0.0, %v5833
    %v5835 = vpop.f32.mrb[0].mxu0
    %5836 = vmatprep.mubr.bf16.mxu0 0
    %5837 = vmatmul.mubr.bf16.gmra.mrb[0].mxu0 %v5794
    %v5838 = vpop.f32.mrb[0].mxu0
    %v5839 = vadd.f32 0.0, %v5838
    %v5840 = vpop.f32.mrb[0].mxu0
    %v5841 = vpop.f32.mrb[0].mxu0
    %v5842 = vadd.f32 0.0, %v5841
    %v5843 = vpop.f32.mrb[0].mxu0
    %5844 = vdwg.mxu0
    %5847 = vrot.lane.b32.xlu0 %v5667, 120
    %v5848 = vpop.permute.xlu0 %5847
    %5849 = vrot.lane.b32.xlu0 %v5668, 120
    %v5850 = vpop.permute.xlu0 %5849
    %5851 = vrot.lane.b32.xlu0 %v5669, 88
    %v5852 = vpop.permute.xlu0 %5851
    %5853 = vrot.lane.b32.xlu0 %v5670, 88
    %v5854 = vpop.permute.xlu0 %5853
    %v5856 = vsel %vm287, %v5848, 0
    %v5859 = vsel %vm287, %v5850, 0
    %v5862 = vsel %vm287, %v5852, 0
    %v5865 = vsel %vm287, %v5854, 0
    %5867 = vmatprep.subr.bf16.mxu0 0
    %5868 = vmatpush1.bf16.xpose.msra.mxu0 %v5862
    %5869 = vmatprep.subr.bf16.mxu0 0
    %5870 = vmatpush1.bf16.xpose.msra.mxu0 %v5865
    %5871 = vmatprep.subr.bf16.mxu0 0
    %5872 = vmatpush1.bf16.xpose.msra.mxu0 0
    %5873 = vmatprep.subr.bf16.mxu0 0
    %5874 = vmatpush1.bf16.xpose.msra.mxu0 0
    %5875 = vmatprep.subr.bf16.mxu0 0
    %5876 = vmatpush1.bf16.xpose.msra.mxu0 0
    %5877 = vmatprep.subr.bf16.mxu0 0
    %5878 = vmatpush1.bf16.xpose.msra.mxu0 0
    %5879 = vmatprep.subr.bf16.mxu0 0
    %5880 = vmatpush1.bf16.xpose.msra.mxu0 0
    %5881 = vmatprep.subr.bf16.mxu0 0
    %5882 = vmatpush1.bf16.xpose.msra.mxu0 0
    %5883 = vmatprep.subr.bf16.mxu0 0
    %5884 = vmatpush1.bf16.xpose.msra.mxu0 0
    %5885 = vmatprep.subr.bf16.mxu0 0
    %5886 = vmatpush1.bf16.xpose.msra.mxu0 0
    %5887 = vmatprep.subr.bf16.mxu0 0
    %5888 = vmatpush1.bf16.xpose.msra.mxu0 0
    %5889 = vmatprep.subr.bf16.mxu0 0
    %5890 = vmatpush1.bf16.xpose.msra.mxu0 0
    %5891 = vmatprep.subr.bf16.mxu0 0
    %5892 = vmatpush1.bf16.xpose.msra.mxu0 0
    %5893 = vmatprep.subr.bf16.mxu0 0
    %5894 = vmatpush1.bf16.xpose.msra.mxu0 0
    %5895 = vmatprep.subr.bf16.mxu0 0
    %5896 = vmatpush1.bf16.xpose.msra.mxu0 0
    %5897 = vmatprep.subr.bf16.mxu0 0
    %5898 = vmatpush1.bf16.xpose.msra.mxu0 0
    %5899 = vmatprep.mubr.bf16.mxu0 0
    %5900 = vmatmul.mubr.bf16.gmra.mrb[0].mxu0 %v5856
    %v5901 = vpop.f32.mrb[0].mxu0
    %v5902 = vadd.f32 %v3211, %v5901
    %v5903 = vpop.f32.mrb[0].mxu0
    %v5904 = vpop.f32.mrb[0].mxu0
    %v5905 = vadd.f32 %v3212, %v5904
    %v5906 = vpop.f32.mrb[0].mxu0
    %5907 = vmatprep.mubr.bf16.mxu0 0
    %5908 = vmatmul.mubr.bf16.gmra.mrb[0].mxu0 %v5859
    %v5909 = vpop.f32.mrb[0].mxu0
    %v5910 = vadd.f32 %v3213, %v5909
    %v5911 = vpop.f32.mrb[0].mxu0
    %v5912 = vpop.f32.mrb[0].mxu0
    %v5913 = vadd.f32 %v3214, %v5912
    %v5914 = vpop.f32.mrb[0].mxu0
    %5915 = vdwg.mxu0
    %v5916 = vsel %vm217, %v5902, -inf
    %5917 = vmax.xlane.f32.xlu0 %v5916
    %v5918 = vpop.xlane.xlu0 %5917
    %v5919 = vsel %vm217, %v5905, -inf
    %5920 = vmax.xlane.f32.xlu0 %v5919
    %v5921 = vpop.xlane.xlu0 %5920
    %v5922 = vsel %vm217, %v5910, -inf
    %5923 = vmax.xlane.f32.xlu0 %v5922
    %v5924 = vpop.xlane.xlu0 %5923
    %v5925 = vsel %vm217, %v5913, -inf
    %5926 = vmax.xlane.f32.xlu0 %v5925
    %v5927 = vpop.xlane.xlu0 %5926
    %v5928 = vsub.f32 %v5902, %v5918
    %v5929 = vsub.f32 %v5905, %v5921
    %v5930 = vsub.f32 %v5910, %v5924
    %v5931 = vsub.f32 %v5913, %v5927
    %v5932 = vmul.f32 %v5928, 1.442695
    %v5933 = vpow.pop %v5932
    %v5934 = vmul.f32 %v5929, 1.442695
    %v5935 = vpow.pop %v5934
    %v5936 = vmul.f32 %v5930, 1.442695
    %v5937 = vpow.pop %v5936
    %v5938 = vmul.f32 %v5931, 1.442695
    %v5939 = vpow.pop %v5938
    %v5940 = vsel %vm217, %v5933, 0.0
    %5941 = vadd.xlane.f32.xlu0 %v5940
    %v5942 = vpop.xlane.xlu0 %5941
    %v5943 = vsel %vm217, %v5935, 0.0
    %5944 = vadd.xlane.f32.xlu0 %v5943
    %v5945 = vpop.xlane.xlu0 %5944
    %v5946 = vsel %vm217, %v5937, 0.0
    %5947 = vadd.xlane.f32.xlu0 %v5946
    %v5948 = vpop.xlane.xlu0 %5947
    %v5949 = vsel %vm217, %v5939, 0.0
    %5950 = vadd.xlane.f32.xlu0 %v5949
    %v5951 = vpop.xlane.xlu0 %5950
    %v5952 = vrcp.pop %v5942
    %v5953 = vrcp.pop %v5945
    %v5954 = vrcp.pop %v5948
    %v5955 = vrcp.pop %v5951
    %v5956 = vmul.f32 %v5933, %v5952
    %v5957 = vmul.f32 %v5935, %v5953
    %v5958 = vmul.f32 %v5937, %v5954
    %v5959 = vmul.f32 %v5939, %v5955
    %v5960 = vpack.c.bf16 %v5957, %v5956
    %v5961 = vpack.c.bf16 %v5959, %v5958
    %5962 = vrot.lane.b32.xlu0 %v5669, 56
    %v5963 = vpop.permute.xlu0 %5962
    %5964 = vrot.lane.b32.xlu0 %v5670, 56
    %v5965 = vpop.permute.xlu0 %5964
    %v5969 = vsel %vm217, %v5960, 0
    %v5972 = vsel %vm217, %v5961, 0
    %5974 = vmatprep.subr.bf16.mxu0 0
    %5975 = vmatpush1.bf16.msra.mxu0 %v5963
    %5976 = vmatprep.subr.bf16.mxu0 0
    %5977 = vmatpush1.bf16.msra.mxu0 %v5965
    %5978 = vmatprep.subr.bf16.mxu0 0
    %5979 = vmatpush1.bf16.msra.mxu0 0
    %5980 = vmatprep.subr.bf16.mxu0 0
    %5981 = vmatpush1.bf16.msra.mxu0 0
    %5982 = vmatprep.subr.bf16.mxu0 0
    %5983 = vmatpush1.bf16.msra.mxu0 0
    %5984 = vmatprep.subr.bf16.mxu0 0
    %5985 = vmatpush1.bf16.msra.mxu0 0
    %5986 = vmatprep.subr.bf16.mxu0 0
    %5987 = vmatpush1.bf16.msra.mxu0 0
    %5988 = vmatprep.subr.bf16.mxu0 0
    %5989 = vmatpush1.bf16.msra.mxu0 0
    %5990 = vmatprep.subr.bf16.mxu0 0
    %5991 = vmatpush1.bf16.msra.mxu0 0
    %5992 = vmatprep.subr.bf16.mxu0 0
    %5993 = vmatpush1.bf16.msra.mxu0 0
    %5994 = vmatprep.subr.bf16.mxu0 0
    %5995 = vmatpush1.bf16.msra.mxu0 0
    %5996 = vmatprep.subr.bf16.mxu0 0
    %5997 = vmatpush1.bf16.msra.mxu0 0
    %5998 = vmatprep.subr.bf16.mxu0 0
    %5999 = vmatpush1.bf16.msra.mxu0 0
    %6000 = vmatprep.subr.bf16.mxu0 0
    %6001 = vmatpush1.bf16.msra.mxu0 0
    %6002 = vmatprep.subr.bf16.mxu0 0
    %6003 = vmatpush1.bf16.msra.mxu0 0
    %6004 = vmatprep.subr.bf16.mxu0 0
    %6005 = vmatpush1.bf16.msra.mxu0 0
    %6006 = vmatprep.mubr.bf16.mxu0 0
    %6007 = vmatmul.mubr.bf16.gmra.mrb[0].mxu0 %v5969
    %v6008 = vpop.f32.mrb[0].mxu0
    %v6009 = vadd.f32 0.0, %v6008
    %v6010 = vpop.f32.mrb[0].mxu0
    %v6011 = vpop.f32.mrb[0].mxu0
    %v6012 = vadd.f32 0.0, %v6011
    %v6013 = vpop.f32.mrb[0].mxu0
    %6014 = vmatprep.mubr.bf16.mxu0 0
    %6015 = vmatmul.mubr.bf16.gmra.mrb[0].mxu0 %v5972
    %v6016 = vpop.f32.mrb[0].mxu0
    %v6017 = vadd.f32 0.0, %v6016
    %v6018 = vpop.f32.mrb[0].mxu0
    %v6019 = vpop.f32.mrb[0].mxu0
    %v6020 = vadd.f32 0.0, %v6019
    %v6021 = vpop.f32.mrb[0].mxu0
    %6022 = vdwg.mxu0
    %6023 = vrot.lane.b32.xlu0 %v5667, 112
    %v6024 = vpop.permute.xlu0 %6023
    %6025 = vrot.lane.b32.xlu0 %v5668, 112
    %v6026 = vpop.permute.xlu0 %6025
    %6027 = vrot.lane.b32.xlu0 %v5669, 80
    %v6028 = vpop.permute.xlu0 %6027
    %6029 = vrot.lane.b32.xlu0 %v5670, 80
    %v6030 = vpop.permute.xlu0 %6029
    %v6032 = vsel %vm287, %v6024, 0
    %v6035 = vsel %vm287, %v6026, 0
    %v6038 = vsel %vm287, %v6028, 0
    %v6041 = vsel %vm287, %v6030, 0
    %6043 = vmatprep.subr.bf16.mxu0 0
    %6044 = vmatpush1.bf16.xpose.msra.mxu0 %v6038
    %6045 = vmatprep.subr.bf16.mxu0 0
    %6046 = vmatpush1.bf16.xpose.msra.mxu0 %v6041
    %6047 = vmatprep.subr.bf16.mxu0 0
    %6048 = vmatpush1.bf16.xpose.msra.mxu0 0
    %6049 = vmatprep.subr.bf16.mxu0 0
    %6050 = vmatpush1.bf16.xpose.msra.mxu0 0
    %6051 = vmatprep.subr.bf16.mxu0 0
    %6052 = vmatpush1.bf16.xpose.msra.mxu0 0
    %6053 = vmatprep.subr.bf16.mxu0 0
    %6054 = vmatpush1.bf16.xpose.msra.mxu0 0
    %6055 = vmatprep.subr.bf16.mxu0 0
    %6056 = vmatpush1.bf16.xpose.msra.mxu0 0
    %6057 = vmatprep.subr.bf16.mxu0 0
    %6058 = vmatpush1.bf16.xpose.msra.mxu0 0
    %6059 = vmatprep.subr.bf16.mxu0 0
    %6060 = vmatpush1.bf16.xpose.msra.mxu0 0
    %6061 = vmatprep.subr.bf16.mxu0 0
    %6062 = vmatpush1.bf16.xpose.msra.mxu0 0
    %6063 = vmatprep.subr.bf16.mxu0 0
    %6064 = vmatpush1.bf16.xpose.msra.mxu0 0
    %6065 = vmatprep.subr.bf16.mxu0 0
    %6066 = vmatpush1.bf16.xpose.msra.mxu0 0
    %6067 = vmatprep.subr.bf16.mxu0 0
    %6068 = vmatpush1.bf16.xpose.msra.mxu0 0
    %6069 = vmatprep.subr.bf16.mxu0 0
    %6070 = vmatpush1.bf16.xpose.msra.mxu0 0
    %6071 = vmatprep.subr.bf16.mxu0 0
    %6072 = vmatpush1.bf16.xpose.msra.mxu0 0
    %6073 = vmatprep.subr.bf16.mxu0 0
    %6074 = vmatpush1.bf16.xpose.msra.mxu0 0
    %6075 = vmatprep.mubr.bf16.mxu0 0
    %6076 = vmatmul.mubr.bf16.gmra.mrb[0].mxu0 %v6032
    %v6077 = vpop.f32.mrb[0].mxu0
    %v6078 = vadd.f32 %v3211, %v6077
    %v6079 = vpop.f32.mrb[0].mxu0
    %v6080 = vpop.f32.mrb[0].mxu0
    %v6081 = vadd.f32 %v3212, %v6080
    %v6082 = vpop.f32.mrb[0].mxu0
    %6083 = vmatprep.mubr.bf16.mxu0 0
    %6084 = vmatmul.mubr.bf16.gmra.mrb[0].mxu0 %v6035
    %v6085 = vpop.f32.mrb[0].mxu0
    %v6086 = vadd.f32 %v3213, %v6085
    %v6087 = vpop.f32.mrb[0].mxu0
    %v6088 = vpop.f32.mrb[0].mxu0
    %v6089 = vadd.f32 %v3214, %v6088
    %v6090 = vpop.f32.mrb[0].mxu0
    %6091 = vdwg.mxu0
    %v6092 = vsel %vm217, %v6078, -inf
    %6093 = vmax.xlane.f32.xlu0 %v6092
    %v6094 = vpop.xlane.xlu0 %6093
    %v6095 = vsel %vm217, %v6081, -inf
    %6096 = vmax.xlane.f32.xlu0 %v6095
    %v6097 = vpop.xlane.xlu0 %6096
    %v6098 = vsel %vm217, %v6086, -inf
    %6099 = vmax.xlane.f32.xlu0 %v6098
    %v6100 = vpop.xlane.xlu0 %6099
    %v6101 = vsel %vm217, %v6089, -inf
    %6102 = vmax.xlane.f32.xlu0 %v6101
    %v6103 = vpop.xlane.xlu0 %6102
    %v6104 = vsub.f32 %v6078, %v6094
    %v6105 = vsub.f32 %v6081, %v6097
    %v6106 = vsub.f32 %v6086, %v6100
    %v6107 = vsub.f32 %v6089, %v6103
    %v6108 = vmul.f32 %v6104, 1.442695
    %v6109 = vpow.pop %v6108
    %v6110 = vmul.f32 %v6105, 1.442695
    %v6111 = vpow.pop %v6110
    %v6112 = vmul.f32 %v6106, 1.442695
    %v6113 = vpow.pop %v6112
    %v6114 = vmul.f32 %v6107, 1.442695
    %v6115 = vpow.pop %v6114
    %v6116 = vsel %vm217, %v6109, 0.0
    %6117 = vadd.xlane.f32.xlu0 %v6116
    %v6118 = vpop.xlane.xlu0 %6117
    %v6119 = vsel %vm217, %v6111, 0.0
    %6120 = vadd.xlane.f32.xlu0 %v6119
    %v6121 = vpop.xlane.xlu0 %6120
    %v6122 = vsel %vm217, %v6113, 0.0
    %6123 = vadd.xlane.f32.xlu0 %v6122
    %v6124 = vpop.xlane.xlu0 %6123
    %v6125 = vsel %vm217, %v6115, 0.0
    %6126 = vadd.xlane.f32.xlu0 %v6125
    %v6127 = vpop.xlane.xlu0 %6126
    %v6128 = vrcp.pop %v6118
    %v6129 = vrcp.pop %v6121
    %v6130 = vrcp.pop %v6124
    %v6131 = vrcp.pop %v6127
    %v6132 = vmul.f32 %v6109, %v6128
    %v6133 = vmul.f32 %v6111, %v6129
    %v6134 = vmul.f32 %v6113, %v6130
    %v6135 = vmul.f32 %v6115, %v6131
    %v6136 = vpack.c.bf16 %v6133, %v6132
    %v6137 = vpack.c.bf16 %v6135, %v6134
    %6138 = vrot.lane.b32.xlu0 %v5669, 48
    %v6139 = vpop.permute.xlu0 %6138
    %6140 = vrot.lane.b32.xlu0 %v5670, 48
    %v6141 = vpop.permute.xlu0 %6140
    %v6145 = vsel %vm217, %v6136, 0
    %v6148 = vsel %vm217, %v6137, 0
    %6150 = vmatprep.subr.bf16.mxu0 0
    %6151 = vmatpush1.bf16.msra.mxu0 %v6139
    %6152 = vmatprep.subr.bf16.mxu0 0
    %6153 = vmatpush1.bf16.msra.mxu0 %v6141
    %6154 = vmatprep.subr.bf16.mxu0 0
    %6155 = vmatpush1.bf16.msra.mxu0 0
    %6156 = vmatprep.subr.bf16.mxu0 0
    %6157 = vmatpush1.bf16.msra.mxu0 0
    %6158 = vmatprep.subr.bf16.mxu0 0
    %6159 = vmatpush1.bf16.msra.mxu0 0
    %6160 = vmatprep.subr.bf16.mxu0 0
    %6161 = vmatpush1.bf16.msra.mxu0 0
    %6162 = vmatprep.subr.bf16.mxu0 0
    %6163 = vmatpush1.bf16.msra.mxu0 0
    %6164 = vmatprep.subr.bf16.mxu0 0
    %6165 = vmatpush1.bf16.msra.mxu0 0
    %6166 = vmatprep.subr.bf16.mxu0 0
    %6167 = vmatpush1.bf16.msra.mxu0 0
    %6168 = vmatprep.subr.bf16.mxu0 0
    %6169 = vmatpush1.bf16.msra.mxu0 0
    %6170 = vmatprep.subr.bf16.mxu0 0
    %6171 = vmatpush1.bf16.msra.mxu0 0
    %6172 = vmatprep.subr.bf16.mxu0 0
    %6173 = vmatpush1.bf16.msra.mxu0 0
    %6174 = vmatprep.subr.bf16.mxu0 0
    %6175 = vmatpush1.bf16.msra.mxu0 0
    %6176 = vmatprep.subr.bf16.mxu0 0
    %6177 = vmatpush1.bf16.msra.mxu0 0
    %6178 = vmatprep.subr.bf16.mxu0 0
    %6179 = vmatpush1.bf16.msra.mxu0 0
    %6180 = vmatprep.subr.bf16.mxu0 0
    %6181 = vmatpush1.bf16.msra.mxu0 0
    %6182 = vmatprep.mubr.bf16.mxu0 0
    %6183 = vmatmul.mubr.bf16.gmra.mrb[0].mxu0 %v6145
    %v6184 = vpop.f32.mrb[0].mxu0
    %v6185 = vadd.f32 0.0, %v6184
    %v6186 = vpop.f32.mrb[0].mxu0
    %v6187 = vpop.f32.mrb[0].mxu0
    %v6188 = vadd.f32 0.0, %v6187
    %v6189 = vpop.f32.mrb[0].mxu0
    %6190 = vmatprep.mubr.bf16.mxu0 0
    %6191 = vmatmul.mubr.bf16.gmra.mrb[0].mxu0 %v6148
    %v6192 = vpop.f32.mrb[0].mxu0
    %v6193 = vadd.f32 0.0, %v6192
    %v6194 = vpop.f32.mrb[0].mxu0
    %v6195 = vpop.f32.mrb[0].mxu0
    %v6196 = vadd.f32 0.0, %v6195
    %v6197 = vpop.f32.mrb[0].mxu0
    %6198 = vdwg.mxu0
    %6199 = vrot.lane.b32.xlu0 %v5667, 104
    %v6200 = vpop.permute.xlu0 %6199
    %6201 = vrot.lane.b32.xlu0 %v5668, 104
    %v6202 = vpop.permute.xlu0 %6201
    %6203 = vrot.lane.b32.xlu0 %v5669, 72
    %v6204 = vpop.permute.xlu0 %6203
    %6205 = vrot.lane.b32.xlu0 %v5670, 72
    %v6206 = vpop.permute.xlu0 %6205
    %v6208 = vsel %vm287, %v6200, 0
    %v6211 = vsel %vm287, %v6202, 0
    %v6214 = vsel %vm287, %v6204, 0
    %v6217 = vsel %vm287, %v6206, 0
    %6219 = vmatprep.subr.bf16.mxu0 0
    %6220 = vmatpush1.bf16.xpose.msra.mxu0 %v6214
    %6221 = vmatprep.subr.bf16.mxu0 0
    %6222 = vmatpush1.bf16.xpose.msra.mxu0 %v6217
    %6223 = vmatprep.subr.bf16.mxu0 0
    %6224 = vmatpush1.bf16.xpose.msra.mxu0 0
    %6225 = vmatprep.subr.bf16.mxu0 0
    %6226 = vmatpush1.bf16.xpose.msra.mxu0 0
    %6227 = vmatprep.subr.bf16.mxu0 0
    %6228 = vmatpush1.bf16.xpose.msra.mxu0 0
    %6229 = vmatprep.subr.bf16.mxu0 0
    %6230 = vmatpush1.bf16.xpose.msra.mxu0 0
    %6231 = vmatprep.subr.bf16.mxu0 0
    %6232 = vmatpush1.bf16.xpose.msra.mxu0 0
    %6233 = vmatprep.subr.bf16.mxu0 0
    %6234 = vmatpush1.bf16.xpose.msra.mxu0 0
    %6235 = vmatprep.subr.bf16.mxu0 0
    %6236 = vmatpush1.bf16.xpose.msra.mxu0 0
    %6237 = vmatprep.subr.bf16.mxu0 0
    %6238 = vmatpush1.bf16.xpose.msra.mxu0 0
    %6239 = vmatprep.subr.bf16.mxu0 0
    %6240 = vmatpush1.bf16.xpose.msra.mxu0 0
    %6241 = vmatprep.subr.bf16.mxu0 0
    %6242 = vmatpush1.bf16.xpose.msra.mxu0 0
    %6243 = vmatprep.subr.bf16.mxu0 0
    %6244 = vmatpush1.bf16.xpose.msra.mxu0 0
    %6245 = vmatprep.subr.bf16.mxu0 0
    %6246 = vmatpush1.bf16.xpose.msra.mxu0 0
    %6247 = vmatprep.subr.bf16.mxu0 0
    %6248 = vmatpush1.bf16.xpose.msra.mxu0 0
    %6249 = vmatprep.subr.bf16.mxu0 0
    %6250 = vmatpush1.bf16.xpose.msra.mxu0 0
    %6251 = vmatprep.mubr.bf16.mxu0 0
    %6252 = vmatmul.mubr.bf16.gmra.mrb[0].mxu0 %v6208
    %v6253 = vpop.f32.mrb[0].mxu0
    %v6254 = vadd.f32 %v3211, %v6253
    %v6255 = vpop.f32.mrb[0].mxu0
    %v6256 = vpop.f32.mrb[0].mxu0
    %v6257 = vadd.f32 %v3212, %v6256
    %v6258 = vpop.f32.mrb[0].mxu0
    %6259 = vmatprep.mubr.bf16.mxu0 0
    %6260 = vmatmul.mubr.bf16.gmra.mrb[0].mxu0 %v6211
    %v6261 = vpop.f32.mrb[0].mxu0
    %v6262 = vadd.f32 %v3213, %v6261
    %v6263 = vpop.f32.mrb[0].mxu0
    %v6264 = vpop.f32.mrb[0].mxu0
    %v6265 = vadd.f32 %v3214, %v6264
    %v6266 = vpop.f32.mrb[0].mxu0
    %6267 = vdwg.mxu0
    %v6268 = vsel %vm217, %v6254, -inf
    %6269 = vmax.xlane.f32.xlu0 %v6268
    %v6270 = vpop.xlane.xlu0 %6269
    %v6271 = vsel %vm217, %v6257, -inf
    %6272 = vmax.xlane.f32.xlu0 %v6271
    %v6273 = vpop.xlane.xlu0 %6272
    %v6274 = vsel %vm217, %v6262, -inf
    %6275 = vmax.xlane.f32.xlu0 %v6274
    %v6276 = vpop.xlane.xlu0 %6275
    %v6277 = vsel %vm217, %v6265, -inf
    %6278 = vmax.xlane.f32.xlu0 %v6277
    %v6279 = vpop.xlane.xlu0 %6278
    %v6280 = vsub.f32 %v6254, %v6270
    %v6281 = vsub.f32 %v6257, %v6273
    %v6282 = vsub.f32 %v6262, %v6276
    %v6283 = vsub.f32 %v6265, %v6279
    %v6284 = vmul.f32 %v6280, 1.442695
    %v6285 = vpow.pop %v6284
    %v6286 = vmul.f32 %v6281, 1.442695
    %v6287 = vpow.pop %v6286
    %v6288 = vmul.f32 %v6282, 1.442695
    %v6289 = vpow.pop %v6288
    %v6290 = vmul.f32 %v6283, 1.442695
    %v6291 = vpow.pop %v6290
    %v6292 = vsel %vm217, %v6285, 0.0
    %6293 = vadd.xlane.f32.xlu0 %v6292
    %v6294 = vpop.xlane.xlu0 %6293
    %v6295 = vsel %vm217, %v6287, 0.0
    %6296 = vadd.xlane.f32.xlu0 %v6295
    %v6297 = vpop.xlane.xlu0 %6296
    %v6298 = vsel %vm217, %v6289, 0.0
    %6299 = vadd.xlane.f32.xlu0 %v6298
    %v6300 = vpop.xlane.xlu0 %6299
    %v6301 = vsel %vm217, %v6291, 0.0
    %6302 = vadd.xlane.f32.xlu0 %v6301
    %v6303 = vpop.xlane.xlu0 %6302
    %v6304 = vrcp.pop %v6294
    %v6305 = vrcp.pop %v6297
    %v6306 = vrcp.pop %v6300
    %v6307 = vrcp.pop %v6303
    %v6308 = vmul.f32 %v6285, %v6304
    %v6309 = vmul.f32 %v6287, %v6305
    %v6310 = vmul.f32 %v6289, %v6306
    %v6311 = vmul.f32 %v6291, %v6307
    %v6312 = vpack.c.bf16 %v6309, %v6308
    %v6313 = vpack.c.bf16 %v6311, %v6310
    %6314 = vrot.lane.b32.xlu0 %v5669, 40
    %v6315 = vpop.permute.xlu0 %6314
    %6316 = vrot.lane.b32.xlu0 %v5670, 40
    %v6317 = vpop.permute.xlu0 %6316
    %v6321 = vsel %vm217, %v6312, 0
    %v6324 = vsel %vm217, %v6313, 0
    %6326 = vmatprep.subr.bf16.mxu0 0
    %6327 = vmatpush1.bf16.msra.mxu0 %v6315
    %6328 = vmatprep.subr.bf16.mxu0 0
    %6329 = vmatpush1.bf16.msra.mxu0 %v6317
    %6330 = vmatprep.subr.bf16.mxu0 0
    %6331 = vmatpush1.bf16.msra.mxu0 0
    %6332 = vmatprep.subr.bf16.mxu0 0
    %6333 = vmatpush1.bf16.msra.mxu0 0
    %6334 = vmatprep.subr.bf16.mxu0 0
    %6335 = vmatpush1.bf16.msra.mxu0 0
    %6336 = vmatprep.subr.bf16.mxu0 0
    %6337 = vmatpush1.bf16.msra.mxu0 0
    %6338 = vmatprep.subr.bf16.mxu0 0
    %6339 = vmatpush1.bf16.msra.mxu0 0
    %6340 = vmatprep.subr.bf16.mxu0 0
    %6341 = vmatpush1.bf16.msra.mxu0 0
    %6342 = vmatprep.subr.bf16.mxu0 0
    %6343 = vmatpush1.bf16.msra.mxu0 0
    %6344 = vmatprep.subr.bf16.mxu0 0
    %6345 = vmatpush1.bf16.msra.mxu0 0
    %6346 = vmatprep.subr.bf16.mxu0 0
    %6347 = vmatpush1.bf16.msra.mxu0 0
    %6348 = vmatprep.subr.bf16.mxu0 0
    %6349 = vmatpush1.bf16.msra.mxu0 0
    %6350 = vmatprep.subr.bf16.mxu0 0
    %6351 = vmatpush1.bf16.msra.mxu0 0
    %6352 = vmatprep.subr.bf16.mxu0 0
    %6353 = vmatpush1.bf16.msra.mxu0 0
    %6354 = vmatprep.subr.bf16.mxu0 0
    %6355 = vmatpush1.bf16.msra.mxu0 0
    %6356 = vmatprep.subr.bf16.mxu0 0
    %6357 = vmatpush1.bf16.msra.mxu0 0
    %6358 = vmatprep.mubr.bf16.mxu0 0
    %6359 = vmatmul.mubr.bf16.gmra.mrb[0].mxu0 %v6321
    %v6360 = vpop.f32.mrb[0].mxu0
    %v6361 = vadd.f32 0.0, %v6360
    %v6362 = vpop.f32.mrb[0].mxu0
    %v6363 = vpop.f32.mrb[0].mxu0
    %v6364 = vadd.f32 0.0, %v6363
    %v6365 = vpop.f32.mrb[0].mxu0
    %6366 = vmatprep.mubr.bf16.mxu0 0
    %6367 = vmatmul.mubr.bf16.gmra.mrb[0].mxu0 %v6324
    %v6368 = vpop.f32.mrb[0].mxu0
    %v6369 = vadd.f32 0.0, %v6368
    %v6370 = vpop.f32.mrb[0].mxu0
    %v6371 = vpop.f32.mrb[0].mxu0
    %v6372 = vadd.f32 0.0, %v6371
    %v6373 = vpop.f32.mrb[0].mxu0
    %6374 = vdwg.mxu0
    %6379 = vrot.lane.b32.xlu0 %v6009, 8
    %v6380 = vpop.permute.xlu0 %6379
    %6381 = vrot.lane.b32.xlu0 %v6012, 8
    %v6382 = vpop.permute.xlu0 %6381
    %6383 = vrot.lane.b32.xlu0 %v6017, 8
    %v6384 = vpop.permute.xlu0 %6383
    %6385 = vrot.lane.b32.xlu0 %v6020, 8
    %v6386 = vpop.permute.xlu0 %6385
    %6395 = vrot.lane.b32.xlu0 %v6185, 16
    %v6396 = vpop.permute.xlu0 %6395
    %6397 = vrot.lane.b32.xlu0 %v6188, 16
    %v6398 = vpop.permute.xlu0 %6397
    %6399 = vrot.lane.b32.xlu0 %v6193, 16
    %v6400 = vpop.permute.xlu0 %6399
    %6401 = vrot.lane.b32.xlu0 %v6196, 16
    %v6402 = vpop.permute.xlu0 %6401
    %6411 = vrot.lane.b32.xlu0 %v6361, 24
    %v6412 = vpop.permute.xlu0 %6411
    %6413 = vrot.lane.b32.xlu0 %v6364, 24
    %v6414 = vpop.permute.xlu0 %6413
    %6415 = vrot.lane.b32.xlu0 %v6369, 24
    %v6416 = vpop.permute.xlu0 %6415
    %6417 = vrot.lane.b32.xlu0 %v6372, 24
    %v6418 = vpop.permute.xlu0 %6417
    %v6423 = vsel %vm287, %v5831, %v6380
    %v6424 = vsel %vm287, %v5834, %v6382
    %v6425 = vsel %vm287, %v5839, %v6384
    %v6426 = vsel %vm287, %v5842, %v6386
    %v6427 = vsel %vm1049, %v6423, %v6396
    %v6428 = vsel %vm1049, %v6424, %v6398
    %v6429 = vsel %vm1049, %v6425, %v6400
    %v6430 = vsel %vm1049, %v6426, %v6402
    %v6431 = vsel %vm1054, %v6427, %v6412
    %v6432 = vsel %vm1054, %v6428, %v6414
    %v6433 = vsel %vm1054, %v6429, %v6416
    %v6434 = vsel %vm1054, %v6430, %v6418
    %s6435 = scalar_lea.vmem %s41, 16
    %v6436 = vld [vmem:[%s6435] sm:$0xf]
    %v6437 = vld [vmem:[%s6435 + $0x4] sm:$0xf]
    %v6438 = vld [vmem:[%s6435 + $0x8] sm:$0xf]
    %v6439 = vld [vmem:[%s6435 + $0xc] sm:$0xf]
    %v6440 = vpack.c.bf16 %v6432, %v6431
    %v6441 = vpack.c.bf16 %v6434, %v6433
    %s6442 = scalar_lea.vmem %s43, 1
    %v6443 = vld [vmem:[%s6442] sm:$0x1]
    %v6445 = vlaneseq
    %v6446 = vshrl.u32 %v6445, 7
    %v6447 = vsub.s32 0, %v6446
    %v6448 = vrot.slane %v6443, %v6447
    %v6454 = vunpack.c.l.b16 %v6436
    %v6455 = vunpack.c.l.b16 %v6437
    %v6456 = vunpack.c.l.b16 %v6438
    %v6457 = vunpack.c.l.b16 %v6439
    %v6458 = vpack.c.b16 %v6455, %v6454
    %v6459 = vpack.c.b16 %v6457, %v6456
    %v6463 = vsel %vm217, %v6440, 0
    %v6466 = vsel %vm217, %v6441, 0
    %6468 = vmatprep.subr.bf16.mxu0 0
    %6469 = vmatpush1.bf16.msra.mxu0 %v6458
    %6470 = vmatprep.subr.bf16.mxu0 0
    %6471 = vmatpush1.bf16.msra.mxu0 %v6459
    %6472 = vmatprep.subr.bf16.mxu0 0
    %6473 = vmatpush1.bf16.msra.mxu0 0
    %6474 = vmatprep.subr.bf16.mxu0 0
    %6475 = vmatpush1.bf16.msra.mxu0 0
    %6476 = vmatprep.subr.bf16.mxu0 0
    %6477 = vmatpush1.bf16.msra.mxu0 0
    %6478 = vmatprep.subr.bf16.mxu0 0
    %6479 = vmatpush1.bf16.msra.mxu0 0
    %6480 = vmatprep.subr.bf16.mxu0 0
    %6481 = vmatpush1.bf16.msra.mxu0 0
    %6482 = vmatprep.subr.bf16.mxu0 0
    %6483 = vmatpush1.bf16.msra.mxu0 0
    %6484 = vmatprep.subr.bf16.mxu0 0
    %6485 = vmatpush1.bf16.msra.mxu0 0
    %6486 = vmatprep.subr.bf16.mxu0 0
    %6487 = vmatpush1.bf16.msra.mxu0 0
    %6488 = vmatprep.subr.bf16.mxu0 0
    %6489 = vmatpush1.bf16.msra.mxu0 0
    %6490 = vmatprep.subr.bf16.mxu0 0
    %6491 = vmatpush1.bf16.msra.mxu0 0
    %6492 = vmatprep.subr.bf16.mxu0 0
    %6493 = vmatpush1.bf16.msra.mxu0 0
    %6494 = vmatprep.subr.bf16.mxu0 0
    %6495 = vmatpush1.bf16.msra.mxu0 0
    %6496 = vmatprep.subr.bf16.mxu0 0
    %6497 = vmatpush1.bf16.msra.mxu0 0
    %6498 = vmatprep.subr.bf16.mxu0 0
    %6499 = vmatpush1.bf16.msra.mxu0 0
    %6500 = vmatprep.mubr.bf16.mxu0 0
    %6501 = vmatmul.mubr.bf16.gmra.mrb[0].mxu0 %v6463
    %v6502 = vpop.f32.mrb[0].mxu0
    %v6503 = vadd.f32 %v6448, %v6502
    %v6504 = vpop.f32.mrb[0].mxu0
    %v6505 = vpop.f32.mrb[0].mxu0
    %v6506 = vadd.f32 %v6448, %v6505
    %v6507 = vpop.f32.mrb[0].mxu0
    %6508 = vmatprep.mubr.bf16.mxu0 0
    %6509 = vmatmul.mubr.bf16.gmra.mrb[0].mxu0 %v6466
    %v6510 = vpop.f32.mrb[0].mxu0
    %v6511 = vadd.f32 %v6448, %v6510
    %v6512 = vpop.f32.mrb[0].mxu0
    %v6513 = vpop.f32.mrb[0].mxu0
    %v6514 = vadd.f32 %v6448, %v6513
    %v6515 = vpop.f32.mrb[0].mxu0
    %6516 = vdwg.mxu0
    %v6517 = vadd.f32 %v5577, %v6503
    %v6518 = vadd.f32 %v5578, %v6506
    %v6519 = vadd.f32 %v5579, %v6511
    %v6520 = vadd.f32 %v5580, %v6514
    %s6521 = scalar_lea.vmem %s57, 1
    %v6522 = vld [vmem:[%s6521] sm:$0x1]
    %s6523 = scalar_lea.vmem %s59, 1
    %v6524 = vld [vmem:[%s6523] sm:$0x1]
    %v6525 = vsel %vm217, %v6517, 0.0
    %6526 = vadd.xlane.f32.xlu0 %v6525
    %v6527 = vpop.xlane.xlu0 %6526
    %v6528 = vsel %vm217, %v6518, 0.0
    %6529 = vadd.xlane.f32.xlu0 %v6528
    %v6530 = vpop.xlane.xlu0 %6529
    %v6531 = vsel %vm217, %v6519, 0.0
    %6532 = vadd.xlane.f32.xlu0 %v6531
    %v6533 = vpop.xlane.xlu0 %6532
    %v6534 = vsel %vm217, %v6520, 0.0
    %6535 = vadd.xlane.f32.xlu0 %v6534
    %v6536 = vpop.xlane.xlu0 %6535
    %v6537 = vmul.f32 %v6527, %v1158
    %v6538 = vmul.f32 %v6530, %v1158
    %v6539 = vmul.f32 %v6533, %v1158
    %v6540 = vmul.f32 %v6536, %v1158
    %v6541 = vsub.f32 %v6517, %v6537
    %v6542 = vsub.f32 %v6518, %v6538
    %v6543 = vsub.f32 %v6519, %v6539
    %v6544 = vsub.f32 %v6520, %v6540
    %v6545 = vmul.f32 %v6541, %v6541
    %v6546 = vmul.f32 %v6542, %v6542
    %v6547 = vmul.f32 %v6543, %v6543
    %v6548 = vmul.f32 %v6544, %v6544
    %v6549 = vsel %vm217, %v6545, 0.0
    %6550 = vadd.xlane.f32.xlu0 %v6549
    %v6551 = vpop.xlane.xlu0 %6550
    %v6552 = vsel %vm217, %v6546, 0.0
    %6553 = vadd.xlane.f32.xlu0 %v6552
    %v6554 = vpop.xlane.xlu0 %6553
    %v6555 = vsel %vm217, %v6547, 0.0
    %6556 = vadd.xlane.f32.xlu0 %v6555
    %v6557 = vpop.xlane.xlu0 %6556
    %v6558 = vsel %vm217, %v6548, 0.0
    %6559 = vadd.xlane.f32.xlu0 %v6558
    %v6560 = vpop.xlane.xlu0 %6559
    %v6561 = vmul.f32 %v6551, %v1158
    %v6562 = vmul.f32 %v6554, %v1158
    %v6563 = vmul.f32 %v6557, %v1158
    %v6564 = vmul.f32 %v6560, %v1158
    %v6565 = vadd.f32 %v6561, 1e-05
    %v6566 = vadd.f32 %v6562, 1e-05
    %v6567 = vadd.f32 %v6563, 1e-05
    %v6568 = vadd.f32 %v6564, 1e-05
    %v6569 = vrsqrt.pop %v6565
    %v6570 = vrsqrt.pop %v6566
    %v6571 = vrsqrt.pop %v6567
    %v6572 = vrsqrt.pop %v6568
    %v6573 = vmul.f32 %v6541, %v6569
    %v6574 = vmul.f32 %v6542, %v6570
    %v6575 = vmul.f32 %v6543, %v6571
    %v6576 = vmul.f32 %v6544, %v6572
    %v6578 = vlaneseq
    %v6579 = vshrl.u32 %v6578, 7
    %v6580 = vsub.s32 0, %v6579
    %v6581 = vrot.slane %v6522, %v6580
    %v6583 = vmul.f32 %v6573, %v6581
    %v6584 = vmul.f32 %v6574, %v6581
    %v6585 = vmul.f32 %v6575, %v6581
    %v6586 = vmul.f32 %v6576, %v6581
    %v6588 = vlaneseq
    %v6589 = vshrl.u32 %v6588, 7
    %v6590 = vsub.s32 0, %v6589
    %v6591 = vrot.slane %v6524, %v6590
    %v6593 = vadd.f32 %v6583, %v6591
    %v6594 = vadd.f32 %v6584, %v6591
    %v6595 = vadd.f32 %v6585, %v6591
    %v6596 = vadd.f32 %v6586, %v6591
    %s6597 = scalar_lea.vmem %s45, 16
    %v6598 = vld [vmem:[%s6597] sm:$0xf]
    %v6599 = vld [vmem:[%s6597 + $0x4] sm:$0xf]
    %v6600 = vld [vmem:[%s6597 + $0x8] sm:$0xf]
    %v6601 = vld [vmem:[%s6597 + $0xc] sm:$0xf]
    %v6602 = vpack.c.bf16 %v6594, %v6593
    %v6603 = vpack.c.bf16 %v6596, %v6595
    %s6604 = scalar_lea.vmem %s47, 1
    %v6605 = vld [vmem:[%s6604] sm:$0x1]
    %v6607 = vlaneseq
    %v6608 = vshrl.u32 %v6607, 7
    %v6609 = vsub.s32 0, %v6608
    %v6610 = vrot.slane %v6605, %v6609
    %v6616 = vunpack.c.l.b16 %v6598
    %v6617 = vunpack.c.l.b16 %v6599
    %v6618 = vunpack.c.l.b16 %v6600
    %v6619 = vunpack.c.l.b16 %v6601
    %v6620 = vpack.c.b16 %v6617, %v6616
    %v6621 = vpack.c.b16 %v6619, %v6618
    %v6625 = vsel %vm217, %v6602, 0
    %v6628 = vsel %vm217, %v6603, 0
    %6630 = vmatprep.subr.bf16.mxu0 0
    %6631 = vmatpush1.bf16.msra.mxu0 %v6620
    %6632 = vmatprep.subr.bf16.mxu0 0
    %6633 = vmatpush1.bf16.msra.mxu0 %v6621
    %6634 = vmatprep.subr.bf16.mxu0 0
    %6635 = vmatpush1.bf16.msra.mxu0 0
    %6636 = vmatprep.subr.bf16.mxu0 0
    %6637 = vmatpush1.bf16.msra.mxu0 0
    %6638 = vmatprep.subr.bf16.mxu0 0
    %6639 = vmatpush1.bf16.msra.mxu0 0
    %6640 = vmatprep.subr.bf16.mxu0 0
    %6641 = vmatpush1.bf16.msra.mxu0 0
    %6642 = vmatprep.subr.bf16.mxu0 0
    %6643 = vmatpush1.bf16.msra.mxu0 0
    %6644 = vmatprep.subr.bf16.mxu0 0
    %6645 = vmatpush1.bf16.msra.mxu0 0
    %6646 = vmatprep.subr.bf16.mxu0 0
    %6647 = vmatpush1.bf16.msra.mxu0 0
    %6648 = vmatprep.subr.bf16.mxu0 0
    %6649 = vmatpush1.bf16.msra.mxu0 0
    %6650 = vmatprep.subr.bf16.mxu0 0
    %6651 = vmatpush1.bf16.msra.mxu0 0
    %6652 = vmatprep.subr.bf16.mxu0 0
    %6653 = vmatpush1.bf16.msra.mxu0 0
    %6654 = vmatprep.subr.bf16.mxu0 0
    %6655 = vmatpush1.bf16.msra.mxu0 0
    %6656 = vmatprep.subr.bf16.mxu0 0
    %6657 = vmatpush1.bf16.msra.mxu0 0
    %6658 = vmatprep.subr.bf16.mxu0 0
    %6659 = vmatpush1.bf16.msra.mxu0 0
    %6660 = vmatprep.subr.bf16.mxu0 0
    %6661 = vmatpush1.bf16.msra.mxu0 0
    %6662 = vmatprep.mubr.bf16.mxu0 0
    %6663 = vmatmul.mubr.bf16.gmra.mrb[0].mxu0 %v6625
    %v6664 = vpop.f32.mrb[0].mxu0
    %v6665 = vadd.f32 %v6610, %v6664
    %v6666 = vpop.f32.mrb[0].mxu0
    %v6667 = vpop.f32.mrb[0].mxu0
    %v6668 = vadd.f32 %v6610, %v6667
    %v6669 = vpop.f32.mrb[0].mxu0
    %6670 = vmatprep.mubr.bf16.mxu0 0
    %6671 = vmatmul.mubr.bf16.gmra.mrb[0].mxu0 %v6628
    %v6672 = vpop.f32.mrb[0].mxu0
    %v6673 = vadd.f32 %v6610, %v6672
    %v6674 = vpop.f32.mrb[0].mxu0
    %v6675 = vpop.f32.mrb[0].mxu0
    %v6676 = vadd.f32 %v6610, %v6675
    %v6677 = vpop.f32.mrb[0].mxu0
    %6678 = vdwg.mxu0
    %s6679 = scalar_lea.vmem %s49, 16
    %v6680 = vld [vmem:[%s6679] sm:$0xf]
    %v6681 = vld [vmem:[%s6679 + $0x4] sm:$0xf]
    %v6682 = vld [vmem:[%s6679 + $0x8] sm:$0xf]
    %v6683 = vld [vmem:[%s6679 + $0xc] sm:$0xf]
    %s6684 = scalar_lea.vmem %s51, 1
    %v6685 = vld [vmem:[%s6684] sm:$0x1]
    %v6687 = vlaneseq
    %v6688 = vshrl.u32 %v6687, 7
    %v6689 = vsub.s32 0, %v6688
    %v6690 = vrot.slane %v6685, %v6689
    %v6696 = vunpack.c.l.b16 %v6680
    %v6697 = vunpack.c.l.b16 %v6681
    %v6698 = vunpack.c.l.b16 %v6682
    %v6699 = vunpack.c.l.b16 %v6683
    %v6700 = vpack.c.b16 %v6697, %v6696
    %v6701 = vpack.c.b16 %v6699, %v6698
    %6704 = vmatprep.subr.bf16.mxu0 0
    %6705 = vmatpush1.bf16.msra.mxu0 %v6700
    %6706 = vmatprep.subr.bf16.mxu0 0
    %6707 = vmatpush1.bf16.msra.mxu0 %v6701
    %6708 = vmatprep.subr.bf16.mxu0 0
    %6709 = vmatpush1.bf16.msra.mxu0 0
    %6710 = vmatprep.subr.bf16.mxu0 0
    %6711 = vmatpush1.bf16.msra.mxu0 0
    %6712 = vmatprep.subr.bf16.mxu0 0
    %6713 = vmatpush1.bf16.msra.mxu0 0
    %6714 = vmatprep.subr.bf16.mxu0 0
    %6715 = vmatpush1.bf16.msra.mxu0 0
    %6716 = vmatprep.subr.bf16.mxu0 0
    %6717 = vmatpush1.bf16.msra.mxu0 0
    %6718 = vmatprep.subr.bf16.mxu0 0
    %6719 = vmatpush1.bf16.msra.mxu0 0
    %6720 = vmatprep.subr.bf16.mxu0 0
    %6721 = vmatpush1.bf16.msra.mxu0 0
    %6722 = vmatprep.subr.bf16.mxu0 0
    %6723 = vmatpush1.bf16.msra.mxu0 0
    %6724 = vmatprep.subr.bf16.mxu0 0
    %6725 = vmatpush1.bf16.msra.mxu0 0
    %6726 = vmatprep.subr.bf16.mxu0 0
    %6727 = vmatpush1.bf16.msra.mxu0 0
    %6728 = vmatprep.subr.bf16.mxu0 0
    %6729 = vmatpush1.bf16.msra.mxu0 0
    %6730 = vmatprep.subr.bf16.mxu0 0
    %6731 = vmatpush1.bf16.msra.mxu0 0
    %6732 = vmatprep.subr.bf16.mxu0 0
    %6733 = vmatpush1.bf16.msra.mxu0 0
    %6734 = vmatprep.subr.bf16.mxu0 0
    %6735 = vmatpush1.bf16.msra.mxu0 0
    %6736 = vmatprep.mubr.bf16.mxu0 0
    %6737 = vmatmul.mubr.bf16.gmra.mrb[0].mxu0 %v4335
    %v6738 = vpop.f32.mrb[0].mxu0
    %v6739 = vadd.f32 %v6690, %v6738
    %v6740 = vpop.f32.mrb[0].mxu0
    %v6741 = vpop.f32.mrb[0].mxu0
    %v6742 = vadd.f32 %v6690, %v6741
    %v6743 = vpop.f32.mrb[0].mxu0
    %6744 = vmatprep.mubr.bf16.mxu0 0
    %6745 = vmatmul.mubr.bf16.gmra.mrb[0].mxu0 %v4338
    %v6746 = vpop.f32.mrb[0].mxu0
    %v6747 = vadd.f32 %v6690, %v6746
    %v6748 = vpop.f32.mrb[0].mxu0
    %v6749 = vpop.f32.mrb[0].mxu0
    %v6750 = vadd.f32 %v6690, %v6749
    %v6751 = vpop.f32.mrb[0].mxu0
    %6752 = vdwg.mxu0
    %v6753 = vmul.f32 %v6665, 0.35355338
    %v6754 = vmul.f32 %v6668, 0.35355338
    %v6755 = vmul.f32 %v6673, 0.35355338
    %v6756 = vmul.f32 %v6676, 0.35355338
    %v6757 = vpack.c.bf16 %v6754, %v6753
    %v6758 = vpack.c.bf16 %v6756, %v6755
    %v6759 = vpack.c.bf16 %v6742, %v6739
    %v6760 = vpack.c.bf16 %v6750, %v6747
    %v6762 = vsel %vm287, %v6757, 0
    %v6765 = vsel %vm287, %v6758, 0
    %v6768 = vsel %vm287, %v6759, 0
    %v6771 = vsel %vm287, %v6760, 0
    %6773 = vmatprep.subr.bf16.mxu0 0
    %6774 = vmatpush1.bf16.xpose.msra.mxu0 %v6768
    %6775 = vmatprep.subr.bf16.mxu0 0
    %6776 = vmatpush1.bf16.xpose.msra.mxu0 %v6771
    %6777 = vmatprep.subr.bf16.mxu0 0
    %6778 = vmatpush1.bf16.xpose.msra.mxu0 0
    %6779 = vmatprep.subr.bf16.mxu0 0
    %6780 = vmatpush1.bf16.xpose.msra.mxu0 0
    %6781 = vmatprep.subr.bf16.mxu0 0
    %6782 = vmatpush1.bf16.xpose.msra.mxu0 0
    %6783 = vmatprep.subr.bf16.mxu0 0
    %6784 = vmatpush1.bf16.xpose.msra.mxu0 0
    %6785 = vmatprep.subr.bf16.mxu0 0
    %6786 = vmatpush1.bf16.xpose.msra.mxu0 0
    %6787 = vmatprep.subr.bf16.mxu0 0
    %6788 = vmatpush1.bf16.xpose.msra.mxu0 0
    %6789 = vmatprep.subr.bf16.mxu0 0
    %6790 = vmatpush1.bf16.xpose.msra.mxu0 0
    %6791 = vmatprep.subr.bf16.mxu0 0
    %6792 = vmatpush1.bf16.xpose.msra.mxu0 0
    %6793 = vmatprep.subr.bf16.mxu0 0
    %6794 = vmatpush1.bf16.xpose.msra.mxu0 0
    %6795 = vmatprep.subr.bf16.mxu0 0
    %6796 = vmatpush1.bf16.xpose.msra.mxu0 0
    %6797 = vmatprep.subr.bf16.mxu0 0
    %6798 = vmatpush1.bf16.xpose.msra.mxu0 0
    %6799 = vmatprep.subr.bf16.mxu0 0
    %6800 = vmatpush1.bf16.xpose.msra.mxu0 0
    %6801 = vmatprep.subr.bf16.mxu0 0
    %6802 = vmatpush1.bf16.xpose.msra.mxu0 0
    %6803 = vmatprep.subr.bf16.mxu0 0
    %6804 = vmatpush1.bf16.xpose.msra.mxu0 0
    %6805 = vmatprep.mubr.bf16.mxu0 0
    %6806 = vmatmul.mubr.bf16.gmra.mrb[0].mxu0 %v6762
    %v6807 = vpop.f32.mrb[0].mxu0
    %v6808 = vadd.f32 %v3215, %v6807
    %v6809 = vpop.f32.mrb[0].mxu0
    %v6810 = vpop.f32.mrb[0].mxu0
    %v6811 = vadd.f32 %v3216, %v6810
    %v6812 = vpop.f32.mrb[0].mxu0
    %6813 = vmatprep.mubr.bf16.mxu0 0
    %6814 = vmatmul.mubr.bf16.gmra.mrb[0].mxu0 %v6765
    %v6815 = vpop.f32.mrb[0].mxu0
    %v6816 = vadd.f32 %v3217, %v6815
    %v6817 = vpop.f32.mrb[0].mxu0
    %v6818 = vpop.f32.mrb[0].mxu0
    %v6819 = vadd.f32 %v3218, %v6818
    %v6820 = vpop.f32.mrb[0].mxu0
    %6821 = vdwg.mxu0
    %v6822 = vsel %vm349, %v6808, -inf
    %6823 = vmax.xlane.f32.xlu0 %v6822
    %v6824 = vpop.xlane.xlu0 %6823
    %v6825 = vsel %vm349, %v6811, -inf
    %6826 = vmax.xlane.f32.xlu0 %v6825
    %v6827 = vpop.xlane.xlu0 %6826
    %v6828 = vsel %vm349, %v6816, -inf
    %6829 = vmax.xlane.f32.xlu0 %v6828
    %v6830 = vpop.xlane.xlu0 %6829
    %v6831 = vsel %vm349, %v6819, -inf
    %6832 = vmax.xlane.f32.xlu0 %v6831
    %v6833 = vpop.xlane.xlu0 %6832
    %v6834 = vsub.f32 %v6808, %v6824
    %v6835 = vsub.f32 %v6811, %v6827
    %v6836 = vsub.f32 %v6816, %v6830
    %v6837 = vsub.f32 %v6819, %v6833
    %v6838 = vmul.f32 %v6834, 1.442695
    %v6839 = vpow.pop %v6838
    %v6840 = vmul.f32 %v6835, 1.442695
    %v6841 = vpow.pop %v6840
    %v6842 = vmul.f32 %v6836, 1.442695
    %v6843 = vpow.pop %v6842
    %v6844 = vmul.f32 %v6837, 1.442695
    %v6845 = vpow.pop %v6844
    %v6846 = vsel %vm349, %v6839, 0.0
    %6847 = vadd.xlane.f32.xlu0 %v6846
    %v6848 = vpop.xlane.xlu0 %6847
    %v6849 = vsel %vm349, %v6841, 0.0
    %6850 = vadd.xlane.f32.xlu0 %v6849
    %v6851 = vpop.xlane.xlu0 %6850
    %v6852 = vsel %vm349, %v6843, 0.0
    %6853 = vadd.xlane.f32.xlu0 %v6852
    %v6854 = vpop.xlane.xlu0 %6853
    %v6855 = vsel %vm349, %v6845, 0.0
    %6856 = vadd.xlane.f32.xlu0 %v6855
    %v6857 = vpop.xlane.xlu0 %6856
    %v6858 = vrcp.pop %v6848
    %v6859 = vrcp.pop %v6851
    %v6860 = vrcp.pop %v6854
    %v6861 = vrcp.pop %v6857
    %v6862 = vmul.f32 %v6839, %v6858
    %v6863 = vmul.f32 %v6841, %v6859
    %v6864 = vmul.f32 %v6843, %v6860
    %v6865 = vmul.f32 %v6845, %v6861
    %v6866 = vpack.c.bf16 %v6863, %v6862
    %v6867 = vpack.c.bf16 %v6865, %v6864
    %6870 = vrot.lane.b32.xlu0 %v6759, 96
    %v6871 = vpop.permute.xlu0 %6870
    %6872 = vrot.lane.b32.xlu0 %v6760, 96
    %v6873 = vpop.permute.xlu0 %6872
    %v6876 = vsel %vm349, %v6866, 0
    %v6879 = vsel %vm349, %v6867, 0
    %v6882 = vsel %vm408, %v6873, 0
    %6884 = vmatprep.subr.bf16.mxu0 0
    %6885 = vmatpush1.bf16.msra.mxu0 %v6871
    %6886 = vmatprep.subr.bf16.mxu0 0
    %6887 = vmatpush1.bf16.msra.mxu0 %v6882
    %6888 = vmatprep.subr.bf16.mxu0 0
    %6889 = vmatpush1.bf16.msra.mxu0 0
    %6890 = vmatprep.subr.bf16.mxu0 0
    %6891 = vmatpush1.bf16.msra.mxu0 0
    %6892 = vmatprep.subr.bf16.mxu0 0
    %6893 = vmatpush1.bf16.msra.mxu0 0
    %6894 = vmatprep.subr.bf16.mxu0 0
    %6895 = vmatpush1.bf16.msra.mxu0 0
    %6896 = vmatprep.subr.bf16.mxu0 0
    %6897 = vmatpush1.bf16.msra.mxu0 0
    %6898 = vmatprep.subr.bf16.mxu0 0
    %6899 = vmatpush1.bf16.msra.mxu0 0
    %6900 = vmatprep.subr.bf16.mxu0 0
    %6901 = vmatpush1.bf16.msra.mxu0 0
    %6902 = vmatprep.subr.bf16.mxu0 0
    %6903 = vmatpush1.bf16.msra.mxu0 0
    %6904 = vmatprep.subr.bf16.mxu0 0
    %6905 = vmatpush1.bf16.msra.mxu0 0
    %6906 = vmatprep.subr.bf16.mxu0 0
    %6907 = vmatpush1.bf16.msra.mxu0 0
    %6908 = vmatprep.subr.bf16.mxu0 0
    %6909 = vmatpush1.bf16.msra.mxu0 0
    %6910 = vmatprep.subr.bf16.mxu0 0
    %6911 = vmatpush1.bf16.msra.mxu0 0
    %6912 = vmatprep.subr.bf16.mxu0 0
    %6913 = vmatpush1.bf16.msra.mxu0 0
    %6914 = vmatprep.subr.bf16.mxu0 0
    %6915 = vmatpush1.bf16.msra.mxu0 0
    %6916 = vmatprep.mubr.bf16.mxu0 0
    %6917 = vmatmul.mubr.bf16.gmra.mrb[0].mxu0 %v6876
    %v6918 = vpop.f32.mrb[0].mxu0
    %v6919 = vadd.f32 0.0, %v6918
    %v6920 = vpop.f32.mrb[0].mxu0
    %v6921 = vpop.f32.mrb[0].mxu0
    %v6922 = vadd.f32 0.0, %v6921
    %v6923 = vpop.f32.mrb[0].mxu0
    %6924 = vmatprep.mubr.bf16.mxu0 0
    %6925 = vmatmul.mubr.bf16.gmra.mrb[0].mxu0 %v6879
    %v6926 = vpop.f32.mrb[0].mxu0
    %v6927 = vadd.f32 0.0, %v6926
    %v6928 = vpop.f32.mrb[0].mxu0
    %v6929 = vpop.f32.mrb[0].mxu0
    %v6930 = vadd.f32 0.0, %v6929
    %v6931 = vpop.f32.mrb[0].mxu0
    %6932 = vdwg.mxu0
    %6935 = vrot.lane.b32.xlu0 %v6757, 120
    %v6936 = vpop.permute.xlu0 %6935
    %6937 = vrot.lane.b32.xlu0 %v6758, 120
    %v6938 = vpop.permute.xlu0 %6937
    %6939 = vrot.lane.b32.xlu0 %v6759, 120
    %v6940 = vpop.permute.xlu0 %6939
    %6941 = vrot.lane.b32.xlu0 %v6760, 120
    %v6942 = vpop.permute.xlu0 %6941
    %v6944 = vsel %vm287, %v6936, 0
    %v6947 = vsel %vm287, %v6938, 0
    %v6950 = vsel %vm287, %v6940, 0
    %v6953 = vsel %vm287, %v6942, 0
    %6955 = vmatprep.subr.bf16.mxu0 0
    %6956 = vmatpush1.bf16.xpose.msra.mxu0 %v6950
    %6957 = vmatprep.subr.bf16.mxu0 0
    %6958 = vmatpush1.bf16.xpose.msra.mxu0 %v6953
    %6959 = vmatprep.subr.bf16.mxu0 0
    %6960 = vmatpush1.bf16.xpose.msra.mxu0 0
    %6961 = vmatprep.subr.bf16.mxu0 0
    %6962 = vmatpush1.bf16.xpose.msra.mxu0 0
    %6963 = vmatprep.subr.bf16.mxu0 0
    %6964 = vmatpush1.bf16.xpose.msra.mxu0 0
    %6965 = vmatprep.subr.bf16.mxu0 0
    %6966 = vmatpush1.bf16.xpose.msra.mxu0 0
    %6967 = vmatprep.subr.bf16.mxu0 0
    %6968 = vmatpush1.bf16.xpose.msra.mxu0 0
    %6969 = vmatprep.subr.bf16.mxu0 0
    %6970 = vmatpush1.bf16.xpose.msra.mxu0 0
    %6971 = vmatprep.subr.bf16.mxu0 0
    %6972 = vmatpush1.bf16.xpose.msra.mxu0 0
    %6973 = vmatprep.subr.bf16.mxu0 0
    %6974 = vmatpush1.bf16.xpose.msra.mxu0 0
    %6975 = vmatprep.subr.bf16.mxu0 0
    %6976 = vmatpush1.bf16.xpose.msra.mxu0 0
    %6977 = vmatprep.subr.bf16.mxu0 0
    %6978 = vmatpush1.bf16.xpose.msra.mxu0 0
    %6979 = vmatprep.subr.bf16.mxu0 0
    %6980 = vmatpush1.bf16.xpose.msra.mxu0 0
    %6981 = vmatprep.subr.bf16.mxu0 0
    %6982 = vmatpush1.bf16.xpose.msra.mxu0 0
    %6983 = vmatprep.subr.bf16.mxu0 0
    %6984 = vmatpush1.bf16.xpose.msra.mxu0 0
    %6985 = vmatprep.subr.bf16.mxu0 0
    %6986 = vmatpush1.bf16.xpose.msra.mxu0 0
    %6987 = vmatprep.mubr.bf16.mxu0 0
    %6988 = vmatmul.mubr.bf16.gmra.mrb[0].mxu0 %v6944
    %v6989 = vpop.f32.mrb[0].mxu0
    %v6990 = vadd.f32 %v3215, %v6989
    %v6991 = vpop.f32.mrb[0].mxu0
    %v6992 = vpop.f32.mrb[0].mxu0
    %v6993 = vadd.f32 %v3216, %v6992
    %v6994 = vpop.f32.mrb[0].mxu0
    %6995 = vmatprep.mubr.bf16.mxu0 0
    %6996 = vmatmul.mubr.bf16.gmra.mrb[0].mxu0 %v6947
    %v6997 = vpop.f32.mrb[0].mxu0
    %v6998 = vadd.f32 %v3217, %v6997
    %v6999 = vpop.f32.mrb[0].mxu0
    %v7000 = vpop.f32.mrb[0].mxu0
    %v7001 = vadd.f32 %v3218, %v7000
    %v7002 = vpop.f32.mrb[0].mxu0
    %7003 = vdwg.mxu0
    %v7004 = vsel %vm349, %v6990, -inf
    %7005 = vmax.xlane.f32.xlu0 %v7004
    %v7006 = vpop.xlane.xlu0 %7005
    %v7007 = vsel %vm349, %v6993, -inf
    %7008 = vmax.xlane.f32.xlu0 %v7007
    %v7009 = vpop.xlane.xlu0 %7008
    %v7010 = vsel %vm349, %v6998, -inf
    %7011 = vmax.xlane.f32.xlu0 %v7010
    %v7012 = vpop.xlane.xlu0 %7011
    %v7013 = vsel %vm349, %v7001, -inf
    %7014 = vmax.xlane.f32.xlu0 %v7013
    %v7015 = vpop.xlane.xlu0 %7014
    %v7016 = vsub.f32 %v6990, %v7006
    %v7017 = vsub.f32 %v6993, %v7009
    %v7018 = vsub.f32 %v6998, %v7012
    %v7019 = vsub.f32 %v7001, %v7015
    %v7020 = vmul.f32 %v7016, 1.442695
    %v7021 = vpow.pop %v7020
    %v7022 = vmul.f32 %v7017, 1.442695
    %v7023 = vpow.pop %v7022
    %v7024 = vmul.f32 %v7018, 1.442695
    %v7025 = vpow.pop %v7024
    %v7026 = vmul.f32 %v7019, 1.442695
    %v7027 = vpow.pop %v7026
    %v7028 = vsel %vm349, %v7021, 0.0
    %7029 = vadd.xlane.f32.xlu0 %v7028
    %v7030 = vpop.xlane.xlu0 %7029
    %v7031 = vsel %vm349, %v7023, 0.0
    %7032 = vadd.xlane.f32.xlu0 %v7031
    %v7033 = vpop.xlane.xlu0 %7032
    %v7034 = vsel %vm349, %v7025, 0.0
    %7035 = vadd.xlane.f32.xlu0 %v7034
    %v7036 = vpop.xlane.xlu0 %7035
    %v7037 = vsel %vm349, %v7027, 0.0
    %7038 = vadd.xlane.f32.xlu0 %v7037
    %v7039 = vpop.xlane.xlu0 %7038
    %v7040 = vrcp.pop %v7030
    %v7041 = vrcp.pop %v7033
    %v7042 = vrcp.pop %v7036
    %v7043 = vrcp.pop %v7039
    %v7044 = vmul.f32 %v7021, %v7040
    %v7045 = vmul.f32 %v7023, %v7041
    %v7046 = vmul.f32 %v7025, %v7042
    %v7047 = vmul.f32 %v7027, %v7043
    %v7048 = vpack.c.bf16 %v7045, %v7044
    %v7049 = vpack.c.bf16 %v7047, %v7046
    %7050 = vrot.lane.b32.xlu0 %v6759, 88
    %v7051 = vpop.permute.xlu0 %7050
    %7052 = vrot.lane.b32.xlu0 %v6760, 88
    %v7053 = vpop.permute.xlu0 %7052
    %v7056 = vsel %vm349, %v7048, 0
    %v7059 = vsel %vm349, %v7049, 0
    %v7062 = vsel %vm408, %v7053, 0
    %7064 = vmatprep.subr.bf16.mxu0 0
    %7065 = vmatpush1.bf16.msra.mxu0 %v7051
    %7066 = vmatprep.subr.bf16.mxu0 0
    %7067 = vmatpush1.bf16.msra.mxu0 %v7062
    %7068 = vmatprep.subr.bf16.mxu0 0
    %7069 = vmatpush1.bf16.msra.mxu0 0
    %7070 = vmatprep.subr.bf16.mxu0 0
    %7071 = vmatpush1.bf16.msra.mxu0 0
    %7072 = vmatprep.subr.bf16.mxu0 0
    %7073 = vmatpush1.bf16.msra.mxu0 0
    %7074 = vmatprep.subr.bf16.mxu0 0
    %7075 = vmatpush1.bf16.msra.mxu0 0
    %7076 = vmatprep.subr.bf16.mxu0 0
    %7077 = vmatpush1.bf16.msra.mxu0 0
    %7078 = vmatprep.subr.bf16.mxu0 0
    %7079 = vmatpush1.bf16.msra.mxu0 0
    %7080 = vmatprep.subr.bf16.mxu0 0
    %7081 = vmatpush1.bf16.msra.mxu0 0
    %7082 = vmatprep.subr.bf16.mxu0 0
    %7083 = vmatpush1.bf16.msra.mxu0 0
    %7084 = vmatprep.subr.bf16.mxu0 0
    %7085 = vmatpush1.bf16.msra.mxu0 0
    %7086 = vmatprep.subr.bf16.mxu0 0
    %7087 = vmatpush1.bf16.msra.mxu0 0
    %7088 = vmatprep.subr.bf16.mxu0 0
    %7089 = vmatpush1.bf16.msra.mxu0 0
    %7090 = vmatprep.subr.bf16.mxu0 0
    %7091 = vmatpush1.bf16.msra.mxu0 0
    %7092 = vmatprep.subr.bf16.mxu0 0
    %7093 = vmatpush1.bf16.msra.mxu0 0
    %7094 = vmatprep.subr.bf16.mxu0 0
    %7095 = vmatpush1.bf16.msra.mxu0 0
    %7096 = vmatprep.mubr.bf16.mxu0 0
    %7097 = vmatmul.mubr.bf16.gmra.mrb[0].mxu0 %v7056
    %v7098 = vpop.f32.mrb[0].mxu0
    %v7099 = vadd.f32 0.0, %v7098
    %v7100 = vpop.f32.mrb[0].mxu0
    %v7101 = vpop.f32.mrb[0].mxu0
    %v7102 = vadd.f32 0.0, %v7101
    %v7103 = vpop.f32.mrb[0].mxu0
    %7104 = vmatprep.mubr.bf16.mxu0 0
    %7105 = vmatmul.mubr.bf16.gmra.mrb[0].mxu0 %v7059
    %v7106 = vpop.f32.mrb[0].mxu0
    %v7107 = vadd.f32 0.0, %v7106
    %v7108 = vpop.f32.mrb[0].mxu0
    %v7109 = vpop.f32.mrb[0].mxu0
    %v7110 = vadd.f32 0.0, %v7109
    %v7111 = vpop.f32.mrb[0].mxu0
    %7112 = vdwg.mxu0
    %7113 = vrot.lane.b32.xlu0 %v6757, 112
    %v7114 = vpop.permute.xlu0 %7113
    %7115 = vrot.lane.b32.xlu0 %v6758, 112
    %v7116 = vpop.permute.xlu0 %7115
    %7117 = vrot.lane.b32.xlu0 %v6759, 112
    %v7118 = vpop.permute.xlu0 %7117
    %7119 = vrot.lane.b32.xlu0 %v6760, 112
    %v7120 = vpop.permute.xlu0 %7119
    %v7122 = vsel %vm287, %v7114, 0
    %v7125 = vsel %vm287, %v7116, 0
    %v7128 = vsel %vm287, %v7118, 0
    %v7131 = vsel %vm287, %v7120, 0
    %7133 = vmatprep.subr.bf16.mxu0 0
    %7134 = vmatpush1.bf16.xpose.msra.mxu0 %v7128
    %7135 = vmatprep.subr.bf16.mxu0 0
    %7136 = vmatpush1.bf16.xpose.msra.mxu0 %v7131
    %7137 = vmatprep.subr.bf16.mxu0 0
    %7138 = vmatpush1.bf16.xpose.msra.mxu0 0
    %7139 = vmatprep.subr.bf16.mxu0 0
    %7140 = vmatpush1.bf16.xpose.msra.mxu0 0
    %7141 = vmatprep.subr.bf16.mxu0 0
    %7142 = vmatpush1.bf16.xpose.msra.mxu0 0
    %7143 = vmatprep.subr.bf16.mxu0 0
    %7144 = vmatpush1.bf16.xpose.msra.mxu0 0
    %7145 = vmatprep.subr.bf16.mxu0 0
    %7146 = vmatpush1.bf16.xpose.msra.mxu0 0
    %7147 = vmatprep.subr.bf16.mxu0 0
    %7148 = vmatpush1.bf16.xpose.msra.mxu0 0
    %7149 = vmatprep.subr.bf16.mxu0 0
    %7150 = vmatpush1.bf16.xpose.msra.mxu0 0
    %7151 = vmatprep.subr.bf16.mxu0 0
    %7152 = vmatpush1.bf16.xpose.msra.mxu0 0
    %7153 = vmatprep.subr.bf16.mxu0 0
    %7154 = vmatpush1.bf16.xpose.msra.mxu0 0
    %7155 = vmatprep.subr.bf16.mxu0 0
    %7156 = vmatpush1.bf16.xpose.msra.mxu0 0
    %7157 = vmatprep.subr.bf16.mxu0 0
    %7158 = vmatpush1.bf16.xpose.msra.mxu0 0
    %7159 = vmatprep.subr.bf16.mxu0 0
    %7160 = vmatpush1.bf16.xpose.msra.mxu0 0
    %7161 = vmatprep.subr.bf16.mxu0 0
    %7162 = vmatpush1.bf16.xpose.msra.mxu0 0
    %7163 = vmatprep.subr.bf16.mxu0 0
    %7164 = vmatpush1.bf16.xpose.msra.mxu0 0
    %7165 = vmatprep.mubr.bf16.mxu0 0
    %7166 = vmatmul.mubr.bf16.gmra.mrb[0].mxu0 %v7122
    %v7167 = vpop.f32.mrb[0].mxu0
    %v7168 = vadd.f32 %v3215, %v7167
    %v7169 = vpop.f32.mrb[0].mxu0
    %v7170 = vpop.f32.mrb[0].mxu0
    %v7171 = vadd.f32 %v3216, %v7170
    %v7172 = vpop.f32.mrb[0].mxu0
    %7173 = vmatprep.mubr.bf16.mxu0 0
    %7174 = vmatmul.mubr.bf16.gmra.mrb[0].mxu0 %v7125
    %v7175 = vpop.f32.mrb[0].mxu0
    %v7176 = vadd.f32 %v3217, %v7175
    %v7177 = vpop.f32.mrb[0].mxu0
    %v7178 = vpop.f32.mrb[0].mxu0
    %v7179 = vadd.f32 %v3218, %v7178
    %v7180 = vpop.f32.mrb[0].mxu0
    %7181 = vdwg.mxu0
    %v7182 = vsel %vm349, %v7168, -inf
    %7183 = vmax.xlane.f32.xlu0 %v7182
    %v7184 = vpop.xlane.xlu0 %7183
    %v7185 = vsel %vm349, %v7171, -inf
    %7186 = vmax.xlane.f32.xlu0 %v7185
    %v7187 = vpop.xlane.xlu0 %7186
    %v7188 = vsel %vm349, %v7176, -inf
    %7189 = vmax.xlane.f32.xlu0 %v7188
    %v7190 = vpop.xlane.xlu0 %7189
    %v7191 = vsel %vm349, %v7179, -inf
    %7192 = vmax.xlane.f32.xlu0 %v7191
    %v7193 = vpop.xlane.xlu0 %7192
    %v7194 = vsub.f32 %v7168, %v7184
    %v7195 = vsub.f32 %v7171, %v7187
    %v7196 = vsub.f32 %v7176, %v7190
    %v7197 = vsub.f32 %v7179, %v7193
    %v7198 = vmul.f32 %v7194, 1.442695
    %v7199 = vpow.pop %v7198
    %v7200 = vmul.f32 %v7195, 1.442695
    %v7201 = vpow.pop %v7200
    %v7202 = vmul.f32 %v7196, 1.442695
    %v7203 = vpow.pop %v7202
    %v7204 = vmul.f32 %v7197, 1.442695
    %v7205 = vpow.pop %v7204
    %v7206 = vsel %vm349, %v7199, 0.0
    %7207 = vadd.xlane.f32.xlu0 %v7206
    %v7208 = vpop.xlane.xlu0 %7207
    %v7209 = vsel %vm349, %v7201, 0.0
    %7210 = vadd.xlane.f32.xlu0 %v7209
    %v7211 = vpop.xlane.xlu0 %7210
    %v7212 = vsel %vm349, %v7203, 0.0
    %7213 = vadd.xlane.f32.xlu0 %v7212
    %v7214 = vpop.xlane.xlu0 %7213
    %v7215 = vsel %vm349, %v7205, 0.0
    %7216 = vadd.xlane.f32.xlu0 %v7215
    %v7217 = vpop.xlane.xlu0 %7216
    %v7218 = vrcp.pop %v7208
    %v7219 = vrcp.pop %v7211
    %v7220 = vrcp.pop %v7214
    %v7221 = vrcp.pop %v7217
    %v7222 = vmul.f32 %v7199, %v7218
    %v7223 = vmul.f32 %v7201, %v7219
    %v7224 = vmul.f32 %v7203, %v7220
    %v7225 = vmul.f32 %v7205, %v7221
    %v7226 = vpack.c.bf16 %v7223, %v7222
    %v7227 = vpack.c.bf16 %v7225, %v7224
    %7228 = vrot.lane.b32.xlu0 %v6759, 80
    %v7229 = vpop.permute.xlu0 %7228
    %7230 = vrot.lane.b32.xlu0 %v6760, 80
    %v7231 = vpop.permute.xlu0 %7230
    %v7234 = vsel %vm349, %v7226, 0
    %v7237 = vsel %vm349, %v7227, 0
    %v7240 = vsel %vm408, %v7231, 0
    %7242 = vmatprep.subr.bf16.mxu0 0
    %7243 = vmatpush1.bf16.msra.mxu0 %v7229
    %7244 = vmatprep.subr.bf16.mxu0 0
    %7245 = vmatpush1.bf16.msra.mxu0 %v7240
    %7246 = vmatprep.subr.bf16.mxu0 0
    %7247 = vmatpush1.bf16.msra.mxu0 0
    %7248 = vmatprep.subr.bf16.mxu0 0
    %7249 = vmatpush1.bf16.msra.mxu0 0
    %7250 = vmatprep.subr.bf16.mxu0 0
    %7251 = vmatpush1.bf16.msra.mxu0 0
    %7252 = vmatprep.subr.bf16.mxu0 0
    %7253 = vmatpush1.bf16.msra.mxu0 0
    %7254 = vmatprep.subr.bf16.mxu0 0
    %7255 = vmatpush1.bf16.msra.mxu0 0
    %7256 = vmatprep.subr.bf16.mxu0 0
    %7257 = vmatpush1.bf16.msra.mxu0 0
    %7258 = vmatprep.subr.bf16.mxu0 0
    %7259 = vmatpush1.bf16.msra.mxu0 0
    %7260 = vmatprep.subr.bf16.mxu0 0
    %7261 = vmatpush1.bf16.msra.mxu0 0
    %7262 = vmatprep.subr.bf16.mxu0 0
    %7263 = vmatpush1.bf16.msra.mxu0 0
    %7264 = vmatprep.subr.bf16.mxu0 0
    %7265 = vmatpush1.bf16.msra.mxu0 0
    %7266 = vmatprep.subr.bf16.mxu0 0
    %7267 = vmatpush1.bf16.msra.mxu0 0
    %7268 = vmatprep.subr.bf16.mxu0 0
    %7269 = vmatpush1.bf16.msra.mxu0 0
    %7270 = vmatprep.subr.bf16.mxu0 0
    %7271 = vmatpush1.bf16.msra.mxu0 0
    %7272 = vmatprep.subr.bf16.mxu0 0
    %7273 = vmatpush1.bf16.msra.mxu0 0
    %7274 = vmatprep.mubr.bf16.mxu0 0
    %7275 = vmatmul.mubr.bf16.gmra.mrb[0].mxu0 %v7234
    %v7276 = vpop.f32.mrb[0].mxu0
    %v7277 = vadd.f32 0.0, %v7276
    %v7278 = vpop.f32.mrb[0].mxu0
    %v7279 = vpop.f32.mrb[0].mxu0
    %v7280 = vadd.f32 0.0, %v7279
    %v7281 = vpop.f32.mrb[0].mxu0
    %7282 = vmatprep.mubr.bf16.mxu0 0
    %7283 = vmatmul.mubr.bf16.gmra.mrb[0].mxu0 %v7237
    %v7284 = vpop.f32.mrb[0].mxu0
    %v7285 = vadd.f32 0.0, %v7284
    %v7286 = vpop.f32.mrb[0].mxu0
    %v7287 = vpop.f32.mrb[0].mxu0
    %v7288 = vadd.f32 0.0, %v7287
    %v7289 = vpop.f32.mrb[0].mxu0
    %7290 = vdwg.mxu0
    %7291 = vrot.lane.b32.xlu0 %v6757, 104
    %v7292 = vpop.permute.xlu0 %7291
    %7293 = vrot.lane.b32.xlu0 %v6758, 104
    %v7294 = vpop.permute.xlu0 %7293
    %7295 = vrot.lane.b32.xlu0 %v6759, 104
    %v7296 = vpop.permute.xlu0 %7295
    %7297 = vrot.lane.b32.xlu0 %v6760, 104
    %v7298 = vpop.permute.xlu0 %7297
    %v7300 = vsel %vm287, %v7292, 0
    %v7303 = vsel %vm287, %v7294, 0
    %v7306 = vsel %vm287, %v7296, 0
    %v7309 = vsel %vm287, %v7298, 0
    %7311 = vmatprep.subr.bf16.mxu0 0
    %7312 = vmatpush1.bf16.xpose.msra.mxu0 %v7306
    %7313 = vmatprep.subr.bf16.mxu0 0
    %7314 = vmatpush1.bf16.xpose.msra.mxu0 %v7309
    %7315 = vmatprep.subr.bf16.mxu0 0
    %7316 = vmatpush1.bf16.xpose.msra.mxu0 0
    %7317 = vmatprep.subr.bf16.mxu0 0
    %7318 = vmatpush1.bf16.xpose.msra.mxu0 0
    %7319 = vmatprep.subr.bf16.mxu0 0
    %7320 = vmatpush1.bf16.xpose.msra.mxu0 0
    %7321 = vmatprep.subr.bf16.mxu0 0
    %7322 = vmatpush1.bf16.xpose.msra.mxu0 0
    %7323 = vmatprep.subr.bf16.mxu0 0
    %7324 = vmatpush1.bf16.xpose.msra.mxu0 0
    %7325 = vmatprep.subr.bf16.mxu0 0
    %7326 = vmatpush1.bf16.xpose.msra.mxu0 0
    %7327 = vmatprep.subr.bf16.mxu0 0
    %7328 = vmatpush1.bf16.xpose.msra.mxu0 0
    %7329 = vmatprep.subr.bf16.mxu0 0
    %7330 = vmatpush1.bf16.xpose.msra.mxu0 0
    %7331 = vmatprep.subr.bf16.mxu0 0
    %7332 = vmatpush1.bf16.xpose.msra.mxu0 0
    %7333 = vmatprep.subr.bf16.mxu0 0
    %7334 = vmatpush1.bf16.xpose.msra.mxu0 0
    %7335 = vmatprep.subr.bf16.mxu0 0
    %7336 = vmatpush1.bf16.xpose.msra.mxu0 0
    %7337 = vmatprep.subr.bf16.mxu0 0
    %7338 = vmatpush1.bf16.xpose.msra.mxu0 0
    %7339 = vmatprep.subr.bf16.mxu0 0
    %7340 = vmatpush1.bf16.xpose.msra.mxu0 0
    %7341 = vmatprep.subr.bf16.mxu0 0
    %7342 = vmatpush1.bf16.xpose.msra.mxu0 0
    %7343 = vmatprep.mubr.bf16.mxu0 0
    %7344 = vmatmul.mubr.bf16.gmra.mrb[0].mxu0 %v7300
    %v7345 = vpop.f32.mrb[0].mxu0
    %v7346 = vadd.f32 %v3215, %v7345
    %v7347 = vpop.f32.mrb[0].mxu0
    %v7348 = vpop.f32.mrb[0].mxu0
    %v7349 = vadd.f32 %v3216, %v7348
    %v7350 = vpop.f32.mrb[0].mxu0
    %7351 = vmatprep.mubr.bf16.mxu0 0
    %7352 = vmatmul.mubr.bf16.gmra.mrb[0].mxu0 %v7303
    %v7353 = vpop.f32.mrb[0].mxu0
    %v7354 = vadd.f32 %v3217, %v7353
    %v7355 = vpop.f32.mrb[0].mxu0
    %v7356 = vpop.f32.mrb[0].mxu0
    %v7357 = vadd.f32 %v3218, %v7356
    %v7358 = vpop.f32.mrb[0].mxu0
    %7359 = vdwg.mxu0
    %v7360 = vsel %vm349, %v7346, -inf
    %7361 = vmax.xlane.f32.xlu0 %v7360
    %v7362 = vpop.xlane.xlu0 %7361
    %v7363 = vsel %vm349, %v7349, -inf
    %7364 = vmax.xlane.f32.xlu0 %v7363
    %v7365 = vpop.xlane.xlu0 %7364
    %v7366 = vsel %vm349, %v7354, -inf
    %7367 = vmax.xlane.f32.xlu0 %v7366
    %v7368 = vpop.xlane.xlu0 %7367
    %v7369 = vsel %vm349, %v7357, -inf
    %7370 = vmax.xlane.f32.xlu0 %v7369
    %v7371 = vpop.xlane.xlu0 %7370
    %v7372 = vsub.f32 %v7346, %v7362
    %v7373 = vsub.f32 %v7349, %v7365
    %v7374 = vsub.f32 %v7354, %v7368
    %v7375 = vsub.f32 %v7357, %v7371
    %v7376 = vmul.f32 %v7372, 1.442695
    %v7377 = vpow.pop %v7376
    %v7378 = vmul.f32 %v7373, 1.442695
    %v7379 = vpow.pop %v7378
    %v7380 = vmul.f32 %v7374, 1.442695
    %v7381 = vpow.pop %v7380
    %v7382 = vmul.f32 %v7375, 1.442695
    %v7383 = vpow.pop %v7382
    %v7384 = vsel %vm349, %v7377, 0.0
    %7385 = vadd.xlane.f32.xlu0 %v7384
    %v7386 = vpop.xlane.xlu0 %7385
    %v7387 = vsel %vm349, %v7379, 0.0
    %7388 = vadd.xlane.f32.xlu0 %v7387
    %v7389 = vpop.xlane.xlu0 %7388
    %v7390 = vsel %vm349, %v7381, 0.0
    %7391 = vadd.xlane.f32.xlu0 %v7390
    %v7392 = vpop.xlane.xlu0 %7391
    %v7393 = vsel %vm349, %v7383, 0.0
    %7394 = vadd.xlane.f32.xlu0 %v7393
    %v7395 = vpop.xlane.xlu0 %7394
    %v7396 = vrcp.pop %v7386
    %v7397 = vrcp.pop %v7389
    %v7398 = vrcp.pop %v7392
    %v7399 = vrcp.pop %v7395
    %v7400 = vmul.f32 %v7377, %v7396
    %v7401 = vmul.f32 %v7379, %v7397
    %v7402 = vmul.f32 %v7381, %v7398
    %v7403 = vmul.f32 %v7383, %v7399
    %v7404 = vpack.c.bf16 %v7401, %v7400
    %v7405 = vpack.c.bf16 %v7403, %v7402
    %7406 = vrot.lane.b32.xlu0 %v6759, 72
    %v7407 = vpop.permute.xlu0 %7406
    %7408 = vrot.lane.b32.xlu0 %v6760, 72
    %v7409 = vpop.permute.xlu0 %7408
    %v7412 = vsel %vm349, %v7404, 0
    %v7415 = vsel %vm349, %v7405, 0
    %v7418 = vsel %vm408, %v7409, 0
    %7420 = vmatprep.subr.bf16.mxu0 0
    %7421 = vmatpush1.bf16.msra.mxu0 %v7407
    %7422 = vmatprep.subr.bf16.mxu0 0
    %7423 = vmatpush1.bf16.msra.mxu0 %v7418
    %7424 = vmatprep.subr.bf16.mxu0 0
    %7425 = vmatpush1.bf16.msra.mxu0 0
    %7426 = vmatprep.subr.bf16.mxu0 0
    %7427 = vmatpush1.bf16.msra.mxu0 0
    %7428 = vmatprep.subr.bf16.mxu0 0
    %7429 = vmatpush1.bf16.msra.mxu0 0
    %7430 = vmatprep.subr.bf16.mxu0 0
    %7431 = vmatpush1.bf16.msra.mxu0 0
    %7432 = vmatprep.subr.bf16.mxu0 0
    %7433 = vmatpush1.bf16.msra.mxu0 0
    %7434 = vmatprep.subr.bf16.mxu0 0
    %7435 = vmatpush1.bf16.msra.mxu0 0
    %7436 = vmatprep.subr.bf16.mxu0 0
    %7437 = vmatpush1.bf16.msra.mxu0 0
    %7438 = vmatprep.subr.bf16.mxu0 0
    %7439 = vmatpush1.bf16.msra.mxu0 0
    %7440 = vmatprep.subr.bf16.mxu0 0
    %7441 = vmatpush1.bf16.msra.mxu0 0
    %7442 = vmatprep.subr.bf16.mxu0 0
    %7443 = vmatpush1.bf16.msra.mxu0 0
    %7444 = vmatprep.subr.bf16.mxu0 0
    %7445 = vmatpush1.bf16.msra.mxu0 0
    %7446 = vmatprep.subr.bf16.mxu0 0
    %7447 = vmatpush1.bf16.msra.mxu0 0
    %7448 = vmatprep.subr.bf16.mxu0 0
    %7449 = vmatpush1.bf16.msra.mxu0 0
    %7450 = vmatprep.subr.bf16.mxu0 0
    %7451 = vmatpush1.bf16.msra.mxu0 0
    %7452 = vmatprep.mubr.bf16.mxu0 0
    %7453 = vmatmul.mubr.bf16.gmra.mrb[0].mxu0 %v7412
    %v7454 = vpop.f32.mrb[0].mxu0
    %v7455 = vadd.f32 0.0, %v7454
    %v7456 = vpop.f32.mrb[0].mxu0
    %v7457 = vpop.f32.mrb[0].mxu0
    %v7458 = vadd.f32 0.0, %v7457
    %v7459 = vpop.f32.mrb[0].mxu0
    %7460 = vmatprep.mubr.bf16.mxu0 0
    %7461 = vmatmul.mubr.bf16.gmra.mrb[0].mxu0 %v7415
    %v7462 = vpop.f32.mrb[0].mxu0
    %v7463 = vadd.f32 0.0, %v7462
    %v7464 = vpop.f32.mrb[0].mxu0
    %v7465 = vpop.f32.mrb[0].mxu0
    %v7466 = vadd.f32 0.0, %v7465
    %v7467 = vpop.f32.mrb[0].mxu0
    %7468 = vdwg.mxu0
    %7473 = vrot.lane.b32.xlu0 %v7099, 8
    %v7474 = vpop.permute.xlu0 %7473
    %7475 = vrot.lane.b32.xlu0 %v7102, 8
    %v7476 = vpop.permute.xlu0 %7475
    %7477 = vrot.lane.b32.xlu0 %v7107, 8
    %v7478 = vpop.permute.xlu0 %7477
    %7479 = vrot.lane.b32.xlu0 %v7110, 8
    %v7480 = vpop.permute.xlu0 %7479
    %7489 = vrot.lane.b32.xlu0 %v7277, 16
    %v7490 = vpop.permute.xlu0 %7489
    %7491 = vrot.lane.b32.xlu0 %v7280, 16
    %v7492 = vpop.permute.xlu0 %7491
    %7493 = vrot.lane.b32.xlu0 %v7285, 16
    %v7494 = vpop.permute.xlu0 %7493
    %7495 = vrot.lane.b32.xlu0 %v7288, 16
    %v7496 = vpop.permute.xlu0 %7495
    %7505 = vrot.lane.b32.xlu0 %v7455, 24
    %v7506 = vpop.permute.xlu0 %7505
    %7507 = vrot.lane.b32.xlu0 %v7458, 24
    %v7508 = vpop.permute.xlu0 %7507
    %7509 = vrot.lane.b32.xlu0 %v7463, 24
    %v7510 = vpop.permute.xlu0 %7509
    %7511 = vrot.lane.b32.xlu0 %v7466, 24
    %v7512 = vpop.permute.xlu0 %7511
    %v7517 = vsel %vm287, %v6919, %v7474
    %v7518 = vsel %vm287, %v6922, %v7476
    %v7519 = vsel %vm287, %v6927, %v7478
    %v7520 = vsel %vm287, %v6930, %v7480
    %v7521 = vsel %vm1049, %v7517, %v7490
    %v7522 = vsel %vm1049, %v7518, %v7492
    %v7523 = vsel %vm1049, %v7519, %v7494
    %v7524 = vsel %vm1049, %v7520, %v7496
    %v7525 = vsel %vm1054, %v7521, %v7506
    %v7526 = vsel %vm1054, %v7522, %v7508
    %v7527 = vsel %vm1054, %v7523, %v7510
    %v7528 = vsel %vm1054, %v7524, %v7512
    %s7529 = scalar_lea.vmem %s53, 16
    %v7530 = vld [vmem:[%s7529] sm:$0xf]
    %v7531 = vld [vmem:[%s7529 + $0x4] sm:$0xf]
    %v7532 = vld [vmem:[%s7529 + $0x8] sm:$0xf]
    %v7533 = vld [vmem:[%s7529 + $0xc] sm:$0xf]
    %v7534 = vpack.c.bf16 %v7526, %v7525
    %v7535 = vpack.c.bf16 %v7528, %v7527
    %s7536 = scalar_lea.vmem %s55, 1
    %v7537 = vld [vmem:[%s7536] sm:$0x1]
    %v7539 = vlaneseq
    %v7540 = vshrl.u32 %v7539, 7
    %v7541 = vsub.s32 0, %v7540
    %v7542 = vrot.slane %v7537, %v7541
    %v7548 = vunpack.c.l.b16 %v7530
    %v7549 = vunpack.c.l.b16 %v7531
    %v7550 = vunpack.c.l.b16 %v7532
    %v7551 = vunpack.c.l.b16 %v7533
    %v7552 = vpack.c.b16 %v7549, %v7548
    %v7553 = vpack.c.b16 %v7551, %v7550
    %v7557 = vsel %vm217, %v7534, 0
    %v7560 = vsel %vm217, %v7535, 0
    %7562 = vmatprep.subr.bf16.mxu0 0
    %7563 = vmatpush1.bf16.msra.mxu0 %v7552
    %7564 = vmatprep.subr.bf16.mxu0 0
    %7565 = vmatpush1.bf16.msra.mxu0 %v7553
    %7566 = vmatprep.subr.bf16.mxu0 0
    %7567 = vmatpush1.bf16.msra.mxu0 0
    %7568 = vmatprep.subr.bf16.mxu0 0
    %7569 = vmatpush1.bf16.msra.mxu0 0
    %7570 = vmatprep.subr.bf16.mxu0 0
    %7571 = vmatpush1.bf16.msra.mxu0 0
    %7572 = vmatprep.subr.bf16.mxu0 0
    %7573 = vmatpush1.bf16.msra.mxu0 0
    %7574 = vmatprep.subr.bf16.mxu0 0
    %7575 = vmatpush1.bf16.msra.mxu0 0
    %7576 = vmatprep.subr.bf16.mxu0 0
    %7577 = vmatpush1.bf16.msra.mxu0 0
    %7578 = vmatprep.subr.bf16.mxu0 0
    %7579 = vmatpush1.bf16.msra.mxu0 0
    %7580 = vmatprep.subr.bf16.mxu0 0
    %7581 = vmatpush1.bf16.msra.mxu0 0
    %7582 = vmatprep.subr.bf16.mxu0 0
    %7583 = vmatpush1.bf16.msra.mxu0 0
    %7584 = vmatprep.subr.bf16.mxu0 0
    %7585 = vmatpush1.bf16.msra.mxu0 0
    %7586 = vmatprep.subr.bf16.mxu0 0
    %7587 = vmatpush1.bf16.msra.mxu0 0
    %7588 = vmatprep.subr.bf16.mxu0 0
    %7589 = vmatpush1.bf16.msra.mxu0 0
    %7590 = vmatprep.subr.bf16.mxu0 0
    %7591 = vmatpush1.bf16.msra.mxu0 0
    %7592 = vmatprep.subr.bf16.mxu0 0
    %7593 = vmatpush1.bf16.msra.mxu0 0
    %7594 = vmatprep.mubr.bf16.mxu0 0
    %7595 = vmatmul.mubr.bf16.gmra.mrb[0].mxu0 %v7557
    %v7596 = vpop.f32.mrb[0].mxu0
    %v7597 = vadd.f32 %v7542, %v7596
    %v7598 = vpop.f32.mrb[0].mxu0
    %v7599 = vpop.f32.mrb[0].mxu0
    %v7600 = vadd.f32 %v7542, %v7599
    %v7601 = vpop.f32.mrb[0].mxu0
    %7602 = vmatprep.mubr.bf16.mxu0 0
    %7603 = vmatmul.mubr.bf16.gmra.mrb[0].mxu0 %v7560
    %v7604 = vpop.f32.mrb[0].mxu0
    %v7605 = vadd.f32 %v7542, %v7604
    %v7606 = vpop.f32.mrb[0].mxu0
    %v7607 = vpop.f32.mrb[0].mxu0
    %v7608 = vadd.f32 %v7542, %v7607
    %v7609 = vpop.f32.mrb[0].mxu0
    %7610 = vdwg.mxu0
    %v7611 = vadd.f32 %v6593, %v7597
    %v7612 = vadd.f32 %v6594, %v7600
    %v7613 = vadd.f32 %v6595, %v7605
    %v7614 = vadd.f32 %v6596, %v7608
    %s7615 = scalar_lea.vmem %s61, 1
    %v7616 = vld [vmem:[%s7615] sm:$0x1]
    %s7617 = scalar_lea.vmem %s63, 1
    %v7618 = vld [vmem:[%s7617] sm:$0x1]
    %v7619 = vsel %vm217, %v7611, 0.0
    %7620 = vadd.xlane.f32.xlu0 %v7619
    %v7621 = vpop.xlane.xlu0 %7620
    %v7622 = vsel %vm217, %v7612, 0.0
    %7623 = vadd.xlane.f32.xlu0 %v7622
    %v7624 = vpop.xlane.xlu0 %7623
    %v7625 = vsel %vm217, %v7613, 0.0
    %7626 = vadd.xlane.f32.xlu0 %v7625
    %v7627 = vpop.xlane.xlu0 %7626
    %v7628 = vsel %vm217, %v7614, 0.0
    %7629 = vadd.xlane.f32.xlu0 %v7628
    %v7630 = vpop.xlane.xlu0 %7629
    %v7631 = vmul.f32 %v7621, %v1158
    %v7632 = vmul.f32 %v7624, %v1158
    %v7633 = vmul.f32 %v7627, %v1158
    %v7634 = vmul.f32 %v7630, %v1158
    %v7635 = vsub.f32 %v7611, %v7631
    %v7636 = vsub.f32 %v7612, %v7632
    %v7637 = vsub.f32 %v7613, %v7633
    %v7638 = vsub.f32 %v7614, %v7634
    %v7639 = vmul.f32 %v7635, %v7635
    %v7640 = vmul.f32 %v7636, %v7636
    %v7641 = vmul.f32 %v7637, %v7637
    %v7642 = vmul.f32 %v7638, %v7638
    %v7643 = vsel %vm217, %v7639, 0.0
    %7644 = vadd.xlane.f32.xlu0 %v7643
    %v7645 = vpop.xlane.xlu0 %7644
    %v7646 = vsel %vm217, %v7640, 0.0
    %7647 = vadd.xlane.f32.xlu0 %v7646
    %v7648 = vpop.xlane.xlu0 %7647
    %v7649 = vsel %vm217, %v7641, 0.0
    %7650 = vadd.xlane.f32.xlu0 %v7649
    %v7651 = vpop.xlane.xlu0 %7650
    %v7652 = vsel %vm217, %v7642, 0.0
    %7653 = vadd.xlane.f32.xlu0 %v7652
    %v7654 = vpop.xlane.xlu0 %7653
    %v7655 = vmul.f32 %v7645, %v1158
    %v7656 = vmul.f32 %v7648, %v1158
    %v7657 = vmul.f32 %v7651, %v1158
    %v7658 = vmul.f32 %v7654, %v1158
    %v7659 = vadd.f32 %v7655, 1e-05
    %v7660 = vadd.f32 %v7656, 1e-05
    %v7661 = vadd.f32 %v7657, 1e-05
    %v7662 = vadd.f32 %v7658, 1e-05
    %v7663 = vrsqrt.pop %v7659
    %v7664 = vrsqrt.pop %v7660
    %v7665 = vrsqrt.pop %v7661
    %v7666 = vrsqrt.pop %v7662
    %v7667 = vmul.f32 %v7635, %v7663
    %v7668 = vmul.f32 %v7636, %v7664
    %v7669 = vmul.f32 %v7637, %v7665
    %v7670 = vmul.f32 %v7638, %v7666
    %v7672 = vlaneseq
    %v7673 = vshrl.u32 %v7672, 7
    %v7674 = vsub.s32 0, %v7673
    %v7675 = vrot.slane %v7616, %v7674
    %v7677 = vmul.f32 %v7667, %v7675
    %v7678 = vmul.f32 %v7668, %v7675
    %v7679 = vmul.f32 %v7669, %v7675
    %v7680 = vmul.f32 %v7670, %v7675
    %v7682 = vlaneseq
    %v7683 = vshrl.u32 %v7682, 7
    %v7684 = vsub.s32 0, %v7683
    %v7685 = vrot.slane %v7618, %v7684
    %v7687 = vadd.f32 %v7677, %v7685
    %v7688 = vadd.f32 %v7678, %v7685
    %v7689 = vadd.f32 %v7679, %v7685
    %v7690 = vadd.f32 %v7680, %v7685
    %s7691 = scalar_lea.vmem %s69, 16
    %v7692 = vld [vmem:[%s7691] sm:$0xf]
    %v7693 = vld [vmem:[%s7691 + $0x4] sm:$0xf]
    %v7694 = vld [vmem:[%s7691 + $0x8] sm:$0xf]
    %v7695 = vld [vmem:[%s7691 + $0xc] sm:$0xf]
    %v7696 = vpack.c.bf16 %v7688, %v7687
    %v7697 = vpack.c.bf16 %v7690, %v7689
    %s7698 = scalar_lea.vmem %s71, 1
    %v7699 = vld [vmem:[%s7698] sm:$0x1]
    %v7701 = vlaneseq
    %v7702 = vshrl.u32 %v7701, 7
    %v7703 = vsub.s32 0, %v7702
    %v7704 = vrot.slane %v7699, %v7703
    %v7710 = vunpack.c.l.b16 %v7692
    %v7711 = vunpack.c.l.b16 %v7693
    %v7712 = vunpack.c.l.b16 %v7694
    %v7713 = vunpack.c.l.b16 %v7695
    %v7714 = vpack.c.b16 %v7711, %v7710
    %v7715 = vpack.c.b16 %v7713, %v7712
    %v7719 = vsel %vm217, %v7696, 0
    %v7722 = vsel %vm217, %v7697, 0
    %7724 = vmatprep.subr.bf16.mxu0 0
    %7725 = vmatpush1.bf16.msra.mxu0 %v7714
    %7726 = vmatprep.subr.bf16.mxu0 0
    %7727 = vmatpush1.bf16.msra.mxu0 %v7715
    %7728 = vmatprep.subr.bf16.mxu0 0
    %7729 = vmatpush1.bf16.msra.mxu0 0
    %7730 = vmatprep.subr.bf16.mxu0 0
    %7731 = vmatpush1.bf16.msra.mxu0 0
    %7732 = vmatprep.subr.bf16.mxu0 0
    %7733 = vmatpush1.bf16.msra.mxu0 0
    %7734 = vmatprep.subr.bf16.mxu0 0
    %7735 = vmatpush1.bf16.msra.mxu0 0
    %7736 = vmatprep.subr.bf16.mxu0 0
    %7737 = vmatpush1.bf16.msra.mxu0 0
    %7738 = vmatprep.subr.bf16.mxu0 0
    %7739 = vmatpush1.bf16.msra.mxu0 0
    %7740 = vmatprep.subr.bf16.mxu0 0
    %7741 = vmatpush1.bf16.msra.mxu0 0
    %7742 = vmatprep.subr.bf16.mxu0 0
    %7743 = vmatpush1.bf16.msra.mxu0 0
    %7744 = vmatprep.subr.bf16.mxu0 0
    %7745 = vmatpush1.bf16.msra.mxu0 0
    %7746 = vmatprep.subr.bf16.mxu0 0
    %7747 = vmatpush1.bf16.msra.mxu0 0
    %7748 = vmatprep.subr.bf16.mxu0 0
    %7749 = vmatpush1.bf16.msra.mxu0 0
    %7750 = vmatprep.subr.bf16.mxu0 0
    %7751 = vmatpush1.bf16.msra.mxu0 0
    %7752 = vmatprep.subr.bf16.mxu0 0
    %7753 = vmatpush1.bf16.msra.mxu0 0
    %7754 = vmatprep.subr.bf16.mxu0 0
    %7755 = vmatpush1.bf16.msra.mxu0 0
    %7756 = vmatprep.mubr.bf16.mxu0 0
    %7757 = vmatmul.mubr.bf16.gmra.mrb[0].mxu0 %v7719
    %v7758 = vpop.f32.mrb[0].mxu0
    %v7759 = vadd.f32 %v7704, %v7758
    %v7760 = vpop.f32.mrb[0].mxu0
    %v7761 = vpop.f32.mrb[0].mxu0
    %v7762 = vadd.f32 %v7704, %v7761
    %v7763 = vpop.f32.mrb[0].mxu0
    %7764 = vmatprep.mubr.bf16.mxu0 0
    %7765 = vmatmul.mubr.bf16.gmra.mrb[0].mxu0 %v7722
    %v7766 = vpop.f32.mrb[0].mxu0
    %v7767 = vadd.f32 %v7704, %v7766
    %v7768 = vpop.f32.mrb[0].mxu0
    %v7769 = vpop.f32.mrb[0].mxu0
    %v7770 = vadd.f32 %v7704, %v7769
    %v7771 = vpop.f32.mrb[0].mxu0
    %7772 = vdwg.mxu0
    %v7773 = vmax.f32 %v7759, 0.0
    %v7774 = vmax.f32 %v7762, 0.0
    %v7775 = vmax.f32 %v7767, 0.0
    %v7776 = vmax.f32 %v7770, 0.0
    %s7777 = scalar_lea.vmem %s73, 32
    %v7778 = vld [vmem:[%s7777] sm:$0xf]
    %v7779 = vld [vmem:[%s7777 + $0x4] sm:$0xf]
    %v7780 = vld [vmem:[%s7777 + $0x8] sm:$0xf]
    %v7781 = vld [vmem:[%s7777 + $0xc] sm:$0xf]
    %v7782 = vld [vmem:[%s7777 + $0x10] sm:$0xf]
    %v7783 = vld [vmem:[%s7777 + $0x14] sm:$0xf]
    %v7784 = vld [vmem:[%s7777 + $0x18] sm:$0xf]
    %v7785 = vld [vmem:[%s7777 + $0x1c] sm:$0xf]
    %v7786 = vpack.c.bf16 %v7774, %v7773
    %v7787 = vpack.c.bf16 %v7776, %v7775
    %s7788 = scalar_lea.vmem %s75, 1
    %v7789 = vld [vmem:[%s7788] sm:$0x1]
    %v7791 = vlaneseq
    %v7792 = vshrl.u32 %v7791, 7
    %v7793 = vsub.s32 0, %v7792
    %v7794 = vrot.slane %v7789, %v7793
    %v7804 = vunpack.c.l.b16 %v7778
    %v7805 = vunpack.c.l.b16 %v7779
    %v7806 = vunpack.c.l.b16 %v7780
    %v7807 = vunpack.c.l.b16 %v7781
    %v7808 = vunpack.c.l.b16 %v7782
    %v7809 = vunpack.c.l.b16 %v7783
    %v7810 = vunpack.c.l.b16 %v7784
    %v7811 = vunpack.c.l.b16 %v7785
    %v7812 = vpack.c.b16 %v7805, %v7804
    %v7813 = vpack.c.b16 %v7807, %v7806
    %v7814 = vpack.c.b16 %v7809, %v7808
    %v7815 = vpack.c.b16 %v7811, %v7810
    %v7821 = vsel %vm1344, %v7786, 0
    %v7824 = vsel %vm1344, %v7787, 0
    %7826 = vmatprep.subr.bf16.mxu0 0
    %7827 = vmatpush1.bf16.msra.mxu0 %v7812
    %7828 = vmatprep.subr.bf16.mxu0 0
    %7829 = vmatpush1.bf16.msra.mxu0 %v7813
    %7830 = vmatprep.subr.bf16.mxu0 0
    %7831 = vmatpush1.bf16.msra.mxu0 %v7814
    %7832 = vmatprep.subr.bf16.mxu0 0
    %7833 = vmatpush1.bf16.msra.mxu0 %v7815
    %7834 = vmatprep.subr.bf16.mxu0 0
    %7835 = vmatpush1.bf16.msra.mxu0 0
    %7836 = vmatprep.subr.bf16.mxu0 0
    %7837 = vmatpush1.bf16.msra.mxu0 0
    %7838 = vmatprep.subr.bf16.mxu0 0
    %7839 = vmatpush1.bf16.msra.mxu0 0
    %7840 = vmatprep.subr.bf16.mxu0 0
    %7841 = vmatpush1.bf16.msra.mxu0 0
    %7842 = vmatprep.subr.bf16.mxu0 0
    %7843 = vmatpush1.bf16.msra.mxu0 0
    %7844 = vmatprep.subr.bf16.mxu0 0
    %7845 = vmatpush1.bf16.msra.mxu0 0
    %7846 = vmatprep.subr.bf16.mxu0 0
    %7847 = vmatpush1.bf16.msra.mxu0 0
    %7848 = vmatprep.subr.bf16.mxu0 0
    %7849 = vmatpush1.bf16.msra.mxu0 0
    %7850 = vmatprep.subr.bf16.mxu0 0
    %7851 = vmatpush1.bf16.msra.mxu0 0
    %7852 = vmatprep.subr.bf16.mxu0 0
    %7853 = vmatpush1.bf16.msra.mxu0 0
    %7854 = vmatprep.subr.bf16.mxu0 0
    %7855 = vmatpush1.bf16.msra.mxu0 0
    %7856 = vmatprep.subr.bf16.mxu0 0
    %7857 = vmatpush1.bf16.msra.mxu0 0
    %7858 = vmatprep.mubr.bf16.mxu0 0
    %7859 = vmatmul.mubr.bf16.gmra.mrb[0].mxu0 %v7821
    %v7860 = vpop.f32.mrb[0].mxu0
    %v7861 = vadd.f32 %v7794, %v7860
    %v7862 = vpop.f32.mrb[0].mxu0
    %v7863 = vpop.f32.mrb[0].mxu0
    %v7864 = vadd.f32 %v7794, %v7863
    %v7865 = vpop.f32.mrb[0].mxu0
    %7866 = vmatprep.mubr.bf16.mxu0 0
    %7867 = vmatmul.mubr.bf16.gmra.mrb[0].mxu0 %v7824
    %v7868 = vpop.f32.mrb[0].mxu0
    %v7869 = vadd.f32 %v7794, %v7868
    %v7870 = vpop.f32.mrb[0].mxu0
    %v7871 = vpop.f32.mrb[0].mxu0
    %v7872 = vadd.f32 %v7794, %v7871
    %v7873 = vpop.f32.mrb[0].mxu0
    %7874 = vdwg.mxu0
    %v7875 = vadd.f32 %v7687, %v7861
    %v7876 = vadd.f32 %v7688, %v7864
    %v7877 = vadd.f32 %v7689, %v7869
    %v7878 = vadd.f32 %v7690, %v7872
    %s7879 = scalar_lea.vmem %s65, 1
    %v7880 = vld [vmem:[%s7879] sm:$0x1]
    %s7881 = scalar_lea.vmem %s67, 1
    %v7882 = vld [vmem:[%s7881] sm:$0x1]
    %v7883 = vsel %vm217, %v7875, 0.0
    %7884 = vadd.xlane.f32.xlu0 %v7883
    %v7885 = vpop.xlane.xlu0 %7884
    %v7886 = vsel %vm217, %v7876, 0.0
    %7887 = vadd.xlane.f32.xlu0 %v7886
    %v7888 = vpop.xlane.xlu0 %7887
    %v7889 = vsel %vm217, %v7877, 0.0
    %7890 = vadd.xlane.f32.xlu0 %v7889
    %v7891 = vpop.xlane.xlu0 %7890
    %v7892 = vsel %vm217, %v7878, 0.0
    %7893 = vadd.xlane.f32.xlu0 %v7892
    %v7894 = vpop.xlane.xlu0 %7893
    %v7895 = vmul.f32 %v7885, %v1158
    %v7896 = vmul.f32 %v7888, %v1158
    %v7897 = vmul.f32 %v7891, %v1158
    %v7898 = vmul.f32 %v7894, %v1158
    %v7899 = vsub.f32 %v7875, %v7895
    %v7900 = vsub.f32 %v7876, %v7896
    %v7901 = vsub.f32 %v7877, %v7897
    %v7902 = vsub.f32 %v7878, %v7898
    %v7903 = vmul.f32 %v7899, %v7899
    %v7904 = vmul.f32 %v7900, %v7900
    %v7905 = vmul.f32 %v7901, %v7901
    %v7906 = vmul.f32 %v7902, %v7902
    %v7907 = vsel %vm217, %v7903, 0.0
    %7908 = vadd.xlane.f32.xlu0 %v7907
    %v7909 = vpop.xlane.xlu0 %7908
    %v7910 = vsel %vm217, %v7904, 0.0
    %7911 = vadd.xlane.f32.xlu0 %v7910
    %v7912 = vpop.xlane.xlu0 %7911
    %v7913 = vsel %vm217, %v7905, 0.0
    %7914 = vadd.xlane.f32.xlu0 %v7913
    %v7915 = vpop.xlane.xlu0 %7914
    %v7916 = vsel %vm217, %v7906, 0.0
    %7917 = vadd.xlane.f32.xlu0 %v7916
    %v7918 = vpop.xlane.xlu0 %7917
    %v7919 = vmul.f32 %v7909, %v1158
    %v7920 = vmul.f32 %v7912, %v1158
    %v7921 = vmul.f32 %v7915, %v1158
    %v7922 = vmul.f32 %v7918, %v1158
    %v7923 = vadd.f32 %v7919, 1e-05
    %v7924 = vadd.f32 %v7920, 1e-05
    %v7925 = vadd.f32 %v7921, 1e-05
    %v7926 = vadd.f32 %v7922, 1e-05
    %v7927 = vrsqrt.pop %v7923
    %v7928 = vrsqrt.pop %v7924
    %v7929 = vrsqrt.pop %v7925
    %v7930 = vrsqrt.pop %v7926
    %v7931 = vmul.f32 %v7899, %v7927
    %v7932 = vmul.f32 %v7900, %v7928
    %v7933 = vmul.f32 %v7901, %v7929
    %v7934 = vmul.f32 %v7902, %v7930
    %v7936 = vlaneseq
    %v7937 = vshrl.u32 %v7936, 7
    %v7938 = vsub.s32 0, %v7937
    %v7939 = vrot.slane %v7880, %v7938
    %v7941 = vmul.f32 %v7931, %v7939
    %v7942 = vmul.f32 %v7932, %v7939
    %v7943 = vmul.f32 %v7933, %v7939
    %v7944 = vmul.f32 %v7934, %v7939
    %v7946 = vlaneseq
    %v7947 = vshrl.u32 %v7946, 7
    %v7948 = vsub.s32 0, %v7947
    %v7949 = vrot.slane %v7882, %v7948
    %v7951 = vadd.f32 %v7941, %v7949
    %v7952 = vadd.f32 %v7942, %v7949
    %v7953 = vadd.f32 %v7943, %v7949
    %v7954 = vadd.f32 %v7944, %v7949
    %v7955 = vld [vmem:[%s77] sm:$0x1]
    %v7956 = vld [vmem:[%s79] sm:$0x1]
    %v7957 = vsel %vm217, %v7951, 0.0
    %7958 = vadd.xlane.f32.xlu0 %v7957
    %v7959 = vpop.xlane.xlu0 %7958
    %v7960 = vsel %vm217, %v7952, 0.0
    %7961 = vadd.xlane.f32.xlu0 %v7960
    %v7962 = vpop.xlane.xlu0 %7961
    %v7963 = vsel %vm217, %v7953, 0.0
    %7964 = vadd.xlane.f32.xlu0 %v7963
    %v7965 = vpop.xlane.xlu0 %7964
    %v7966 = vsel %vm217, %v7954, 0.0
    %7967 = vadd.xlane.f32.xlu0 %v7966
    %v7968 = vpop.xlane.xlu0 %7967
    %v7969 = vmul.f32 %v7959, %v1158
    %v7970 = vmul.f32 %v7962, %v1158
    %v7971 = vmul.f32 %v7965, %v1158
    %v7972 = vmul.f32 %v7968, %v1158
    %v7973 = vsub.f32 %v7951, %v7969
    %v7974 = vsub.f32 %v7952, %v7970
    %v7975 = vsub.f32 %v7953, %v7971
    %v7976 = vsub.f32 %v7954, %v7972
    %v7977 = vmul.f32 %v7973, %v7973
    %v7978 = vmul.f32 %v7974, %v7974
    %v7979 = vmul.f32 %v7975, %v7975
    %v7980 = vmul.f32 %v7976, %v7976
    %v7981 = vsel %vm217, %v7977, 0.0
    %7982 = vadd.xlane.f32.xlu0 %v7981
    %v7983 = vpop.xlane.xlu0 %7982
    %v7984 = vsel %vm217, %v7978, 0.0
    %7985 = vadd.xlane.f32.xlu0 %v7984
    %v7986 = vpop.xlane.xlu0 %7985
    %v7987 = vsel %vm217, %v7979, 0.0
    %7988 = vadd.xlane.f32.xlu0 %v7987
    %v7989 = vpop.xlane.xlu0 %7988
    %v7990 = vsel %vm217, %v7980, 0.0
    %7991 = vadd.xlane.f32.xlu0 %v7990
    %v7992 = vpop.xlane.xlu0 %7991
    %v7993 = vmul.f32 %v7983, %v1158
    %v7994 = vmul.f32 %v7986, %v1158
    %v7995 = vmul.f32 %v7989, %v1158
    %v7996 = vmul.f32 %v7992, %v1158
    %v7997 = vadd.f32 %v7993, 1e-05
    %v7998 = vadd.f32 %v7994, 1e-05
    %v7999 = vadd.f32 %v7995, 1e-05
    %v8000 = vadd.f32 %v7996, 1e-05
    %v8001 = vrsqrt.pop %v7997
    %v8002 = vrsqrt.pop %v7998
    %v8003 = vrsqrt.pop %v7999
    %v8004 = vrsqrt.pop %v8000
    %v8005 = vmul.f32 %v7973, %v8001
    %v8006 = vmul.f32 %v7974, %v8002
    %v8007 = vmul.f32 %v7975, %v8003
    %v8008 = vmul.f32 %v7976, %v8004
    %v8010 = vlaneseq
    %v8011 = vshrl.u32 %v8010, 7
    %v8012 = vsub.s32 0, %v8011
    %v8013 = vrot.slane %v7955, %v8012
    %v8015 = vmul.f32 %v8005, %v8013
    %v8016 = vmul.f32 %v8006, %v8013
    %v8017 = vmul.f32 %v8007, %v8013
    %v8018 = vmul.f32 %v8008, %v8013
    %v8020 = vlaneseq
    %v8021 = vshrl.u32 %v8020, 7
    %v8022 = vsub.s32 0, %v8021
    %v8023 = vrot.slane %v7956, %v8022
    %v8025 = vadd.f32 %v8015, %v8023
    %v8026 = vadd.f32 %v8016, %v8023
    %v8027 = vadd.f32 %v8017, %v8023
    %v8028 = vadd.f32 %v8018, %v8023
    %v8029 = vld [vmem:[%s81] sm:$0xf]
    %v8030 = vld [vmem:[%s81 + $0x4] sm:$0xf]
    %v8031 = vld [vmem:[%s81 + $0x8] sm:$0xf]
    %v8032 = vld [vmem:[%s81 + $0xc] sm:$0xf]
    %v8033 = vpack.c.bf16 %v8026, %v8025
    %v8034 = vpack.c.bf16 %v8028, %v8027
    %v8035 = vld [vmem:[%s83] sm:$0x1]
    %v8037 = vlaneseq
    %v8038 = vshrl.u32 %v8037, 7
    %v8039 = vsub.s32 0, %v8038
    %v8040 = vrot.slane %v8035, %v8039
    %v8046 = vunpack.c.l.b16 %v8029
    %v8047 = vunpack.c.l.b16 %v8030
    %v8048 = vunpack.c.l.b16 %v8031
    %v8049 = vunpack.c.l.b16 %v8032
    %v8050 = vpack.c.b16 %v8047, %v8046
    %v8051 = vpack.c.b16 %v8049, %v8048
    %v8055 = vsel %vm217, %v8033, 0
    %v8058 = vsel %vm217, %v8034, 0
    %8060 = vmatprep.subr.bf16.mxu0 0
    %8061 = vmatpush1.bf16.msra.mxu0 %v8050
    %8062 = vmatprep.subr.bf16.mxu0 0
    %8063 = vmatpush1.bf16.msra.mxu0 %v8051
    %8064 = vmatprep.subr.bf16.mxu0 0
    %8065 = vmatpush1.bf16.msra.mxu0 0
    %8066 = vmatprep.subr.bf16.mxu0 0
    %8067 = vmatpush1.bf16.msra.mxu0 0
    %8068 = vmatprep.subr.bf16.mxu0 0
    %8069 = vmatpush1.bf16.msra.mxu0 0
    %8070 = vmatprep.subr.bf16.mxu0 0
    %8071 = vmatpush1.bf16.msra.mxu0 0
    %8072 = vmatprep.subr.bf16.mxu0 0
    %8073 = vmatpush1.bf16.msra.mxu0 0
    %8074 = vmatprep.subr.bf16.mxu0 0
    %8075 = vmatpush1.bf16.msra.mxu0 0
    %8076 = vmatprep.subr.bf16.mxu0 0
    %8077 = vmatpush1.bf16.msra.mxu0 0
    %8078 = vmatprep.subr.bf16.mxu0 0
    %8079 = vmatpush1.bf16.msra.mxu0 0
    %8080 = vmatprep.subr.bf16.mxu0 0
    %8081 = vmatpush1.bf16.msra.mxu0 0
    %8082 = vmatprep.subr.bf16.mxu0 0
    %8083 = vmatpush1.bf16.msra.mxu0 0
    %8084 = vmatprep.subr.bf16.mxu0 0
    %8085 = vmatpush1.bf16.msra.mxu0 0
    %8086 = vmatprep.subr.bf16.mxu0 0
    %8087 = vmatpush1.bf16.msra.mxu0 0
    %8088 = vmatprep.subr.bf16.mxu0 0
    %8089 = vmatpush1.bf16.msra.mxu0 0
    %8090 = vmatprep.subr.bf16.mxu0 0
    %8091 = vmatpush1.bf16.msra.mxu0 0
    %8092 = vmatprep.mubr.bf16.mxu0 0
    %8093 = vmatmul.mubr.bf16.gmra.mrb[0].mxu0 %v8055
    %v8094 = vpop.f32.mrb[0].mxu0
    %v8095 = vadd.f32 %v8040, %v8094
    %v8096 = vpop.f32.mrb[0].mxu0
    %v8097 = vpop.f32.mrb[0].mxu0
    %v8098 = vadd.f32 %v8040, %v8097
    %v8099 = vpop.f32.mrb[0].mxu0
    %8100 = vmatprep.mubr.bf16.mxu0 0
    %8101 = vmatmul.mubr.bf16.gmra.mrb[0].mxu0 %v8058
    %v8102 = vpop.f32.mrb[0].mxu0
    %v8103 = vadd.f32 %v8040, %v8102
    %v8104 = vpop.f32.mrb[0].mxu0
    %v8105 = vpop.f32.mrb[0].mxu0
    %v8106 = vadd.f32 %v8040, %v8105
    %v8107 = vpop.f32.mrb[0].mxu0
    %8108 = vdwg.mxu0
    %8109 = vst [vmem:[#allocation2] sm:$0xff] %v8095
    %8110 = vst [vmem:[#allocation2 + $0x8] sm:$0xff] %v8098
    %8111 = vst [vmem:[#allocation2 + $0x10] sm:$0xff] %v8103
    %8112 = vst [vmem:[#allocation2 + $0x18] sm:$0xff] %v8106
    // Predicated region
    $region170: #{forward.1} parent=1 // pred_check
      _
    $region171: #{forward.1} parent=1 // pred_check_branch
      %8114 = sbr.rel (0) target = $region173
    $region172: #{forward.1} parent=1 // pred_region
      %s8116 = ssub.s32 512, 512
      %8117 = vsyncadd [#allocation3], %s8116
      %s8118 = sshll.u32 [#allocation2], 4
      %s8119 = int_to_ptr.vmem [resolvable:$true] %s8118
      %8124 = dma.vmem_to_hbm [thread:$0]  %s8119, 512, %s85, [#allocation3], 128, 128, 8
    $region173: #{forward.1} parent=1 // pred_fallthru
      _
    // Predicated region
    $region174: #{forward.1} parent=1 // pred_check
      _
    $region175: #{forward.1} parent=1 // pred_check_branch
      %8126 = sbr.rel (0) target = $region177
    $region176: #{forward.1} parent=1 // pred_region
      _
    $region177: #{forward.1} parent=1 // pred_fallthru
      _
    // Predicated region
    $region178: #{forward.1} parent=1 // pred_check
      _
    $region179: #{forward.1} parent=1 // pred_check_branch
      %8128 = sbr.rel (0) target = $region181
    $region180: #{forward.1} parent=1 // pred_region
      %s8130 = ssub.s32 16, 16
      %8131 = vsyncadd [#allocation5], %s8130
      %s8133 = sshll.u32 [#allocation4], 4
      %s8134 = int_to_ptr.vmem [resolvable:$true] %s8133
      %8136 = dma.vmem_to_hbm [thread:$0]  %s8134, 16, %s89, [#allocation5]
    $region181: #{forward.1} parent=1 // pred_fallthru
      _
    // Predicated region
    $region182: #{forward.1} parent=1 // pred_check
      _
    $region183: #{forward.1} parent=1 // pred_check_branch
      %8138 = sbr.rel (0) target = $region185
    $region184: #{forward.1} parent=1 // pred_region
      %s8140 = ssub.s32 16, 16
      %8141 = vsyncadd [#allocation5], %s8140
      %s8143 = sshll.u32 [#allocation6], 4
      %s8144 = int_to_ptr.vmem [resolvable:$true] %s8143
      %8146 = dma.vmem_to_hbm [thread:$0]  %s8144, 16, %s91, [#allocation5]
    $region185: #{forward.1} parent=1 // pred_fallthru
      _
    // Predicated region
    $region186: #{forward.1} parent=1 // pred_check
      _
    $region187: #{forward.1} parent=1 // pred_check_branch
      %8148 = sbr.rel (0) target = $region189
    $region188: #{forward.1} parent=1 // pred_region
      %8149 = dma.done [#allocation3], 512
    $region189: #{forward.1} parent=1 // pred_fallthru
      _
    // Predicated region
    $region190: #{forward.1} parent=1 // pred_check
      _
    $region191: #{forward.1} parent=1 // pred_check_branch
      %8151 = sbr.rel (0) target = $region193
    $region192: #{forward.1} parent=1 // pred_region
      _
    $region193: #{forward.1} parent=1 // pred_fallthru
      _
    // Predicated region
    $region194: #{forward.1} parent=1 // pred_check
      _
    $region195: #{forward.1} parent=1 // pred_check_branch
      %8153 = sbr.rel (0) target = $region197
    $region196: #{forward.1} parent=1 // pred_region
      %8154 = dma.done [#allocation5], 16
    $region197: #{forward.1} parent=1 // pred_fallthru
      _
    // Predicated region
    $region198: #{forward.1} parent=1 // pred_check
      _
    $region199: #{forward.1} parent=1 // pred_check_branch
      %8156 = sbr.rel (0) target = $region201
    $region200: #{forward.1} parent=1 // pred_region
      %8157 = dma.done [#allocation5], 16
    $region201: #{forward.1} parent=1 // pred_fallthru
      _
    %8158 = vsyncpa [#allocation3], 1
    %8159 = vsyncpa [#allocation5], 1

</llo_original>
